<compile_context>
chip_gen: v6e
topology: v6e:2x2x1
jax: 0.10.0
libtpu: 0.0.40
codegen_flags: <defaults>
</compile_context>

<pallas_src>
import functools
import math

import numpy as np
import jax
import jax.numpy as jnp
from jax import lax
from jax.experimental import pallas as pl
from jax.experimental.pallas import tpu as pltpu


# Set by the startup probes in __main__ (safe defaults when imported).
_BUFFERED_ONE_OK = False


def _round_up(x, m):
    return (x + m - 1) // m * m


def _vmem_limit_bytes():
    # Generation-aware scoped-VMEM cap: ~3/4 of physical, capped at 96 MiB
    # (v5e/v6e: 128 MiB physical -> 96 MiB; v7x: 64 MiB physical -> 48 MiB).
    try:
        cap = int(pltpu.get_tpu_info().vmem_capacity_bytes)
    except Exception:
        cap = 64 * 1024 * 1024
    return max(32 * 1024 * 1024, min(cap * 3 // 4, 96 * 1024 * 1024))


def _invariant_spec(block_shape, index_map):
    # Grid-invariant block: single-buffer it when the runtime supports
    # pipeline_mode=pl.Buffered(1) (halves VMEM for weights / index tables).
    if _BUFFERED_ONE_OK:
        try:
            return pl.BlockSpec(block_shape, index_map,
                                pipeline_mode=pl.Buffered(1))
        except Exception:
            pass
    return pl.BlockSpec(block_shape, index_map)


# ----------------------------------------------------------------------------
# fused LayerNorm + QK / VG projections, row-tiled
# ----------------------------------------------------------------------------
def _ln_qkvg_kernel(eps, x_ref, wqk_ref, bqk_ref, wvg_ref, bvg_ref,
                    q_ref, k_ref, v_ref, g_ref):
    H = q_ref.shape[-1]
    x = x_ref[...].astype(jnp.float32)
    mu = jnp.mean(x, axis=-1, keepdims=True)
    xc = x - mu
    var = jnp.mean(xc * xc, axis=-1, keepdims=True)
    xn = (xc * lax.rsqrt(var + eps)).astype(wqk_ref.dtype)
    qk = jnp.dot(xn, wqk_ref[...], preferred_element_type=jnp.float32) + bqk_ref[...]
    vg = jnp.dot(xn, wvg_ref[...], preferred_element_type=jnp.float32) + bvg_ref[...]
    q_ref[...] = qk[:, :H].astype(q_ref.dtype)
    k_ref[...] = qk[:, H:].astype(k_ref.dtype)
    v_ref[...] = vg[:, :H].astype(v_ref.dtype)
    g_ref[...] = vg[:, H:].astype(g_ref.dtype)


def ln_qkvg_proj(x2d, wqk, bqk, wvg, bvg, eps, out_dtype):
    # TODO(synk): for H >= ~1024 additionally column-tile the (H, 2H) weights.
    R, H = x2d.shape
    tr = min(512, R)
    row_in = pl.BlockSpec((tr, H), lambda i: (i, 0))
    row_out = pl.BlockSpec((tr, H), lambda i: (i, 0))
    wspec = _invariant_spec((H, 2 * H), lambda i: (0, 0))
    bspec = _invariant_spec((1, 2 * H), lambda i: (0, 0))
    out = jax.ShapeDtypeStruct((R, H), out_dtype)
    return pl.pallas_call(
        functools.partial(_ln_qkvg_kernel, eps),
        out_shape=(out, out, out, out),
        grid=(pl.cdiv(R, tr),),
        in_specs=[row_in, wspec, bspec, wspec, bspec],
        out_specs=(row_out, row_out, row_out, row_out),
        compiler_params=pltpu.CompilerParams(
            dimension_semantics=("parallel",),
            vmem_limit_bytes=_vmem_limit_bytes()),
    )(x2d, wqk, bqk.reshape(1, -1), wvg, bvg.reshape(1, -1))


# ----------------------------------------------------------------------------
# fused LayerNorm + linear (post-LN + out_proj), row-tiled
# ----------------------------------------------------------------------------
def _ln_linear_kernel(eps, x_ref, w_ref, b_ref, o_ref):
    x = x_ref[...].astype(jnp.float32)
    mu = jnp.mean(x, axis=-1, keepdims=True)
    xc = x - mu
    var = jnp.mean(xc * xc, axis=-1, keepdims=True)
    xn = xc * lax.rsqrt(var + eps)
    o_ref[...] = (jnp.dot(xn, w_ref[...], preferred_element_type=jnp.float32)
                  + b_ref[...]).astype(o_ref.dtype)


def ln_linear(x2d, w, b, eps):
    R, K = x2d.shape
    M = w.shape[1]
    tr = min(512, R)
    return pl.pallas_call(
        functools.partial(_ln_linear_kernel, eps),
        out_shape=jax.ShapeDtypeStruct((R, M), jnp.float32),
        grid=(pl.cdiv(R, tr),),
        in_specs=[pl.BlockSpec((tr, K), lambda i: (i, 0)),
                  _invariant_spec((K, M), lambda i: (0, 0)),
                  _invariant_spec((1, M), lambda i: (0, 0))],
        out_specs=pl.BlockSpec((tr, M), lambda i: (i, 0)),
        compiler_params=pltpu.CompilerParams(
            dimension_semantics=("parallel",),
            vmem_limit_bytes=_vmem_limit_bytes()),
    )(x2d, w, b.reshape(1, -1))


# ----------------------------------------------------------------------------
# in-kernel expansion of per-bucket scores to (L, L) relative scores
# ----------------------------------------------------------------------------
def _expand_lanes(src, idx_i32, num_valid, use_gather):
    # out[q, k] = src[q, idx[q, k]]          src: (L, Wp), idx: (L, L)
    if use_gather:
        return jnp.take_along_axis(src, idx_i32, axis=1)
    out = jnp.zeros(idx_i32.shape, jnp.float32)
    for b in range(num_valid):  # O(L^2) memory; no (L,L,buckets) intermediate
        out = out + jnp.where(idx_i32 == b, src[:, b:b + 1], 0.0)
    return out


def _expand_sublanes(src_t, idx_i32, num_valid, use_gather):
    # out[q, k] = src_t[idx[q, k], k]        src_t: (Wp, L), idx: (L, L)
    if use_gather:
        return jnp.take_along_axis(src_t, idx_i32, axis=0)
    out = jnp.zeros(idx_i32.shape, jnp.float32)
    for b in range(num_valid):
        out = out + jnp.where(idx_i32 == b, src_t[b:b + 1, :], 0.0)
    return out


# ----------------------------------------------------------------------------
# disentangled attention + masked softmax + gating
# ----------------------------------------------------------------------------
def _attn_kernel(heads_per_block, head_dim, num_buckets, approx_recip,
                 gather_lanes, gather_sublanes,
                 q_ref, k_ref, v_ref, g_ref, kpos_ref, qpos_ref,
                 idx_ref, mask_ref, o_ref):
    # TODO(synk): for very long L (>~1024) key-tile this with an online-softmax
    # accumulator; the un-tiled (L, L) working set is what binds v7x's 64 MiB VMEM.
    idx = idx_ref[...].astype(jnp.int32)          # (L, L), buckets in [0, num_buckets)
    key_masked = mask_ref[0] != 0                 # (1, L) key-padding predicate
    neg_fill = jnp.float32(-1e30)                 # finite fill: no inf-inf NaNs
    dn_t = (((1,), (1,)), ((), ()))               # contract last dims (a @ b.T form)

    qall = q_ref[0]                               # (L, ghd) pre-scaled queries
    kall = k_ref[0]
    vall = v_ref[0]
    kpall = kpos_ref[...]                         # (Wp, ghd) key_pos bucket table
    qpall = qpos_ref[...]                         # (Wp, ghd) query_pos table (pre-scaled)

    ctx_parts = []
    for hh in range(heads_per_block):             # small static unroll over the group
        sl = slice(hh * head_dim, (hh + 1) * head_dim)
        qh, kh, vh = qall[:, sl], kall[:, sl], vall[:, sl]
        kp_t, qp_t = kpall[:, sl], qpall[:, sl]

        # content-to-content / content-to-position / position-to-content,
        # all MXU-native (no in-kernel transposes).
        s = lax.dot_general(qh, kh, dn_t, preferred_element_type=jnp.float32)
        c2p = lax.dot_general(qh, kp_t, dn_t, preferred_element_type=jnp.float32)   # (L, Wp)
        p2c_t = lax.dot_general(qp_t, kh, dn_t, preferred_element_type=jnp.float32) # (Wp, L)
        s = s + _expand_lanes(c2p, idx, num_buckets, gather_lanes)
        s = s + _expand_sublanes(p2c_t, idx, num_buckets, gather_sublanes)

        # masked softmax over keys.  exp underflow already zeroes masked probs;
        # fully-masked rows give uniform probs instead of the reference's zeros.
        s = jnp.where(key_masked, neg_fill, s)
        m = jnp.max(s, axis=-1, keepdims=True)
        e = jnp.exp(s - m)
        denom = jnp.sum(e, axis=-1, keepdims=True)
        if approx_recip:
            p = e * pl.reciprocal(denom, approx=True)
        else:
            p = e / denom
        # TODO(synk): attention_probs_dropout_prob treated as identity (eval mode).
        ctx_parts.append(jnp.dot(p.astype(vh.dtype), vh,
                                 preferred_element_type=jnp.float32))

    ctx = ctx_parts[0] if len(ctx_parts) == 1 else jnp.concatenate(ctx_parts, axis=-1)
    # one lane-dense store of the gated context for the whole head group
    o_ref[0] = (ctx * g_ref[0].astype(jnp.float32)).astype(o_ref.dtype)


def _pick_head_group(num_heads, head_dim):
    # smallest divisor G of num_heads with G*head_dim a multiple of 128
    # (lane-dense blocks); otherwise all heads (block width == H, also allowed).
    for g in range(1, num_heads + 1):
        if num_heads % g == 0 and (g * head_dim) % 128 == 0:
            return g
    return num_heads


def disentangled_attention(q, k, v, g, kpos_t, qpos_t, idx16, mask_i8,
                           num_heads, head_dim, num_buckets,
                           approx_recip, gather_lanes, gather_sublanes):
    B, L, H = q.shape
    Wp = kpos_t.shape[0]
    G = _pick_head_group(num_heads, head_dim)
    ghd = G * head_dim
    nhg = num_heads // G

    # Megacore: lead with whichever independent axis has extent > 1 (v7x has two
    # TensorCores); keep batch innermost when head groups > 1 so the per-group
    # bucket tables stay resident across the batch loop.
    if nhg > 1:
        grid = (nhg, B)
        gb = lambda hh, bb: (bb, hh)
    else:
        grid = (B, nhg)
        gb = lambda bb, hh: (bb, hh)

    qkvg_spec = pl.BlockSpec((1, L, ghd), lambda *i: (gb(*i)[0], 0, gb(*i)[1]))
    pos_spec = pl.BlockSpec((Wp, ghd), lambda *i: (0, gb(*i)[1]))
    idx_spec = _invariant_spec((L, L), lambda *i: (0, 0))
    mask_spec = pl.BlockSpec((1, 1, L), lambda *i: (gb(*i)[0], 0, 0))

    kernel = functools.partial(_attn_kernel, G, head_dim, num_buckets,
                               approx_recip, gather_lanes, gather_sublanes)
    return pl.pallas_call(
        kernel,
        out_shape=jax.ShapeDtypeStruct((B, L, H), q.dtype),
        grid=grid,
        in_specs=[qkvg_spec, qkvg_spec, qkvg_spec, qkvg_spec,   # q, k, v, gate
                  pos_spec, pos_spec,                           # key_pos, query_pos
                  idx_spec, mask_spec],
        out_specs=qkvg_spec,
        compiler_params=pltpu.CompilerParams(
            dimension_semantics=("parallel", "parallel"),
            vmem_limit_bytes=_vmem_limit_bytes()),
    )(q, k, v, g, kpos_t, qpos_t, idx16, mask_i8)


# ----------------------------------------------------------------------------
# position-bucket table (host-side, mirrors the module __init__)
# ----------------------------------------------------------------------------
def make_log_bucket_position(relative_pos, bucket_size, max_position):
    sign = np.sign(relative_pos)
    mid = bucket_size // 2
    abs_pos = np.where(
        (relative_pos < mid) & (relative_pos > -mid),
        mid - 1,
        np.minimum(np.abs(relative_pos), max_position - 1),
    )
    log_pos = (
        np.ceil(np.log(abs_pos / mid) / math.log((max_position - 1) / mid)
                * (mid - 1)).astype(np.int64) + mid)
    return np.where(abs_pos <= mid, relative_pos, log_pos * sign).astype(np.int64)


def build_position_indices(max_position, bucket_size):
    rel = (np.arange(max_position, dtype=np.int64)[:, None]
           - np.arange(max_position, dtype=np.int64)[None, :])
    bucket = make_log_bucket_position(rel, bucket_size, max_position)
    return (bucket_size - 1 + bucket).astype(np.int32)


# ----------------------------------------------------------------------------
# full forward (XLA glue + Pallas kernels)
# ----------------------------------------------------------------------------
def attention_forward(params, hidden_states, attention_mask, relative_embedding,
                      position_indices, *, num_heads, eps,
                      operand_dtype=jnp.float32, approx_recip=False,
                      gather_lanes=False, gather_sublanes=False):
    # hidden_states: (L, B, H); attention_mask: (B, 1, 1, L) bool key-padding
    # mask; relative_embedding: (2*bucket_size - 1, H).
    L, B, H = hidden_states.shape
    hd = H // num_heads
    P = relative_embedding.shape[0]
    scale = 1.0 / math.sqrt(3 * hd)
    Wp = _round_up(P, 128)
    assert position_indices.shape[0] >= L
    # TODO(synk): rebuild position_indices host-side when L exceeds the table
    # (module's query_len > max_position_embeddings branch).

    # Fold the 1/sqrt(3*hd) score scale into the query half of Wqk (which also
    # pre-scales the query_pos bucket table): zero in-kernel scale multiplies.
    Wqk_s = jnp.concatenate([params["Wqk"][:, :H] * scale, params["Wqk"][:, H:]], axis=1)
    bqk_s = jnp.concatenate([params["bqk"][:H] * scale, params["bqk"][H:]])

    # batch-major rows: single input transpose, later reshapes are free.
    x2d = hidden_states.transpose(1, 0, 2).reshape(B * L, H)
    q2d, k2d, v2d, g2d = ln_qkvg_proj(
        x2d, Wqk_s.astype(operand_dtype), bqk_s,
        params["Wvg"].astype(operand_dtype), params["bvg"], eps, operand_dtype)
    # TODO(synk): exact-erf GELU kept in XLA (erf lowering inside Mosaic is not guaranteed).
    g2d = jax.nn.gelu(g2d.astype(jnp.float32), approximate=False).astype(operand_dtype)

    q = q2d.reshape(B, L, H)
    k = k2d.reshape(B, L, H)
    v = v2d.reshape(B, L, H)
    g = g2d.reshape(B, L, H)

    # relative-position bucket tables, bucket-major (Wp, H) so the in-kernel
    # c2p / p2c matmuls are both the MXU-native a @ b.T form (no transposes).
    # TODO(synk): dropout on relative_embedding is identity (eval mode).
    pos = relative_embedding @ Wqk_s + bqk_s                       # (P, 2H)
    posp = jnp.pad(pos, ((0, Wp - P), (0, 0))).astype(operand_dtype)
    qpos_t = posp[:, :H]                                           # (Wp, H), pre-scaled
    kpos_t = posp[:, H:]                                           # (Wp, H)

    idx16 = position_indices[:L, :L].astype(jnp.int16)             # bucket ids < 2^15
    mask_i8 = attention_mask.reshape(B, 1, L).astype(jnp.int8)     # key-padding mask

    ctx = disentangled_attention(q, k, v, g, kpos_t, qpos_t, idx16, mask_i8,
                                 num_heads, hd, P,
                                 approx_recip, gather_lanes, gather_sublanes)

    out2d = ln_linear(ctx.reshape(B * L, H), params["Wout"], params["bout"], eps)
    # TODO(synk): output dropout is identity (eval mode).
    return out2d.reshape(B, L, H).transpose(1, 0, 2)               # (L, B, H)


# ----------------------------------------------------------------------------
# capability probes (run once, before jit tracing)
# ----------------------------------------------------------------------------
def _probe_gather(src_shape, idx_shape, axis, num_valid):
    """True iff take_along_axis lowers & is correct at the exact kernel shapes."""
    def kern(s_ref, i_ref, o_ref):
        o_ref[...] = jnp.take_along_axis(s_ref[...], i_ref[...], axis=axis)
    try:
        rng = np.random.RandomState(0)
        s = rng.randn(*src_shape).astype(np.float32)
        i = rng.randint(0, num_valid, size=idx_shape).astype(np.int32)
        out = pl.pallas_call(
            kern, out_shape=jax.ShapeDtypeStruct(idx_shape, jnp.float32),
        )(jnp.asarray(s), jnp.asarray(i))
        out = np.asarray(jax.block_until_ready(out))
        return bool(np.allclose(out, np.take_along_axis(s, i, axis=axis)))
    except Exception:
        return False


def _probe_buffered_one():
    """True iff pipeline_mode=pl.Buffered(1) is accepted and correct."""
    def kern(x_ref, o_ref):
        o_ref[...] = x_ref[...] + 1.0
    try:
        out = pl.pallas_call(
            kern, out_shape=jax.ShapeDtypeStruct((16, 128), jnp.float32),
            grid=(2,),
            in_specs=[pl.BlockSpec((8, 128), lambda i: (0, 0),
                                   pipeline_mode=pl.Buffered(1))],
            out_specs=pl.BlockSpec((8, 128), lambda i: (i, 0)),
        )(jnp.zeros((8, 128), jnp.float32))
        out = np.asarray(jax.block_until_ready(out))
        return bool(np.allclose(out, 1.0))
    except Exception:
        return False


# ----------------------------------------------------------------------------
# pure-JAX reference (for correctness check)
# ----------------------------------------------------------------------------
def reference_forward(params, hidden_states, attention_mask, relative_embedding,
                      position_indices, num_heads, eps):
    L, B, H = hidden_states.shape
    hd = H // num_heads
    scale = 1.0 / math.sqrt(3 * hd)

    def ln(x):
        m = jnp.mean(x, -1, keepdims=True)
        v = jnp.mean((x - m) ** 2, -1, keepdims=True)
        return (x - m) / jnp.sqrt(v + eps)

    hs = ln(hidden_states)
    qk = hs @ params["Wqk"] + params["bqk"]
    vg = hs @ params["Wvg"] + params["bvg"]
    query, key_ = jnp.split(qk, 2, axis=-1)
    value, gate = jnp.split(vg, 2, axis=-1)
    gate = jax.nn.gelu(gate, approximate=False)

    pos = relative_embedding @ params["Wqk"] + params["bqk"]
    pos = pos[position_indices[:L, :L]]
    query_pos, key_pos = jnp.split(pos, 2, axis=-1)
    query_pos = query_pos.reshape(L, L, num_heads, hd)
    key_pos = key_pos.reshape(L, L, num_heads, hd)

    q = query.reshape(L, B, num_heads, hd).transpose(1, 2, 0, 3)
    k = key_.reshape(L, B, num_heads, hd).transpose(1, 2, 0, 3)
    v = value.reshape(L, B, num_heads, hd).transpose(1, 2, 0, 3)

    scores = jnp.einsum("bhqd,bhkd->bhqk", q, k) * scale
    scores = scores + jnp.einsum("bhqd,qkhd->bhqk", q, key_pos * scale)
    scores = scores + jnp.einsum("bhkd,qkhd->bhqk", k * scale, query_pos)

    mask = attention_mask  # (B, 1, 1, L) bool
    scores = jnp.where(mask, -jnp.inf, scores)
    probs = jax.nn.softmax(scores, axis=-1)
    probs = jnp.where(mask, 0.0, probs)

    ctx = jnp.einsum("bhqk,bhkd->bhqd", probs, v)
    ctx = ctx.transpose(2, 0, 1, 3).reshape(L, B, H)
    ctx = ctx * gate
    ctx = ln(ctx)
    return ctx @ params["Wout"] + params["bout"]


# ----------------------------------------------------------------------------
if __name__ == "__main__":
    L, B = 16, 2
    H, NH = 64, 4
    bucket_size = 8
    max_pos = 64
    eps = 1e-7
    P = 2 * bucket_size - 1
    Wp = _round_up(P, 128)

    std = math.sqrt(2.0 / (5.0 * H))
    key = jax.random.PRNGKey(0)
    k1, k2, k3, k4, k5 = jax.random.split(key, 5)

    params = {
        "Wqk": jax.random.truncated_normal(k1, -2.0, 2.0, (H, 2 * H), jnp.float32) * std,
        "bqk": jnp.zeros((2 * H,), jnp.float32),
        "Wvg": jax.random.truncated_normal(k2, -2.0, 2.0, (H, 2 * H), jnp.float32) * std,
        "bvg": jnp.zeros((2 * H,), jnp.float32),
        "Wout": jax.random.truncated_normal(k3, -2.0, 2.0, (H, H), jnp.float32) * std,
        "bout": jnp.zeros((H,), jnp.float32),
    }

    hidden_states = jax.random.normal(k4, (L, B, H), jnp.float32)
    relative_embedding = jax.random.normal(k5, (P, H), jnp.float32) * 0.02

    # key-padding mask: batch 0 full length, batch 1 last 4 tokens padded
    lengths = jnp.array([L, L - 4])
    attention_mask = (jnp.arange(L)[None, :] >= lengths[:, None]).reshape(B, 1, 1, L)

    position_indices = jnp.asarray(build_position_indices(max_pos, bucket_size))

    # capability probes at the exact in-kernel shapes
    _BUFFERED_ONE_OK = _probe_buffered_one()
    gather_lanes_ok = _probe_gather((L, Wp), (L, L), 1, P)
    gather_sub_ok = _probe_gather((Wp, L), (L, L), 0, P)

    ref = jax.block_until_ready(reference_forward(
        params, hidden_states, attention_mask, relative_embedding,
        position_indices, NH, eps))

    # precise path: f32 operands, exact reciprocal -> tight check
    fwd = jax.jit(functools.partial(
        attention_forward, num_heads=NH, eps=eps,
        operand_dtype=jnp.float32, approx_recip=False,
        gather_lanes=gather_lanes_ok, gather_sublanes=gather_sub_ok))
    out = jax.block_until_ready(fwd(params, hidden_states, attention_mask,
                                    relative_embedding, position_indices))
    assert out.shape == (L, B, H)
    np.testing.assert_allclose(np.asarray(out), np.asarray(ref),
                               atol=1e-3, rtol=1e-3)

    # fast path: bf16 operand storage + approximate reciprocal -> loose check
    fwd_fast = jax.jit(functools.partial(
        attention_forward, num_heads=NH, eps=eps,
        operand_dtype=jnp.bfloat16, approx_recip=True,
        gather_lanes=gather_lanes_ok, gather_sublanes=gather_sub_ok))
    out_fast = jax.block_until_ready(fwd_fast(params, hidden_states, attention_mask,
                                              relative_embedding, position_indices))
    np.testing.assert_allclose(np.asarray(out_fast).astype(np.float32),
                               np.asarray(ref), atol=5e-2, rtol=5e-2)

    print("KERNEL_OK")
</pallas_src>

<mosaic_0001>
module attributes {stable_mosaic.version = 11 : i64} {
  func.func @kern(%arg0: i32, %arg1: memref<8x128xf32, #tpu.memory_space<vmem>>, %arg2: memref<8x128xf32, #tpu.memory_space<vmem>>) attributes {dimension_semantics = [#tpu.dimension_semantics<arbitrary>], iteration_bounds = array<i64: 2>, scalar_prefetch = 0 : i64, scratch_operands = 0 : i64, tpu.core_type = #tpu.core_type<tc>, window_params = [{pipeline_mode = #tpu.pipeline_mode<synchronous>, transform_indices = @transform_0, window_bounds = array<i64: 8, 128>}, {transform_indices = @transform_1, window_bounds = array<i64: 8, 128>}]} {
    %c0 = arith.constant 0 : index
    %c0_0 = arith.constant 0 : index
    %0 = vector.load %arg1[%c0, %c0_0] : memref<8x128xf32, #tpu.memory_space<vmem>>, vector<8x128xf32>
    %cst = arith.constant 1.000000e+00 : f32
    %1 = vector.broadcast %cst : f32 to vector<8x128xf32>
    %2 = arith.addf %0, %1 : vector<8x128xf32>
    %c0_1 = arith.constant 0 : index
    %c0_2 = arith.constant 0 : index
    %3 = vector.load %arg2[%c0_1, %c0_2] : memref<8x128xf32, #tpu.memory_space<vmem>>, vector<8x128xf32>
    tpu.vector_store %arg2[%c0_1, %c0_2], %2 {strides = array<i32>} : memref<8x128xf32, #tpu.memory_space<vmem>>, vector<8x128xf32>,
    return
  }
  func.func @transform_0(%arg0: i32) -> (i32, i32) {
    %c0_i32 = arith.constant 0 : i32
    %c0_i32_0 = arith.constant 0 : i32
    %c0_i32_1 = arith.constant 0 : i32
    return %c0_i32, %c0_i32_0 : i32, i32
  }
  func.func @transform_1(%arg0: i32) -> (i32, i32) {
    %c0_i32 = arith.constant 0 : i32
    %c0_i32_0 = arith.constant 0 : i32
    return %arg0, %c0_i32 : i32, i32
  }
}

module attributes {stable_mosaic.version = 11 : i64} {
  func.func @kern(%arg0: memref<16x128xf32, #tpu.memory_space<vmem>>, %arg1: memref<16x16xi32, #tpu.memory_space<vmem>>, %arg2: memref<16x16xf32, #tpu.memory_space<vmem>>) attributes {dimension_semantics = [], scalar_prefetch = 0 : i64, scratch_operands = 0 : i64, tpu.core_type = #tpu.core_type<tc>} {
    %c0 = arith.constant 0 : index
    %c0_0 = arith.constant 0 : index
    %0 = vector.load %arg0[%c0, %c0_0] : memref<16x128xf32, #tpu.memory_space<vmem>>, vector<16x128xf32>
    %c0_1 = arith.constant 0 : index
    %c0_2 = arith.constant 0 : index
    %1 = vector.load %arg1[%c0_1, %c0_2] : memref<16x16xi32, #tpu.memory_space<vmem>>, vector<16x16xi32>
    %c0_i32 = arith.constant 0 : i32
    %2 = vector.broadcast %c0_i32 : i32 to vector<16x16xi32>
    %3 = arith.cmpi slt, %1, %2 : vector<16x16xi32>
    %c128_i32 = arith.constant 128 : i32
    %4 = vector.broadcast %c128_i32 : i32 to vector<16x16xi32>
    %5 = arith.addi %1, %4 : vector<16x16xi32>
    %6 = arith.select %3, %5, %1 : vector<16x16xi1>, vector<16x16xi32>
    %7 = vector.shape_cast %6 : vector<16x16xi32> to vector<16x16x1xi32>
    %8 = vector.shape_cast %7 : vector<16x16x1xi32> to vector<16x16xi32>
    %9 = tpu.dynamic_gather %0[%8] in [1] : vector<16x128xf32>, vector<16x16xi32> -> vector<16x16xf32>
    %c0_3 = arith.constant 0 : index
    %c0_4 = arith.constant 0 : index
    %10 = vector.load %arg2[%c0_3, %c0_4] : memref<16x16xf32, #tpu.memory_space<vmem>>, vector<16x16xf32>
    tpu.vector_store %arg2[%c0_3, %c0_4], %9 {strides = array<i32>} : memref<16x16xf32, #tpu.memory_space<vmem>>, vector<16x16xf32>,
    return
  }
}

module attributes {stable_mosaic.version = 11 : i64} {
  func.func @kern(%arg0: memref<128x16xf32, #tpu.memory_space<vmem>>, %arg1: memref<16x16xi32, #tpu.memory_space<vmem>>, %arg2: memref<16x16xf32, #tpu.memory_space<vmem>>) attributes {dimension_semantics = [], scalar_prefetch = 0 : i64, scratch_operands = 0 : i64, tpu.core_type = #tpu.core_type<tc>} {
    %c0 = arith.constant 0 : index
    %c0_0 = arith.constant 0 : index
    %0 = vector.load %arg0[%c0, %c0_0] : memref<128x16xf32, #tpu.memory_space<vmem>>, vector<128x16xf32>
    %c0_1 = arith.constant 0 : index
    %c0_2 = arith.constant 0 : index
    %1 = vector.load %arg1[%c0_1, %c0_2] : memref<16x16xi32, #tpu.memory_space<vmem>>, vector<16x16xi32>
    %c0_i32 = arith.constant 0 : i32
    %2 = vector.broadcast %c0_i32 : i32 to vector<16x16xi32>
    %3 = arith.cmpi slt, %1, %2 : vector<16x16xi32>
    %c128_i32 = arith.constant 128 : i32
    %4 = vector.broadcast %c128_i32 : i32 to vector<16x16xi32>
    %5 = arith.addi %1, %4 : vector<16x16xi32>
    %6 = arith.select %3, %5, %1 : vector<16x16xi1>, vector<16x16xi32>
    %7 = vector.shape_cast %6 : vector<16x16xi32> to vector<16x16x1xi32>
    %8 = vector.shape_cast %7 : vector<16x16x1xi32> to vector<16x16xi32>
    %9 = tpu.dynamic_gather %0[%8] in [0] : vector<128x16xf32>, vector<16x16xi32> -> vector<16x16xf32>
    %c0_3 = arith.constant 0 : index
    %c0_4 = arith.constant 0 : index
    %10 = vector.load %arg2[%c0_3, %c0_4] : memref<16x16xf32, #tpu.memory_space<vmem>>, vector<16x16xf32>
    tpu.vector_store %arg2[%c0_3, %c0_4], %9 {strides = array<i32>} : memref<16x16xf32, #tpu.memory_space<vmem>>, vector<16x16xf32>,
    return
  }
}

module attributes {stable_mosaic.version = 11 : i64} {
  func.func @_ln_qkvg_kernel(%arg0: i32, %arg1: memref<32x64xf32, #tpu.memory_space<vmem>>, %arg2: memref<64x128xf32, #tpu.memory_space<vmem>>, %arg3: memref<1x128xf32, #tpu.memory_space<vmem>>, %arg4: memref<64x128xf32, #tpu.memory_space<vmem>>, %arg5: memref<1x128xf32, #tpu.memory_space<vmem>>, %arg6: memref<32x64xf32, #tpu.memory_space<vmem>>, %arg7: memref<32x64xf32, #tpu.memory_space<vmem>>, %arg8: memref<32x64xf32, #tpu.memory_space<vmem>>, %arg9: memref<32x64xf32, #tpu.memory_space<vmem>>) attributes {dimension_semantics = [#tpu.dimension_semantics<parallel>], iteration_bounds = array<i64: 1>, scalar_prefetch = 0 : i64, scratch_operands = 0 : i64, tpu.core_type = #tpu.core_type<tc>, window_params = [{transform_indices = @transform_0, window_bounds = array<i64: 32, 64>}, {pipeline_mode = #tpu.pipeline_mode<synchronous>, transform_indices = @transform_1, window_bounds = array<i64: 64, 128>}, {pipeline_mode = #tpu.pipeline_mode<synchronous>, transform_indices = @transform_2, window_bounds = array<i64: 1, 128>}, {pipeline_mode = #tpu.pipeline_mode<synchronous>, transform_indices = @transform_3, window_bounds = array<i64: 64, 128>}, {pipeline_mode = #tpu.pipeline_mode<synchronous>, transform_indices = @transform_4, window_bounds = array<i64: 1, 128>}, {transform_indices = @transform_5, window_bounds = array<i64: 32, 64>}, {transform_indices = @transform_6, window_bounds = array<i64: 32, 64>}, {transform_indices = @transform_7, window_bounds = array<i64: 32, 64>}, {transform_indices = @transform_8, window_bounds = array<i64: 32, 64>}]} {
    %c0 = arith.constant 0 : index
    %c0_0 = arith.constant 0 : index
    %0 = vector.load %arg1[%c0, %c0_0] : memref<32x64xf32, #tpu.memory_space<vmem>>, vector<32x64xf32>
    %cst = arith.constant dense<0.000000e+00> : vector<32xf32>
    %1 = vector.multi_reduction <add>, %0, %cst [1] : vector<32x64xf32> to vector<32xf32>
    %2 = vector.shape_cast %1 : vector<32xf32> to vector<32x1xf32>
    %cst_1 = arith.constant 6.400000e+01 : f32
    %3 = vector.broadcast %cst_1 : f32 to vector<32x1xf32>
    %4 = arith.divf %2, %3 : vector<32x1xf32>
    %5 = vector.broadcast %4 : vector<32x1xf32> to vector<32x64xf32>
    %6 = arith.subf %0, %5 : vector<32x64xf32>
    %7 = arith.mulf %6, %6 : vector<32x64xf32>
    %cst_2 = arith.constant dense<0.000000e+00> : vector<32xf32>
    %8 = vector.multi_reduction <add>, %7, %cst_2 [1] : vector<32x64xf32> to vector<32xf32>
    %9 = vector.shape_cast %8 : vector<32xf32> to vector<32x1xf32>
    %cst_3 = arith.constant 6.400000e+01 : f32
    %10 = vector.broadcast %cst_3 : f32 to vector<32x1xf32>
    %11 = arith.divf %9, %10 : vector<32x1xf32>
    %cst_4 = arith.constant 1.000000e-07 : f32
    %12 = vector.broadcast %cst_4 : f32 to vector<32x1xf32>
    %13 = arith.addf %11, %12 : vector<32x1xf32>
    %14 = math.rsqrt %13 : vector<32x1xf32>
    %15 = vector.broadcast %14 : vector<32x1xf32> to vector<32x64xf32>
    %16 = arith.mulf %6, %15 : vector<32x64xf32>
    %c0_5 = arith.constant 0 : index
    %c0_6 = arith.constant 0 : index
    %17 = vector.load %arg2[%c0_5, %c0_6] : memref<64x128xf32, #tpu.memory_space<vmem>>, vector<64x128xf32>
    %cst_7 = arith.constant dense<0.000000e+00> : vector<32x128xf32>
    %18 = tpu.matmul %16, %17, %cst_7 {dimension_numbers = #tpu.dot_dimension_numbers<[1], [0], [0], [1], [0, 0, 1, 1], [], []>} : vector<32x64xf32>, vector<64x128xf32>, vector<32x128xf32> -> vector<32x128xf32>
    %c0_8 = arith.constant 0 : index
    %c0_9 = arith.constant 0 : index
    %19 = vector.load %arg3[%c0_8, %c0_9] : memref<1x128xf32, #tpu.memory_space<vmem>>, vector<1x128xf32>
    %20 = vector.broadcast %19 : vector<1x128xf32> to vector<32x128xf32>
    %21 = arith.addf %18, %20 : vector<32x128xf32>
    %c0_10 = arith.constant 0 : index
    %c0_11 = arith.constant 0 : index
    %22 = vector.load %arg4[%c0_10, %c0_11] : memref<64x128xf32, #tpu.memory_space<vmem>>, vector<64x128xf32>
    %cst_12 = arith.constant dense<0.000000e+00> : vector<32x128xf32>
    %23 = tpu.matmul %16, %22, %cst_12 {dimension_numbers = #tpu.dot_dimension_numbers<[1], [0], [0], [1], [0, 0, 1, 1], [], []>} : vector<32x64xf32>, vector<64x128xf32>, vector<32x128xf32> -> vector<32x128xf32>
    %c0_13 = arith.constant 0 : index
    %c0_14 = arith.constant 0 : index
    %24 = vector.load %arg5[%c0_13, %c0_14] : memref<1x128xf32, #tpu.memory_space<vmem>>, vector<1x128xf32>
    %25 = vector.broadcast %24 : vector<1x128xf32> to vector<32x128xf32>
    %26 = arith.addf %23, %25 : vector<32x128xf32>
    %27 = vector.extract_strided_slice %21 {offsets = [0, 0], sizes = [32, 64], strides = [1, 1]} : vector<32x128xf32> to vector<32x64xf32>
    %c0_15 = arith.constant 0 : index
    %c0_16 = arith.constant 0 : index
    %28 = vector.load %arg6[%c0_15, %c0_16] : memref<32x64xf32, #tpu.memory_space<vmem>>, vector<32x64xf32>
    tpu.vector_store %arg6[%c0_15, %c0_16], %27 {strides = array<i32>} : memref<32x64xf32, #tpu.memory_space<vmem>>, vector<32x64xf32>,
    %29 = vector.extract_strided_slice %21 {offsets = [0, 64], sizes = [32, 64], strides = [1, 1]} : vector<32x128xf32> to vector<32x64xf32>
    %c0_17 = arith.constant 0 : index
    %c0_18 = arith.constant 0 : index
    %30 = vector.load %arg7[%c0_17, %c0_18] : memref<32x64xf32, #tpu.memory_space<vmem>>, vector<32x64xf32>
    tpu.vector_store %arg7[%c0_17, %c0_18], %29 {strides = array<i32>} : memref<32x64xf32, #tpu.memory_space<vmem>>, vector<32x64xf32>,
    %31 = vector.extract_strided_slice %26 {offsets = [0, 0], sizes = [32, 64], strides = [1, 1]} : vector<32x128xf32> to vector<32x64xf32>
    %c0_19 = arith.constant 0 : index
    %c0_20 = arith.constant 0 : index
    %32 = vector.load %arg8[%c0_19, %c0_20] : memref<32x64xf32, #tpu.memory_space<vmem>>, vector<32x64xf32>
    tpu.vector_store %arg8[%c0_19, %c0_20], %31 {strides = array<i32>} : memref<32x64xf32, #tpu.memory_space<vmem>>, vector<32x64xf32>,
    %33 = vector.extract_strided_slice %26 {offsets = [0, 64], sizes = [32, 64], strides = [1, 1]} : vector<32x128xf32> to vector<32x64xf32>
    %c0_21 = arith.constant 0 : index
    %c0_22 = arith.constant 0 : index
    %34 = vector.load %arg9[%c0_21, %c0_22] : memref<32x64xf32, #tpu.memory_space<vmem>>, vector<32x64xf32>
    tpu.vector_store %arg9[%c0_21, %c0_22], %33 {strides = array<i32>} : memref<32x64xf32, #tpu.memory_space<vmem>>, vector<32x64xf32>,
    return
  }
  func.func @transform_0(%arg0: i32) -> (i32, i32) {
    %c0_i32 = arith.constant 0 : i32
    %c0_i32_0 = arith.constant 0 : i32
    return %arg0, %c0_i32 : i32, i32
  }
  func.func @transform_1(%arg0: i32) -> (i32, i32) {
    %c0_i32 = arith.constant 0 : i32
    %c0_i32_0 = arith.constant 0 : i32
    %c0_i32_1 = arith.constant 0 : i32
    return %c0_i32, %c0_i32_0 : i32, i32
  }
  func.func @transform_2(%arg0: i32) -> (i32, i32) {
    %c0_i32 = arith.constant 0 : i32
    %c0_i32_0 = arith.constant 0 : i32
    %c0_i32_1 = arith.constant 0 : i32
    return %c0_i32, %c0_i32_0 : i32, i32
  }
  func.func @transform_3(%arg0: i32) -> (i32, i32) {
    %c0_i32 = arith.constant 0 : i32
    %c0_i32_0 = arith.constant 0 : i32
    %c0_i32_1 = arith.constant 0 : i32
    return %c0_i32, %c0_i32_0 : i32, i32
  }
  func.func @transform_4(%arg0: i32) -> (i32, i32) {
    %c0_i32 = arith.constant 0 : i32
    %c0_i32_0 = arith.constant 0 : i32
    %c0_i32_1 = arith.constant 0 : i32
    return %c0_i32, %c0_i32_0 : i32, i32
  }
  func.func @transform_5(%arg0: i32) -> (i32, i32) {
    %c0_i32 = arith.constant 0 : i32
    %c0_i32_0 = arith.constant 0 : i32
    return %arg0, %c0_i32 : i32, i32
  }
  func.func @transform_6(%arg0: i32) -> (i32, i32) {
    %c0_i32 = arith.constant 0 : i32
    %c0_i32_0 = arith.constant 0 : i32
    return %arg0, %c0_i32 : i32, i32
  }
  func.func @transform_7(%arg0: i32) -> (i32, i32) {
    %c0_i32 = arith.constant 0 : i32
    %c0_i32_0 = arith.constant 0 : i32
    return %arg0, %c0_i32 : i32, i32
  }
  func.func @transform_8(%arg0: i32) -> (i32, i32) {
    %c0_i32 = arith.constant 0 : i32
    %c0_i32_0 = arith.constant 0 : i32
    return %arg0, %c0_i32 : i32, i32
  }
}

module attributes {stable_mosaic.version = 11 : i64} {
  func.func @_ln_linear_kernel(%arg0: i32, %arg1: memref<32x64xf32, #tpu.memory_space<vmem>>, %arg2: memref<64x64xf32, #tpu.memory_space<vmem>>, %arg3: memref<1x64xf32, #tpu.memory_space<vmem>>, %arg4: memref<32x64xf32, #tpu.memory_space<vmem>>) attributes {dimension_semantics = [#tpu.dimension_semantics<parallel>], iteration_bounds = array<i64: 1>, scalar_prefetch = 0 : i64, scratch_operands = 0 : i64, tpu.core_type = #tpu.core_type<tc>, window_params = [{transform_indices = @transform_0, window_bounds = array<i64: 32, 64>}, {pipeline_mode = #tpu.pipeline_mode<synchronous>, transform_indices = @transform_1, window_bounds = array<i64: 64, 64>}, {pipeline_mode = #tpu.pipeline_mode<synchronous>, transform_indices = @transform_2, window_bounds = array<i64: 1, 64>}, {transform_indices = @transform_3, window_bounds = array<i64: 32, 64>}]} {
    %c0 = arith.constant 0 : index
    %c0_0 = arith.constant 0 : index
    %0 = vector.load %arg1[%c0, %c0_0] : memref<32x64xf32, #tpu.memory_space<vmem>>, vector<32x64xf32>
    %cst = arith.constant dense<0.000000e+00> : vector<32xf32>
    %1 = vector.multi_reduction <add>, %0, %cst [1] : vector<32x64xf32> to vector<32xf32>
    %2 = vector.shape_cast %1 : vector<32xf32> to vector<32x1xf32>
    %cst_1 = arith.constant 6.400000e+01 : f32
    %3 = vector.broadcast %cst_1 : f32 to vector<32x1xf32>
    %4 = arith.divf %2, %3 : vector<32x1xf32>
    %5 = vector.broadcast %4 : vector<32x1xf32> to vector<32x64xf32>
    %6 = arith.subf %0, %5 : vector<32x64xf32>
    %7 = arith.mulf %6, %6 : vector<32x64xf32>
    %cst_2 = arith.constant dense<0.000000e+00> : vector<32xf32>
    %8 = vector.multi_reduction <add>, %7, %cst_2 [1] : vector<32x64xf32> to vector<32xf32>
    %9 = vector.shape_cast %8 : vector<32xf32> to vector<32x1xf32>
    %cst_3 = arith.constant 6.400000e+01 : f32
    %10 = vector.broadcast %cst_3 : f32 to vector<32x1xf32>
    %11 = arith.divf %9, %10 : vector<32x1xf32>
    %cst_4 = arith.constant 1.000000e-07 : f32
    %12 = vector.broadcast %cst_4 : f32 to vector<32x1xf32>
    %13 = arith.addf %11, %12 : vector<32x1xf32>
    %14 = math.rsqrt %13 : vector<32x1xf32>
    %15 = vector.broadcast %14 : vector<32x1xf32> to vector<32x64xf32>
    %16 = arith.mulf %6, %15 : vector<32x64xf32>
    %c0_5 = arith.constant 0 : index
    %c0_6 = arith.constant 0 : index
    %17 = vector.load %arg2[%c0_5, %c0_6] : memref<64x64xf32, #tpu.memory_space<vmem>>, vector<64x64xf32>
    %cst_7 = arith.constant dense<0.000000e+00> : vector<32x64xf32>
    %18 = tpu.matmul %16, %17, %cst_7 {dimension_numbers = #tpu.dot_dimension_numbers<[1], [0], [0], [1], [0, 0, 1, 1], [], []>} : vector<32x64xf32>, vector<64x64xf32>, vector<32x64xf32> -> vector<32x64xf32>
    %c0_8 = arith.constant 0 : index
    %c0_9 = arith.constant 0 : index
    %19 = vector.load %arg3[%c0_8, %c0_9] : memref<1x64xf32, #tpu.memory_space<vmem>>, vector<1x64xf32>
    %20 = vector.broadcast %19 : vector<1x64xf32> to vector<32x64xf32>
    %21 = arith.addf %18, %20 : vector<32x64xf32>
    %c0_10 = arith.constant 0 : index
    %c0_11 = arith.constant 0 : index
    %22 = vector.load %arg4[%c0_10, %c0_11] : memref<32x64xf32, #tpu.memory_space<vmem>>, vector<32x64xf32>
    tpu.vector_store %arg4[%c0_10, %c0_11], %21 {strides = array<i32>} : memref<32x64xf32, #tpu.memory_space<vmem>>, vector<32x64xf32>,
    return
  }
  func.func @transform_0(%arg0: i32) -> (i32, i32) {
    %c0_i32 = arith.constant 0 : i32
    %c0_i32_0 = arith.constant 0 : i32
    return %arg0, %c0_i32 : i32, i32
  }
  func.func @transform_1(%arg0: i32) -> (i32, i32) {
    %c0_i32 = arith.constant 0 : i32
    %c0_i32_0 = arith.constant 0 : i32
    %c0_i32_1 = arith.constant 0 : i32
    return %c0_i32, %c0_i32_0 : i32, i32
  }
  func.func @transform_2(%arg0: i32) -> (i32, i32) {
    %c0_i32 = arith.constant 0 : i32
    %c0_i32_0 = arith.constant 0 : i32
    %c0_i32_1 = arith.constant 0 : i32
    return %c0_i32, %c0_i32_0 : i32, i32
  }
  func.func @transform_3(%arg0: i32) -> (i32, i32) {
    %c0_i32 = arith.constant 0 : i32
    %c0_i32_0 = arith.constant 0 : i32
    return %arg0, %c0_i32 : i32, i32
  }
}

module attributes {stable_mosaic.version = 11 : i64} {
  func.func @_attn_kernel(%arg0: i32, %arg1: i32, %arg2: memref<1x16x64xf32, #tpu.memory_space<vmem>>, %arg3: memref<1x16x64xf32, #tpu.memory_space<vmem>>, %arg4: memref<1x16x64xf32, #tpu.memory_space<vmem>>, %arg5: memref<1x16x64xf32, #tpu.memory_space<vmem>>, %arg6: memref<128x64xf32, #tpu.memory_space<vmem>>, %arg7: memref<128x64xf32, #tpu.memory_space<vmem>>, %arg8: memref<16x16xi16, #tpu.memory_space<vmem>>, %arg9: memref<1x1x16xi8, #tpu.memory_space<vmem>>, %arg10: memref<1x16x64xf32, #tpu.memory_space<vmem>>) attributes {dimension_semantics = [#tpu.dimension_semantics<parallel>, #tpu.dimension_semantics<parallel>], iteration_bounds = array<i64: 2, 1>, scalar_prefetch = 0 : i64, scratch_operands = 0 : i64, tpu.core_type = #tpu.core_type<tc>, window_params = [{transform_indices = @transform_0, window_bounds = array<i64: 1, 16, 64>}, {transform_indices = @transform_1, window_bounds = array<i64: 1, 16, 64>}, {transform_indices = @transform_2, window_bounds = array<i64: 1, 16, 64>}, {transform_indices = @transform_3, window_bounds = array<i64: 1, 16, 64>}, {transform_indices = @transform_4, window_bounds = array<i64: 128, 64>}, {transform_indices = @transform_5, window_bounds = array<i64: 128, 64>}, {pipeline_mode = #tpu.pipeline_mode<synchronous>, transform_indices = @transform_6, window_bounds = array<i64: 16, 16>}, {transform_indices = @transform_7, window_bounds = array<i64: 1, 1, 16>}, {transform_indices = @transform_8, window_bounds = array<i64: 1, 16, 64>}]} {
    %c0 = arith.constant 0 : index
    %c0_0 = arith.constant 0 : index
    %0 = vector.load %arg8[%c0, %c0_0] : memref<16x16xi16, #tpu.memory_space<vmem>>, vector<16x16xi16>
    %1 = arith.extsi %0 : vector<16x16xi16> to vector<16x16xi32>
    %c0_1 = arith.constant 0 : index
    %c0_2 = arith.constant 0 : index
    %c0_3 = arith.constant 0 : index
    %2 = vector.load %arg9[%c0_1, %c0_2, %c0_3] : memref<1x1x16xi8, #tpu.memory_space<vmem>>, vector<1x1x16xi8>
    %3 = vector.shape_cast %2 : vector<1x1x16xi8> to vector<1x16xi8>
    %c0_i8 = arith.constant 0 : i8
    %4 = vector.broadcast %c0_i8 : i8 to vector<1x16xi8>
    %5 = arith.cmpi ne, %3, %4 : vector<1x16xi8>
    %c0_4 = arith.constant 0 : index
    %c0_5 = arith.constant 0 : index
    %c0_6 = arith.constant 0 : index
    %6 = vector.load %arg2[%c0_4, %c0_5, %c0_6] : memref<1x16x64xf32, #tpu.memory_space<vmem>>, vector<1x16x64xf32>
    %7 = vector.shape_cast %6 : vector<1x16x64xf32> to vector<16x64xf32>
    %c0_7 = arith.constant 0 : index
    %c0_8 = arith.constant 0 : index
    %c0_9 = arith.constant 0 : index
    %8 = vector.load %arg3[%c0_7, %c0_8, %c0_9] : memref<1x16x64xf32, #tpu.memory_space<vmem>>, vector<1x16x64xf32>
    %9 = vector.shape_cast %8 : vector<1x16x64xf32> to vector<16x64xf32>
    %c0_10 = arith.constant 0 : index
    %c0_11 = arith.constant 0 : index
    %c0_12 = arith.constant 0 : index
    %10 = vector.load %arg4[%c0_10, %c0_11, %c0_12] : memref<1x16x64xf32, #tpu.memory_space<vmem>>, vector<1x16x64xf32>
    %11 = vector.shape_cast %10 : vector<1x16x64xf32> to vector<16x64xf32>
    %c0_13 = arith.constant 0 : index
    %c0_14 = arith.constant 0 : index
    %12 = vector.load %arg6[%c0_13, %c0_14] : memref<128x64xf32, #tpu.memory_space<vmem>>, vector<128x64xf32>
    %c0_15 = arith.constant 0 : index
    %c0_16 = arith.constant 0 : index
    %13 = vector.load %arg7[%c0_15, %c0_16] : memref<128x64xf32, #tpu.memory_space<vmem>>, vector<128x64xf32>
    %14 = vector.extract_strided_slice %7 {offsets = [0, 0], sizes = [16, 16], strides = [1, 1]} : vector<16x64xf32> to vector<16x16xf32>
    %15 = vector.extract_strided_slice %9 {offsets = [0, 0], sizes = [16, 16], strides = [1, 1]} : vector<16x64xf32> to vector<16x16xf32>
    %16 = vector.extract_strided_slice %11 {offsets = [0, 0], sizes = [16, 16], strides = [1, 1]} : vector<16x64xf32> to vector<16x16xf32>
    %17 = vector.extract_strided_slice %12 {offsets = [0, 0], sizes = [128, 16], strides = [1, 1]} : vector<128x64xf32> to vector<128x16xf32>
    %18 = vector.extract_strided_slice %13 {offsets = [0, 0], sizes = [128, 16], strides = [1, 1]} : vector<128x64xf32> to vector<128x16xf32>
    %cst = arith.constant dense<0.000000e+00> : vector<16x16xf32>
    %19 = tpu.matmul %14, %15, %cst {dimension_numbers = #tpu.dot_dimension_numbers<[1], [1], [0], [0], [0, 0, 1, 0], [], []>} : vector<16x16xf32>, vector<16x16xf32>, vector<16x16xf32> -> vector<16x16xf32>
    %cst_17 = arith.constant dense<0.000000e+00> : vector<16x128xf32>
    %20 = tpu.matmul %14, %17, %cst_17 {dimension_numbers = #tpu.dot_dimension_numbers<[1], [1], [0], [0], [0, 0, 1, 0], [], []>} : vector<16x16xf32>, vector<128x16xf32>, vector<16x128xf32> -> vector<16x128xf32>
    %cst_18 = arith.constant dense<0.000000e+00> : vector<128x16xf32>
    %21 = tpu.matmul %18, %15, %cst_18 {dimension_numbers = #tpu.dot_dimension_numbers<[1], [1], [0], [0], [0, 0, 1, 0], [], []>} : vector<128x16xf32>, vector<16x16xf32>, vector<128x16xf32> -> vector<128x16xf32>
    %cst_19 = arith.constant 0.000000e+00 : f32
    %22 = vector.broadcast %cst_19 : f32 to vector<16x16xf32>
    %c0_i32 = arith.constant 0 : i32
    %23 = vector.broadcast %c0_i32 : i32 to vector<16x16xi32>
    %24 = arith.cmpi eq, %1, %23 : vector<16x16xi32>
    %25 = vector.extract_strided_slice %20 {offsets = [0, 0], sizes = [16, 1], strides = [1, 1]} : vector<16x128xf32> to vector<16x1xf32>
    %cst_20 = arith.constant 0.000000e+00 : f32
    %26 = vector.shape_cast %25 : vector<16x1xf32> to vector<16x1xf32>
    %27 = vector.broadcast %26 : vector<16x1xf32> to vector<16x16xf32>
    %28 = vector.broadcast %cst_20 : f32 to vector<16x16xf32>
    %29 = arith.select %24, %27, %28 : vector<16x16xi1>, vector<16x16xf32>
    %30 = arith.addf %22, %29 : vector<16x16xf32>
    %c1_i32 = arith.constant 1 : i32
    %31 = vector.broadcast %c1_i32 : i32 to vector<16x16xi32>
    %32 = arith.cmpi eq, %1, %31 : vector<16x16xi32>
    %33 = vector.extract_strided_slice %20 {offsets = [0, 1], sizes = [16, 1], strides = [1, 1]} : vector<16x128xf32> to vector<16x1xf32>
    %cst_21 = arith.constant 0.000000e+00 : f32
    %34 = vector.shape_cast %33 : vector<16x1xf32> to vector<16x1xf32>
    %35 = vector.broadcast %34 : vector<16x1xf32> to vector<16x16xf32>
    %36 = vector.broadcast %cst_21 : f32 to vector<16x16xf32>
    %37 = arith.select %32, %35, %36 : vector<16x16xi1>, vector<16x16xf32>
    %38 = arith.addf %30, %37 : vector<16x16xf32>
    %c2_i32 = arith.constant 2 : i32
    %39 = vector.broadcast %c2_i32 : i32 to vector<16x16xi32>
    %40 = arith.cmpi eq, %1, %39 : vector<16x16xi32>
    %41 = vector.extract_strided_slice %20 {offsets = [0, 2], sizes = [16, 1], strides = [1, 1]} : vector<16x128xf32> to vector<16x1xf32>
    %cst_22 = arith.constant 0.000000e+00 : f32
    %42 = vector.shape_cast %41 : vector<16x1xf32> to vector<16x1xf32>
    %43 = vector.broadcast %42 : vector<16x1xf32> to vector<16x16xf32>
    %44 = vector.broadcast %cst_22 : f32 to vector<16x16xf32>
    %45 = arith.select %40, %43, %44 : vector<16x16xi1>, vector<16x16xf32>
    %46 = arith.addf %38, %45 : vector<16x16xf32>
    %c3_i32 = arith.constant 3 : i32
    %47 = vector.broadcast %c3_i32 : i32 to vector<16x16xi32>
    %48 = arith.cmpi eq, %1, %47 : vector<16x16xi32>
    %49 = vector.extract_strided_slice %20 {offsets = [0, 3], sizes = [16, 1], strides = [1, 1]} : vector<16x128xf32> to vector<16x1xf32>
    %cst_23 = arith.constant 0.000000e+00 : f32
    %50 = vector.shape_cast %49 : vector<16x1xf32> to vector<16x1xf32>
    %51 = vector.broadcast %50 : vector<16x1xf32> to vector<16x16xf32>
    %52 = vector.broadcast %cst_23 : f32 to vector<16x16xf32>
    %53 = arith.select %48, %51, %52 : vector<16x16xi1>, vector<16x16xf32>
    %54 = arith.addf %46, %53 : vector<16x16xf32>
    %c4_i32 = arith.constant 4 : i32
    %55 = vector.broadcast %c4_i32 : i32 to vector<16x16xi32>
    %56 = arith.cmpi eq, %1, %55 : vector<16x16xi32>
    %57 = vector.extract_strided_slice %20 {offsets = [0, 4], sizes = [16, 1], strides = [1, 1]} : vector<16x128xf32> to vector<16x1xf32>
    %cst_24 = arith.constant 0.000000e+00 : f32
    %58 = vector.shape_cast %57 : vector<16x1xf32> to vector<16x1xf32>
    %59 = vector.broadcast %58 : vector<16x1xf32> to vector<16x16xf32>
    %60 = vector.broadcast %cst_24 : f32 to vector<16x16xf32>
    %61 = arith.select %56, %59, %60 : vector<16x16xi1>, vector<16x16xf32>
    %62 = arith.addf %54, %61 : vector<16x16xf32>
    %c5_i32 = arith.constant 5 : i32
    %63 = vector.broadcast %c5_i32 : i32 to vector<16x16xi32>
    %64 = arith.cmpi eq, %1, %63 : vector<16x16xi32>
    %65 = vector.extract_strided_slice %20 {offsets = [0, 5], sizes = [16, 1], strides = [1, 1]} : vector<16x128xf32> to vector<16x1xf32>
    %cst_25 = arith.constant 0.000000e+00 : f32
    %66 = vector.shape_cast %65 : vector<16x1xf32> to vector<16x1xf32>
    %67 = vector.broadcast %66 : vector<16x1xf32> to vector<16x16xf32>
    %68 = vector.broadcast %cst_25 : f32 to vector<16x16xf32>
    %69 = arith.select %64, %67, %68 : vector<16x16xi1>, vector<16x16xf32>
    %70 = arith.addf %62, %69 : vector<16x16xf32>
    %c6_i32 = arith.constant 6 : i32
    %71 = vector.broadcast %c6_i32 : i32 to vector<16x16xi32>
    %72 = arith.cmpi eq, %1, %71 : vector<16x16xi32>
    %73 = vector.extract_strided_slice %20 {offsets = [0, 6], sizes = [16, 1], strides = [1, 1]} : vector<16x128xf32> to vector<16x1xf32>
    %cst_26 = arith.constant 0.000000e+00 : f32
    %74 = vector.shape_cast %73 : vector<16x1xf32> to vector<16x1xf32>
    %75 = vector.broadcast %74 : vector<16x1xf32> to vector<16x16xf32>
    %76 = vector.broadcast %cst_26 : f32 to vector<16x16xf32>
    %77 = arith.select %72, %75, %76 : vector<16x16xi1>, vector<16x16xf32>
    %78 = arith.addf %70, %77 : vector<16x16xf32>
    %c7_i32 = arith.constant 7 : i32
    %79 = vector.broadcast %c7_i32 : i32 to vector<16x16xi32>
    %80 = arith.cmpi eq, %1, %79 : vector<16x16xi32>
    %81 = vector.extract_strided_slice %20 {offsets = [0, 7], sizes = [16, 1], strides = [1, 1]} : vector<16x128xf32> to vector<16x1xf32>
    %cst_27 = arith.constant 0.000000e+00 : f32
    %82 = vector.shape_cast %81 : vector<16x1xf32> to vector<16x1xf32>
    %83 = vector.broadcast %82 : vector<16x1xf32> to vector<16x16xf32>
    %84 = vector.broadcast %cst_27 : f32 to vector<16x16xf32>
    %85 = arith.select %80, %83, %84 : vector<16x16xi1>, vector<16x16xf32>
    %86 = arith.addf %78, %85 : vector<16x16xf32>
    %c8_i32 = arith.constant 8 : i32
    %87 = vector.broadcast %c8_i32 : i32 to vector<16x16xi32>
    %88 = arith.cmpi eq, %1, %87 : vector<16x16xi32>
    %89 = vector.extract_strided_slice %20 {offsets = [0, 8], sizes = [16, 1], strides = [1, 1]} : vector<16x128xf32> to vector<16x1xf32>
    %cst_28 = arith.constant 0.000000e+00 : f32
    %90 = vector.shape_cast %89 : vector<16x1xf32> to vector<16x1xf32>
    %91 = vector.broadcast %90 : vector<16x1xf32> to vector<16x16xf32>
    %92 = vector.broadcast %cst_28 : f32 to vector<16x16xf32>
    %93 = arith.select %88, %91, %92 : vector<16x16xi1>, vector<16x16xf32>
    %94 = arith.addf %86, %93 : vector<16x16xf32>
    %c9_i32 = arith.constant 9 : i32
    %95 = vector.broadcast %c9_i32 : i32 to vector<16x16xi32>
    %96 = arith.cmpi eq, %1, %95 : vector<16x16xi32>
    %97 = vector.extract_strided_slice %20 {offsets = [0, 9], sizes = [16, 1], strides = [1, 1]} : vector<16x128xf32> to vector<16x1xf32>
    %cst_29 = arith.constant 0.000000e+00 : f32
    %98 = vector.shape_cast %97 : vector<16x1xf32> to vector<16x1xf32>
    %99 = vector.broadcast %98 : vector<16x1xf32> to vector<16x16xf32>
    %100 = vector.broadcast %cst_29 : f32 to vector<16x16xf32>
    %101 = arith.select %96, %99, %100 : vector<16x16xi1>, vector<16x16xf32>
    %102 = arith.addf %94, %101 : vector<16x16xf32>
    %c10_i32 = arith.constant 10 : i32
    %103 = vector.broadcast %c10_i32 : i32 to vector<16x16xi32>
    %104 = arith.cmpi eq, %1, %103 : vector<16x16xi32>
    %105 = vector.extract_strided_slice %20 {offsets = [0, 10], sizes = [16, 1], strides = [1, 1]} : vector<16x128xf32> to vector<16x1xf32>
    %cst_30 = arith.constant 0.000000e+00 : f32
    %106 = vector.shape_cast %105 : vector<16x1xf32> to vector<16x1xf32>
    %107 = vector.broadcast %106 : vector<16x1xf32> to vector<16x16xf32>
    %108 = vector.broadcast %cst_30 : f32 to vector<16x16xf32>
    %109 = arith.select %104, %107, %108 : vector<16x16xi1>, vector<16x16xf32>
    %110 = arith.addf %102, %109 : vector<16x16xf32>
    %c11_i32 = arith.constant 11 : i32
    %111 = vector.broadcast %c11_i32 : i32 to vector<16x16xi32>
    %112 = arith.cmpi eq, %1, %111 : vector<16x16xi32>
    %113 = vector.extract_strided_slice %20 {offsets = [0, 11], sizes = [16, 1], strides = [1, 1]} : vector<16x128xf32> to vector<16x1xf32>
    %cst_31 = arith.constant 0.000000e+00 : f32
    %114 = vector.shape_cast %113 : vector<16x1xf32> to vector<16x1xf32>
    %115 = vector.broadcast %114 : vector<16x1xf32> to vector<16x16xf32>
    %116 = vector.broadcast %cst_31 : f32 to vector<16x16xf32>
    %117 = arith.select %112, %115, %116 : vector<16x16xi1>, vector<16x16xf32>
    %118 = arith.addf %110, %117 : vector<16x16xf32>
    %c12_i32 = arith.constant 12 : i32
    %119 = vector.broadcast %c12_i32 : i32 to vector<16x16xi32>
    %120 = arith.cmpi eq, %1, %119 : vector<16x16xi32>
    %121 = vector.extract_strided_slice %20 {offsets = [0, 12], sizes = [16, 1], strides = [1, 1]} : vector<16x128xf32> to vector<16x1xf32>
    %cst_32 = arith.constant 0.000000e+00 : f32
    %122 = vector.shape_cast %121 : vector<16x1xf32> to vector<16x1xf32>
    %123 = vector.broadcast %122 : vector<16x1xf32> to vector<16x16xf32>
    %124 = vector.broadcast %cst_32 : f32 to vector<16x16xf32>
    %125 = arith.select %120, %123, %124 : vector<16x16xi1>, vector<16x16xf32>
    %126 = arith.addf %118, %125 : vector<16x16xf32>
    %c13_i32 = arith.constant 13 : i32
    %127 = vector.broadcast %c13_i32 : i32 to vector<16x16xi32>
    %128 = arith.cmpi eq, %1, %127 : vector<16x16xi32>
    %129 = vector.extract_strided_slice %20 {offsets = [0, 13], sizes = [16, 1], strides = [1, 1]} : vector<16x128xf32> to vector<16x1xf32>
    %cst_33 = arith.constant 0.000000e+00 : f32
    %130 = vector.shape_cast %129 : vector<16x1xf32> to vector<16x1xf32>
    %131 = vector.broadcast %130 : vector<16x1xf32> to vector<16x16xf32>
    %132 = vector.broadcast %cst_33 : f32 to vector<16x16xf32>
    %133 = arith.select %128, %131, %132 : vector<16x16xi1>, vector<16x16xf32>
    %134 = arith.addf %126, %133 : vector<16x16xf32>
    %c14_i32 = arith.constant 14 : i32
    %135 = vector.broadcast %c14_i32 : i32 to vector<16x16xi32>
    %136 = arith.cmpi eq, %1, %135 : vector<16x16xi32>
    %137 = vector.extract_strided_slice %20 {offsets = [0, 14], sizes = [16, 1], strides = [1, 1]} : vector<16x128xf32> to vector<16x1xf32>
    %cst_34 = arith.constant 0.000000e+00 : f32
    %138 = vector.shape_cast %137 : vector<16x1xf32> to vector<16x1xf32>
    %139 = vector.broadcast %138 : vector<16x1xf32> to vector<16x16xf32>
    %140 = vector.broadcast %cst_34 : f32 to vector<16x16xf32>
    %141 = arith.select %136, %139, %140 : vector<16x16xi1>, vector<16x16xf32>
    %142 = arith.addf %134, %141 : vector<16x16xf32>
    %143 = arith.addf %19, %142 : vector<16x16xf32>
    %cst_35 = arith.constant 0.000000e+00 : f32
    %144 = vector.broadcast %cst_35 : f32 to vector<16x16xf32>
    %c0_i32_36 = arith.constant 0 : i32
    %145 = vector.broadcast %c0_i32_36 : i32 to vector<16x16xi32>
    %146 = arith.cmpi eq, %1, %145 : vector<16x16xi32>
    %147 = vector.extract_strided_slice %21 {offsets = [0, 0], sizes = [1, 16], strides = [1, 1]} : vector<128x16xf32> to vector<1x16xf32>
    %cst_37 = arith.constant 0.000000e+00 : f32
    %148 = vector.shape_cast %147 : vector<1x16xf32> to vector<1x16xf32>
    %149 = vector.broadcast %148 : vector<1x16xf32> to vector<16x16xf32>
    %150 = vector.broadcast %cst_37 : f32 to vector<16x16xf32>
    %151 = arith.select %146, %149, %150 : vector<16x16xi1>, vector<16x16xf32>
    %152 = arith.addf %144, %151 : vector<16x16xf32>
    %c1_i32_38 = arith.constant 1 : i32
    %153 = vector.broadcast %c1_i32_38 : i32 to vector<16x16xi32>
    %154 = arith.cmpi eq, %1, %153 : vector<16x16xi32>
    %155 = vector.extract_strided_slice %21 {offsets = [1, 0], sizes = [1, 16], strides = [1, 1]} : vector<128x16xf32> to vector<1x16xf32>
    %cst_39 = arith.constant 0.000000e+00 : f32
    %156 = vector.shape_cast %155 : vector<1x16xf32> to vector<1x16xf32>
    %157 = vector.broadcast %156 : vector<1x16xf32> to vector<16x16xf32>
    %158 = vector.broadcast %cst_39 : f32 to vector<16x16xf32>
    %159 = arith.select %154, %157, %158 : vector<16x16xi1>, vector<16x16xf32>
    %160 = arith.addf %152, %159 : vector<16x16xf32>
    %c2_i32_40 = arith.constant 2 : i32
    %161 = vector.broadcast %c2_i32_40 : i32 to vector<16x16xi32>
    %162 = arith.cmpi eq, %1, %161 : vector<16x16xi32>
    %163 = vector.extract_strided_slice %21 {offsets = [2, 0], sizes = [1, 16], strides = [1, 1]} : vector<128x16xf32> to vector<1x16xf32>
    %cst_41 = arith.constant 0.000000e+00 : f32
    %164 = vector.shape_cast %163 : vector<1x16xf32> to vector<1x16xf32>
    %165 = vector.broadcast %164 : vector<1x16xf32> to vector<16x16xf32>
    %166 = vector.broadcast %cst_41 : f32 to vector<16x16xf32>
    %167 = arith.select %162, %165, %166 : vector<16x16xi1>, vector<16x16xf32>
    %168 = arith.addf %160, %167 : vector<16x16xf32>
    %c3_i32_42 = arith.constant 3 : i32
    %169 = vector.broadcast %c3_i32_42 : i32 to vector<16x16xi32>
    %170 = arith.cmpi eq, %1, %169 : vector<16x16xi32>
    %171 = vector.extract_strided_slice %21 {offsets = [3, 0], sizes = [1, 16], strides = [1, 1]} : vector<128x16xf32> to vector<1x16xf32>
    %cst_43 = arith.constant 0.000000e+00 : f32
    %172 = vector.shape_cast %171 : vector<1x16xf32> to vector<1x16xf32>
    %173 = vector.broadcast %172 : vector<1x16xf32> to vector<16x16xf32>
    %174 = vector.broadcast %cst_43 : f32 to vector<16x16xf32>
    %175 = arith.select %170, %173, %174 : vector<16x16xi1>, vector<16x16xf32>
    %176 = arith.addf %168, %175 : vector<16x16xf32>
    %c4_i32_44 = arith.constant 4 : i32
    %177 = vector.broadcast %c4_i32_44 : i32 to vector<16x16xi32>
    %178 = arith.cmpi eq, %1, %177 : vector<16x16xi32>
    %179 = vector.extract_strided_slice %21 {offsets = [4, 0], sizes = [1, 16], strides = [1, 1]} : vector<128x16xf32> to vector<1x16xf32>
    %cst_45 = arith.constant 0.000000e+00 : f32
    %180 = vector.shape_cast %179 : vector<1x16xf32> to vector<1x16xf32>
    %181 = vector.broadcast %180 : vector<1x16xf32> to vector<16x16xf32>
    %182 = vector.broadcast %cst_45 : f32 to vector<16x16xf32>
    %183 = arith.select %178, %181, %182 : vector<16x16xi1>, vector<16x16xf32>
    %184 = arith.addf %176, %183 : vector<16x16xf32>
    %c5_i32_46 = arith.constant 5 : i32
    %185 = vector.broadcast %c5_i32_46 : i32 to vector<16x16xi32>
    %186 = arith.cmpi eq, %1, %185 : vector<16x16xi32>
    %187 = vector.extract_strided_slice %21 {offsets = [5, 0], sizes = [1, 16], strides = [1, 1]} : vector<128x16xf32> to vector<1x16xf32>
    %cst_47 = arith.constant 0.000000e+00 : f32
    %188 = vector.shape_cast %187 : vector<1x16xf32> to vector<1x16xf32>
    %189 = vector.broadcast %188 : vector<1x16xf32> to vector<16x16xf32>
    %190 = vector.broadcast %cst_47 : f32 to vector<16x16xf32>
    %191 = arith.select %186, %189, %190 : vector<16x16xi1>, vector<16x16xf32>
    %192 = arith.addf %184, %191 : vector<16x16xf32>
    %c6_i32_48 = arith.constant 6 : i32
    %193 = vector.broadcast %c6_i32_48 : i32 to vector<16x16xi32>
    %194 = arith.cmpi eq, %1, %193 : vector<16x16xi32>
    %195 = vector.extract_strided_slice %21 {offsets = [6, 0], sizes = [1, 16], strides = [1, 1]} : vector<128x16xf32> to vector<1x16xf32>
    %cst_49 = arith.constant 0.000000e+00 : f32
    %196 = vector.shape_cast %195 : vector<1x16xf32> to vector<1x16xf32>
    %197 = vector.broadcast %196 : vector<1x16xf32> to vector<16x16xf32>
    %198 = vector.broadcast %cst_49 : f32 to vector<16x16xf32>
    %199 = arith.select %194, %197, %198 : vector<16x16xi1>, vector<16x16xf32>
    %200 = arith.addf %192, %199 : vector<16x16xf32>
    %c7_i32_50 = arith.constant 7 : i32
    %201 = vector.broadcast %c7_i32_50 : i32 to vector<16x16xi32>
    %202 = arith.cmpi eq, %1, %201 : vector<16x16xi32>
    %203 = vector.extract_strided_slice %21 {offsets = [7, 0], sizes = [1, 16], strides = [1, 1]} : vector<128x16xf32> to vector<1x16xf32>
    %cst_51 = arith.constant 0.000000e+00 : f32
    %204 = vector.shape_cast %203 : vector<1x16xf32> to vector<1x16xf32>
    %205 = vector.broadcast %204 : vector<1x16xf32> to vector<16x16xf32>
    %206 = vector.broadcast %cst_51 : f32 to vector<16x16xf32>
    %207 = arith.select %202, %205, %206 : vector<16x16xi1>, vector<16x16xf32>
    %208 = arith.addf %200, %207 : vector<16x16xf32>
    %c8_i32_52 = arith.constant 8 : i32
    %209 = vector.broadcast %c8_i32_52 : i32 to vector<16x16xi32>
    %210 = arith.cmpi eq, %1, %209 : vector<16x16xi32>
    %211 = vector.extract_strided_slice %21 {offsets = [8, 0], sizes = [1, 16], strides = [1, 1]} : vector<128x16xf32> to vector<1x16xf32>
    %cst_53 = arith.constant 0.000000e+00 : f32
    %212 = vector.shape_cast %211 : vector<1x16xf32> to vector<1x16xf32>
    %213 = vector.broadcast %212 : vector<1x16xf32> to vector<16x16xf32>
    %214 = vector.broadcast %cst_53 : f32 to vector<16x16xf32>
    %215 = arith.select %210, %213, %214 : vector<16x16xi1>, vector<16x16xf32>
    %216 = arith.addf %208, %215 : vector<16x16xf32>
    %c9_i32_54 = arith.constant 9 : i32
    %217 = vector.broadcast %c9_i32_54 : i32 to vector<16x16xi32>
    %218 = arith.cmpi eq, %1, %217 : vector<16x16xi32>
    %219 = vector.extract_strided_slice %21 {offsets = [9, 0], sizes = [1, 16], strides = [1, 1]} : vector<128x16xf32> to vector<1x16xf32>
    %cst_55 = arith.constant 0.000000e+00 : f32
    %220 = vector.shape_cast %219 : vector<1x16xf32> to vector<1x16xf32>
    %221 = vector.broadcast %220 : vector<1x16xf32> to vector<16x16xf32>
    %222 = vector.broadcast %cst_55 : f32 to vector<16x16xf32>
    %223 = arith.select %218, %221, %222 : vector<16x16xi1>, vector<16x16xf32>
    %224 = arith.addf %216, %223 : vector<16x16xf32>
    %c10_i32_56 = arith.constant 10 : i32
    %225 = vector.broadcast %c10_i32_56 : i32 to vector<16x16xi32>
    %226 = arith.cmpi eq, %1, %225 : vector<16x16xi32>
    %227 = vector.extract_strided_slice %21 {offsets = [10, 0], sizes = [1, 16], strides = [1, 1]} : vector<128x16xf32> to vector<1x16xf32>
    %cst_57 = arith.constant 0.000000e+00 : f32
    %228 = vector.shape_cast %227 : vector<1x16xf32> to vector<1x16xf32>
    %229 = vector.broadcast %228 : vector<1x16xf32> to vector<16x16xf32>
    %230 = vector.broadcast %cst_57 : f32 to vector<16x16xf32>
    %231 = arith.select %226, %229, %230 : vector<16x16xi1>, vector<16x16xf32>
    %232 = arith.addf %224, %231 : vector<16x16xf32>
    %c11_i32_58 = arith.constant 11 : i32
    %233 = vector.broadcast %c11_i32_58 : i32 to vector<16x16xi32>
    %234 = arith.cmpi eq, %1, %233 : vector<16x16xi32>
    %235 = vector.extract_strided_slice %21 {offsets = [11, 0], sizes = [1, 16], strides = [1, 1]} : vector<128x16xf32> to vector<1x16xf32>
    %cst_59 = arith.constant 0.000000e+00 : f32
    %236 = vector.shape_cast %235 : vector<1x16xf32> to vector<1x16xf32>
    %237 = vector.broadcast %236 : vector<1x16xf32> to vector<16x16xf32>
    %238 = vector.broadcast %cst_59 : f32 to vector<16x16xf32>
    %239 = arith.select %234, %237, %238 : vector<16x16xi1>, vector<16x16xf32>
    %240 = arith.addf %232, %239 : vector<16x16xf32>
    %c12_i32_60 = arith.constant 12 : i32
    %241 = vector.broadcast %c12_i32_60 : i32 to vector<16x16xi32>
    %242 = arith.cmpi eq, %1, %241 : vector<16x16xi32>
    %243 = vector.extract_strided_slice %21 {offsets = [12, 0], sizes = [1, 16], strides = [1, 1]} : vector<128x16xf32> to vector<1x16xf32>
    %cst_61 = arith.constant 0.000000e+00 : f32
    %244 = vector.shape_cast %243 : vector<1x16xf32> to vector<1x16xf32>
    %245 = vector.broadcast %244 : vector<1x16xf32> to vector<16x16xf32>
    %246 = vector.broadcast %cst_61 : f32 to vector<16x16xf32>
    %247 = arith.select %242, %245, %246 : vector<16x16xi1>, vector<16x16xf32>
    %248 = arith.addf %240, %247 : vector<16x16xf32>
    %c13_i32_62 = arith.constant 13 : i32
    %249 = vector.broadcast %c13_i32_62 : i32 to vector<16x16xi32>
    %250 = arith.cmpi eq, %1, %249 : vector<16x16xi32>
    %251 = vector.extract_strided_slice %21 {offsets = [13, 0], sizes = [1, 16], strides = [1, 1]} : vector<128x16xf32> to vector<1x16xf32>
    %cst_63 = arith.constant 0.000000e+00 : f32
    %252 = vector.shape_cast %251 : vector<1x16xf32> to vector<1x16xf32>
    %253 = vector.broadcast %252 : vector<1x16xf32> to vector<16x16xf32>
    %254 = vector.broadcast %cst_63 : f32 to vector<16x16xf32>
    %255 = arith.select %250, %253, %254 : vector<16x16xi1>, vector<16x16xf32>
    %256 = arith.addf %248, %255 : vector<16x16xf32>
    %c14_i32_64 = arith.constant 14 : i32
    %257 = vector.broadcast %c14_i32_64 : i32 to vector<16x16xi32>
    %258 = arith.cmpi eq, %1, %257 : vector<16x16xi32>
    %259 = vector.extract_strided_slice %21 {offsets = [14, 0], sizes = [1, 16], strides = [1, 1]} : vector<128x16xf32> to vector<1x16xf32>
    %cst_65 = arith.constant 0.000000e+00 : f32
    %260 = vector.shape_cast %259 : vector<1x16xf32> to vector<1x16xf32>
    %261 = vector.broadcast %260 : vector<1x16xf32> to vector<16x16xf32>
    %262 = vector.broadcast %cst_65 : f32 to vector<16x16xf32>
    %263 = arith.select %258, %261, %262 : vector<16x16xi1>, vector<16x16xf32>
    %264 = arith.addf %256, %263 : vector<16x16xf32>
    %265 = arith.addf %143, %264 : vector<16x16xf32>
    %cst_66 = arith.constant -1.000000e+30 : f32
    %266 = vector.shape_cast %5 : vector<1x16xi1> to vector<1x16xi1>
    %267 = vector.broadcast %266 : vector<1x16xi1> to vector<16x16xi1>
    %268 = vector.broadcast %cst_66 : f32 to vector<16x16xf32>
    %269 = arith.select %267, %268, %265 : vector<16x16xi1>, vector<16x16xf32>
    %cst_67 = arith.constant dense<0xFF800000> : vector<16xf32>
    %270 = vector.multi_reduction <maximumf>, %269, %cst_67 [1] : vector<16x16xf32> to vector<16xf32>
    %271 = vector.shape_cast %270 : vector<16xf32> to vector<16x1xf32>
    %272 = vector.broadcast %271 : vector<16x1xf32> to vector<16x16xf32>
    %273 = arith.subf %269, %272 : vector<16x16xf32>
    %274 = math.exp %273 : vector<16x16xf32>
    %cst_68 = arith.constant dense<0.000000e+00> : vector<16xf32>
    %275 = vector.multi_reduction <add>, %274, %cst_68 [1] : vector<16x16xf32> to vector<16xf32>
    %276 = vector.shape_cast %275 : vector<16xf32> to vector<16x1xf32>
    %277 = vector.broadcast %276 : vector<16x1xf32> to vector<16x16xf32>
    %278 = arith.divf %274, %277 : vector<16x16xf32>
    %cst_69 = arith.constant dense<0.000000e+00> : vector<16x16xf32>
    %279 = tpu.matmul %278, %16, %cst_69 {dimension_numbers = #tpu.dot_dimension_numbers<[1], [0], [0], [1], [0, 0, 1, 1], [], []>} : vector<16x16xf32>, vector<16x16xf32>, vector<16x16xf32> -> vector<16x16xf32>
    %280 = vector.extract_strided_slice %7 {offsets = [0, 16], sizes = [16, 16], strides = [1, 1]} : vector<16x64xf32> to vector<16x16xf32>
    %281 = vector.extract_strided_slice %9 {offsets = [0, 16], sizes = [16, 16], strides = [1, 1]} : vector<16x64xf32> to vector<16x16xf32>
    %282 = vector.extract_strided_slice %11 {offsets = [0, 16], sizes = [16, 16], strides = [1, 1]} : vector<16x64xf32> to vector<16x16xf32>
    %283 = vector.extract_strided_slice %12 {offsets = [0, 16], sizes = [128, 16], strides = [1, 1]} : vector<128x64xf32> to vector<128x16xf32>
    %284 = vector.extract_strided_slice %13 {offsets = [0, 16], sizes = [128, 16], strides = [1, 1]} : vector<128x64xf32> to vector<128x16xf32>
    %cst_70 = arith.constant dense<0.000000e+00> : vector<16x16xf32>
    %285 = tpu.matmul %280, %281, %cst_70 {dimension_numbers = #tpu.dot_dimension_numbers<[1], [1], [0], [0], [0, 0, 1, 0], [], []>} : vector<16x16xf32>, vector<16x16xf32>, vector<16x16xf32> -> vector<16x16xf32>
    %cst_71 = arith.constant dense<0.000000e+00> : vector<16x128xf32>
    %286 = tpu.matmul %280, %283, %cst_71 {dimension_numbers = #tpu.dot_dimension_numbers<[1], [1], [0], [0], [0, 0, 1, 0], [], []>} : vector<16x16xf32>, vector<128x16xf32>, vector<16x128xf32> -> vector<16x128xf32>
    %cst_72 = arith.constant dense<0.000000e+00> : vector<128x16xf32>
    %287 = tpu.matmul %284, %281, %cst_72 {dimension_numbers = #tpu.dot_dimension_numbers<[1], [1], [0], [0], [0, 0, 1, 0], [], []>} : vector<128x16xf32>, vector<16x16xf32>, vector<128x16xf32> -> vector<128x16xf32>
    %cst_73 = arith.constant 0.000000e+00 : f32
    %288 = vector.broadcast %cst_73 : f32 to vector<16x16xf32>
    %c0_i32_74 = arith.constant 0 : i32
    %289 = vector.broadcast %c0_i32_74 : i32 to vector<16x16xi32>
    %290 = arith.cmpi eq, %1, %289 : vector<16x16xi32>
    %291 = vector.extract_strided_slice %286 {offsets = [0, 0], sizes = [16, 1], strides = [1, 1]} : vector<16x128xf32> to vector<16x1xf32>
    %cst_75 = arith.constant 0.000000e+00 : f32
    %292 = vector.shape_cast %291 : vector<16x1xf32> to vector<16x1xf32>
    %293 = vector.broadcast %292 : vector<16x1xf32> to vector<16x16xf32>
    %294 = vector.broadcast %cst_75 : f32 to vector<16x16xf32>
    %295 = arith.select %290, %293, %294 : vector<16x16xi1>, vector<16x16xf32>
    %296 = arith.addf %288, %295 : vector<16x16xf32>
    %c1_i32_76 = arith.constant 1 : i32
    %297 = vector.broadcast %c1_i32_76 : i32 to vector<16x16xi32>
    %298 = arith.cmpi eq, %1, %297 : vector<16x16xi32>
    %299 = vector.extract_strided_slice %286 {offsets = [0, 1], sizes = [16, 1], strides = [1, 1]} : vector<16x128xf32> to vector<16x1xf32>
    %cst_77 = arith.constant 0.000000e+00 : f32
    %300 = vector.shape_cast %299 : vector<16x1xf32> to vector<16x1xf32>
    %301 = vector.broadcast %300 : vector<16x1xf32> to vector<16x16xf32>
    %302 = vector.broadcast %cst_77 : f32 to vector<16x16xf32>
    %303 = arith.select %298, %301, %302 : vector<16x16xi1>, vector<16x16xf32>
    %304 = arith.addf %296, %303 : vector<16x16xf32>
    %c2_i32_78 = arith.constant 2 : i32
    %305 = vector.broadcast %c2_i32_78 : i32 to vector<16x16xi32>
    %306 = arith.cmpi eq, %1, %305 : vector<16x16xi32>
    %307 = vector.extract_strided_slice %286 {offsets = [0, 2], sizes = [16, 1], strides = [1, 1]} : vector<16x128xf32> to vector<16x1xf32>
    %cst_79 = arith.constant 0.000000e+00 : f32
    %308 = vector.shape_cast %307 : vector<16x1xf32> to vector<16x1xf32>
    %309 = vector.broadcast %308 : vector<16x1xf32> to vector<16x16xf32>
    %310 = vector.broadcast %cst_79 : f32 to vector<16x16xf32>
    %311 = arith.select %306, %309, %310 : vector<16x16xi1>, vector<16x16xf32>
    %312 = arith.addf %304, %311 : vector<16x16xf32>
    %c3_i32_80 = arith.constant 3 : i32
    %313 = vector.broadcast %c3_i32_80 : i32 to vector<16x16xi32>
    %314 = arith.cmpi eq, %1, %313 : vector<16x16xi32>
    %315 = vector.extract_strided_slice %286 {offsets = [0, 3], sizes = [16, 1], strides = [1, 1]} : vector<16x128xf32> to vector<16x1xf32>
    %cst_81 = arith.constant 0.000000e+00 : f32
    %316 = vector.shape_cast %315 : vector<16x1xf32> to vector<16x1xf32>
    %317 = vector.broadcast %316 : vector<16x1xf32> to vector<16x16xf32>
    %318 = vector.broadcast %cst_81 : f32 to vector<16x16xf32>
    %319 = arith.select %314, %317, %318 : vector<16x16xi1>, vector<16x16xf32>
    %320 = arith.addf %312, %319 : vector<16x16xf32>
    %c4_i32_82 = arith.constant 4 : i32
    %321 = vector.broadcast %c4_i32_82 : i32 to vector<16x16xi32>
    %322 = arith.cmpi eq, %1, %321 : vector<16x16xi32>
    %323 = vector.extract_strided_slice %286 {offsets = [0, 4], sizes = [16, 1], strides = [1, 1]} : vector<16x128xf32> to vector<16x1xf32>
    %cst_83 = arith.constant 0.000000e+00 : f32
    %324 = vector.shape_cast %323 : vector<16x1xf32> to vector<16x1xf32>
    %325 = vector.broadcast %324 : vector<16x1xf32> to vector<16x16xf32>
    %326 = vector.broadcast %cst_83 : f32 to vector<16x16xf32>
    %327 = arith.select %322, %325, %326 : vector<16x16xi1>, vector<16x16xf32>
    %328 = arith.addf %320, %327 : vector<16x16xf32>
    %c5_i32_84 = arith.constant 5 : i32
    %329 = vector.broadcast %c5_i32_84 : i32 to vector<16x16xi32>
    %330 = arith.cmpi eq, %1, %329 : vector<16x16xi32>
    %331 = vector.extract_strided_slice %286 {offsets = [0, 5], sizes = [16, 1], strides = [1, 1]} : vector<16x128xf32> to vector<16x1xf32>
    %cst_85 = arith.constant 0.000000e+00 : f32
    %332 = vector.shape_cast %331 : vector<16x1xf32> to vector<16x1xf32>
    %333 = vector.broadcast %332 : vector<16x1xf32> to vector<16x16xf32>
    %334 = vector.broadcast %cst_85 : f32 to vector<16x16xf32>
    %335 = arith.select %330, %333, %334 : vector<16x16xi1>, vector<16x16xf32>
    %336 = arith.addf %328, %335 : vector<16x16xf32>
    %c6_i32_86 = arith.constant 6 : i32
    %337 = vector.broadcast %c6_i32_86 : i32 to vector<16x16xi32>
    %338 = arith.cmpi eq, %1, %337 : vector<16x16xi32>
    %339 = vector.extract_strided_slice %286 {offsets = [0, 6], sizes = [16, 1], strides = [1, 1]} : vector<16x128xf32> to vector<16x1xf32>
    %cst_87 = arith.constant 0.000000e+00 : f32
    %340 = vector.shape_cast %339 : vector<16x1xf32> to vector<16x1xf32>
    %341 = vector.broadcast %340 : vector<16x1xf32> to vector<16x16xf32>
    %342 = vector.broadcast %cst_87 : f32 to vector<16x16xf32>
    %343 = arith.select %338, %341, %342 : vector<16x16xi1>, vector<16x16xf32>
    %344 = arith.addf %336, %343 : vector<16x16xf32>
    %c7_i32_88 = arith.constant 7 : i32
    %345 = vector.broadcast %c7_i32_88 : i32 to vector<16x16xi32>
    %346 = arith.cmpi eq, %1, %345 : vector<16x16xi32>
    %347 = vector.extract_strided_slice %286 {offsets = [0, 7], sizes = [16, 1], strides = [1, 1]} : vector<16x128xf32> to vector<16x1xf32>
    %cst_89 = arith.constant 0.000000e+00 : f32
    %348 = vector.shape_cast %347 : vector<16x1xf32> to vector<16x1xf32>
    %349 = vector.broadcast %348 : vector<16x1xf32> to vector<16x16xf32>
    %350 = vector.broadcast %cst_89 : f32 to vector<16x16xf32>
    %351 = arith.select %346, %349, %350 : vector<16x16xi1>, vector<16x16xf32>
    %352 = arith.addf %344, %351 : vector<16x16xf32>
    %c8_i32_90 = arith.constant 8 : i32
    %353 = vector.broadcast %c8_i32_90 : i32 to vector<16x16xi32>
    %354 = arith.cmpi eq, %1, %353 : vector<16x16xi32>
    %355 = vector.extract_strided_slice %286 {offsets = [0, 8], sizes = [16, 1], strides = [1, 1]} : vector<16x128xf32> to vector<16x1xf32>
    %cst_91 = arith.constant 0.000000e+00 : f32
    %356 = vector.shape_cast %355 : vector<16x1xf32> to vector<16x1xf32>
    %357 = vector.broadcast %356 : vector<16x1xf32> to vector<16x16xf32>
    %358 = vector.broadcast %cst_91 : f32 to vector<16x16xf32>
    %359 = arith.select %354, %357, %358 : vector<16x16xi1>, vector<16x16xf32>
    %360 = arith.addf %352, %359 : vector<16x16xf32>
    %c9_i32_92 = arith.constant 9 : i32
    %361 = vector.broadcast %c9_i32_92 : i32 to vector<16x16xi32>
    %362 = arith.cmpi eq, %1, %361 : vector<16x16xi32>
    %363 = vector.extract_strided_slice %286 {offsets = [0, 9], sizes = [16, 1], strides = [1, 1]} : vector<16x128xf32> to vector<16x1xf32>
    %cst_93 = arith.constant 0.000000e+00 : f32
    %364 = vector.shape_cast %363 : vector<16x1xf32> to vector<16x1xf32>
    %365 = vector.broadcast %364 : vector<16x1xf32> to vector<16x16xf32>
    %366 = vector.broadcast %cst_93 : f32 to vector<16x16xf32>
    %367 = arith.select %362, %365, %366 : vector<16x16xi1>, vector<16x16xf32>
    %368 = arith.addf %360, %367 : vector<16x16xf32>
    %c10_i32_94 = arith.constant 10 : i32
    %369 = vector.broadcast %c10_i32_94 : i32 to vector<16x16xi32>
    %370 = arith.cmpi eq, %1, %369 : vector<16x16xi32>
    %371 = vector.extract_strided_slice %286 {offsets = [0, 10], sizes = [16, 1], strides = [1, 1]} : vector<16x128xf32> to vector<16x1xf32>
    %cst_95 = arith.constant 0.000000e+00 : f32
    %372 = vector.shape_cast %371 : vector<16x1xf32> to vector<16x1xf32>
    %373 = vector.broadcast %372 : vector<16x1xf32> to vector<16x16xf32>
    %374 = vector.broadcast %cst_95 : f32 to vector<16x16xf32>
    %375 = arith.select %370, %373, %374 : vector<16x16xi1>, vector<16x16xf32>
    %376 = arith.addf %368, %375 : vector<16x16xf32>
    %c11_i32_96 = arith.constant 11 : i32
    %377 = vector.broadcast %c11_i32_96 : i32 to vector<16x16xi32>
    %378 = arith.cmpi eq, %1, %377 : vector<16x16xi32>
    %379 = vector.extract_strided_slice %286 {offsets = [0, 11], sizes = [16, 1], strides = [1, 1]} : vector<16x128xf32> to vector<16x1xf32>
    %cst_97 = arith.constant 0.000000e+00 : f32
    %380 = vector.shape_cast %379 : vector<16x1xf32> to vector<16x1xf32>
    %381 = vector.broadcast %380 : vector<16x1xf32> to vector<16x16xf32>
    %382 = vector.broadcast %cst_97 : f32 to vector<16x16xf32>
    %383 = arith.select %378, %381, %382 : vector<16x16xi1>, vector<16x16xf32>
    %384 = arith.addf %376, %383 : vector<16x16xf32>
    %c12_i32_98 = arith.constant 12 : i32
    %385 = vector.broadcast %c12_i32_98 : i32 to vector<16x16xi32>
    %386 = arith.cmpi eq, %1, %385 : vector<16x16xi32>
    %387 = vector.extract_strided_slice %286 {offsets = [0, 12], sizes = [16, 1], strides = [1, 1]} : vector<16x128xf32> to vector<16x1xf32>
    %cst_99 = arith.constant 0.000000e+00 : f32
    %388 = vector.shape_cast %387 : vector<16x1xf32> to vector<16x1xf32>
    %389 = vector.broadcast %388 : vector<16x1xf32> to vector<16x16xf32>
    %390 = vector.broadcast %cst_99 : f32 to vector<16x16xf32>
    %391 = arith.select %386, %389, %390 : vector<16x16xi1>, vector<16x16xf32>
    %392 = arith.addf %384, %391 : vector<16x16xf32>
    %c13_i32_100 = arith.constant 13 : i32
    %393 = vector.broadcast %c13_i32_100 : i32 to vector<16x16xi32>
    %394 = arith.cmpi eq, %1, %393 : vector<16x16xi32>
    %395 = vector.extract_strided_slice %286 {offsets = [0, 13], sizes = [16, 1], strides = [1, 1]} : vector<16x128xf32> to vector<16x1xf32>
    %cst_101 = arith.constant 0.000000e+00 : f32
    %396 = vector.shape_cast %395 : vector<16x1xf32> to vector<16x1xf32>
    %397 = vector.broadcast %396 : vector<16x1xf32> to vector<16x16xf32>
    %398 = vector.broadcast %cst_101 : f32 to vector<16x16xf32>
    %399 = arith.select %394, %397, %398 : vector<16x16xi1>, vector<16x16xf32>
    %400 = arith.addf %392, %399 : vector<16x16xf32>
    %c14_i32_102 = arith.constant 14 : i32
    %401 = vector.broadcast %c14_i32_102 : i32 to vector<16x16xi32>
    %402 = arith.cmpi eq, %1, %401 : vector<16x16xi32>
    %403 = vector.extract_strided_slice %286 {offsets = [0, 14], sizes = [16, 1], strides = [1, 1]} : vector<16x128xf32> to vector<16x1xf32>
    %cst_103 = arith.constant 0.000000e+00 : f32
    %404 = vector.shape_cast %403 : vector<16x1xf32> to vector<16x1xf32>
    %405 = vector.broadcast %404 : vector<16x1xf32> to vector<16x16xf32>
    %406 = vector.broadcast %cst_103 : f32 to vector<16x16xf32>
    %407 = arith.select %402, %405, %406 : vector<16x16xi1>, vector<16x16xf32>
    %408 = arith.addf %400, %407 : vector<16x16xf32>
    %409 = arith.addf %285, %408 : vector<16x16xf32>
    %cst_104 = arith.constant 0.000000e+00 : f32
    %410 = vector.broadcast %cst_104 : f32 to vector<16x16xf32>
    %c0_i32_105 = arith.constant 0 : i32
    %411 = vector.broadcast %c0_i32_105 : i32 to vector<16x16xi32>
    %412 = arith.cmpi eq, %1, %411 : vector<16x16xi32>
    %413 = vector.extract_strided_slice %287 {offsets = [0, 0], sizes = [1, 16], strides = [1, 1]} : vector<128x16xf32> to vector<1x16xf32>
    %cst_106 = arith.constant 0.000000e+00 : f32
    %414 = vector.shape_cast %413 : vector<1x16xf32> to vector<1x16xf32>
    %415 = vector.broadcast %414 : vector<1x16xf32> to vector<16x16xf32>
    %416 = vector.broadcast %cst_106 : f32 to vector<16x16xf32>
    %417 = arith.select %412, %415, %416 : vector<16x16xi1>, vector<16x16xf32>
    %418 = arith.addf %410, %417 : vector<16x16xf32>
    %c1_i32_107 = arith.constant 1 : i32
    %419 = vector.broadcast %c1_i32_107 : i32 to vector<16x16xi32>
    %420 = arith.cmpi eq, %1, %419 : vector<16x16xi32>
    %421 = vector.extract_strided_slice %287 {offsets = [1, 0], sizes = [1, 16], strides = [1, 1]} : vector<128x16xf32> to vector<1x16xf32>
    %cst_108 = arith.constant 0.000000e+00 : f32
    %422 = vector.shape_cast %421 : vector<1x16xf32> to vector<1x16xf32>
    %423 = vector.broadcast %422 : vector<1x16xf32> to vector<16x16xf32>
    %424 = vector.broadcast %cst_108 : f32 to vector<16x16xf32>
    %425 = arith.select %420, %423, %424 : vector<16x16xi1>, vector<16x16xf32>
    %426 = arith.addf %418, %425 : vector<16x16xf32>
    %c2_i32_109 = arith.constant 2 : i32
    %427 = vector.broadcast %c2_i32_109 : i32 to vector<16x16xi32>
    %428 = arith.cmpi eq, %1, %427 : vector<16x16xi32>
    %429 = vector.extract_strided_slice %287 {offsets = [2, 0], sizes = [1, 16], strides = [1, 1]} : vector<128x16xf32> to vector<1x16xf32>
    %cst_110 = arith.constant 0.000000e+00 : f32
    %430 = vector.shape_cast %429 : vector<1x16xf32> to vector<1x16xf32>
    %431 = vector.broadcast %430 : vector<1x16xf32> to vector<16x16xf32>
    %432 = vector.broadcast %cst_110 : f32 to vector<16x16xf32>
    %433 = arith.select %428, %431, %432 : vector<16x16xi1>, vector<16x16xf32>
    %434 = arith.addf %426, %433 : vector<16x16xf32>
    %c3_i32_111 = arith.constant 3 : i32
    %435 = vector.broadcast %c3_i32_111 : i32 to vector<16x16xi32>
    %436 = arith.cmpi eq, %1, %435 : vector<16x16xi32>
    %437 = vector.extract_strided_slice %287 {offsets = [3, 0], sizes = [1, 16], strides = [1, 1]} : vector<128x16xf32> to vector<1x16xf32>
    %cst_112 = arith.constant 0.000000e+00 : f32
    %438 = vector.shape_cast %437 : vector<1x16xf32> to vector<1x16xf32>
    %439 = vector.broadcast %438 : vector<1x16xf32> to vector<16x16xf32>
    %440 = vector.broadcast %cst_112 : f32 to vector<16x16xf32>
    %441 = arith.select %436, %439, %440 : vector<16x16xi1>, vector<16x16xf32>
    %442 = arith.addf %434, %441 : vector<16x16xf32>
    %c4_i32_113 = arith.constant 4 : i32
    %443 = vector.broadcast %c4_i32_113 : i32 to vector<16x16xi32>
    %444 = arith.cmpi eq, %1, %443 : vector<16x16xi32>
    %445 = vector.extract_strided_slice %287 {offsets = [4, 0], sizes = [1, 16], strides = [1, 1]} : vector<128x16xf32> to vector<1x16xf32>
    %cst_114 = arith.constant 0.000000e+00 : f32
    %446 = vector.shape_cast %445 : vector<1x16xf32> to vector<1x16xf32>
    %447 = vector.broadcast %446 : vector<1x16xf32> to vector<16x16xf32>
    %448 = vector.broadcast %cst_114 : f32 to vector<16x16xf32>
    %449 = arith.select %444, %447, %448 : vector<16x16xi1>, vector<16x16xf32>
    %450 = arith.addf %442, %449 : vector<16x16xf32>
    %c5_i32_115 = arith.constant 5 : i32
    %451 = vector.broadcast %c5_i32_115 : i32 to vector<16x16xi32>
    %452 = arith.cmpi eq, %1, %451 : vector<16x16xi32>
    %453 = vector.extract_strided_slice %287 {offsets = [5, 0], sizes = [1, 16], strides = [1, 1]} : vector<128x16xf32> to vector<1x16xf32>
    %cst_116 = arith.constant 0.000000e+00 : f32
    %454 = vector.shape_cast %453 : vector<1x16xf32> to vector<1x16xf32>
    %455 = vector.broadcast %454 : vector<1x16xf32> to vector<16x16xf32>
    %456 = vector.broadcast %cst_116 : f32 to vector<16x16xf32>
    %457 = arith.select %452, %455, %456 : vector<16x16xi1>, vector<16x16xf32>
    %458 = arith.addf %450, %457 : vector<16x16xf32>
    %c6_i32_117 = arith.constant 6 : i32
    %459 = vector.broadcast %c6_i32_117 : i32 to vector<16x16xi32>
    %460 = arith.cmpi eq, %1, %459 : vector<16x16xi32>
    %461 = vector.extract_strided_slice %287 {offsets = [6, 0], sizes = [1, 16], strides = [1, 1]} : vector<128x16xf32> to vector<1x16xf32>
    %cst_118 = arith.constant 0.000000e+00 : f32
    %462 = vector.shape_cast %461 : vector<1x16xf32> to vector<1x16xf32>
    %463 = vector.broadcast %462 : vector<1x16xf32> to vector<16x16xf32>
    %464 = vector.broadcast %cst_118 : f32 to vector<16x16xf32>
    %465 = arith.select %460, %463, %464 : vector<16x16xi1>, vector<16x16xf32>
    %466 = arith.addf %458, %465 : vector<16x16xf32>
    %c7_i32_119 = arith.constant 7 : i32
    %467 = vector.broadcast %c7_i32_119 : i32 to vector<16x16xi32>
    %468 = arith.cmpi eq, %1, %467 : vector<16x16xi32>
    %469 = vector.extract_strided_slice %287 {offsets = [7, 0], sizes = [1, 16], strides = [1, 1]} : vector<128x16xf32> to vector<1x16xf32>
    %cst_120 = arith.constant 0.000000e+00 : f32
    %470 = vector.shape_cast %469 : vector<1x16xf32> to vector<1x16xf32>
    %471 = vector.broadcast %470 : vector<1x16xf32> to vector<16x16xf32>
    %472 = vector.broadcast %cst_120 : f32 to vector<16x16xf32>
    %473 = arith.select %468, %471, %472 : vector<16x16xi1>, vector<16x16xf32>
    %474 = arith.addf %466, %473 : vector<16x16xf32>
    %c8_i32_121 = arith.constant 8 : i32
    %475 = vector.broadcast %c8_i32_121 : i32 to vector<16x16xi32>
    %476 = arith.cmpi eq, %1, %475 : vector<16x16xi32>
    %477 = vector.extract_strided_slice %287 {offsets = [8, 0], sizes = [1, 16], strides = [1, 1]} : vector<128x16xf32> to vector<1x16xf32>
    %cst_122 = arith.constant 0.000000e+00 : f32
    %478 = vector.shape_cast %477 : vector<1x16xf32> to vector<1x16xf32>
    %479 = vector.broadcast %478 : vector<1x16xf32> to vector<16x16xf32>
    %480 = vector.broadcast %cst_122 : f32 to vector<16x16xf32>
    %481 = arith.select %476, %479, %480 : vector<16x16xi1>, vector<16x16xf32>
    %482 = arith.addf %474, %481 : vector<16x16xf32>
    %c9_i32_123 = arith.constant 9 : i32
    %483 = vector.broadcast %c9_i32_123 : i32 to vector<16x16xi32>
    %484 = arith.cmpi eq, %1, %483 : vector<16x16xi32>
    %485 = vector.extract_strided_slice %287 {offsets = [9, 0], sizes = [1, 16], strides = [1, 1]} : vector<128x16xf32> to vector<1x16xf32>
    %cst_124 = arith.constant 0.000000e+00 : f32
    %486 = vector.shape_cast %485 : vector<1x16xf32> to vector<1x16xf32>
    %487 = vector.broadcast %486 : vector<1x16xf32> to vector<16x16xf32>
    %488 = vector.broadcast %cst_124 : f32 to vector<16x16xf32>
    %489 = arith.select %484, %487, %488 : vector<16x16xi1>, vector<16x16xf32>
    %490 = arith.addf %482, %489 : vector<16x16xf32>
    %c10_i32_125 = arith.constant 10 : i32
    %491 = vector.broadcast %c10_i32_125 : i32 to vector<16x16xi32>
    %492 = arith.cmpi eq, %1, %491 : vector<16x16xi32>
    %493 = vector.extract_strided_slice %287 {offsets = [10, 0], sizes = [1, 16], strides = [1, 1]} : vector<128x16xf32> to vector<1x16xf32>
    %cst_126 = arith.constant 0.000000e+00 : f32
    %494 = vector.shape_cast %493 : vector<1x16xf32> to vector<1x16xf32>
    %495 = vector.broadcast %494 : vector<1x16xf32> to vector<16x16xf32>
    %496 = vector.broadcast %cst_126 : f32 to vector<16x16xf32>
    %497 = arith.select %492, %495, %496 : vector<16x16xi1>, vector<16x16xf32>
    %498 = arith.addf %490, %497 : vector<16x16xf32>
    %c11_i32_127 = arith.constant 11 : i32
    %499 = vector.broadcast %c11_i32_127 : i32 to vector<16x16xi32>
    %500 = arith.cmpi eq, %1, %499 : vector<16x16xi32>
    %501 = vector.extract_strided_slice %287 {offsets = [11, 0], sizes = [1, 16], strides = [1, 1]} : vector<128x16xf32> to vector<1x16xf32>
    %cst_128 = arith.constant 0.000000e+00 : f32
    %502 = vector.shape_cast %501 : vector<1x16xf32> to vector<1x16xf32>
    %503 = vector.broadcast %502 : vector<1x16xf32> to vector<16x16xf32>
    %504 = vector.broadcast %cst_128 : f32 to vector<16x16xf32>
    %505 = arith.select %500, %503, %504 : vector<16x16xi1>, vector<16x16xf32>
    %506 = arith.addf %498, %505 : vector<16x16xf32>
    %c12_i32_129 = arith.constant 12 : i32
    %507 = vector.broadcast %c12_i32_129 : i32 to vector<16x16xi32>
    %508 = arith.cmpi eq, %1, %507 : vector<16x16xi32>
    %509 = vector.extract_strided_slice %287 {offsets = [12, 0], sizes = [1, 16], strides = [1, 1]} : vector<128x16xf32> to vector<1x16xf32>
    %cst_130 = arith.constant 0.000000e+00 : f32
    %510 = vector.shape_cast %509 : vector<1x16xf32> to vector<1x16xf32>
    %511 = vector.broadcast %510 : vector<1x16xf32> to vector<16x16xf32>
    %512 = vector.broadcast %cst_130 : f32 to vector<16x16xf32>
    %513 = arith.select %508, %511, %512 : vector<16x16xi1>, vector<16x16xf32>
    %514 = arith.addf %506, %513 : vector<16x16xf32>
    %c13_i32_131 = arith.constant 13 : i32
    %515 = vector.broadcast %c13_i32_131 : i32 to vector<16x16xi32>
    %516 = arith.cmpi eq, %1, %515 : vector<16x16xi32>
    %517 = vector.extract_strided_slice %287 {offsets = [13, 0], sizes = [1, 16], strides = [1, 1]} : vector<128x16xf32> to vector<1x16xf32>
    %cst_132 = arith.constant 0.000000e+00 : f32
    %518 = vector.shape_cast %517 : vector<1x16xf32> to vector<1x16xf32>
    %519 = vector.broadcast %518 : vector<1x16xf32> to vector<16x16xf32>
    %520 = vector.broadcast %cst_132 : f32 to vector<16x16xf32>
    %521 = arith.select %516, %519, %520 : vector<16x16xi1>, vector<16x16xf32>
    %522 = arith.addf %514, %521 : vector<16x16xf32>
    %c14_i32_133 = arith.constant 14 : i32
    %523 = vector.broadcast %c14_i32_133 : i32 to vector<16x16xi32>
    %524 = arith.cmpi eq, %1, %523 : vector<16x16xi32>
    %525 = vector.extract_strided_slice %287 {offsets = [14, 0], sizes = [1, 16], strides = [1, 1]} : vector<128x16xf32> to vector<1x16xf32>
    %cst_134 = arith.constant 0.000000e+00 : f32
    %526 = vector.shape_cast %525 : vector<1x16xf32> to vector<1x16xf32>
    %527 = vector.broadcast %526 : vector<1x16xf32> to vector<16x16xf32>
    %528 = vector.broadcast %cst_134 : f32 to vector<16x16xf32>
    %529 = arith.select %524, %527, %528 : vector<16x16xi1>, vector<16x16xf32>
    %530 = arith.addf %522, %529 : vector<16x16xf32>
    %531 = arith.addf %409, %530 : vector<16x16xf32>
    %cst_135 = arith.constant -1.000000e+30 : f32
    %532 = vector.shape_cast %5 : vector<1x16xi1> to vector<1x16xi1>
    %533 = vector.broadcast %532 : vector<1x16xi1> to vector<16x16xi1>
    %534 = vector.broadcast %cst_135 : f32 to vector<16x16xf32>
    %535 = arith.select %533, %534, %531 : vector<16x16xi1>, vector<16x16xf32>
    %cst_136 = arith.constant dense<0xFF800000> : vector<16xf32>
    %536 = vector.multi_reduction <maximumf>, %535, %cst_136 [1] : vector<16x16xf32> to vector<16xf32>
    %537 = vector.shape_cast %536 : vector<16xf32> to vector<16x1xf32>
    %538 = vector.broadcast %537 : vector<16x1xf32> to vector<16x16xf32>
    %539 = arith.subf %535, %538 : vector<16x16xf32>
    %540 = math.exp %539 : vector<16x16xf32>
    %cst_137 = arith.constant dense<0.000000e+00> : vector<16xf32>
    %541 = vector.multi_reduction <add>, %540, %cst_137 [1] : vector<16x16xf32> to vector<16xf32>
    %542 = vector.shape_cast %541 : vector<16xf32> to vector<16x1xf32>
    %543 = vector.broadcast %542 : vector<16x1xf32> to vector<16x16xf32>
    %544 = arith.divf %540, %543 : vector<16x16xf32>
    %cst_138 = arith.constant dense<0.000000e+00> : vector<16x16xf32>
    %545 = tpu.matmul %544, %282, %cst_138 {dimension_numbers = #tpu.dot_dimension_numbers<[1], [0], [0], [1], [0, 0, 1, 1], [], []>} : vector<16x16xf32>, vector<16x16xf32>, vector<16x16xf32> -> vector<16x16xf32>
    %546 = vector.extract_strided_slice %7 {offsets = [0, 32], sizes = [16, 16], strides = [1, 1]} : vector<16x64xf32> to vector<16x16xf32>
    %547 = vector.extract_strided_slice %9 {offsets = [0, 32], sizes = [16, 16], strides = [1, 1]} : vector<16x64xf32> to vector<16x16xf32>
    %548 = vector.extract_strided_slice %11 {offsets = [0, 32], sizes = [16, 16], strides = [1, 1]} : vector<16x64xf32> to vector<16x16xf32>
    %549 = vector.extract_strided_slice %12 {offsets = [0, 32], sizes = [128, 16], strides = [1, 1]} : vector<128x64xf32> to vector<128x16xf32>
    %550 = vector.extract_strided_slice %13 {offsets = [0, 32], sizes = [128, 16], strides = [1, 1]} : vector<128x64xf32> to vector<128x16xf32>
    %cst_139 = arith.constant dense<0.000000e+00> : vector<16x16xf32>
    %551 = tpu.matmul %546, %547, %cst_139 {dimension_numbers = #tpu.dot_dimension_numbers<[1], [1], [0], [0], [0, 0, 1, 0], [], []>} : vector<16x16xf32>, vector<16x16xf32>, vector<16x16xf32> -> vector<16x16xf32>
    %cst_140 = arith.constant dense<0.000000e+00> : vector<16x128xf32>
    %552 = tpu.matmul %546, %549, %cst_140 {dimension_numbers = #tpu.dot_dimension_numbers<[1], [1], [0], [0], [0, 0, 1, 0], [], []>} : vector<16x16xf32>, vector<128x16xf32>, vector<16x128xf32> -> vector<16x128xf32>
    %cst_141 = arith.constant dense<0.000000e+00> : vector<128x16xf32>
    %553 = tpu.matmul %550, %547, %cst_141 {dimension_numbers = #tpu.dot_dimension_numbers<[1], [1], [0], [0], [0, 0, 1, 0], [], []>} : vector<128x16xf32>, vector<16x16xf32>, vector<128x16xf32> -> vector<128x16xf32>
    %cst_142 = arith.constant 0.000000e+00 : f32
    %554 = vector.broadcast %cst_142 : f32 to vector<16x16xf32>
    %c0_i32_143 = arith.constant 0 : i32
    %555 = vector.broadcast %c0_i32_143 : i32 to vector<16x16xi32>
    %556 = arith.cmpi eq, %1, %555 : vector<16x16xi32>
    %557 = vector.extract_strided_slice %552 {offsets = [0, 0], sizes = [16, 1], strides = [1, 1]} : vector<16x128xf32> to vector<16x1xf32>
    %cst_144 = arith.constant 0.000000e+00 : f32
    %558 = vector.shape_cast %557 : vector<16x1xf32> to vector<16x1xf32>
    %559 = vector.broadcast %558 : vector<16x1xf32> to vector<16x16xf32>
    %560 = vector.broadcast %cst_144 : f32 to vector<16x16xf32>
    %561 = arith.select %556, %559, %560 : vector<16x16xi1>, vector<16x16xf32>
    %562 = arith.addf %554, %561 : vector<16x16xf32>
    %c1_i32_145 = arith.constant 1 : i32
    %563 = vector.broadcast %c1_i32_145 : i32 to vector<16x16xi32>
    %564 = arith.cmpi eq, %1, %563 : vector<16x16xi32>
    %565 = vector.extract_strided_slice %552 {offsets = [0, 1], sizes = [16, 1], strides = [1, 1]} : vector<16x128xf32> to vector<16x1xf32>
    %cst_146 = arith.constant 0.000000e+00 : f32
    %566 = vector.shape_cast %565 : vector<16x1xf32> to vector<16x1xf32>
    %567 = vector.broadcast %566 : vector<16x1xf32> to vector<16x16xf32>
    %568 = vector.broadcast %cst_146 : f32 to vector<16x16xf32>
    %569 = arith.select %564, %567, %568 : vector<16x16xi1>, vector<16x16xf32>
    %570 = arith.addf %562, %569 : vector<16x16xf32>
    %c2_i32_147 = arith.constant 2 : i32
    %571 = vector.broadcast %c2_i32_147 : i32 to vector<16x16xi32>
    %572 = arith.cmpi eq, %1, %571 : vector<16x16xi32>
    %573 = vector.extract_strided_slice %552 {offsets = [0, 2], sizes = [16, 1], strides = [1, 1]} : vector<16x128xf32> to vector<16x1xf32>
    %cst_148 = arith.constant 0.000000e+00 : f32
    %574 = vector.shape_cast %573 : vector<16x1xf32> to vector<16x1xf32>
    %575 = vector.broadcast %574 : vector<16x1xf32> to vector<16x16xf32>
    %576 = vector.broadcast %cst_148 : f32 to vector<16x16xf32>
    %577 = arith.select %572, %575, %576 : vector<16x16xi1>, vector<16x16xf32>
    %578 = arith.addf %570, %577 : vector<16x16xf32>
    %c3_i32_149 = arith.constant 3 : i32
    %579 = vector.broadcast %c3_i32_149 : i32 to vector<16x16xi32>
    %580 = arith.cmpi eq, %1, %579 : vector<16x16xi32>
    %581 = vector.extract_strided_slice %552 {offsets = [0, 3], sizes = [16, 1], strides = [1, 1]} : vector<16x128xf32> to vector<16x1xf32>
    %cst_150 = arith.constant 0.000000e+00 : f32
    %582 = vector.shape_cast %581 : vector<16x1xf32> to vector<16x1xf32>
    %583 = vector.broadcast %582 : vector<16x1xf32> to vector<16x16xf32>
    %584 = vector.broadcast %cst_150 : f32 to vector<16x16xf32>
    %585 = arith.select %580, %583, %584 : vector<16x16xi1>, vector<16x16xf32>
    %586 = arith.addf %578, %585 : vector<16x16xf32>
    %c4_i32_151 = arith.constant 4 : i32
    %587 = vector.broadcast %c4_i32_151 : i32 to vector<16x16xi32>
    %588 = arith.cmpi eq, %1, %587 : vector<16x16xi32>
    %589 = vector.extract_strided_slice %552 {offsets = [0, 4], sizes = [16, 1], strides = [1, 1]} : vector<16x128xf32> to vector<16x1xf32>
    %cst_152 = arith.constant 0.000000e+00 : f32
    %590 = vector.shape_cast %589 : vector<16x1xf32> to vector<16x1xf32>
    %591 = vector.broadcast %590 : vector<16x1xf32> to vector<16x16xf32>
    %592 = vector.broadcast %cst_152 : f32 to vector<16x16xf32>
    %593 = arith.select %588, %591, %592 : vector<16x16xi1>, vector<16x16xf32>
    %594 = arith.addf %586, %593 : vector<16x16xf32>
    %c5_i32_153 = arith.constant 5 : i32
    %595 = vector.broadcast %c5_i32_153 : i32 to vector<16x16xi32>
    %596 = arith.cmpi eq, %1, %595 : vector<16x16xi32>
    %597 = vector.extract_strided_slice %552 {offsets = [0, 5], sizes = [16, 1], strides = [1, 1]} : vector<16x128xf32> to vector<16x1xf32>
    %cst_154 = arith.constant 0.000000e+00 : f32
    %598 = vector.shape_cast %597 : vector<16x1xf32> to vector<16x1xf32>
    %599 = vector.broadcast %598 : vector<16x1xf32> to vector<16x16xf32>
    %600 = vector.broadcast %cst_154 : f32 to vector<16x16xf32>
    %601 = arith.select %596, %599, %600 : vector<16x16xi1>, vector<16x16xf32>
    %602 = arith.addf %594, %601 : vector<16x16xf32>
    %c6_i32_155 = arith.constant 6 : i32
    %603 = vector.broadcast %c6_i32_155 : i32 to vector<16x16xi32>
    %604 = arith.cmpi eq, %1, %603 : vector<16x16xi32>
    %605 = vector.extract_strided_slice %552 {offsets = [0, 6], sizes = [16, 1], strides = [1, 1]} : vector<16x128xf32> to vector<16x1xf32>
    %cst_156 = arith.constant 0.000000e+00 : f32
    %606 = vector.shape_cast %605 : vector<16x1xf32> to vector<16x1xf32>
    %607 = vector.broadcast %606 : vector<16x1xf32> to vector<16x16xf32>
    %608 = vector.broadcast %cst_156 : f32 to vector<16x16xf32>
    %609 = arith.select %604, %607, %608 : vector<16x16xi1>, vector<16x16xf32>
    %610 = arith.addf %602, %609 : vector<16x16xf32>
    %c7_i32_157 = arith.constant 7 : i32
    %611 = vector.broadcast %c7_i32_157 : i32 to vector<16x16xi32>
    %612 = arith.cmpi eq, %1, %611 : vector<16x16xi32>
    %613 = vector.extract_strided_slice %552 {offsets = [0, 7], sizes = [16, 1], strides = [1, 1]} : vector<16x128xf32> to vector<16x1xf32>
    %cst_158 = arith.constant 0.000000e+00 : f32
    %614 = vector.shape_cast %613 : vector<16x1xf32> to vector<16x1xf32>
    %615 = vector.broadcast %614 : vector<16x1xf32> to vector<16x16xf32>
    %616 = vector.broadcast %cst_158 : f32 to vector<16x16xf32>
    %617 = arith.select %612, %615, %616 : vector<16x16xi1>, vector<16x16xf32>
    %618 = arith.addf %610, %617 : vector<16x16xf32>
    %c8_i32_159 = arith.constant 8 : i32
    %619 = vector.broadcast %c8_i32_159 : i32 to vector<16x16xi32>
    %620 = arith.cmpi eq, %1, %619 : vector<16x16xi32>
    %621 = vector.extract_strided_slice %552 {offsets = [0, 8], sizes = [16, 1], strides = [1, 1]} : vector<16x128xf32> to vector<16x1xf32>
    %cst_160 = arith.constant 0.000000e+00 : f32
    %622 = vector.shape_cast %621 : vector<16x1xf32> to vector<16x1xf32>
    %623 = vector.broadcast %622 : vector<16x1xf32> to vector<16x16xf32>
    %624 = vector.broadcast %cst_160 : f32 to vector<16x16xf32>
    %625 = arith.select %620, %623, %624 : vector<16x16xi1>, vector<16x16xf32>
    %626 = arith.addf %618, %625 : vector<16x16xf32>
    %c9_i32_161 = arith.constant 9 : i32
    %627 = vector.broadcast %c9_i32_161 : i32 to vector<16x16xi32>
    %628 = arith.cmpi eq, %1, %627 : vector<16x16xi32>
    %629 = vector.extract_strided_slice %552 {offsets = [0, 9], sizes = [16, 1], strides = [1, 1]} : vector<16x128xf32> to vector<16x1xf32>
    %cst_162 = arith.constant 0.000000e+00 : f32
    %630 = vector.shape_cast %629 : vector<16x1xf32> to vector<16x1xf32>
    %631 = vector.broadcast %630 : vector<16x1xf32> to vector<16x16xf32>
    %632 = vector.broadcast %cst_162 : f32 to vector<16x16xf32>
    %633 = arith.select %628, %631, %632 : vector<16x16xi1>, vector<16x16xf32>
    %634 = arith.addf %626, %633 : vector<16x16xf32>
    %c10_i32_163 = arith.constant 10 : i32
    %635 = vector.broadcast %c10_i32_163 : i32 to vector<16x16xi32>
    %636 = arith.cmpi eq, %1, %635 : vector<16x16xi32>
    %637 = vector.extract_strided_slice %552 {offsets = [0, 10], sizes = [16, 1], strides = [1, 1]} : vector<16x128xf32> to vector<16x1xf32>
    %cst_164 = arith.constant 0.000000e+00 : f32
    %638 = vector.shape_cast %637 : vector<16x1xf32> to vector<16x1xf32>
    %639 = vector.broadcast %638 : vector<16x1xf32> to vector<16x16xf32>
    %640 = vector.broadcast %cst_164 : f32 to vector<16x16xf32>
    %641 = arith.select %636, %639, %640 : vector<16x16xi1>, vector<16x16xf32>
    %642 = arith.addf %634, %641 : vector<16x16xf32>
    %c11_i32_165 = arith.constant 11 : i32
    %643 = vector.broadcast %c11_i32_165 : i32 to vector<16x16xi32>
    %644 = arith.cmpi eq, %1, %643 : vector<16x16xi32>
    %645 = vector.extract_strided_slice %552 {offsets = [0, 11], sizes = [16, 1], strides = [1, 1]} : vector<16x128xf32> to vector<16x1xf32>
    %cst_166 = arith.constant 0.000000e+00 : f32
    %646 = vector.shape_cast %645 : vector<16x1xf32> to vector<16x1xf32>
    %647 = vector.broadcast %646 : vector<16x1xf32> to vector<16x16xf32>
    %648 = vector.broadcast %cst_166 : f32 to vector<16x16xf32>
    %649 = arith.select %644, %647, %648 : vector<16x16xi1>, vector<16x16xf32>
    %650 = arith.addf %642, %649 : vector<16x16xf32>
    %c12_i32_167 = arith.constant 12 : i32
    %651 = vector.broadcast %c12_i32_167 : i32 to vector<16x16xi32>
    %652 = arith.cmpi eq, %1, %651 : vector<16x16xi32>
    %653 = vector.extract_strided_slice %552 {offsets = [0, 12], sizes = [16, 1], strides = [1, 1]} : vector<16x128xf32> to vector<16x1xf32>
    %cst_168 = arith.constant 0.000000e+00 : f32
    %654 = vector.shape_cast %653 : vector<16x1xf32> to vector<16x1xf32>
    %655 = vector.broadcast %654 : vector<16x1xf32> to vector<16x16xf32>
    %656 = vector.broadcast %cst_168 : f32 to vector<16x16xf32>
    %657 = arith.select %652, %655, %656 : vector<16x16xi1>, vector<16x16xf32>
    %658 = arith.addf %650, %657 : vector<16x16xf32>
    %c13_i32_169 = arith.constant 13 : i32
    %659 = vector.broadcast %c13_i32_169 : i32 to vector<16x16xi32>
    %660 = arith.cmpi eq, %1, %659 : vector<16x16xi32>
    %661 = vector.extract_strided_slice %552 {offsets = [0, 13], sizes = [16, 1], strides = [1, 1]} : vector<16x128xf32> to vector<16x1xf32>
    %cst_170 = arith.constant 0.000000e+00 : f32
    %662 = vector.shape_cast %661 : vector<16x1xf32> to vector<16x1xf32>
    %663 = vector.broadcast %662 : vector<16x1xf32> to vector<16x16xf32>
    %664 = vector.broadcast %cst_170 : f32 to vector<16x16xf32>
    %665 = arith.select %660, %663, %664 : vector<16x16xi1>, vector<16x16xf32>
    %666 = arith.addf %658, %665 : vector<16x16xf32>
    %c14_i32_171 = arith.constant 14 : i32
    %667 = vector.broadcast %c14_i32_171 : i32 to vector<16x16xi32>
    %668 = arith.cmpi eq, %1, %667 : vector<16x16xi32>
    %669 = vector.extract_strided_slice %552 {offsets = [0, 14], sizes = [16, 1], strides = [1, 1]} : vector<16x128xf32> to vector<16x1xf32>
    %cst_172 = arith.constant 0.000000e+00 : f32
    %670 = vector.shape_cast %669 : vector<16x1xf32> to vector<16x1xf32>
    %671 = vector.broadcast %670 : vector<16x1xf32> to vector<16x16xf32>
    %672 = vector.broadcast %cst_172 : f32 to vector<16x16xf32>
    %673 = arith.select %668, %671, %672 : vector<16x16xi1>, vector<16x16xf32>
    %674 = arith.addf %666, %673 : vector<16x16xf32>
    %675 = arith.addf %551, %674 : vector<16x16xf32>
    %cst_173 = arith.constant 0.000000e+00 : f32
    %676 = vector.broadcast %cst_173 : f32 to vector<16x16xf32>
    %c0_i32_174 = arith.constant 0 : i32
    %677 = vector.broadcast %c0_i32_174 : i32 to vector<16x16xi32>
    %678 = arith.cmpi eq, %1, %677 : vector<16x16xi32>
    %679 = vector.extract_strided_slice %553 {offsets = [0, 0], sizes = [1, 16], strides = [1, 1]} : vector<128x16xf32> to vector<1x16xf32>
    %cst_175 = arith.constant 0.000000e+00 : f32
    %680 = vector.shape_cast %679 : vector<1x16xf32> to vector<1x16xf32>
    %681 = vector.broadcast %680 : vector<1x16xf32> to vector<16x16xf32>
    %682 = vector.broadcast %cst_175 : f32 to vector<16x16xf32>
    %683 = arith.select %678, %681, %682 : vector<16x16xi1>, vector<16x16xf32>
    %684 = arith.addf %676, %683 : vector<16x16xf32>
    %c1_i32_176 = arith.constant 1 : i32
    %685 = vector.broadcast %c1_i32_176 : i32 to vector<16x16xi32>
    %686 = arith.cmpi eq, %1, %685 : vector<16x16xi32>
    %687 = vector.extract_strided_slice %553 {offsets = [1, 0], sizes = [1, 16], strides = [1, 1]} : vector<128x16xf32> to vector<1x16xf32>
    %cst_177 = arith.constant 0.000000e+00 : f32
    %688 = vector.shape_cast %687 : vector<1x16xf32> to vector<1x16xf32>
    %689 = vector.broadcast %688 : vector<1x16xf32> to vector<16x16xf32>
    %690 = vector.broadcast %cst_177 : f32 to vector<16x16xf32>
    %691 = arith.select %686, %689, %690 : vector<16x16xi1>, vector<16x16xf32>
    %692 = arith.addf %684, %691 : vector<16x16xf32>
    %c2_i32_178 = arith.constant 2 : i32
    %693 = vector.broadcast %c2_i32_178 : i32 to vector<16x16xi32>
    %694 = arith.cmpi eq, %1, %693 : vector<16x16xi32>
    %695 = vector.extract_strided_slice %553 {offsets = [2, 0], sizes = [1, 16], strides = [1, 1]} : vector<128x16xf32> to vector<1x16xf32>
    %cst_179 = arith.constant 0.000000e+00 : f32
    %696 = vector.shape_cast %695 : vector<1x16xf32> to vector<1x16xf32>
    %697 = vector.broadcast %696 : vector<1x16xf32> to vector<16x16xf32>
    %698 = vector.broadcast %cst_179 : f32 to vector<16x16xf32>
    %699 = arith.select %694, %697, %698 : vector<16x16xi1>, vector<16x16xf32>
    %700 = arith.addf %692, %699 : vector<16x16xf32>
    %c3_i32_180 = arith.constant 3 : i32
    %701 = vector.broadcast %c3_i32_180 : i32 to vector<16x16xi32>
    %702 = arith.cmpi eq, %1, %701 : vector<16x16xi32>
    %703 = vector.extract_strided_slice %553 {offsets = [3, 0], sizes = [1, 16], strides = [1, 1]} : vector<128x16xf32> to vector<1x16xf32>
    %cst_181 = arith.constant 0.000000e+00 : f32
    %704 = vector.shape_cast %703 : vector<1x16xf32> to vector<1x16xf32>
    %705 = vector.broadcast %704 : vector<1x16xf32> to vector<16x16xf32>
    %706 = vector.broadcast %cst_181 : f32 to vector<16x16xf32>
    %707 = arith.select %702, %705, %706 : vector<16x16xi1>, vector<16x16xf32>
    %708 = arith.addf %700, %707 : vector<16x16xf32>
    %c4_i32_182 = arith.constant 4 : i32
    %709 = vector.broadcast %c4_i32_182 : i32 to vector<16x16xi32>
    %710 = arith.cmpi eq, %1, %709 : vector<16x16xi32>
    %711 = vector.extract_strided_slice %553 {offsets = [4, 0], sizes = [1, 16], strides = [1, 1]} : vector<128x16xf32> to vector<1x16xf32>
    %cst_183 = arith.constant 0.000000e+00 : f32
    %712 = vector.shape_cast %711 : vector<1x16xf32> to vector<1x16xf32>
    %713 = vector.broadcast %712 : vector<1x16xf32> to vector<16x16xf32>
    %714 = vector.broadcast %cst_183 : f32 to vector<16x16xf32>
    %715 = arith.select %710, %713, %714 : vector<16x16xi1>, vector<16x16xf32>
    %716 = arith.addf %708, %715 : vector<16x16xf32>
    %c5_i32_184 = arith.constant 5 : i32
    %717 = vector.broadcast %c5_i32_184 : i32 to vector<16x16xi32>
    %718 = arith.cmpi eq, %1, %717 : vector<16x16xi32>
    %719 = vector.extract_strided_slice %553 {offsets = [5, 0], sizes = [1, 16], strides = [1, 1]} : vector<128x16xf32> to vector<1x16xf32>
    %cst_185 = arith.constant 0.000000e+00 : f32
    %720 = vector.shape_cast %719 : vector<1x16xf32> to vector<1x16xf32>
    %721 = vector.broadcast %720 : vector<1x16xf32> to vector<16x16xf32>
    %722 = vector.broadcast %cst_185 : f32 to vector<16x16xf32>
    %723 = arith.select %718, %721, %722 : vector<16x16xi1>, vector<16x16xf32>
    %724 = arith.addf %716, %723 : vector<16x16xf32>
    %c6_i32_186 = arith.constant 6 : i32
    %725 = vector.broadcast %c6_i32_186 : i32 to vector<16x16xi32>
    %726 = arith.cmpi eq, %1, %725 : vector<16x16xi32>
    %727 = vector.extract_strided_slice %553 {offsets = [6, 0], sizes = [1, 16], strides = [1, 1]} : vector<128x16xf32> to vector<1x16xf32>
    %cst_187 = arith.constant 0.000000e+00 : f32
    %728 = vector.shape_cast %727 : vector<1x16xf32> to vector<1x16xf32>
    %729 = vector.broadcast %728 : vector<1x16xf32> to vector<16x16xf32>
    %730 = vector.broadcast %cst_187 : f32 to vector<16x16xf32>
    %731 = arith.select %726, %729, %730 : vector<16x16xi1>, vector<16x16xf32>
    %732 = arith.addf %724, %731 : vector<16x16xf32>
    %c7_i32_188 = arith.constant 7 : i32
    %733 = vector.broadcast %c7_i32_188 : i32 to vector<16x16xi32>
    %734 = arith.cmpi eq, %1, %733 : vector<16x16xi32>
    %735 = vector.extract_strided_slice %553 {offsets = [7, 0], sizes = [1, 16], strides = [1, 1]} : vector<128x16xf32> to vector<1x16xf32>
    %cst_189 = arith.constant 0.000000e+00 : f32
    %736 = vector.shape_cast %735 : vector<1x16xf32> to vector<1x16xf32>
    %737 = vector.broadcast %736 : vector<1x16xf32> to vector<16x16xf32>
    %738 = vector.broadcast %cst_189 : f32 to vector<16x16xf32>
    %739 = arith.select %734, %737, %738 : vector<16x16xi1>, vector<16x16xf32>
    %740 = arith.addf %732, %739 : vector<16x16xf32>
    %c8_i32_190 = arith.constant 8 : i32
    %741 = vector.broadcast %c8_i32_190 : i32 to vector<16x16xi32>
    %742 = arith.cmpi eq, %1, %741 : vector<16x16xi32>
    %743 = vector.extract_strided_slice %553 {offsets = [8, 0], sizes = [1, 16], strides = [1, 1]} : vector<128x16xf32> to vector<1x16xf32>
    %cst_191 = arith.constant 0.000000e+00 : f32
    %744 = vector.shape_cast %743 : vector<1x16xf32> to vector<1x16xf32>
    %745 = vector.broadcast %744 : vector<1x16xf32> to vector<16x16xf32>
    %746 = vector.broadcast %cst_191 : f32 to vector<16x16xf32>
    %747 = arith.select %742, %745, %746 : vector<16x16xi1>, vector<16x16xf32>
    %748 = arith.addf %740, %747 : vector<16x16xf32>
    %c9_i32_192 = arith.constant 9 : i32
    %749 = vector.broadcast %c9_i32_192 : i32 to vector<16x16xi32>
    %750 = arith.cmpi eq, %1, %749 : vector<16x16xi32>
    %751 = vector.extract_strided_slice %553 {offsets = [9, 0], sizes = [1, 16], strides = [1, 1]} : vector<128x16xf32> to vector<1x16xf32>
    %cst_193 = arith.constant 0.000000e+00 : f32
    %752 = vector.shape_cast %751 : vector<1x16xf32> to vector<1x16xf32>
    %753 = vector.broadcast %752 : vector<1x16xf32> to vector<16x16xf32>
    %754 = vector.broadcast %cst_193 : f32 to vector<16x16xf32>
    %755 = arith.select %750, %753, %754 : vector<16x16xi1>, vector<16x16xf32>
    %756 = arith.addf %748, %755 : vector<16x16xf32>
    %c10_i32_194 = arith.constant 10 : i32
    %757 = vector.broadcast %c10_i32_194 : i32 to vector<16x16xi32>
    %758 = arith.cmpi eq, %1, %757 : vector<16x16xi32>
    %759 = vector.extract_strided_slice %553 {offsets = [10, 0], sizes = [1, 16], strides = [1, 1]} : vector<128x16xf32> to vector<1x16xf32>
    %cst_195 = arith.constant 0.000000e+00 : f32
    %760 = vector.shape_cast %759 : vector<1x16xf32> to vector<1x16xf32>
    %761 = vector.broadcast %760 : vector<1x16xf32> to vector<16x16xf32>
    %762 = vector.broadcast %cst_195 : f32 to vector<16x16xf32>
    %763 = arith.select %758, %761, %762 : vector<16x16xi1>, vector<16x16xf32>
    %764 = arith.addf %756, %763 : vector<16x16xf32>
    %c11_i32_196 = arith.constant 11 : i32
    %765 = vector.broadcast %c11_i32_196 : i32 to vector<16x16xi32>
    %766 = arith.cmpi eq, %1, %765 : vector<16x16xi32>
    %767 = vector.extract_strided_slice %553 {offsets = [11, 0], sizes = [1, 16], strides = [1, 1]} : vector<128x16xf32> to vector<1x16xf32>
    %cst_197 = arith.constant 0.000000e+00 : f32
    %768 = vector.shape_cast %767 : vector<1x16xf32> to vector<1x16xf32>
    %769 = vector.broadcast %768 : vector<1x16xf32> to vector<16x16xf32>
    %770 = vector.broadcast %cst_197 : f32 to vector<16x16xf32>
    %771 = arith.select %766, %769, %770 : vector<16x16xi1>, vector<16x16xf32>
    %772 = arith.addf %764, %771 : vector<16x16xf32>
    %c12_i32_198 = arith.constant 12 : i32
    %773 = vector.broadcast %c12_i32_198 : i32 to vector<16x16xi32>
    %774 = arith.cmpi eq, %1, %773 : vector<16x16xi32>
    %775 = vector.extract_strided_slice %553 {offsets = [12, 0], sizes = [1, 16], strides = [1, 1]} : vector<128x16xf32> to vector<1x16xf32>
    %cst_199 = arith.constant 0.000000e+00 : f32
    %776 = vector.shape_cast %775 : vector<1x16xf32> to vector<1x16xf32>
    %777 = vector.broadcast %776 : vector<1x16xf32> to vector<16x16xf32>
    %778 = vector.broadcast %cst_199 : f32 to vector<16x16xf32>
    %779 = arith.select %774, %777, %778 : vector<16x16xi1>, vector<16x16xf32>
    %780 = arith.addf %772, %779 : vector<16x16xf32>
    %c13_i32_200 = arith.constant 13 : i32
    %781 = vector.broadcast %c13_i32_200 : i32 to vector<16x16xi32>
    %782 = arith.cmpi eq, %1, %781 : vector<16x16xi32>
    %783 = vector.extract_strided_slice %553 {offsets = [13, 0], sizes = [1, 16], strides = [1, 1]} : vector<128x16xf32> to vector<1x16xf32>
    %cst_201 = arith.constant 0.000000e+00 : f32
    %784 = vector.shape_cast %783 : vector<1x16xf32> to vector<1x16xf32>
    %785 = vector.broadcast %784 : vector<1x16xf32> to vector<16x16xf32>
    %786 = vector.broadcast %cst_201 : f32 to vector<16x16xf32>
    %787 = arith.select %782, %785, %786 : vector<16x16xi1>, vector<16x16xf32>
    %788 = arith.addf %780, %787 : vector<16x16xf32>
    %c14_i32_202 = arith.constant 14 : i32
    %789 = vector.broadcast %c14_i32_202 : i32 to vector<16x16xi32>
    %790 = arith.cmpi eq, %1, %789 : vector<16x16xi32>
    %791 = vector.extract_strided_slice %553 {offsets = [14, 0], sizes = [1, 16], strides = [1, 1]} : vector<128x16xf32> to vector<1x16xf32>
    %cst_203 = arith.constant 0.000000e+00 : f32
    %792 = vector.shape_cast %791 : vector<1x16xf32> to vector<1x16xf32>
    %793 = vector.broadcast %792 : vector<1x16xf32> to vector<16x16xf32>
    %794 = vector.broadcast %cst_203 : f32 to vector<16x16xf32>
    %795 = arith.select %790, %793, %794 : vector<16x16xi1>, vector<16x16xf32>
    %796 = arith.addf %788, %795 : vector<16x16xf32>
    %797 = arith.addf %675, %796 : vector<16x16xf32>
    %cst_204 = arith.constant -1.000000e+30 : f32
    %798 = vector.shape_cast %5 : vector<1x16xi1> to vector<1x16xi1>
    %799 = vector.broadcast %798 : vector<1x16xi1> to vector<16x16xi1>
    %800 = vector.broadcast %cst_204 : f32 to vector<16x16xf32>
    %801 = arith.select %799, %800, %797 : vector<16x16xi1>, vector<16x16xf32>
    %cst_205 = arith.constant dense<0xFF800000> : vector<16xf32>
    %802 = vector.multi_reduction <maximumf>, %801, %cst_205 [1] : vector<16x16xf32> to vector<16xf32>
    %803 = vector.shape_cast %802 : vector<16xf32> to vector<16x1xf32>
    %804 = vector.broadcast %803 : vector<16x1xf32> to vector<16x16xf32>
    %805 = arith.subf %801, %804 : vector<16x16xf32>
    %806 = math.exp %805 : vector<16x16xf32>
    %cst_206 = arith.constant dense<0.000000e+00> : vector<16xf32>
    %807 = vector.multi_reduction <add>, %806, %cst_206 [1] : vector<16x16xf32> to vector<16xf32>
    %808 = vector.shape_cast %807 : vector<16xf32> to vector<16x1xf32>
    %809 = vector.broadcast %808 : vector<16x1xf32> to vector<16x16xf32>
    %810 = arith.divf %806, %809 : vector<16x16xf32>
    %cst_207 = arith.constant dense<0.000000e+00> : vector<16x16xf32>
    %811 = tpu.matmul %810, %548, %cst_207 {dimension_numbers = #tpu.dot_dimension_numbers<[1], [0], [0], [1], [0, 0, 1, 1], [], []>} : vector<16x16xf32>, vector<16x16xf32>, vector<16x16xf32> -> vector<16x16xf32>
    %812 = vector.extract_strided_slice %7 {offsets = [0, 48], sizes = [16, 16], strides = [1, 1]} : vector<16x64xf32> to vector<16x16xf32>
    %813 = vector.extract_strided_slice %9 {offsets = [0, 48], sizes = [16, 16], strides = [1, 1]} : vector<16x64xf32> to vector<16x16xf32>
    %814 = vector.extract_strided_slice %11 {offsets = [0, 48], sizes = [16, 16], strides = [1, 1]} : vector<16x64xf32> to vector<16x16xf32>
    %815 = vector.extract_strided_slice %12 {offsets = [0, 48], sizes = [128, 16], strides = [1, 1]} : vector<128x64xf32> to vector<128x16xf32>
    %816 = vector.extract_strided_slice %13 {offsets = [0, 48], sizes = [128, 16], strides = [1, 1]} : vector<128x64xf32> to vector<128x16xf32>
    %cst_208 = arith.constant dense<0.000000e+00> : vector<16x16xf32>
    %817 = tpu.matmul %812, %813, %cst_208 {dimension_numbers = #tpu.dot_dimension_numbers<[1], [1], [0], [0], [0, 0, 1, 0], [], []>} : vector<16x16xf32>, vector<16x16xf32>, vector<16x16xf32> -> vector<16x16xf32>
    %cst_209 = arith.constant dense<0.000000e+00> : vector<16x128xf32>
    %818 = tpu.matmul %812, %815, %cst_209 {dimension_numbers = #tpu.dot_dimension_numbers<[1], [1], [0], [0], [0, 0, 1, 0], [], []>} : vector<16x16xf32>, vector<128x16xf32>, vector<16x128xf32> -> vector<16x128xf32>
    %cst_210 = arith.constant dense<0.000000e+00> : vector<128x16xf32>
    %819 = tpu.matmul %816, %813, %cst_210 {dimension_numbers = #tpu.dot_dimension_numbers<[1], [1], [0], [0], [0, 0, 1, 0], [], []>} : vector<128x16xf32>, vector<16x16xf32>, vector<128x16xf32> -> vector<128x16xf32>
    %cst_211 = arith.constant 0.000000e+00 : f32
    %820 = vector.broadcast %cst_211 : f32 to vector<16x16xf32>
    %c0_i32_212 = arith.constant 0 : i32
    %821 = vector.broadcast %c0_i32_212 : i32 to vector<16x16xi32>
    %822 = arith.cmpi eq, %1, %821 : vector<16x16xi32>
    %823 = vector.extract_strided_slice %818 {offsets = [0, 0], sizes = [16, 1], strides = [1, 1]} : vector<16x128xf32> to vector<16x1xf32>
    %cst_213 = arith.constant 0.000000e+00 : f32
    %824 = vector.shape_cast %823 : vector<16x1xf32> to vector<16x1xf32>
    %825 = vector.broadcast %824 : vector<16x1xf32> to vector<16x16xf32>
    %826 = vector.broadcast %cst_213 : f32 to vector<16x16xf32>
    %827 = arith.select %822, %825, %826 : vector<16x16xi1>, vector<16x16xf32>
    %828 = arith.addf %820, %827 : vector<16x16xf32>
    %c1_i32_214 = arith.constant 1 : i32
    %829 = vector.broadcast %c1_i32_214 : i32 to vector<16x16xi32>
    %830 = arith.cmpi eq, %1, %829 : vector<16x16xi32>
    %831 = vector.extract_strided_slice %818 {offsets = [0, 1], sizes = [16, 1], strides = [1, 1]} : vector<16x128xf32> to vector<16x1xf32>
    %cst_215 = arith.constant 0.000000e+00 : f32
    %832 = vector.shape_cast %831 : vector<16x1xf32> to vector<16x1xf32>
    %833 = vector.broadcast %832 : vector<16x1xf32> to vector<16x16xf32>
    %834 = vector.broadcast %cst_215 : f32 to vector<16x16xf32>
    %835 = arith.select %830, %833, %834 : vector<16x16xi1>, vector<16x16xf32>
    %836 = arith.addf %828, %835 : vector<16x16xf32>
    %c2_i32_216 = arith.constant 2 : i32
    %837 = vector.broadcast %c2_i32_216 : i32 to vector<16x16xi32>
    %838 = arith.cmpi eq, %1, %837 : vector<16x16xi32>
    %839 = vector.extract_strided_slice %818 {offsets = [0, 2], sizes = [16, 1], strides = [1, 1]} : vector<16x128xf32> to vector<16x1xf32>
    %cst_217 = arith.constant 0.000000e+00 : f32
    %840 = vector.shape_cast %839 : vector<16x1xf32> to vector<16x1xf32>
    %841 = vector.broadcast %840 : vector<16x1xf32> to vector<16x16xf32>
    %842 = vector.broadcast %cst_217 : f32 to vector<16x16xf32>
    %843 = arith.select %838, %841, %842 : vector<16x16xi1>, vector<16x16xf32>
    %844 = arith.addf %836, %843 : vector<16x16xf32>
    %c3_i32_218 = arith.constant 3 : i32
    %845 = vector.broadcast %c3_i32_218 : i32 to vector<16x16xi32>
    %846 = arith.cmpi eq, %1, %845 : vector<16x16xi32>
    %847 = vector.extract_strided_slice %818 {offsets = [0, 3], sizes = [16, 1], strides = [1, 1]} : vector<16x128xf32> to vector<16x1xf32>
    %cst_219 = arith.constant 0.000000e+00 : f32
    %848 = vector.shape_cast %847 : vector<16x1xf32> to vector<16x1xf32>
    %849 = vector.broadcast %848 : vector<16x1xf32> to vector<16x16xf32>
    %850 = vector.broadcast %cst_219 : f32 to vector<16x16xf32>
    %851 = arith.select %846, %849, %850 : vector<16x16xi1>, vector<16x16xf32>
    %852 = arith.addf %844, %851 : vector<16x16xf32>
    %c4_i32_220 = arith.constant 4 : i32
    %853 = vector.broadcast %c4_i32_220 : i32 to vector<16x16xi32>
    %854 = arith.cmpi eq, %1, %853 : vector<16x16xi32>
    %855 = vector.extract_strided_slice %818 {offsets = [0, 4], sizes = [16, 1], strides = [1, 1]} : vector<16x128xf32> to vector<16x1xf32>
    %cst_221 = arith.constant 0.000000e+00 : f32
    %856 = vector.shape_cast %855 : vector<16x1xf32> to vector<16x1xf32>
    %857 = vector.broadcast %856 : vector<16x1xf32> to vector<16x16xf32>
    %858 = vector.broadcast %cst_221 : f32 to vector<16x16xf32>
    %859 = arith.select %854, %857, %858 : vector<16x16xi1>, vector<16x16xf32>
    %860 = arith.addf %852, %859 : vector<16x16xf32>
    %c5_i32_222 = arith.constant 5 : i32
    %861 = vector.broadcast %c5_i32_222 : i32 to vector<16x16xi32>
    %862 = arith.cmpi eq, %1, %861 : vector<16x16xi32>
    %863 = vector.extract_strided_slice %818 {offsets = [0, 5], sizes = [16, 1], strides = [1, 1]} : vector<16x128xf32> to vector<16x1xf32>
    %cst_223 = arith.constant 0.000000e+00 : f32
    %864 = vector.shape_cast %863 : vector<16x1xf32> to vector<16x1xf32>
    %865 = vector.broadcast %864 : vector<16x1xf32> to vector<16x16xf32>
    %866 = vector.broadcast %cst_223 : f32 to vector<16x16xf32>
    %867 = arith.select %862, %865, %866 : vector<16x16xi1>, vector<16x16xf32>
    %868 = arith.addf %860, %867 : vector<16x16xf32>
    %c6_i32_224 = arith.constant 6 : i32
    %869 = vector.broadcast %c6_i32_224 : i32 to vector<16x16xi32>
    %870 = arith.cmpi eq, %1, %869 : vector<16x16xi32>
    %871 = vector.extract_strided_slice %818 {offsets = [0, 6], sizes = [16, 1], strides = [1, 1]} : vector<16x128xf32> to vector<16x1xf32>
    %cst_225 = arith.constant 0.000000e+00 : f32
    %872 = vector.shape_cast %871 : vector<16x1xf32> to vector<16x1xf32>
    %873 = vector.broadcast %872 : vector<16x1xf32> to vector<16x16xf32>
    %874 = vector.broadcast %cst_225 : f32 to vector<16x16xf32>
    %875 = arith.select %870, %873, %874 : vector<16x16xi1>, vector<16x16xf32>
    %876 = arith.addf %868, %875 : vector<16x16xf32>
    %c7_i32_226 = arith.constant 7 : i32
    %877 = vector.broadcast %c7_i32_226 : i32 to vector<16x16xi32>
    %878 = arith.cmpi eq, %1, %877 : vector<16x16xi32>
    %879 = vector.extract_strided_slice %818 {offsets = [0, 7], sizes = [16, 1], strides = [1, 1]} : vector<16x128xf32> to vector<16x1xf32>
    %cst_227 = arith.constant 0.000000e+00 : f32
    %880 = vector.shape_cast %879 : vector<16x1xf32> to vector<16x1xf32>
    %881 = vector.broadcast %880 : vector<16x1xf32> to vector<16x16xf32>
    %882 = vector.broadcast %cst_227 : f32 to vector<16x16xf32>
    %883 = arith.select %878, %881, %882 : vector<16x16xi1>, vector<16x16xf32>
    %884 = arith.addf %876, %883 : vector<16x16xf32>
    %c8_i32_228 = arith.constant 8 : i32
    %885 = vector.broadcast %c8_i32_228 : i32 to vector<16x16xi32>
    %886 = arith.cmpi eq, %1, %885 : vector<16x16xi32>
    %887 = vector.extract_strided_slice %818 {offsets = [0, 8], sizes = [16, 1], strides = [1, 1]} : vector<16x128xf32> to vector<16x1xf32>
    %cst_229 = arith.constant 0.000000e+00 : f32
    %888 = vector.shape_cast %887 : vector<16x1xf32> to vector<16x1xf32>
    %889 = vector.broadcast %888 : vector<16x1xf32> to vector<16x16xf32>
    %890 = vector.broadcast %cst_229 : f32 to vector<16x16xf32>
    %891 = arith.select %886, %889, %890 : vector<16x16xi1>, vector<16x16xf32>
    %892 = arith.addf %884, %891 : vector<16x16xf32>
    %c9_i32_230 = arith.constant 9 : i32
    %893 = vector.broadcast %c9_i32_230 : i32 to vector<16x16xi32>
    %894 = arith.cmpi eq, %1, %893 : vector<16x16xi32>
    %895 = vector.extract_strided_slice %818 {offsets = [0, 9], sizes = [16, 1], strides = [1, 1]} : vector<16x128xf32> to vector<16x1xf32>
    %cst_231 = arith.constant 0.000000e+00 : f32
    %896 = vector.shape_cast %895 : vector<16x1xf32> to vector<16x1xf32>
    %897 = vector.broadcast %896 : vector<16x1xf32> to vector<16x16xf32>
    %898 = vector.broadcast %cst_231 : f32 to vector<16x16xf32>
    %899 = arith.select %894, %897, %898 : vector<16x16xi1>, vector<16x16xf32>
    %900 = arith.addf %892, %899 : vector<16x16xf32>
    %c10_i32_232 = arith.constant 10 : i32
    %901 = vector.broadcast %c10_i32_232 : i32 to vector<16x16xi32>
    %902 = arith.cmpi eq, %1, %901 : vector<16x16xi32>
    %903 = vector.extract_strided_slice %818 {offsets = [0, 10], sizes = [16, 1], strides = [1, 1]} : vector<16x128xf32> to vector<16x1xf32>
    %cst_233 = arith.constant 0.000000e+00 : f32
    %904 = vector.shape_cast %903 : vector<16x1xf32> to vector<16x1xf32>
    %905 = vector.broadcast %904 : vector<16x1xf32> to vector<16x16xf32>
    %906 = vector.broadcast %cst_233 : f32 to vector<16x16xf32>
    %907 = arith.select %902, %905, %906 : vector<16x16xi1>, vector<16x16xf32>
    %908 = arith.addf %900, %907 : vector<16x16xf32>
    %c11_i32_234 = arith.constant 11 : i32
    %909 = vector.broadcast %c11_i32_234 : i32 to vector<16x16xi32>
    %910 = arith.cmpi eq, %1, %909 : vector<16x16xi32>
    %911 = vector.extract_strided_slice %818 {offsets = [0, 11], sizes = [16, 1], strides = [1, 1]} : vector<16x128xf32> to vector<16x1xf32>
    %cst_235 = arith.constant 0.000000e+00 : f32
    %912 = vector.shape_cast %911 : vector<16x1xf32> to vector<16x1xf32>
    %913 = vector.broadcast %912 : vector<16x1xf32> to vector<16x16xf32>
    %914 = vector.broadcast %cst_235 : f32 to vector<16x16xf32>
    %915 = arith.select %910, %913, %914 : vector<16x16xi1>, vector<16x16xf32>
    %916 = arith.addf %908, %915 : vector<16x16xf32>
    %c12_i32_236 = arith.constant 12 : i32
    %917 = vector.broadcast %c12_i32_236 : i32 to vector<16x16xi32>
    %918 = arith.cmpi eq, %1, %917 : vector<16x16xi32>
    %919 = vector.extract_strided_slice %818 {offsets = [0, 12], sizes = [16, 1], strides = [1, 1]} : vector<16x128xf32> to vector<16x1xf32>
    %cst_237 = arith.constant 0.000000e+00 : f32
    %920 = vector.shape_cast %919 : vector<16x1xf32> to vector<16x1xf32>
    %921 = vector.broadcast %920 : vector<16x1xf32> to vector<16x16xf32>
    %922 = vector.broadcast %cst_237 : f32 to vector<16x16xf32>
    %923 = arith.select %918, %921, %922 : vector<16x16xi1>, vector<16x16xf32>
    %924 = arith.addf %916, %923 : vector<16x16xf32>
    %c13_i32_238 = arith.constant 13 : i32
    %925 = vector.broadcast %c13_i32_238 : i32 to vector<16x16xi32>
    %926 = arith.cmpi eq, %1, %925 : vector<16x16xi32>
    %927 = vector.extract_strided_slice %818 {offsets = [0, 13], sizes = [16, 1], strides = [1, 1]} : vector<16x128xf32> to vector<16x1xf32>
    %cst_239 = arith.constant 0.000000e+00 : f32
    %928 = vector.shape_cast %927 : vector<16x1xf32> to vector<16x1xf32>
    %929 = vector.broadcast %928 : vector<16x1xf32> to vector<16x16xf32>
    %930 = vector.broadcast %cst_239 : f32 to vector<16x16xf32>
    %931 = arith.select %926, %929, %930 : vector<16x16xi1>, vector<16x16xf32>
    %932 = arith.addf %924, %931 : vector<16x16xf32>
    %c14_i32_240 = arith.constant 14 : i32
    %933 = vector.broadcast %c14_i32_240 : i32 to vector<16x16xi32>
    %934 = arith.cmpi eq, %1, %933 : vector<16x16xi32>
    %935 = vector.extract_strided_slice %818 {offsets = [0, 14], sizes = [16, 1], strides = [1, 1]} : vector<16x128xf32> to vector<16x1xf32>
    %cst_241 = arith.constant 0.000000e+00 : f32
    %936 = vector.shape_cast %935 : vector<16x1xf32> to vector<16x1xf32>
    %937 = vector.broadcast %936 : vector<16x1xf32> to vector<16x16xf32>
    %938 = vector.broadcast %cst_241 : f32 to vector<16x16xf32>
    %939 = arith.select %934, %937, %938 : vector<16x16xi1>, vector<16x16xf32>
    %940 = arith.addf %932, %939 : vector<16x16xf32>
    %941 = arith.addf %817, %940 : vector<16x16xf32>
    %cst_242 = arith.constant 0.000000e+00 : f32
    %942 = vector.broadcast %cst_242 : f32 to vector<16x16xf32>
    %c0_i32_243 = arith.constant 0 : i32
    %943 = vector.broadcast %c0_i32_243 : i32 to vector<16x16xi32>
    %944 = arith.cmpi eq, %1, %943 : vector<16x16xi32>
    %945 = vector.extract_strided_slice %819 {offsets = [0, 0], sizes = [1, 16], strides = [1, 1]} : vector<128x16xf32> to vector<1x16xf32>
    %cst_244 = arith.constant 0.000000e+00 : f32
    %946 = vector.shape_cast %945 : vector<1x16xf32> to vector<1x16xf32>
    %947 = vector.broadcast %946 : vector<1x16xf32> to vector<16x16xf32>
    %948 = vector.broadcast %cst_244 : f32 to vector<16x16xf32>
    %949 = arith.select %944, %947, %948 : vector<16x16xi1>, vector<16x16xf32>
    %950 = arith.addf %942, %949 : vector<16x16xf32>
    %c1_i32_245 = arith.constant 1 : i32
    %951 = vector.broadcast %c1_i32_245 : i32 to vector<16x16xi32>
    %952 = arith.cmpi eq, %1, %951 : vector<16x16xi32>
    %953 = vector.extract_strided_slice %819 {offsets = [1, 0], sizes = [1, 16], strides = [1, 1]} : vector<128x16xf32> to vector<1x16xf32>
    %cst_246 = arith.constant 0.000000e+00 : f32
    %954 = vector.shape_cast %953 : vector<1x16xf32> to vector<1x16xf32>
    %955 = vector.broadcast %954 : vector<1x16xf32> to vector<16x16xf32>
    %956 = vector.broadcast %cst_246 : f32 to vector<16x16xf32>
    %957 = arith.select %952, %955, %956 : vector<16x16xi1>, vector<16x16xf32>
    %958 = arith.addf %950, %957 : vector<16x16xf32>
    %c2_i32_247 = arith.constant 2 : i32
    %959 = vector.broadcast %c2_i32_247 : i32 to vector<16x16xi32>
    %960 = arith.cmpi eq, %1, %959 : vector<16x16xi32>
    %961 = vector.extract_strided_slice %819 {offsets = [2, 0], sizes = [1, 16], strides = [1, 1]} : vector<128x16xf32> to vector<1x16xf32>
    %cst_248 = arith.constant 0.000000e+00 : f32
    %962 = vector.shape_cast %961 : vector<1x16xf32> to vector<1x16xf32>
    %963 = vector.broadcast %962 : vector<1x16xf32> to vector<16x16xf32>
    %964 = vector.broadcast %cst_248 : f32 to vector<16x16xf32>
    %965 = arith.select %960, %963, %964 : vector<16x16xi1>, vector<16x16xf32>
    %966 = arith.addf %958, %965 : vector<16x16xf32>
    %c3_i32_249 = arith.constant 3 : i32
    %967 = vector.broadcast %c3_i32_249 : i32 to vector<16x16xi32>
    %968 = arith.cmpi eq, %1, %967 : vector<16x16xi32>
    %969 = vector.extract_strided_slice %819 {offsets = [3, 0], sizes = [1, 16], strides = [1, 1]} : vector<128x16xf32> to vector<1x16xf32>
    %cst_250 = arith.constant 0.000000e+00 : f32
    %970 = vector.shape_cast %969 : vector<1x16xf32> to vector<1x16xf32>
    %971 = vector.broadcast %970 : vector<1x16xf32> to vector<16x16xf32>
    %972 = vector.broadcast %cst_250 : f32 to vector<16x16xf32>
    %973 = arith.select %968, %971, %972 : vector<16x16xi1>, vector<16x16xf32>
    %974 = arith.addf %966, %973 : vector<16x16xf32>
    %c4_i32_251 = arith.constant 4 : i32
    %975 = vector.broadcast %c4_i32_251 : i32 to vector<16x16xi32>
    %976 = arith.cmpi eq, %1, %975 : vector<16x16xi32>
    %977 = vector.extract_strided_slice %819 {offsets = [4, 0], sizes = [1, 16], strides = [1, 1]} : vector<128x16xf32> to vector<1x16xf32>
    %cst_252 = arith.constant 0.000000e+00 : f32
    %978 = vector.shape_cast %977 : vector<1x16xf32> to vector<1x16xf32>
    %979 = vector.broadcast %978 : vector<1x16xf32> to vector<16x16xf32>
    %980 = vector.broadcast %cst_252 : f32 to vector<16x16xf32>
    %981 = arith.select %976, %979, %980 : vector<16x16xi1>, vector<16x16xf32>
    %982 = arith.addf %974, %981 : vector<16x16xf32>
    %c5_i32_253 = arith.constant 5 : i32
    %983 = vector.broadcast %c5_i32_253 : i32 to vector<16x16xi32>
    %984 = arith.cmpi eq, %1, %983 : vector<16x16xi32>
    %985 = vector.extract_strided_slice %819 {offsets = [5, 0], sizes = [1, 16], strides = [1, 1]} : vector<128x16xf32> to vector<1x16xf32>
    %cst_254 = arith.constant 0.000000e+00 : f32
    %986 = vector.shape_cast %985 : vector<1x16xf32> to vector<1x16xf32>
    %987 = vector.broadcast %986 : vector<1x16xf32> to vector<16x16xf32>
    %988 = vector.broadcast %cst_254 : f32 to vector<16x16xf32>
    %989 = arith.select %984, %987, %988 : vector<16x16xi1>, vector<16x16xf32>
    %990 = arith.addf %982, %989 : vector<16x16xf32>
    %c6_i32_255 = arith.constant 6 : i32
    %991 = vector.broadcast %c6_i32_255 : i32 to vector<16x16xi32>
    %992 = arith.cmpi eq, %1, %991 : vector<16x16xi32>
    %993 = vector.extract_strided_slice %819 {offsets = [6, 0], sizes = [1, 16], strides = [1, 1]} : vector<128x16xf32> to vector<1x16xf32>
    %cst_256 = arith.constant 0.000000e+00 : f32
    %994 = vector.shape_cast %993 : vector<1x16xf32> to vector<1x16xf32>
    %995 = vector.broadcast %994 : vector<1x16xf32> to vector<16x16xf32>
    %996 = vector.broadcast %cst_256 : f32 to vector<16x16xf32>
    %997 = arith.select %992, %995, %996 : vector<16x16xi1>, vector<16x16xf32>
    %998 = arith.addf %990, %997 : vector<16x16xf32>
    %c7_i32_257 = arith.constant 7 : i32
    %999 = vector.broadcast %c7_i32_257 : i32 to vector<16x16xi32>
    %1000 = arith.cmpi eq, %1, %999 : vector<16x16xi32>
    %1001 = vector.extract_strided_slice %819 {offsets = [7, 0], sizes = [1, 16], strides = [1, 1]} : vector<128x16xf32> to vector<1x16xf32>
    %cst_258 = arith.constant 0.000000e+00 : f32
    %1002 = vector.shape_cast %1001 : vector<1x16xf32> to vector<1x16xf32>
    %1003 = vector.broadcast %1002 : vector<1x16xf32> to vector<16x16xf32>
    %1004 = vector.broadcast %cst_258 : f32 to vector<16x16xf32>
    %1005 = arith.select %1000, %1003, %1004 : vector<16x16xi1>, vector<16x16xf32>
    %1006 = arith.addf %998, %1005 : vector<16x16xf32>
    %c8_i32_259 = arith.constant 8 : i32
    %1007 = vector.broadcast %c8_i32_259 : i32 to vector<16x16xi32>
    %1008 = arith.cmpi eq, %1, %1007 : vector<16x16xi32>
    %1009 = vector.extract_strided_slice %819 {offsets = [8, 0], sizes = [1, 16], strides = [1, 1]} : vector<128x16xf32> to vector<1x16xf32>
    %cst_260 = arith.constant 0.000000e+00 : f32
    %1010 = vector.shape_cast %1009 : vector<1x16xf32> to vector<1x16xf32>
    %1011 = vector.broadcast %1010 : vector<1x16xf32> to vector<16x16xf32>
    %1012 = vector.broadcast %cst_260 : f32 to vector<16x16xf32>
    %1013 = arith.select %1008, %1011, %1012 : vector<16x16xi1>, vector<16x16xf32>
    %1014 = arith.addf %1006, %1013 : vector<16x16xf32>
    %c9_i32_261 = arith.constant 9 : i32
    %1015 = vector.broadcast %c9_i32_261 : i32 to vector<16x16xi32>
    %1016 = arith.cmpi eq, %1, %1015 : vector<16x16xi32>
    %1017 = vector.extract_strided_slice %819 {offsets = [9, 0], sizes = [1, 16], strides = [1, 1]} : vector<128x16xf32> to vector<1x16xf32>
    %cst_262 = arith.constant 0.000000e+00 : f32
    %1018 = vector.shape_cast %1017 : vector<1x16xf32> to vector<1x16xf32>
    %1019 = vector.broadcast %1018 : vector<1x16xf32> to vector<16x16xf32>
    %1020 = vector.broadcast %cst_262 : f32 to vector<16x16xf32>
    %1021 = arith.select %1016, %1019, %1020 : vector<16x16xi1>, vector<16x16xf32>
    %1022 = arith.addf %1014, %1021 : vector<16x16xf32>
    %c10_i32_263 = arith.constant 10 : i32
    %1023 = vector.broadcast %c10_i32_263 : i32 to vector<16x16xi32>
    %1024 = arith.cmpi eq, %1, %1023 : vector<16x16xi32>
    %1025 = vector.extract_strided_slice %819 {offsets = [10, 0], sizes = [1, 16], strides = [1, 1]} : vector<128x16xf32> to vector<1x16xf32>
    %cst_264 = arith.constant 0.000000e+00 : f32
    %1026 = vector.shape_cast %1025 : vector<1x16xf32> to vector<1x16xf32>
    %1027 = vector.broadcast %1026 : vector<1x16xf32> to vector<16x16xf32>
    %1028 = vector.broadcast %cst_264 : f32 to vector<16x16xf32>
    %1029 = arith.select %1024, %1027, %1028 : vector<16x16xi1>, vector<16x16xf32>
    %1030 = arith.addf %1022, %1029 : vector<16x16xf32>
    %c11_i32_265 = arith.constant 11 : i32
    %1031 = vector.broadcast %c11_i32_265 : i32 to vector<16x16xi32>
    %1032 = arith.cmpi eq, %1, %1031 : vector<16x16xi32>
    %1033 = vector.extract_strided_slice %819 {offsets = [11, 0], sizes = [1, 16], strides = [1, 1]} : vector<128x16xf32> to vector<1x16xf32>
    %cst_266 = arith.constant 0.000000e+00 : f32
    %1034 = vector.shape_cast %1033 : vector<1x16xf32> to vector<1x16xf32>
    %1035 = vector.broadcast %1034 : vector<1x16xf32> to vector<16x16xf32>
    %1036 = vector.broadcast %cst_266 : f32 to vector<16x16xf32>
    %1037 = arith.select %1032, %1035, %1036 : vector<16x16xi1>, vector<16x16xf32>
    %1038 = arith.addf %1030, %1037 : vector<16x16xf32>
    %c12_i32_267 = arith.constant 12 : i32
    %1039 = vector.broadcast %c12_i32_267 : i32 to vector<16x16xi32>
    %1040 = arith.cmpi eq, %1, %1039 : vector<16x16xi32>
    %1041 = vector.extract_strided_slice %819 {offsets = [12, 0], sizes = [1, 16], strides = [1, 1]} : vector<128x16xf32> to vector<1x16xf32>
    %cst_268 = arith.constant 0.000000e+00 : f32
    %1042 = vector.shape_cast %1041 : vector<1x16xf32> to vector<1x16xf32>
    %1043 = vector.broadcast %1042 : vector<1x16xf32> to vector<16x16xf32>
    %1044 = vector.broadcast %cst_268 : f32 to vector<16x16xf32>
    %1045 = arith.select %1040, %1043, %1044 : vector<16x16xi1>, vector<16x16xf32>
    %1046 = arith.addf %1038, %1045 : vector<16x16xf32>
    %c13_i32_269 = arith.constant 13 : i32
    %1047 = vector.broadcast %c13_i32_269 : i32 to vector<16x16xi32>
    %1048 = arith.cmpi eq, %1, %1047 : vector<16x16xi32>
    %1049 = vector.extract_strided_slice %819 {offsets = [13, 0], sizes = [1, 16], strides = [1, 1]} : vector<128x16xf32> to vector<1x16xf32>
    %cst_270 = arith.constant 0.000000e+00 : f32
    %1050 = vector.shape_cast %1049 : vector<1x16xf32> to vector<1x16xf32>
    %1051 = vector.broadcast %1050 : vector<1x16xf32> to vector<16x16xf32>
    %1052 = vector.broadcast %cst_270 : f32 to vector<16x16xf32>
    %1053 = arith.select %1048, %1051, %1052 : vector<16x16xi1>, vector<16x16xf32>
    %1054 = arith.addf %1046, %1053 : vector<16x16xf32>
    %c14_i32_271 = arith.constant 14 : i32
    %1055 = vector.broadcast %c14_i32_271 : i32 to vector<16x16xi32>
    %1056 = arith.cmpi eq, %1, %1055 : vector<16x16xi32>
    %1057 = vector.extract_strided_slice %819 {offsets = [14, 0], sizes = [1, 16], strides = [1, 1]} : vector<128x16xf32> to vector<1x16xf32>
    %cst_272 = arith.constant 0.000000e+00 : f32
    %1058 = vector.shape_cast %1057 : vector<1x16xf32> to vector<1x16xf32>
    %1059 = vector.broadcast %1058 : vector<1x16xf32> to vector<16x16xf32>
    %1060 = vector.broadcast %cst_272 : f32 to vector<16x16xf32>
    %1061 = arith.select %1056, %1059, %1060 : vector<16x16xi1>, vector<16x16xf32>
    %1062 = arith.addf %1054, %1061 : vector<16x16xf32>
    %1063 = arith.addf %941, %1062 : vector<16x16xf32>
    %cst_273 = arith.constant -1.000000e+30 : f32
    %1064 = vector.shape_cast %5 : vector<1x16xi1> to vector<1x16xi1>
    %1065 = vector.broadcast %1064 : vector<1x16xi1> to vector<16x16xi1>
    %1066 = vector.broadcast %cst_273 : f32 to vector<16x16xf32>
    %1067 = arith.select %1065, %1066, %1063 : vector<16x16xi1>, vector<16x16xf32>
    %cst_274 = arith.constant dense<0xFF800000> : vector<16xf32>
    %1068 = vector.multi_reduction <maximumf>, %1067, %cst_274 [1] : vector<16x16xf32> to vector<16xf32>
    %1069 = vector.shape_cast %1068 : vector<16xf32> to vector<16x1xf32>
    %1070 = vector.broadcast %1069 : vector<16x1xf32> to vector<16x16xf32>
    %1071 = arith.subf %1067, %1070 : vector<16x16xf32>
    %1072 = math.exp %1071 : vector<16x16xf32>
    %cst_275 = arith.constant dense<0.000000e+00> : vector<16xf32>
    %1073 = vector.multi_reduction <add>, %1072, %cst_275 [1] : vector<16x16xf32> to vector<16xf32>
    %1074 = vector.shape_cast %1073 : vector<16xf32> to vector<16x1xf32>
    %1075 = vector.broadcast %1074 : vector<16x1xf32> to vector<16x16xf32>
    %1076 = arith.divf %1072, %1075 : vector<16x16xf32>
    %cst_276 = arith.constant dense<0.000000e+00> : vector<16x16xf32>
    %1077 = tpu.matmul %1076, %814, %cst_276 {dimension_numbers = #tpu.dot_dimension_numbers<[1], [0], [0], [1], [0, 0, 1, 1], [], []>} : vector<16x16xf32>, vector<16x16xf32>, vector<16x16xf32> -> vector<16x16xf32>
    %1078 = tpu.concatenate %279, %545, %811, %1077 in 1 : vector<16x16xf32>, vector<16x16xf32>, vector<16x16xf32>, vector<16x16xf32> -> vector<16x64xf32>
    %c0_277 = arith.constant 0 : index
    %c0_278 = arith.constant 0 : index
    %c0_279 = arith.constant 0 : index
    %1079 = vector.load %arg5[%c0_277, %c0_278, %c0_279] : memref<1x16x64xf32, #tpu.memory_space<vmem>>, vector<1x16x64xf32>
    %1080 = vector.shape_cast %1079 : vector<1x16x64xf32> to vector<16x64xf32>
    %1081 = arith.mulf %1078, %1080 : vector<16x64xf32>
    %c0_280 = arith.constant 0 : index
    %c0_281 = arith.constant 0 : index
    %c0_282 = arith.constant 0 : index
    %1082 = vector.load %arg10[%c0_280, %c0_281, %c0_282] : memref<1x16x64xf32, #tpu.memory_space<vmem>>, vector<1x16x64xf32>
    %1083 = vector.shape_cast %1082 : vector<1x16x64xf32> to vector<16x64xf32>
    %1084 = vector.shape_cast %1081 : vector<16x64xf32> to vector<1x16x64xf32>
    tpu.vector_store %arg10[%c0_280, %c0_281, %c0_282], %1084 {strides = array<i32>} : memref<1x16x64xf32, #tpu.memory_space<vmem>>, vector<1x16x64xf32>,
    return
  }
  func.func @transform_0(%arg0: i32, %arg1: i32) -> (i32, i32, i32) {
    %c0_i32 = arith.constant 0 : i32
    %c0_i32_0 = arith.constant 0 : i32
    return %arg0, %c0_i32, %arg1 : i32, i32, i32
  }
  func.func @transform_1(%arg0: i32, %arg1: i32) -> (i32, i32, i32) {
    %c0_i32 = arith.constant 0 : i32
    %c0_i32_0 = arith.constant 0 : i32
    return %arg0, %c0_i32, %arg1 : i32, i32, i32
  }
  func.func @transform_2(%arg0: i32, %arg1: i32) -> (i32, i32, i32) {
    %c0_i32 = arith.constant 0 : i32
    %c0_i32_0 = arith.constant 0 : i32
    return %arg0, %c0_i32, %arg1 : i32, i32, i32
  }
  func.func @transform_3(%arg0: i32, %arg1: i32) -> (i32, i32, i32) {
    %c0_i32 = arith.constant 0 : i32
    %c0_i32_0 = arith.constant 0 : i32
    return %arg0, %c0_i32, %arg1 : i32, i32, i32
  }
  func.func @transform_4(%arg0: i32, %arg1: i32) -> (i32, i32) {
    %c0_i32 = arith.constant 0 : i32
    %c0_i32_0 = arith.constant 0 : i32
    return %c0_i32, %arg1 : i32, i32
  }
  func.func @transform_5(%arg0: i32, %arg1: i32) -> (i32, i32) {
    %c0_i32 = arith.constant 0 : i32
    %c0_i32_0 = arith.constant 0 : i32
    return %c0_i32, %arg1 : i32, i32
  }
  func.func @transform_6(%arg0: i32, %arg1: i32) -> (i32, i32) {
    %c0_i32 = arith.constant 0 : i32
    %c0_i32_0 = arith.constant 0 : i32
    %c0_i32_1 = arith.constant 0 : i32
    return %c0_i32, %c0_i32_0 : i32, i32
  }
  func.func @transform_7(%arg0: i32, %arg1: i32) -> (i32, i32, i32) {
    %c0_i32 = arith.constant 0 : i32
    %c0_i32_0 = arith.constant 0 : i32
    %c0_i32_1 = arith.constant 0 : i32
    return %arg0, %c0_i32, %c0_i32_0 : i32, i32, i32
  }
  func.func @transform_8(%arg0: i32, %arg1: i32) -> (i32, i32, i32) {
    %c0_i32 = arith.constant 0 : i32
    %c0_i32_0 = arith.constant 0 : i32
    return %arg0, %c0_i32, %arg1 : i32, i32, i32
  }
}

</mosaic_0001>

<llo_original>
// kernel: tpu_custom_call.1
$region0: #{tpu_custom_call.1}
  #allocation0 [shape = 'u32[]', space=smem, size = 0x4, offset = 0x4, fixed_abs, tag = 'smem constant byte address 0x4 - core index']
  #allocation1 [shape = 'u32[144,128]{1,0:T(1,128)}', space=vmem, size = 0x12000, scoped, tag = 'internal scratch']
  %s0 = inlined_call_operand.hbm [shape: f32[8,128], index: 0, kind: input, shape index: {}]
  %s1 = inlined_call_operand.hbm [shape: f32[16,128], index: 1, kind: output, shape index: {}]
  %s2 = sld [smem:[#allocation0]]
  $region41: #{tpu_custom_call.1} parent=0
    _
  %s4 = ssub.s32 1, %s2
  %s5 = scalar_select 0, %s4, %s2
  $region1: #{tpu_custom_call.1} parent=0
    #allocation2 [shape = 'u8[4096]{0}', space=vmem, size = 0x1000, scoped, tag = 'input window, operand 0, single buffered']
    #allocation3 [shape = 's32[2]{0}', space=sflag, size = 0x8, scoped, tag = 'scoped memory for tpu_custom_call.1']
    #allocation4 [shape = 's32[2]{0}', space=sflag, size = 0x8, scoped, tag = 'scoped memory for tpu_custom_call.1']
    #allocation5 [shape = 'u8[8192]{0}', space=vmem, size = 0x2000, scoped, tag = 'output window, operand 0']
    %6 = vsyncpa [#allocation3], 0
    %7 = vsyncpa [#allocation4], 0
    %s8 = scalar_lea.sflag [#allocation4], 1
    %9 = vsyncpa %s8, 0
    loop: start=0, step=1, limit=4
    $region2: #{tpu_custom_call.1} parent=1 // loop_pre_header
      _
    $region3: #{tpu_custom_call.1} parent=1 // loop_header
      %s11 = sphi 0, %s15
      %p12 = scmp.ge.s32.totalorder %s11, 4
      %s19 = sphi 0, %s19
      %s21 = sphi 0, %s19
      %s22 = sphi 0, %s21
      %s36 = sphi 0, %s22
      %s42 = sphi 0, %s44
      %s45 = sphi 0, %s42
      %s46 = sphi 0, %s45
      %s62 = sphi 0, %s46
    $region4: #{tpu_custom_call.1} parent=1 // loop_header_branch
      %14 = sbr.rel (%p12) target = $region8
    $region5: #{tpu_custom_call.1} parent=1 // loop_body
      %s16 = ssub.s32 %s11, 1
      %s17 = ssub.s32 %s11, 2
      %s18 = sadd.s32 %s11, 1
      %s20 = sadd.s32 %s19, 1
      %p23 = scmp.eq.s32.totalorder %s11, 1
      %p24 = scmp.ne.s32.totalorder %s19, %s21
      %p25 = scmp.eq.s32.totalorder %s11, 0
      %p26 = por %p24, %p25
      %p27 = scmp.ne.s32.totalorder %s19, %s21
      %p28 = scmp.eq.s32.totalorder %s16, 1
      %p29 = por %p27, %p28
      %p30 = scmp.ne.s32.totalorder %s21, %s22
      %p31 = scmp.eq.s32.totalorder %s16, 0
      %p32 = por %p30, %p31
      %p33 = scmp.ne.s32.totalorder %s21, %s22
      %p34 = scmp.eq.s32.totalorder %s17, 1
      %p35 = por %p33, %p34
      %p37 = scmp.ne.s32.totalorder %s22, %s36
      %p38 = scmp.eq.s32.totalorder %s17, 0
      %p39 = por %p37, %p38
      %s40 = ssub.s32 %s11, %s18
      %p41 = scmp.eq.s32.totalorder %s40, 0
      %s43 = sadd.s32 %s42, 1
      %s44 = scalar_select %p41, %s42, %s43
      %p47 = pneg %p41
      %p48 = scmp.eq.s32.totalorder %s11, 1
      %p49 = por %p47, %p48
      %p50 = scmp.ne.s32.totalorder %s42, %s45
      %p51 = scmp.eq.s32.totalorder %s11, 0
      %p52 = por %p50, %p51
      %p53 = scmp.ne.s32.totalorder %s42, %s45
      %p54 = scmp.eq.s32.totalorder %s16, 1
      %p55 = por %p53, %p54
      %p56 = scmp.ne.s32.totalorder %s45, %s46
      %p57 = scmp.eq.s32.totalorder %s16, 0
      %p58 = por %p56, %p57
      %p59 = scmp.ne.s32.totalorder %s45, %s46
      %p60 = scmp.eq.s32.totalorder %s17, 1
      %p61 = por %p59, %p60
      %p63 = scmp.ne.s32.totalorder %s46, %s62
      %p64 = scmp.eq.s32.totalorder %s17, 0
      %p65 = por %p63, %p64
      %p66 = scmp.le.s32.totalorder 1, %s11
      %p67 = scmp.lt.s32.totalorder %s11, 3
      %p68 = pnand %p66, %p67
      %p69 = pneg %p68
      // Predicated region
      $region9: #{tpu_custom_call.1} parent=5 // pred_check
        _
      $region10: #{tpu_custom_call.1} parent=5 // pred_check_branch
        %71 = sbr.rel (%p68) target = $region12
      $region11: #{tpu_custom_call.1} parent=5 // pred_region
        %s72 = ssub.s32 %s11, 1
        // Predicated region
        $region13: #{tpu_custom_call.1} parent=11 // pred_check
          %p73 = pneg %p32
        $region14: #{tpu_custom_call.1} parent=11 // pred_check_branch
          %75 = sbr.rel (%p73) target = $region16
        $region15: #{tpu_custom_call.1} parent=11 // pred_region
          %s77 = ssub.s32 128, 128
          %78 = vsyncadd [#allocation3], %s77
          %s80 = sshll.u32 [#allocation2], 4
          %s81 = int_to_ptr.vmem [resolvable:$true] %s80
          %83 = dma.hbm_to_vmem [thread:$0]  %s0, 128, %s81, [#allocation3]
        $region16: #{tpu_custom_call.1} parent=11 // pred_fallthru
          _
      $region12: #{tpu_custom_call.1} parent=5 // pred_fallthru
        _
      %p84 = scmp.lt.s32.totalorder %s11, 2
      // Predicated region
      $region17: #{tpu_custom_call.1} parent=5 // pred_check
        %p85 = pneg %p84
      $region18: #{tpu_custom_call.1} parent=5 // pred_check_branch
        %87 = sbr.rel (%p85) target = $region20
      $region19: #{tpu_custom_call.1} parent=5 // pred_region
        _
      $region20: #{tpu_custom_call.1} parent=5 // pred_fallthru
        _
      %p88 = scmp.le.s32.totalorder 1, %s11
      %p89 = scmp.lt.s32.totalorder %s11, 3
      %p90 = pnand %p88, %p89
      %p91 = pneg %p90
      // Predicated region
      $region21: #{tpu_custom_call.1} parent=5 // pred_check
        _
      $region22: #{tpu_custom_call.1} parent=5 // pred_check_branch
        %93 = sbr.rel (%p90) target = $region24
      $region23: #{tpu_custom_call.1} parent=5 // pred_region
        %s94 = ssub.s32 %s11, 1
        // Predicated region
        $region25: #{tpu_custom_call.1} parent=23 // pred_check
          %p95 = pneg %p32
        $region26: #{tpu_custom_call.1} parent=23 // pred_check_branch
          %97 = sbr.rel (%p95) target = $region28
        $region27: #{tpu_custom_call.1} parent=23 // pred_region
          %98 = dma.done [#allocation3], 128
        $region28: #{tpu_custom_call.1} parent=23 // pred_fallthru
          _
        %p99 = pneg %p32
        %p100 = pneg %p29
        %p101 = pneg %p58
        %p102 = pneg %p55
        %s103 = sand.u32 %s45, 1
        %s104 = scalar_lea.sflag [#allocation4], %s103
        %s105 = sand.u32 %s45, 1
        %s106 = smul.addr %s105, 8
        %s107 = scalar_lea.vmem [#allocation5], %s106
        %v108 = vld [vmem:[#allocation2] sm:$0xff]
        %v109 = vadd.f32 %v108, 1.0
        %110 = vst [vmem:[%s107] sm:$0xff] %v109
        %s111 = sand.u32 %s45, 1
        %s112 = scalar_lea.sflag [#allocation4], %s111
        %s113 = sand.u32 %s45, 1
        %s114 = smul.addr %s113, 8
        %s115 = scalar_lea.vmem [#allocation5], %s114
        // Predicated region
        $region29: #{tpu_custom_call.1} parent=23 // pred_check
          %p116 = pneg %p55
        $region30: #{tpu_custom_call.1} parent=23 // pred_check_branch
          %118 = sbr.rel (%p116) target = $region32
        $region31: #{tpu_custom_call.1} parent=23 // pred_region
          %s120 = ssub.s32 128, 128
          %121 = vsyncadd %s112, %s120
          %s122 = smul.addr %s16, 128
          %s123 = scalar_lea.hbm %s1, %s122
          %s125 = sshll.u32 %s115, 4
          %s126 = int_to_ptr.vmem [resolvable:$true] %s125
          %128 = dma.vmem_to_hbm [thread:$0]  %s126, 128, %s123, %s112
        $region32: #{tpu_custom_call.1} parent=23 // pred_fallthru
          _
      $region24: #{tpu_custom_call.1} parent=5 // pred_fallthru
        _
      %p129 = scmp.le.s32.totalorder 2, %s11
      // Predicated region
      $region33: #{tpu_custom_call.1} parent=5 // pred_check
        %p130 = pneg %p129
      $region34: #{tpu_custom_call.1} parent=5 // pred_check_branch
        %132 = sbr.rel (%p130) target = $region36
      $region35: #{tpu_custom_call.1} parent=5 // pred_region
        %s133 = ssub.s32 %s11, 2
        // Predicated region
        $region37: #{tpu_custom_call.1} parent=35 // pred_check
          %p134 = pneg %p61
        $region38: #{tpu_custom_call.1} parent=35 // pred_check_branch
          %136 = sbr.rel (%p134) target = $region40
        $region39: #{tpu_custom_call.1} parent=35 // pred_region
          %s137 = sand.u32 %s46, 1
          %s138 = scalar_lea.sflag [#allocation4], %s137
          %s139 = sand.u32 %s46, 1
          %s140 = smul.addr %s139, 8
          %s141 = scalar_lea.vmem [#allocation5], %s140
          %142 = dma.done %s138, 128
        $region40: #{tpu_custom_call.1} parent=35 // pred_fallthru
          _
      $region36: #{tpu_custom_call.1} parent=5 // pred_fallthru
        _
    $region6: #{tpu_custom_call.1} parent=1 // loop_footer
      %s15 = sadd.s32 1, %s11
    $region7: #{tpu_custom_call.1} parent=1 // loop_footer_branch
      %10 = sbr.rel target = $region3
    $region8: #{tpu_custom_call.1} parent=1 // loop_exit
      _
    %143 = vsyncpa [#allocation3], 1
    %s144 = scalar_lea.sflag [#allocation3], 1
    %145 = vsyncpa %s144, 1
    %146 = vsyncpa [#allocation4], 1
    %s147 = scalar_lea.sflag [#allocation4], 1
    %148 = vsyncpa %s147, 1

// kernel: tpu_custom_call.1
$region0: #{tpu_custom_call.1}
  #allocation0 [shape = 'u32[]', space=smem, size = 0x4, offset = 0x4, fixed_abs, tag = 'smem constant byte address 0x4 - core index']
  #allocation1 [shape = 'u32[144,128]{1,0:T(1,128)}', space=vmem, size = 0x12000, scoped, tag = 'internal scratch']
  %s0 = inlined_call_operand.hbm [shape: f32[16,128], index: 0, kind: input, shape index: {}]
  %s1 = inlined_call_operand.hbm [shape: s32[16,16], index: 1, kind: input, shape index: {}]
  %s2 = inlined_call_operand.hbm [shape: f32[16,16], index: 2, kind: output, shape index: {}]
  %s3 = sld [smem:[#allocation0]]
  $region26: #{tpu_custom_call.1} parent=0
    _
  %s5 = ssub.s32 1, %s3
  %s6 = scalar_select 0, %s5, %s3
  $region1: #{tpu_custom_call.1} parent=0
    #allocation2 [shape = 'u8[8192]{0}', space=vmem, size = 0x2000, scoped, tag = 'input window, operand 0, single buffered']
    #allocation3 [shape = 's32[1]{0}', space=sflag, size = 0x4, scoped, tag = 'scoped memory for tpu_custom_call.1']
    #allocation4 [shape = 's32[1]{0}', space=sflag, size = 0x4, scoped, tag = 'scoped memory for tpu_custom_call.1']
    #allocation5 [shape = 'u8[8192]{0}', space=vmem, size = 0x2000, scoped, tag = 'input window, operand 1, single buffered']
    #allocation6 [shape = 's32[1]{0}', space=sflag, size = 0x4, scoped, tag = 'scoped memory for tpu_custom_call.1']
    #allocation7 [shape = 'u8[8192]{0}', space=vmem, size = 0x2000, scoped, tag = 'output window, operand 0, single buffered']
    %7 = vsyncpa [#allocation3], 0
    %8 = vsyncpa [#allocation6], 0
    %9 = vsyncpa [#allocation4], 0
    // Predicated region
    $region2: #{tpu_custom_call.1} parent=1 // pred_check
      _
    $region3: #{tpu_custom_call.1} parent=1 // pred_check_branch
      %11 = sbr.rel (0) target = $region5
    $region4: #{tpu_custom_call.1} parent=1 // pred_region
      %s13 = ssub.s32 256, 256
      %14 = vsyncadd [#allocation3], %s13
      %s15 = sshll.u32 [#allocation2], 4
      %s16 = int_to_ptr.vmem [resolvable:$true] %s15
      %21 = dma.hbm_to_vmem [thread:$0]  %s0, 256, %s16, [#allocation3], 128, 128, 8
    $region5: #{tpu_custom_call.1} parent=1 // pred_fallthru
      _
    // Predicated region
    $region6: #{tpu_custom_call.1} parent=1 // pred_check
      _
    $region7: #{tpu_custom_call.1} parent=1 // pred_check_branch
      %23 = sbr.rel (0) target = $region9
    $region8: #{tpu_custom_call.1} parent=1 // pred_region
      %s25 = ssub.s32 256, 256
      %26 = vsyncadd [#allocation6], %s25
      %s27 = sshll.u32 [#allocation5], 4
      %s28 = int_to_ptr.vmem [resolvable:$true] %s27
      %33 = dma.hbm_to_vmem [thread:$0]  %s1, 256, %s28, [#allocation6], 128, 128, 8
    $region9: #{tpu_custom_call.1} parent=1 // pred_fallthru
      _
    // Predicated region
    $region10: #{tpu_custom_call.1} parent=1 // pred_check
      _
    $region11: #{tpu_custom_call.1} parent=1 // pred_check_branch
      %35 = sbr.rel (0) target = $region13
    $region12: #{tpu_custom_call.1} parent=1 // pred_region
      %36 = dma.done [#allocation3], 256
    $region13: #{tpu_custom_call.1} parent=1 // pred_fallthru
      _
    // Predicated region
    $region14: #{tpu_custom_call.1} parent=1 // pred_check
      _
    $region15: #{tpu_custom_call.1} parent=1 // pred_check_branch
      %38 = sbr.rel (0) target = $region17
    $region16: #{tpu_custom_call.1} parent=1 // pred_region
      %39 = dma.done [#allocation6], 256
    $region17: #{tpu_custom_call.1} parent=1 // pred_fallthru
      _
    %v40 = vld [vmem:[#allocation2] sm:$0xff]
    %v41 = vld [vmem:[#allocation2 + $0x8] sm:$0xff]
    %v42 = vld [vmem:[#allocation5] sm:$0xff]
    %v43 = vld [vmem:[#allocation5 + $0x8] sm:$0xff]
    %vm44 = vcmp.lt.s32.totalorder %v42, 0
    %vm45 = vcmp.lt.s32.totalorder %v43, 0
    %v46 = vadd.s32 %v42, 128
    %v47 = vadd.s32 %v43, 128
    %v48 = vsel %vm44, %v46, %v42
    %v49 = vsel %vm45, %v47, %v43
    %50 = vset.pattern.permute.xlu0 %v48
    %51 = vperm.xlu0 %50, %v40
    %v52 = vpop.permute.xlu0 %51
    %53 = vset.pattern.permute.xlu0 %v49
    %54 = vperm.xlu0 %53, %v41
    %v55 = vpop.permute.xlu0 %54
    %vm56 = vcmask 130048
    %57 = vst.msk [vmem:[#allocation7] sm:$0xff] %vm56, %v52
    %58 = vst.msk [vmem:[#allocation7 + $0x8] sm:$0xff] %vm56, %v55
    // Predicated region
    $region18: #{tpu_custom_call.1} parent=1 // pred_check
      _
    $region19: #{tpu_custom_call.1} parent=1 // pred_check_branch
      %60 = sbr.rel (0) target = $region21
    $region20: #{tpu_custom_call.1} parent=1 // pred_region
      %s62 = ssub.s32 256, 256
      %63 = vsyncadd [#allocation4], %s62
      %s64 = sshll.u32 [#allocation7], 4
      %s65 = int_to_ptr.vmem [resolvable:$true] %s64
      %70 = dma.vmem_to_hbm [thread:$0]  %s65, 256, %s2, [#allocation4], 128, 128, 8
    $region21: #{tpu_custom_call.1} parent=1 // pred_fallthru
      _
    // Predicated region
    $region22: #{tpu_custom_call.1} parent=1 // pred_check
      _
    $region23: #{tpu_custom_call.1} parent=1 // pred_check_branch
      %72 = sbr.rel (0) target = $region25
    $region24: #{tpu_custom_call.1} parent=1 // pred_region
      %73 = dma.done [#allocation4], 256
    $region25: #{tpu_custom_call.1} parent=1 // pred_fallthru
      _
    %74 = vsyncpa [#allocation3], 1
    %75 = vsyncpa [#allocation6], 1
    %76 = vsyncpa [#allocation4], 1

// kernel: attention_forward.5
$region0: #{attention_forward.5}
  #allocation0 [shape = 'u32[]', space=smem, size = 0x4, offset = 0x4, fixed_abs, tag = 'smem constant byte address 0x4 - core index']
  #allocation1 [shape = 'u32[144,128]{1,0:T(1,128)}', space=vmem, size = 0x12000, scoped, tag = 'internal scratch']
  %s0 = inlined_call_operand.vmem [shape: f32[32,64], index: 0, kind: input, shape index: {}]
  %s1 = inlined_call_operand.vmem [shape: f32[64,64], index: 1, kind: input, shape index: {}]
  %s2 = inlined_call_operand.vmem [shape: f32[1,64], index: 2, kind: input, shape index: {}]
  %s3 = inlined_call_operand.vmem [shape: f32[32,64], index: 3, kind: output, shape index: {}]
  %s4 = sld [smem:[#allocation0]]
  $region22: #{attention_forward.5} parent=0
    _
  %s6 = ssub.s32 1, %s4
  %s7 = scalar_select 0, %s6, %s4
  // Predicated region
  $region2: #{attention_forward.5} parent=0 // pred_check
    _
  $region3: #{attention_forward.5} parent=0 // pred_check_branch
    %9 = sbr.rel (0) target = $region5
  $region4: #{attention_forward.5} parent=0 // pred_region
    _
  $region5: #{attention_forward.5} parent=0 // pred_fallthru
    _
  // Predicated region
  $region6: #{attention_forward.5} parent=0 // pred_check
    _
  $region7: #{attention_forward.5} parent=0 // pred_check_branch
    %11 = sbr.rel (0) target = $region9
  $region8: #{attention_forward.5} parent=0 // pred_region
    _
  $region9: #{attention_forward.5} parent=0 // pred_fallthru
    _
  // Predicated region
  $region10: #{attention_forward.5} parent=0 // pred_check
    _
  $region11: #{attention_forward.5} parent=0 // pred_check_branch
    %13 = sbr.rel (0) target = $region13
  $region12: #{attention_forward.5} parent=0 // pred_region
    _
  $region13: #{attention_forward.5} parent=0 // pred_fallthru
    _
  %v14 = vld [vmem:[%s0] sm:$0xff]
  %v15 = vld [vmem:[%s0 + $0x8] sm:$0xff]
  %v16 = vld [vmem:[%s0 + $0x10] sm:$0xff]
  %v17 = vld [vmem:[%s0 + $0x18] sm:$0xff]
  %vm18 = vcmask 523264
  %v19 = vsel %vm18, %v14, 0.0
  %20 = vadd.xlane.f32.xlu0 %v19
  %v21 = vpop.xlane.xlu0 %20
  %v22 = vsel %vm18, %v15, 0.0
  %23 = vadd.xlane.f32.xlu0 %v22
  %v24 = vpop.xlane.xlu0 %23
  %v25 = vsel %vm18, %v16, 0.0
  %26 = vadd.xlane.f32.xlu0 %v25
  %v27 = vpop.xlane.xlu0 %26
  %v28 = vsel %vm18, %v17, 0.0
  %29 = vadd.xlane.f32.xlu0 %v28
  %v30 = vpop.xlane.xlu0 %29
  %v31 = vrcp.pop 64.0
  %v32 = vmul.f32 %v21, %v31
  %v33 = vmul.f32 %v24, %v31
  %v34 = vmul.f32 %v27, %v31
  %v35 = vmul.f32 %v30, %v31
  %v36 = vsub.f32 %v14, %v32
  %v37 = vsub.f32 %v15, %v33
  %v38 = vsub.f32 %v16, %v34
  %v39 = vsub.f32 %v17, %v35
  %v40 = vmul.f32 %v36, %v36
  %v41 = vmul.f32 %v37, %v37
  %v42 = vmul.f32 %v38, %v38
  %v43 = vmul.f32 %v39, %v39
  %v44 = vsel %vm18, %v40, 0.0
  %45 = vadd.xlane.f32.xlu0 %v44
  %v46 = vpop.xlane.xlu0 %45
  %v47 = vsel %vm18, %v41, 0.0
  %48 = vadd.xlane.f32.xlu0 %v47
  %v49 = vpop.xlane.xlu0 %48
  %v50 = vsel %vm18, %v42, 0.0
  %51 = vadd.xlane.f32.xlu0 %v50
  %v52 = vpop.xlane.xlu0 %51
  %v53 = vsel %vm18, %v43, 0.0
  %54 = vadd.xlane.f32.xlu0 %v53
  %v55 = vpop.xlane.xlu0 %54
  %v56 = vmul.f32 %v46, %v31
  %v57 = vmul.f32 %v49, %v31
  %v58 = vmul.f32 %v52, %v31
  %v59 = vmul.f32 %v55, %v31
  %v60 = vadd.f32 %v56, 1e-07
  %v61 = vadd.f32 %v57, 1e-07
  %v62 = vadd.f32 %v58, 1e-07
  %v63 = vadd.f32 %v59, 1e-07
  %v64 = vrsqrt.pop %v60
  %v65 = vrsqrt.pop %v61
  %v66 = vrsqrt.pop %v62
  %v67 = vrsqrt.pop %v63
  %v68 = vmul.f32 %v36, %v64
  %v69 = vmul.f32 %v37, %v65
  %v70 = vmul.f32 %v38, %v66
  %v71 = vmul.f32 %v39, %v67
  %v72 = vld [vmem:[%s1] sm:$0xff]
  %v73 = vld [vmem:[%s1 + $0x8] sm:$0xff]
  %v74 = vld [vmem:[%s1 + $0x10] sm:$0xff]
  %v75 = vld [vmem:[%s1 + $0x18] sm:$0xff]
  %v76 = vld [vmem:[%s1 + $0x20] sm:$0xff]
  %v77 = vld [vmem:[%s1 + $0x28] sm:$0xff]
  %v78 = vld [vmem:[%s1 + $0x30] sm:$0xff]
  %v79 = vld [vmem:[%s1 + $0x38] sm:$0xff]
  %v80 = vld [vmem:[%s2] sm:$0x1]
  %v82 = vlaneseq
  %v83 = vshrl.u32 %v82, 7
  %v84 = vsub.s32 0, %v83
  %v85 = vrot.slane %v80, %v84
  %v88 = vsel %vm18, %v68, 0
  %v91 = vsel %vm18, %v69, 0
  %v94 = vsel %vm18, %v70, 0
  %v97 = vsel %vm18, %v71, 0
  %99 = vmatprep.subr.mxu0 0.0
  %100 = vmatpush1.msra.mxu0 0.0
  %101 = vmatprep.subr.mxu0 0.0
  %102 = vmatpush1.msra.mxu0 0.0
  %103 = vmatprep.subr.mxu0 0.0
  %104 = vmatpush1.msra.mxu0 0.0
  %105 = vmatprep.subr.mxu0 0.0
  %106 = vmatpush1.msra.mxu0 0.0
  %107 = vmatprep.subr.mxu0 0.0
  %108 = vmatpush1.msra.mxu0 0.0
  %109 = vmatprep.subr.mxu0 0.0
  %110 = vmatpush1.msra.mxu0 0.0
  %111 = vmatprep.subr.mxu0 0.0
  %112 = vmatpush1.msra.mxu0 0.0
  %113 = vmatprep.subr.mxu0 0.0
  %114 = vmatpush1.msra.mxu0 0.0
  %115 = vmatprep.subr.mxu0 0.0
  %116 = vmatpush1.msra.mxu0 %v79
  %117 = vmatprep.subr.mxu0 0.0
  %118 = vmatpush1.msra.mxu0 %v78
  %119 = vmatprep.subr.mxu0 0.0
  %120 = vmatpush1.msra.mxu0 %v77
  %121 = vmatprep.subr.mxu0 0.0
  %122 = vmatpush1.msra.mxu0 %v76
  %123 = vmatprep.subr.mxu0 0.0
  %124 = vmatpush1.msra.mxu0 %v75
  %125 = vmatprep.subr.mxu0 0.0
  %126 = vmatpush1.msra.mxu0 %v74
  %127 = vmatprep.subr.mxu0 0.0
  %128 = vmatpush1.msra.mxu0 %v73
  %129 = vmatprep.subr.mxu0 0.0
  %130 = vmatpush1.msra.mxu0 %v72
  %131 = vmatprep.subr.mxu0 0.0
  %132 = vmatpush2.msra.mxu0 0.0
  %133 = vmatprep.subr.mxu0 0.0
  %134 = vmatpush2.msra.mxu0 0.0
  %135 = vmatprep.subr.mxu0 0.0
  %136 = vmatpush2.msra.mxu0 0.0
  %137 = vmatprep.subr.mxu0 0.0
  %138 = vmatpush2.msra.mxu0 0.0
  %139 = vmatprep.subr.mxu0 0.0
  %140 = vmatpush2.msra.mxu0 0.0
  %141 = vmatprep.subr.mxu0 0.0
  %142 = vmatpush2.msra.mxu0 0.0
  %143 = vmatprep.subr.mxu0 0.0
  %144 = vmatpush2.msra.mxu0 0.0
  %145 = vmatprep.subr.mxu0 0.0
  %146 = vmatpush2.msra.mxu0 0.0
  %147 = vmatprep.subr.mxu0 0.0
  %148 = vmatpush2.msra.mxu0 0.0
  %149 = vmatprep.subr.mxu0 0.0
  %150 = vmatpush2.msra.mxu0 0.0
  %151 = vmatprep.subr.mxu0 0.0
  %152 = vmatpush2.msra.mxu0 0.0
  %153 = vmatprep.subr.mxu0 0.0
  %154 = vmatpush2.msra.mxu0 0.0
  %155 = vmatprep.subr.mxu0 0.0
  %156 = vmatpush2.msra.mxu0 0.0
  %157 = vmatprep.subr.mxu0 0.0
  %158 = vmatpush2.msra.mxu0 0.0
  %159 = vmatprep.subr.mxu0 0.0
  %160 = vmatpush2.msra.mxu0 0.0
  %161 = vmatprep.subr.mxu0 0.0
  %162 = vmatpush2.msra.mxu0 0.0
  %163 = vmatprep.mubr.f32.mxu0 0.0
  %164 = vmatmul.mubr.f32.gmra.mxu0 %v88
  %v165 = vpop.f32.mrf.mxu0
  %v166 = vadd.f32 %v85, %v165
  %v167 = vpop.f32.mrf.mxu0
  %168 = vmatprep.mubr.f32.mxu0 0.0
  %169 = vmatmul.mubr.f32.gmra.mxu0 %v91
  %v170 = vpop.f32.mrf.mxu0
  %v171 = vadd.f32 %v85, %v170
  %v172 = vpop.f32.mrf.mxu0
  %173 = vmatprep.mubr.f32.mxu0 0.0
  %174 = vmatmul.mubr.f32.gmra.mxu0 %v94
  %v175 = vpop.f32.mrf.mxu0
  %v176 = vadd.f32 %v85, %v175
  %v177 = vpop.f32.mrf.mxu0
  %178 = vmatprep.mubr.f32.mxu0 0.0
  %179 = vmatmul.mubr.f32.gmra.mxu0 %v97
  %v180 = vpop.f32.mrf.mxu0
  %v181 = vadd.f32 %v85, %v180
  %v182 = vpop.f32.mrf.mxu0
  %183 = vdwg.mxu0
  %184 = vst.msk [vmem:[%s3] sm:$0xff] %vm18, %v166
  %185 = vst.msk [vmem:[%s3 + $0x8] sm:$0xff] %vm18, %v171
  %186 = vst.msk [vmem:[%s3 + $0x10] sm:$0xff] %vm18, %v176
  %187 = vst.msk [vmem:[%s3 + $0x18] sm:$0xff] %vm18, %v181
  // Predicated region
  $region14: #{attention_forward.5} parent=0 // pred_check
    _
  $region15: #{attention_forward.5} parent=0 // pred_check_branch
    %189 = sbr.rel (0) target = $region17
  $region16: #{attention_forward.5} parent=0 // pred_region
    _
  $region17: #{attention_forward.5} parent=0 // pred_fallthru
    _
  // Predicated region
  $region18: #{attention_forward.5} parent=0 // pred_check
    _
  $region19: #{attention_forward.5} parent=0 // pred_check_branch
    %191 = sbr.rel (0) target = $region21
  $region20: #{attention_forward.5} parent=0 // pred_region
    _
  $region21: #{attention_forward.5} parent=0 // pred_fallthru
    _

// kernel: attention_forward.3
$region0: #{attention_forward.3}
  #allocation0 [shape = 'u32[]', space=smem, size = 0x4, offset = 0x4, fixed_abs, tag = 'smem constant byte address 0x4 - core index']
  #allocation1 [shape = 'u32[144,128]{1,0:T(1,128)}', space=vmem, size = 0x12000, scoped, tag = 'internal scratch']
  %s0 = inlined_call_operand.vmem [shape: f32[32,64], index: 0, kind: input, shape index: {}]
  %s1 = inlined_call_operand.vmem [shape: f32[64,128], index: 1, kind: input, shape index: {}]
  %s2 = inlined_call_operand.vmem [shape: f32[1,128], index: 2, kind: input, shape index: {}]
  %s3 = inlined_call_operand.vmem [shape: f32[64,128], index: 3, kind: input, shape index: {}]
  %s4 = inlined_call_operand.vmem [shape: f32[1,128], index: 4, kind: input, shape index: {}]
  %s5 = inlined_call_operand.vmem [shape: f32[32,64], index: 5, kind: output, shape index: {0}]
  %s6 = inlined_call_operand.vmem [shape: f32[32,64], index: 6, kind: output, shape index: {1}]
  %s7 = inlined_call_operand.vmem [shape: f32[32,64], index: 7, kind: output, shape index: {2}]
  %s8 = inlined_call_operand.vmem [shape: f32[32,64], index: 8, kind: output, shape index: {3}]
  %9 = xla_tuple %s5, %s6, %s7, %s8
  %s10 = sld [smem:[#allocation0]]
  $region54: #{attention_forward.3} parent=0
    _
  %s12 = ssub.s32 1, %s10
  %s13 = scalar_select 0, %s12, %s10
  // Predicated region
  $region2: #{attention_forward.3} parent=0 // pred_check
    _
  $region3: #{attention_forward.3} parent=0 // pred_check_branch
    %15 = sbr.rel (0) target = $region5
  $region4: #{attention_forward.3} parent=0 // pred_region
    _
  $region5: #{attention_forward.3} parent=0 // pred_fallthru
    _
  // Predicated region
  $region6: #{attention_forward.3} parent=0 // pred_check
    _
  $region7: #{attention_forward.3} parent=0 // pred_check_branch
    %17 = sbr.rel (0) target = $region9
  $region8: #{attention_forward.3} parent=0 // pred_region
    _
  $region9: #{attention_forward.3} parent=0 // pred_fallthru
    _
  // Predicated region
  $region10: #{attention_forward.3} parent=0 // pred_check
    _
  $region11: #{attention_forward.3} parent=0 // pred_check_branch
    %19 = sbr.rel (0) target = $region13
  $region12: #{attention_forward.3} parent=0 // pred_region
    _
  $region13: #{attention_forward.3} parent=0 // pred_fallthru
    _
  // Predicated region
  $region14: #{attention_forward.3} parent=0 // pred_check
    _
  $region15: #{attention_forward.3} parent=0 // pred_check_branch
    %21 = sbr.rel (0) target = $region17
  $region16: #{attention_forward.3} parent=0 // pred_region
    _
  $region17: #{attention_forward.3} parent=0 // pred_fallthru
    _
  // Predicated region
  $region18: #{attention_forward.3} parent=0 // pred_check
    _
  $region19: #{attention_forward.3} parent=0 // pred_check_branch
    %23 = sbr.rel (0) target = $region21
  $region20: #{attention_forward.3} parent=0 // pred_region
    _
  $region21: #{attention_forward.3} parent=0 // pred_fallthru
    _
  %v24 = vld [vmem:[%s0] sm:$0xff]
  %v25 = vld [vmem:[%s0 + $0x8] sm:$0xff]
  %v26 = vld [vmem:[%s0 + $0x10] sm:$0xff]
  %v27 = vld [vmem:[%s0 + $0x18] sm:$0xff]
  %vm28 = vcmask 523264
  %v29 = vsel %vm28, %v24, 0.0
  %30 = vadd.xlane.f32.xlu0 %v29
  %v31 = vpop.xlane.xlu0 %30
  %v32 = vsel %vm28, %v25, 0.0
  %33 = vadd.xlane.f32.xlu0 %v32
  %v34 = vpop.xlane.xlu0 %33
  %v35 = vsel %vm28, %v26, 0.0
  %36 = vadd.xlane.f32.xlu0 %v35
  %v37 = vpop.xlane.xlu0 %36
  %v38 = vsel %vm28, %v27, 0.0
  %39 = vadd.xlane.f32.xlu0 %v38
  %v40 = vpop.xlane.xlu0 %39
  %v41 = vrcp.pop 64.0
  %v42 = vmul.f32 %v31, %v41
  %v43 = vmul.f32 %v34, %v41
  %v44 = vmul.f32 %v37, %v41
  %v45 = vmul.f32 %v40, %v41
  %v46 = vsub.f32 %v24, %v42
  %v47 = vsub.f32 %v25, %v43
  %v48 = vsub.f32 %v26, %v44
  %v49 = vsub.f32 %v27, %v45
  %v50 = vmul.f32 %v46, %v46
  %v51 = vmul.f32 %v47, %v47
  %v52 = vmul.f32 %v48, %v48
  %v53 = vmul.f32 %v49, %v49
  %v54 = vsel %vm28, %v50, 0.0
  %55 = vadd.xlane.f32.xlu0 %v54
  %v56 = vpop.xlane.xlu0 %55
  %v57 = vsel %vm28, %v51, 0.0
  %58 = vadd.xlane.f32.xlu0 %v57
  %v59 = vpop.xlane.xlu0 %58
  %v60 = vsel %vm28, %v52, 0.0
  %61 = vadd.xlane.f32.xlu0 %v60
  %v62 = vpop.xlane.xlu0 %61
  %v63 = vsel %vm28, %v53, 0.0
  %64 = vadd.xlane.f32.xlu0 %v63
  %v65 = vpop.xlane.xlu0 %64
  %v66 = vmul.f32 %v56, %v41
  %v67 = vmul.f32 %v59, %v41
  %v68 = vmul.f32 %v62, %v41
  %v69 = vmul.f32 %v65, %v41
  %v70 = vadd.f32 %v66, 1e-07
  %v71 = vadd.f32 %v67, 1e-07
  %v72 = vadd.f32 %v68, 1e-07
  %v73 = vadd.f32 %v69, 1e-07
  %v74 = vrsqrt.pop %v70
  %v75 = vrsqrt.pop %v71
  %v76 = vrsqrt.pop %v72
  %v77 = vrsqrt.pop %v73
  %v78 = vmul.f32 %v46, %v74
  %v79 = vmul.f32 %v47, %v75
  %v80 = vmul.f32 %v48, %v76
  %v81 = vmul.f32 %v49, %v77
  %v82 = vld [vmem:[%s1] sm:$0xff]
  %v83 = vld [vmem:[%s1 + $0x8] sm:$0xff]
  %v84 = vld [vmem:[%s1 + $0x10] sm:$0xff]
  %v85 = vld [vmem:[%s1 + $0x18] sm:$0xff]
  %v86 = vld [vmem:[%s1 + $0x20] sm:$0xff]
  %v87 = vld [vmem:[%s1 + $0x28] sm:$0xff]
  %v88 = vld [vmem:[%s1 + $0x30] sm:$0xff]
  %v89 = vld [vmem:[%s1 + $0x38] sm:$0xff]
  %v90 = vld [vmem:[%s2] sm:$0x1]
  %v92 = vlaneseq
  %v93 = vshrl.u32 %v92, 7
  %v94 = vsub.s32 0, %v93
  %v95 = vrot.slane %v90, %v94
  %v98 = vsel %vm28, %v78, 0
  %v101 = vsel %vm28, %v79, 0
  %v104 = vsel %vm28, %v80, 0
  %v107 = vsel %vm28, %v81, 0
  %109 = vmatprep.subr.mxu0 0.0
  %110 = vmatpush1.msra.mxu0 0.0
  %111 = vmatprep.subr.mxu0 0.0
  %112 = vmatpush1.msra.mxu0 0.0
  %113 = vmatprep.subr.mxu0 0.0
  %114 = vmatpush1.msra.mxu0 0.0
  %115 = vmatprep.subr.mxu0 0.0
  %116 = vmatpush1.msra.mxu0 0.0
  %117 = vmatprep.subr.mxu0 0.0
  %118 = vmatpush1.msra.mxu0 0.0
  %119 = vmatprep.subr.mxu0 0.0
  %120 = vmatpush1.msra.mxu0 0.0
  %121 = vmatprep.subr.mxu0 0.0
  %122 = vmatpush1.msra.mxu0 0.0
  %123 = vmatprep.subr.mxu0 0.0
  %124 = vmatpush1.msra.mxu0 0.0
  %125 = vmatprep.subr.mxu0 0.0
  %126 = vmatpush1.msra.mxu0 %v89
  %127 = vmatprep.subr.mxu0 0.0
  %128 = vmatpush1.msra.mxu0 %v88
  %129 = vmatprep.subr.mxu0 0.0
  %130 = vmatpush1.msra.mxu0 %v87
  %131 = vmatprep.subr.mxu0 0.0
  %132 = vmatpush1.msra.mxu0 %v86
  %133 = vmatprep.subr.mxu0 0.0
  %134 = vmatpush1.msra.mxu0 %v85
  %135 = vmatprep.subr.mxu0 0.0
  %136 = vmatpush1.msra.mxu0 %v84
  %137 = vmatprep.subr.mxu0 0.0
  %138 = vmatpush1.msra.mxu0 %v83
  %139 = vmatprep.subr.mxu0 0.0
  %140 = vmatpush1.msra.mxu0 %v82
  %141 = vmatprep.subr.mxu0 0.0
  %142 = vmatpush2.msra.mxu0 0.0
  %143 = vmatprep.subr.mxu0 0.0
  %144 = vmatpush2.msra.mxu0 0.0
  %145 = vmatprep.subr.mxu0 0.0
  %146 = vmatpush2.msra.mxu0 0.0
  %147 = vmatprep.subr.mxu0 0.0
  %148 = vmatpush2.msra.mxu0 0.0
  %149 = vmatprep.subr.mxu0 0.0
  %150 = vmatpush2.msra.mxu0 0.0
  %151 = vmatprep.subr.mxu0 0.0
  %152 = vmatpush2.msra.mxu0 0.0
  %153 = vmatprep.subr.mxu0 0.0
  %154 = vmatpush2.msra.mxu0 0.0
  %155 = vmatprep.subr.mxu0 0.0
  %156 = vmatpush2.msra.mxu0 0.0
  %157 = vmatprep.subr.mxu0 0.0
  %158 = vmatpush2.msra.mxu0 0.0
  %159 = vmatprep.subr.mxu0 0.0
  %160 = vmatpush2.msra.mxu0 0.0
  %161 = vmatprep.subr.mxu0 0.0
  %162 = vmatpush2.msra.mxu0 0.0
  %163 = vmatprep.subr.mxu0 0.0
  %164 = vmatpush2.msra.mxu0 0.0
  %165 = vmatprep.subr.mxu0 0.0
  %166 = vmatpush2.msra.mxu0 0.0
  %167 = vmatprep.subr.mxu0 0.0
  %168 = vmatpush2.msra.mxu0 0.0
  %169 = vmatprep.subr.mxu0 0.0
  %170 = vmatpush2.msra.mxu0 0.0
  %171 = vmatprep.subr.mxu0 0.0
  %172 = vmatpush2.msra.mxu0 0.0
  %173 = vmatprep.mubr.f32.mxu0 0.0
  %174 = vmatmul.mubr.f32.gmra.mxu0 %v98
  %v175 = vpop.f32.mrf.mxu0
  %v176 = vadd.f32 %v95, %v175
  %v177 = vpop.f32.mrf.mxu0
  %178 = vmatprep.mubr.f32.mxu0 0.0
  %179 = vmatmul.mubr.f32.gmra.mxu0 %v101
  %v180 = vpop.f32.mrf.mxu0
  %v181 = vadd.f32 %v95, %v180
  %v182 = vpop.f32.mrf.mxu0
  %183 = vmatprep.mubr.f32.mxu0 0.0
  %184 = vmatmul.mubr.f32.gmra.mxu0 %v104
  %v185 = vpop.f32.mrf.mxu0
  %v186 = vadd.f32 %v95, %v185
  %v187 = vpop.f32.mrf.mxu0
  %188 = vmatprep.mubr.f32.mxu0 0.0
  %189 = vmatmul.mubr.f32.gmra.mxu0 %v107
  %v190 = vpop.f32.mrf.mxu0
  %v191 = vadd.f32 %v95, %v190
  %v192 = vpop.f32.mrf.mxu0
  %193 = vdwg.mxu0
  %v194 = vld [vmem:[%s3] sm:$0xff]
  %v195 = vld [vmem:[%s3 + $0x8] sm:$0xff]
  %v196 = vld [vmem:[%s3 + $0x10] sm:$0xff]
  %v197 = vld [vmem:[%s3 + $0x18] sm:$0xff]
  %v198 = vld [vmem:[%s3 + $0x20] sm:$0xff]
  %v199 = vld [vmem:[%s3 + $0x28] sm:$0xff]
  %v200 = vld [vmem:[%s3 + $0x30] sm:$0xff]
  %v201 = vld [vmem:[%s3 + $0x38] sm:$0xff]
  %v202 = vld [vmem:[%s4] sm:$0x1]
  %v204 = vlaneseq
  %v205 = vshrl.u32 %v204, 7
  %v206 = vsub.s32 0, %v205
  %v207 = vrot.slane %v202, %v206
  %209 = vmatprep.subr.mxu0 0.0
  %210 = vmatpush1.msra.mxu0 0.0
  %211 = vmatprep.subr.mxu0 0.0
  %212 = vmatpush1.msra.mxu0 0.0
  %213 = vmatprep.subr.mxu0 0.0
  %214 = vmatpush1.msra.mxu0 0.0
  %215 = vmatprep.subr.mxu0 0.0
  %216 = vmatpush1.msra.mxu0 0.0
  %217 = vmatprep.subr.mxu0 0.0
  %218 = vmatpush1.msra.mxu0 0.0
  %219 = vmatprep.subr.mxu0 0.0
  %220 = vmatpush1.msra.mxu0 0.0
  %221 = vmatprep.subr.mxu0 0.0
  %222 = vmatpush1.msra.mxu0 0.0
  %223 = vmatprep.subr.mxu0 0.0
  %224 = vmatpush1.msra.mxu0 0.0
  %225 = vmatprep.subr.mxu0 0.0
  %226 = vmatpush1.msra.mxu0 %v201
  %227 = vmatprep.subr.mxu0 0.0
  %228 = vmatpush1.msra.mxu0 %v200
  %229 = vmatprep.subr.mxu0 0.0
  %230 = vmatpush1.msra.mxu0 %v199
  %231 = vmatprep.subr.mxu0 0.0
  %232 = vmatpush1.msra.mxu0 %v198
  %233 = vmatprep.subr.mxu0 0.0
  %234 = vmatpush1.msra.mxu0 %v197
  %235 = vmatprep.subr.mxu0 0.0
  %236 = vmatpush1.msra.mxu0 %v196
  %237 = vmatprep.subr.mxu0 0.0
  %238 = vmatpush1.msra.mxu0 %v195
  %239 = vmatprep.subr.mxu0 0.0
  %240 = vmatpush1.msra.mxu0 %v194
  %241 = vmatprep.subr.mxu0 0.0
  %242 = vmatpush2.msra.mxu0 0.0
  %243 = vmatprep.subr.mxu0 0.0
  %244 = vmatpush2.msra.mxu0 0.0
  %245 = vmatprep.subr.mxu0 0.0
  %246 = vmatpush2.msra.mxu0 0.0
  %247 = vmatprep.subr.mxu0 0.0
  %248 = vmatpush2.msra.mxu0 0.0
  %249 = vmatprep.subr.mxu0 0.0
  %250 = vmatpush2.msra.mxu0 0.0
  %251 = vmatprep.subr.mxu0 0.0
  %252 = vmatpush2.msra.mxu0 0.0
  %253 = vmatprep.subr.mxu0 0.0
  %254 = vmatpush2.msra.mxu0 0.0
  %255 = vmatprep.subr.mxu0 0.0
  %256 = vmatpush2.msra.mxu0 0.0
  %257 = vmatprep.subr.mxu0 0.0
  %258 = vmatpush2.msra.mxu0 0.0
  %259 = vmatprep.subr.mxu0 0.0
  %260 = vmatpush2.msra.mxu0 0.0
  %261 = vmatprep.subr.mxu0 0.0
  %262 = vmatpush2.msra.mxu0 0.0
  %263 = vmatprep.subr.mxu0 0.0
  %264 = vmatpush2.msra.mxu0 0.0
  %265 = vmatprep.subr.mxu0 0.0
  %266 = vmatpush2.msra.mxu0 0.0
  %267 = vmatprep.subr.mxu0 0.0
  %268 = vmatpush2.msra.mxu0 0.0
  %269 = vmatprep.subr.mxu0 0.0
  %270 = vmatpush2.msra.mxu0 0.0
  %271 = vmatprep.subr.mxu0 0.0
  %272 = vmatpush2.msra.mxu0 0.0
  %273 = vmatprep.mubr.f32.mxu0 0.0
  %274 = vmatmul.mubr.f32.gmra.mxu0 %v98
  %v275 = vpop.f32.mrf.mxu0
  %v276 = vadd.f32 %v207, %v275
  %v277 = vpop.f32.mrf.mxu0
  %278 = vmatprep.mubr.f32.mxu0 0.0
  %279 = vmatmul.mubr.f32.gmra.mxu0 %v101
  %v280 = vpop.f32.mrf.mxu0
  %v281 = vadd.f32 %v207, %v280
  %v282 = vpop.f32.mrf.mxu0
  %283 = vmatprep.mubr.f32.mxu0 0.0
  %284 = vmatmul.mubr.f32.gmra.mxu0 %v104
  %v285 = vpop.f32.mrf.mxu0
  %v286 = vadd.f32 %v207, %v285
  %v287 = vpop.f32.mrf.mxu0
  %288 = vmatprep.mubr.f32.mxu0 0.0
  %289 = vmatmul.mubr.f32.gmra.mxu0 %v107
  %v290 = vpop.f32.mrf.mxu0
  %v291 = vadd.f32 %v207, %v290
  %v292 = vpop.f32.mrf.mxu0
  %293 = vdwg.mxu0
  %294 = vst.msk [vmem:[%s5] sm:$0xff] %vm28, %v176
  %295 = vst.msk [vmem:[%s5 + $0x8] sm:$0xff] %vm28, %v181
  %296 = vst.msk [vmem:[%s5 + $0x10] sm:$0xff] %vm28, %v186
  %297 = vst.msk [vmem:[%s5 + $0x18] sm:$0xff] %vm28, %v191
  %302 = vrot.lane.b32.xlu0 %v176, 64
  %v303 = vpop.permute.xlu0 %302
  %304 = vrot.lane.b32.xlu0 %v181, 64
  %v305 = vpop.permute.xlu0 %304
  %306 = vrot.lane.b32.xlu0 %v186, 64
  %v307 = vpop.permute.xlu0 %306
  %308 = vrot.lane.b32.xlu0 %v191, 64
  %v309 = vpop.permute.xlu0 %308
  %314 = vst.msk [vmem:[%s6] sm:$0xff] %vm28, %v303
  %315 = vst.msk [vmem:[%s6 + $0x8] sm:$0xff] %vm28, %v305
  %316 = vst.msk [vmem:[%s6 + $0x10] sm:$0xff] %vm28, %v307
  %317 = vst.msk [vmem:[%s6 + $0x18] sm:$0xff] %vm28, %v309
  %318 = vst.msk [vmem:[%s7] sm:$0xff] %vm28, %v276
  %319 = vst.msk [vmem:[%s7 + $0x8] sm:$0xff] %vm28, %v281
  %320 = vst.msk [vmem:[%s7 + $0x10] sm:$0xff] %vm28, %v286
  %321 = vst.msk [vmem:[%s7 + $0x18] sm:$0xff] %vm28, %v291
  %326 = vrot.lane.b32.xlu0 %v276, 64
  %v327 = vpop.permute.xlu0 %326
  %328 = vrot.lane.b32.xlu0 %v281, 64
  %v329 = vpop.permute.xlu0 %328
  %330 = vrot.lane.b32.xlu0 %v286, 64
  %v331 = vpop.permute.xlu0 %330
  %332 = vrot.lane.b32.xlu0 %v291, 64
  %v333 = vpop.permute.xlu0 %332
  %338 = vst.msk [vmem:[%s8] sm:$0xff] %vm28, %v327
  %339 = vst.msk [vmem:[%s8 + $0x8] sm:$0xff] %vm28, %v329
  %340 = vst.msk [vmem:[%s8 + $0x10] sm:$0xff] %vm28, %v331
  %341 = vst.msk [vmem:[%s8 + $0x18] sm:$0xff] %vm28, %v333
  // Predicated region
  $region22: #{attention_forward.3} parent=0 // pred_check
    _
  $region23: #{attention_forward.3} parent=0 // pred_check_branch
    %343 = sbr.rel (0) target = $region25
  $region24: #{attention_forward.3} parent=0 // pred_region
    _
  $region25: #{attention_forward.3} parent=0 // pred_fallthru
    _
  // Predicated region
  $region26: #{attention_forward.3} parent=0 // pred_check
    _
  $region27: #{attention_forward.3} parent=0 // pred_check_branch
    %345 = sbr.rel (0) target = $region29
  $region28: #{attention_forward.3} parent=0 // pred_region
    _
  $region29: #{attention_forward.3} parent=0 // pred_fallthru
    _
  // Predicated region
  $region30: #{attention_forward.3} parent=0 // pred_check
    _
  $region31: #{attention_forward.3} parent=0 // pred_check_branch
    %347 = sbr.rel (0) target = $region33
  $region32: #{attention_forward.3} parent=0 // pred_region
    _
  $region33: #{attention_forward.3} parent=0 // pred_fallthru
    _
  // Predicated region
  $region34: #{attention_forward.3} parent=0 // pred_check
    _
  $region35: #{attention_forward.3} parent=0 // pred_check_branch
    %349 = sbr.rel (0) target = $region37
  $region36: #{attention_forward.3} parent=0 // pred_region
    _
  $region37: #{attention_forward.3} parent=0 // pred_fallthru
    _
  // Predicated region
  $region38: #{attention_forward.3} parent=0 // pred_check
    _
  $region39: #{attention_forward.3} parent=0 // pred_check_branch
    %351 = sbr.rel (0) target = $region41
  $region40: #{attention_forward.3} parent=0 // pred_region
    _
  $region41: #{attention_forward.3} parent=0 // pred_fallthru
    _
  // Predicated region
  $region42: #{attention_forward.3} parent=0 // pred_check
    _
  $region43: #{attention_forward.3} parent=0 // pred_check_branch
    %353 = sbr.rel (0) target = $region45
  $region44: #{attention_forward.3} parent=0 // pred_region
    _
  $region45: #{attention_forward.3} parent=0 // pred_fallthru
    _
  // Predicated region
  $region46: #{attention_forward.3} parent=0 // pred_check
    _
  $region47: #{attention_forward.3} parent=0 // pred_check_branch
    %355 = sbr.rel (0) target = $region49
  $region48: #{attention_forward.3} parent=0 // pred_region
    _
  $region49: #{attention_forward.3} parent=0 // pred_fallthru
    _
  // Predicated region
  $region50: #{attention_forward.3} parent=0 // pred_check
    _
  $region51: #{attention_forward.3} parent=0 // pred_check_branch
    %357 = sbr.rel (0) target = $region53
  $region52: #{attention_forward.3} parent=0 // pred_region
    _
  $region53: #{attention_forward.3} parent=0 // pred_fallthru
    _

// kernel: attention_forward.4
$region0: #{attention_forward.4}
  #allocation0 [shape = 'u32[]', space=smem, size = 0x4, offset = 0x4, fixed_abs, tag = 'smem constant byte address 0x4 - core index']
  #allocation1 [shape = 'u32[144,128]{1,0:T(1,128)}', space=vmem, size = 0x12000, scoped, tag = 'internal scratch']
  %s0 = inlined_call_operand.vmem [shape: f32[2,16,64], index: 0, kind: input, shape index: {}]
  %s1 = inlined_call_operand.vmem [shape: f32[2,16,64], index: 1, kind: input, shape index: {}]
  %s2 = inlined_call_operand.vmem [shape: f32[2,16,64], index: 2, kind: input, shape index: {}]
  %s3 = inlined_call_operand.vmem [shape: f32[2,16,64], index: 3, kind: input, shape index: {}]
  %s4 = inlined_call_operand.vmem [shape: f32[128,64], index: 4, kind: input, shape index: {}]
  %s5 = inlined_call_operand.vmem [shape: f32[128,64], index: 5, kind: input, shape index: {}]
  %s6 = inlined_call_operand.vmem [shape: s16[16,16], index: 6, kind: input, shape index: {}]
  %s7 = inlined_call_operand.vmem [shape: s8[2,1,16], index: 7, kind: input, shape index: {}]
  %s8 = inlined_call_operand.vmem [shape: f32[2,16,64], index: 8, kind: output, shape index: {}]
  %s9 = sld [smem:[#allocation0]]
  $region65: #{attention_forward.4} parent=0
    _
  %s11 = ssub.s32 1, %s9
  %s12 = scalar_select 0, %s11, %s9
  loop: start=0, step=1, limit=4
  $region2: #{attention_forward.4} parent=0 // loop_pre_header
    _
  $region3: #{attention_forward.4} parent=0 // loop_header
    %s14 = sphi 0, %s18
    %p15 = scmp.ge.s32.totalorder %s14, 4
    %s21 = sphi 0, %s33
    %s22 = sphi 0, %s29
    %s23 = sphi 0, %s21
    %s24 = sphi 0, %s22
    %s25 = sphi 0, %s23
    %s26 = sphi 0, %s24
    %s38 = sphi 0, %s40
    %s41 = sphi 0, %s38
    %s42 = sphi 0, %s41
    %s58 = sphi 0, %s42
    %s66 = sphi 0, %s68
    %s69 = sphi 0, %s66
    %s70 = sphi 0, %s69
    %s86 = sphi 0, %s70
    %s94 = sphi 0, %s96
    %s97 = sphi 0, %s94
    %s98 = sphi 0, %s97
    %s114 = sphi 0, %s98
    %s122 = sphi 0, %s124
    %s125 = sphi 0, %s122
    %s126 = sphi 0, %s125
    %s142 = sphi 0, %s126
    %s148 = sphi 0, %s150
    %s151 = sphi 0, %s148
    %s152 = sphi 0, %s151
    %s168 = sphi 0, %s152
    %s174 = sphi 0, %s176
    %s177 = sphi 0, %s174
    %s178 = sphi 0, %s177
    %s194 = sphi 0, %s178
    %s198 = sphi 0, %s198
    %s200 = sphi 0, %s198
    %s201 = sphi 0, %s200
    %s215 = sphi 0, %s201
    %s221 = sphi 0, %s223
    %s224 = sphi 0, %s221
    %s225 = sphi 0, %s224
    %s241 = sphi 0, %s225
    %s249 = sphi 0, %s251
    %s252 = sphi 0, %s249
    %s253 = sphi 0, %s252
    %s269 = sphi 0, %s253
  $region4: #{attention_forward.4} parent=0 // loop_header_branch
    %17 = sbr.rel (%p15) target = $region8
  $region5: #{attention_forward.4} parent=0 // loop_body
    %s19 = ssub.s32 %s14, 1
    %s20 = ssub.s32 %s14, 2
    %s27 = sadd.s32 1, %s22
    %p28 = scmp.ge.s32.totalorder %s27, 1
    %s29 = scalar_select %p28, 0, %s27
    %s30 = sadd.s32 1, %s21
    %s31 = scalar_select %p28, %s30, %s21
    %p32 = scmp.ge.s32.totalorder %s31, 2
    %s33 = scalar_select %p32, 0, %s31
    %s34 = ssub.s32 %s21, %s33
    %s35 = ssub.s32 %s22, %s29
    %s36 = sor.u32 %s34, %s35
    %p37 = scmp.eq.s32.totalorder %s36, 0
    %s39 = sadd.s32 %s38, 1
    %s40 = scalar_select %p37, %s38, %s39
    %p43 = pneg %p37
    %p44 = scmp.eq.s32.totalorder %s14, 1
    %p45 = por %p43, %p44
    %p46 = scmp.ne.s32.totalorder %s38, %s41
    %p47 = scmp.eq.s32.totalorder %s14, 0
    %p48 = por %p46, %p47
    %p49 = scmp.ne.s32.totalorder %s38, %s41
    %p50 = scmp.eq.s32.totalorder %s19, 1
    %p51 = por %p49, %p50
    %p52 = scmp.ne.s32.totalorder %s41, %s42
    %p53 = scmp.eq.s32.totalorder %s19, 0
    %p54 = por %p52, %p53
    %p55 = scmp.ne.s32.totalorder %s41, %s42
    %p56 = scmp.eq.s32.totalorder %s20, 1
    %p57 = por %p55, %p56
    %p59 = scmp.ne.s32.totalorder %s42, %s58
    %p60 = scmp.eq.s32.totalorder %s20, 0
    %p61 = por %p59, %p60
    %s62 = ssub.s32 %s21, %s33
    %s63 = ssub.s32 %s22, %s29
    %s64 = sor.u32 %s62, %s63
    %p65 = scmp.eq.s32.totalorder %s64, 0
    %s67 = sadd.s32 %s66, 1
    %s68 = scalar_select %p65, %s66, %s67
    %p71 = pneg %p65
    %p72 = scmp.eq.s32.totalorder %s14, 1
    %p73 = por %p71, %p72
    %p74 = scmp.ne.s32.totalorder %s66, %s69
    %p75 = scmp.eq.s32.totalorder %s14, 0
    %p76 = por %p74, %p75
    %p77 = scmp.ne.s32.totalorder %s66, %s69
    %p78 = scmp.eq.s32.totalorder %s19, 1
    %p79 = por %p77, %p78
    %p80 = scmp.ne.s32.totalorder %s69, %s70
    %p81 = scmp.eq.s32.totalorder %s19, 0
    %p82 = por %p80, %p81
    %p83 = scmp.ne.s32.totalorder %s69, %s70
    %p84 = scmp.eq.s32.totalorder %s20, 1
    %p85 = por %p83, %p84
    %p87 = scmp.ne.s32.totalorder %s70, %s86
    %p88 = scmp.eq.s32.totalorder %s20, 0
    %p89 = por %p87, %p88
    %s90 = ssub.s32 %s21, %s33
    %s91 = ssub.s32 %s22, %s29
    %s92 = sor.u32 %s90, %s91
    %p93 = scmp.eq.s32.totalorder %s92, 0
    %s95 = sadd.s32 %s94, 1
    %s96 = scalar_select %p93, %s94, %s95
    %p99 = pneg %p93
    %p100 = scmp.eq.s32.totalorder %s14, 1
    %p101 = por %p99, %p100
    %p102 = scmp.ne.s32.totalorder %s94, %s97
    %p103 = scmp.eq.s32.totalorder %s14, 0
    %p104 = por %p102, %p103
    %p105 = scmp.ne.s32.totalorder %s94, %s97
    %p106 = scmp.eq.s32.totalorder %s19, 1
    %p107 = por %p105, %p106
    %p108 = scmp.ne.s32.totalorder %s97, %s98
    %p109 = scmp.eq.s32.totalorder %s19, 0
    %p110 = por %p108, %p109
    %p111 = scmp.ne.s32.totalorder %s97, %s98
    %p112 = scmp.eq.s32.totalorder %s20, 1
    %p113 = por %p111, %p112
    %p115 = scmp.ne.s32.totalorder %s98, %s114
    %p116 = scmp.eq.s32.totalorder %s20, 0
    %p117 = por %p115, %p116
    %s118 = ssub.s32 %s21, %s33
    %s119 = ssub.s32 %s22, %s29
    %s120 = sor.u32 %s118, %s119
    %p121 = scmp.eq.s32.totalorder %s120, 0
    %s123 = sadd.s32 %s122, 1
    %s124 = scalar_select %p121, %s122, %s123
    %p127 = pneg %p121
    %p128 = scmp.eq.s32.totalorder %s14, 1
    %p129 = por %p127, %p128
    %p130 = scmp.ne.s32.totalorder %s122, %s125
    %p131 = scmp.eq.s32.totalorder %s14, 0
    %p132 = por %p130, %p131
    %p133 = scmp.ne.s32.totalorder %s122, %s125
    %p134 = scmp.eq.s32.totalorder %s19, 1
    %p135 = por %p133, %p134
    %p136 = scmp.ne.s32.totalorder %s125, %s126
    %p137 = scmp.eq.s32.totalorder %s19, 0
    %p138 = por %p136, %p137
    %p139 = scmp.ne.s32.totalorder %s125, %s126
    %p140 = scmp.eq.s32.totalorder %s20, 1
    %p141 = por %p139, %p140
    %p143 = scmp.ne.s32.totalorder %s126, %s142
    %p144 = scmp.eq.s32.totalorder %s20, 0
    %p145 = por %p143, %p144
    %s146 = ssub.s32 %s22, %s29
    %p147 = scmp.eq.s32.totalorder %s146, 0
    %s149 = sadd.s32 %s148, 1
    %s150 = scalar_select %p147, %s148, %s149
    %p153 = pneg %p147
    %p154 = scmp.eq.s32.totalorder %s14, 1
    %p155 = por %p153, %p154
    %p156 = scmp.ne.s32.totalorder %s148, %s151
    %p157 = scmp.eq.s32.totalorder %s14, 0
    %p158 = por %p156, %p157
    %p159 = scmp.ne.s32.totalorder %s148, %s151
    %p160 = scmp.eq.s32.totalorder %s19, 1
    %p161 = por %p159, %p160
    %p162 = scmp.ne.s32.totalorder %s151, %s152
    %p163 = scmp.eq.s32.totalorder %s19, 0
    %p164 = por %p162, %p163
    %p165 = scmp.ne.s32.totalorder %s151, %s152
    %p166 = scmp.eq.s32.totalorder %s20, 1
    %p167 = por %p165, %p166
    %p169 = scmp.ne.s32.totalorder %s152, %s168
    %p170 = scmp.eq.s32.totalorder %s20, 0
    %p171 = por %p169, %p170
    %s172 = ssub.s32 %s22, %s29
    %p173 = scmp.eq.s32.totalorder %s172, 0
    %s175 = sadd.s32 %s174, 1
    %s176 = scalar_select %p173, %s174, %s175
    %p179 = pneg %p173
    %p180 = scmp.eq.s32.totalorder %s14, 1
    %p181 = por %p179, %p180
    %p182 = scmp.ne.s32.totalorder %s174, %s177
    %p183 = scmp.eq.s32.totalorder %s14, 0
    %p184 = por %p182, %p183
    %p185 = scmp.ne.s32.totalorder %s174, %s177
    %p186 = scmp.eq.s32.totalorder %s19, 1
    %p187 = por %p185, %p186
    %p188 = scmp.ne.s32.totalorder %s177, %s178
    %p189 = scmp.eq.s32.totalorder %s19, 0
    %p190 = por %p188, %p189
    %p191 = scmp.ne.s32.totalorder %s177, %s178
    %p192 = scmp.eq.s32.totalorder %s20, 1
    %p193 = por %p191, %p192
    %p195 = scmp.ne.s32.totalorder %s178, %s194
    %p196 = scmp.eq.s32.totalorder %s20, 0
    %p197 = por %p195, %p196
    %s199 = sadd.s32 %s198, 1
    %p202 = scmp.eq.s32.totalorder %s14, 1
    %p203 = scmp.ne.s32.totalorder %s198, %s200
    %p204 = scmp.eq.s32.totalorder %s14, 0
    %p205 = por %p203, %p204
    %p206 = scmp.ne.s32.totalorder %s198, %s200
    %p207 = scmp.eq.s32.totalorder %s19, 1
    %p208 = por %p206, %p207
    %p209 = scmp.ne.s32.totalorder %s200, %s201
    %p210 = scmp.eq.s32.totalorder %s19, 0
    %p211 = por %p209, %p210
    %p212 = scmp.ne.s32.totalorder %s200, %s201
    %p213 = scmp.eq.s32.totalorder %s20, 1
    %p214 = por %p212, %p213
    %p216 = scmp.ne.s32.totalorder %s201, %s215
    %p217 = scmp.eq.s32.totalorder %s20, 0
    %p218 = por %p216, %p217
    %s219 = ssub.s32 %s21, %s33
    %p220 = scmp.eq.s32.totalorder %s219, 0
    %s222 = sadd.s32 %s221, 1
    %s223 = scalar_select %p220, %s221, %s222
    %p226 = pneg %p220
    %p227 = scmp.eq.s32.totalorder %s14, 1
    %p228 = por %p226, %p227
    %p229 = scmp.ne.s32.totalorder %s221, %s224
    %p230 = scmp.eq.s32.totalorder %s14, 0
    %p231 = por %p229, %p230
    %p232 = scmp.ne.s32.totalorder %s221, %s224
    %p233 = scmp.eq.s32.totalorder %s19, 1
    %p234 = por %p232, %p233
    %p235 = scmp.ne.s32.totalorder %s224, %s225
    %p236 = scmp.eq.s32.totalorder %s19, 0
    %p237 = por %p235, %p236
    %p238 = scmp.ne.s32.totalorder %s224, %s225
    %p239 = scmp.eq.s32.totalorder %s20, 1
    %p240 = por %p238, %p239
    %p242 = scmp.ne.s32.totalorder %s225, %s241
    %p243 = scmp.eq.s32.totalorder %s20, 0
    %p244 = por %p242, %p243
    %s245 = ssub.s32 %s21, %s33
    %s246 = ssub.s32 %s22, %s29
    %s247 = sor.u32 %s245, %s246
    %p248 = scmp.eq.s32.totalorder %s247, 0
    %s250 = sadd.s32 %s249, 1
    %s251 = scalar_select %p248, %s249, %s250
    %p254 = pneg %p248
    %p255 = scmp.eq.s32.totalorder %s14, 1
    %p256 = por %p254, %p255
    %p257 = scmp.ne.s32.totalorder %s249, %s252
    %p258 = scmp.eq.s32.totalorder %s14, 0
    %p259 = por %p257, %p258
    %p260 = scmp.ne.s32.totalorder %s249, %s252
    %p261 = scmp.eq.s32.totalorder %s19, 1
    %p262 = por %p260, %p261
    %p263 = scmp.ne.s32.totalorder %s252, %s253
    %p264 = scmp.eq.s32.totalorder %s19, 0
    %p265 = por %p263, %p264
    %p266 = scmp.ne.s32.totalorder %s252, %s253
    %p267 = scmp.eq.s32.totalorder %s20, 1
    %p268 = por %p266, %p267
    %p270 = scmp.ne.s32.totalorder %s253, %s269
    %p271 = scmp.eq.s32.totalorder %s20, 0
    %p272 = por %p270, %p271
    %p273 = scmp.le.s32.totalorder 1, %s14
    %p274 = scmp.lt.s32.totalorder %s14, 3
    %p275 = pnand %p273, %p274
    %p276 = pneg %p275
    // Predicated region
    $region9: #{attention_forward.4} parent=5 // pred_check
      _
    $region10: #{attention_forward.4} parent=5 // pred_check_branch
      %278 = sbr.rel (%p275) target = $region12
    $region11: #{attention_forward.4} parent=5 // pred_region
      %s279 = ssub.s32 %s14, 1
      // Predicated region
      $region13: #{attention_forward.4} parent=11 // pred_check
        %p280 = pneg %p164
      $region14: #{attention_forward.4} parent=11 // pred_check_branch
        %282 = sbr.rel (%p280) target = $region16
      $region15: #{attention_forward.4} parent=11 // pred_region
        %p283 = scmp.lt.s32.totalorder %s24, 0
        %s284 = scalar_select %p283, %s24, 0
        %s285 = smul.addr %s284, 8
        %s286 = scalar_lea.vmem %s4, %s285
      $region16: #{attention_forward.4} parent=11 // pred_fallthru
        _
      // Predicated region
      $region17: #{attention_forward.4} parent=11 // pred_check
        %p287 = pneg %p190
      $region18: #{attention_forward.4} parent=11 // pred_check_branch
        %289 = sbr.rel (%p287) target = $region20
      $region19: #{attention_forward.4} parent=11 // pred_region
        %p290 = scmp.lt.s32.totalorder %s24, 0
        %s291 = scalar_select %p290, %s24, 0
        %s292 = smul.addr %s291, 8
        %s293 = scalar_lea.vmem %s5, %s292
      $region20: #{attention_forward.4} parent=11 // pred_fallthru
        _
      // Predicated region
      $region21: #{attention_forward.4} parent=11 // pred_check
        %p294 = pneg %p211
      $region22: #{attention_forward.4} parent=11 // pred_check_branch
        %296 = sbr.rel (%p294) target = $region24
      $region23: #{attention_forward.4} parent=11 // pred_region
        _
      $region24: #{attention_forward.4} parent=11 // pred_fallthru
        _
    $region12: #{attention_forward.4} parent=5 // pred_fallthru
      _
    %p297 = scmp.lt.s32.totalorder %s14, 2
    // Predicated region
    $region25: #{attention_forward.4} parent=5 // pred_check
      %p298 = pneg %p297
    $region26: #{attention_forward.4} parent=5 // pred_check_branch
      %300 = sbr.rel (%p298) target = $region28
    $region27: #{attention_forward.4} parent=5 // pred_region
      // Predicated region
      $region29: #{attention_forward.4} parent=27 // pred_check
        %p301 = pneg %p48
      $region30: #{attention_forward.4} parent=27 // pred_check_branch
        %303 = sbr.rel (%p301) target = $region32
      $region31: #{attention_forward.4} parent=27 // pred_region
        %p304 = scmp.lt.s32.totalorder %s21, 1
        %s305 = scalar_select %p304, %s21, 1
        %p306 = scmp.lt.s32.totalorder %s22, 0
        %s307 = scalar_select %p306, %s22, 0
        %s308 = smul.addr %s305, 2
        %s309 = sadd.s32 %s307, %s308
        %s310 = smul.addr %s309, 8
        %s311 = scalar_lea.vmem %s0, %s310
      $region32: #{attention_forward.4} parent=27 // pred_fallthru
        _
      // Predicated region
      $region33: #{attention_forward.4} parent=27 // pred_check
        %p312 = pneg %p76
      $region34: #{attention_forward.4} parent=27 // pred_check_branch
        %314 = sbr.rel (%p312) target = $region36
      $region35: #{attention_forward.4} parent=27 // pred_region
        %p315 = scmp.lt.s32.totalorder %s21, 1
        %s316 = scalar_select %p315, %s21, 1
        %p317 = scmp.lt.s32.totalorder %s22, 0
        %s318 = scalar_select %p317, %s22, 0
        %s319 = smul.addr %s316, 2
        %s320 = sadd.s32 %s318, %s319
        %s321 = smul.addr %s320, 8
        %s322 = scalar_lea.vmem %s1, %s321
      $region36: #{attention_forward.4} parent=27 // pred_fallthru
        _
      // Predicated region
      $region37: #{attention_forward.4} parent=27 // pred_check
        %p323 = pneg %p104
      $region38: #{attention_forward.4} parent=27 // pred_check_branch
        %325 = sbr.rel (%p323) target = $region40
      $region39: #{attention_forward.4} parent=27 // pred_region
        %p326 = scmp.lt.s32.totalorder %s21, 1
        %s327 = scalar_select %p326, %s21, 1
        %p328 = scmp.lt.s32.totalorder %s22, 0
        %s329 = scalar_select %p328, %s22, 0
        %s330 = smul.addr %s327, 2
        %s331 = sadd.s32 %s329, %s330
        %s332 = smul.addr %s331, 8
        %s333 = scalar_lea.vmem %s2, %s332
      $region40: #{attention_forward.4} parent=27 // pred_fallthru
        _
      // Predicated region
      $region41: #{attention_forward.4} parent=27 // pred_check
        %p334 = pneg %p132
      $region42: #{attention_forward.4} parent=27 // pred_check_branch
        %336 = sbr.rel (%p334) target = $region44
      $region43: #{attention_forward.4} parent=27 // pred_region
        %p337 = scmp.lt.s32.totalorder %s21, 1
        %s338 = scalar_select %p337, %s21, 1
        %p339 = scmp.lt.s32.totalorder %s22, 0
        %s340 = scalar_select %p339, %s22, 0
        %s341 = smul.addr %s338, 2
        %s342 = sadd.s32 %s340, %s341
        %s343 = smul.addr %s342, 8
        %s344 = scalar_lea.vmem %s3, %s343
      $region44: #{attention_forward.4} parent=27 // pred_fallthru
        _
      // Predicated region
      $region45: #{attention_forward.4} parent=27 // pred_check
        %p345 = pneg %p231
      $region46: #{attention_forward.4} parent=27 // pred_check_branch
        %347 = sbr.rel (%p345) target = $region48
      $region47: #{attention_forward.4} parent=27 // pred_region
        %p348 = scmp.lt.s32.totalorder %s21, 1
        %s349 = scalar_select %p348, %s21, 1
        %s350 = scalar_lea.vmem %s7, %s349
      $region48: #{attention_forward.4} parent=27 // pred_fallthru
        _
    $region28: #{attention_forward.4} parent=5 // pred_fallthru
      _
    %p351 = scmp.le.s32.totalorder 1, %s14
    %p352 = scmp.lt.s32.totalorder %s14, 3
    %p353 = pnand %p351, %p352
    %p354 = pneg %p353
    // Predicated region
    $region49: #{attention_forward.4} parent=5 // pred_check
      _
    $region50: #{attention_forward.4} parent=5 // pred_check_branch
      %356 = sbr.rel (%p353) target = $region52
    $region51: #{attention_forward.4} parent=5 // pred_region
      %s357 = ssub.s32 %s14, 1
      %p358 = scmp.lt.s32.totalorder %s23, 1
      %s359 = scalar_select %p358, %s23, 1
      %p360 = scmp.lt.s32.totalorder %s24, 0
      %s361 = scalar_select %p360, %s24, 0
      %s362 = smul.addr %s359, 2
      %s363 = sadd.s32 %s361, %s362
      %s364 = smul.addr %s363, 8
      %s365 = scalar_lea.vmem %s0, %s364
      %p366 = pneg %p54
      %p367 = pneg %p51
      %p368 = scmp.lt.s32.totalorder %s23, 1
      %s369 = scalar_select %p368, %s23, 1
      %p370 = scmp.lt.s32.totalorder %s24, 0
      %s371 = scalar_select %p370, %s24, 0
      %s372 = smul.addr %s369, 2
      %s373 = sadd.s32 %s371, %s372
      %s374 = smul.addr %s373, 8
      %s375 = scalar_lea.vmem %s1, %s374
      %p376 = pneg %p82
      %p377 = pneg %p79
      %p378 = scmp.lt.s32.totalorder %s23, 1
      %s379 = scalar_select %p378, %s23, 1
      %p380 = scmp.lt.s32.totalorder %s24, 0
      %s381 = scalar_select %p380, %s24, 0
      %s382 = smul.addr %s379, 2
      %s383 = sadd.s32 %s381, %s382
      %s384 = smul.addr %s383, 8
      %s385 = scalar_lea.vmem %s2, %s384
      %p386 = pneg %p110
      %p387 = pneg %p107
      %p388 = scmp.lt.s32.totalorder %s23, 1
      %s389 = scalar_select %p388, %s23, 1
      %p390 = scmp.lt.s32.totalorder %s24, 0
      %s391 = scalar_select %p390, %s24, 0
      %s392 = smul.addr %s389, 2
      %s393 = sadd.s32 %s391, %s392
      %s394 = smul.addr %s393, 8
      %s395 = scalar_lea.vmem %s3, %s394
      %p396 = pneg %p138
      %p397 = pneg %p135
      %p398 = scmp.lt.s32.totalorder %s24, 0
      %s399 = scalar_select %p398, %s24, 0
      %s400 = smul.addr %s399, 8
      %s401 = scalar_lea.vmem %s4, %s400
      %p402 = pneg %p164
      %p403 = pneg %p161
      %p404 = scmp.lt.s32.totalorder %s24, 0
      %s405 = scalar_select %p404, %s24, 0
      %s406 = smul.addr %s405, 8
      %s407 = scalar_lea.vmem %s5, %s406
      %p408 = pneg %p190
      %p409 = pneg %p187
      %p410 = pneg %p211
      %p411 = pneg %p208
      %p412 = scmp.lt.s32.totalorder %s23, 1
      %s413 = scalar_select %p412, %s23, 1
      %s414 = scalar_lea.vmem %s7, %s413
      %p415 = pneg %p237
      %p416 = pneg %p234
      %p417 = pneg %p265
      %p418 = pneg %p262
      %p419 = scmp.lt.s32.totalorder %s23, 1
      %s420 = scalar_select %p419, %s23, 1
      %p421 = scmp.lt.s32.totalorder %s24, 0
      %s422 = scalar_select %p421, %s24, 0
      %s423 = smul.addr %s420, 2
      %s424 = sadd.s32 %s422, %s423
      %s425 = smul.addr %s424, 8
      %s426 = scalar_lea.vmem %s8, %s425
      %p427 = scmp.lt.s32.totalorder %s23, 1
      %s428 = scalar_select %p427, %s23, 1
      %p429 = scmp.lt.s32.totalorder %s24, 0
      %s430 = scalar_select %p429, %s24, 0
      %s431 = smul.addr %s428, 2
      %s432 = sadd.s32 %s430, %s431
      %s433 = smul.addr %s432, 8
      %s434 = scalar_lea.vmem %s0, %s433
      %p435 = scmp.lt.s32.totalorder %s23, 1
      %s436 = scalar_select %p435, %s23, 1
      %p437 = scmp.lt.s32.totalorder %s24, 0
      %s438 = scalar_select %p437, %s24, 0
      %s439 = smul.addr %s436, 2
      %s440 = sadd.s32 %s438, %s439
      %s441 = smul.addr %s440, 8
      %s442 = scalar_lea.vmem %s1, %s441
      %p443 = scmp.lt.s32.totalorder %s23, 1
      %s444 = scalar_select %p443, %s23, 1
      %p445 = scmp.lt.s32.totalorder %s24, 0
      %s446 = scalar_select %p445, %s24, 0
      %s447 = smul.addr %s444, 2
      %s448 = sadd.s32 %s446, %s447
      %s449 = smul.addr %s448, 8
      %s450 = scalar_lea.vmem %s2, %s449
      %p451 = scmp.lt.s32.totalorder %s23, 1
      %s452 = scalar_select %p451, %s23, 1
      %p453 = scmp.lt.s32.totalorder %s24, 0
      %s454 = scalar_select %p453, %s24, 0
      %s455 = smul.addr %s452, 2
      %s456 = sadd.s32 %s454, %s455
      %s457 = smul.addr %s456, 8
      %s458 = scalar_lea.vmem %s3, %s457
      %p459 = scmp.lt.s32.totalorder %s24, 0
      %s460 = scalar_select %p459, %s24, 0
      %s461 = smul.addr %s460, 8
      %s462 = scalar_lea.vmem %s4, %s461
      %p463 = scmp.lt.s32.totalorder %s24, 0
      %s464 = scalar_select %p463, %s24, 0
      %s465 = smul.addr %s464, 8
      %s466 = scalar_lea.vmem %s5, %s465
      %p467 = scmp.lt.s32.totalorder %s23, 1
      %s468 = scalar_select %p467, %s23, 1
      %s469 = scalar_lea.vmem %s7, %s468
      %p470 = scmp.lt.s32.totalorder %s23, 1
      %s471 = scalar_select %p470, %s23, 1
      %p472 = scmp.lt.s32.totalorder %s24, 0
      %s473 = scalar_select %p472, %s24, 0
      %s474 = smul.addr %s471, 2
      %s475 = sadd.s32 %s473, %s474
      %s476 = smul.addr %s475, 8
      %s477 = scalar_lea.vmem %s8, %s476
      %v480 = vld [vmem:[%s6] sm:$0xf]
      %v481 = vld [vmem:[%s6 + $0x4] sm:$0xf]
      %v482 = vunpack.c.l.b16 %v480
      %v483 = vunpack.c.l.b16 %v481
      %v484 = vld [vmem:[%s469] sm:$0x1]
      %vm485 = vnez %v484
      %v486 = vld [vmem:[%s434] sm:$0xff]
      %v487 = vld [vmem:[%s434 + $0x8] sm:$0xff]
      %v488 = vld [vmem:[%s442] sm:$0xff]
      %v489 = vld [vmem:[%s442 + $0x8] sm:$0xff]
      %v490 = vld [vmem:[%s450] sm:$0xff]
      %v491 = vld [vmem:[%s450 + $0x8] sm:$0xff]
      %v492 = vld [vmem:[%s462] sm:$0xff]
      %v493 = vld [vmem:[%s462 + $0x8] sm:$0xff]
      %v494 = vld [vmem:[%s462 + $0x10] sm:$0xff]
      %v495 = vld [vmem:[%s462 + $0x18] sm:$0xff]
      %v496 = vld [vmem:[%s462 + $0x20] sm:$0xff]
      %v497 = vld [vmem:[%s462 + $0x28] sm:$0xff]
      %v498 = vld [vmem:[%s462 + $0x30] sm:$0xff]
      %v499 = vld [vmem:[%s462 + $0x38] sm:$0xff]
      %v500 = vld [vmem:[%s462 + $0x40] sm:$0xff]
      %v501 = vld [vmem:[%s462 + $0x48] sm:$0xff]
      %v502 = vld [vmem:[%s462 + $0x50] sm:$0xff]
      %v503 = vld [vmem:[%s462 + $0x58] sm:$0xff]
      %v504 = vld [vmem:[%s462 + $0x60] sm:$0xff]
      %v505 = vld [vmem:[%s462 + $0x68] sm:$0xff]
      %v506 = vld [vmem:[%s462 + $0x70] sm:$0xff]
      %v507 = vld [vmem:[%s462 + $0x78] sm:$0xff]
      %v508 = vld [vmem:[%s466] sm:$0xff]
      %v509 = vld [vmem:[%s466 + $0x8] sm:$0xff]
      %v510 = vld [vmem:[%s466 + $0x10] sm:$0xff]
      %v511 = vld [vmem:[%s466 + $0x18] sm:$0xff]
      %v512 = vld [vmem:[%s466 + $0x20] sm:$0xff]
      %v513 = vld [vmem:[%s466 + $0x28] sm:$0xff]
      %v514 = vld [vmem:[%s466 + $0x30] sm:$0xff]
      %v515 = vld [vmem:[%s466 + $0x38] sm:$0xff]
      %v516 = vld [vmem:[%s466 + $0x40] sm:$0xff]
      %v517 = vld [vmem:[%s466 + $0x48] sm:$0xff]
      %v518 = vld [vmem:[%s466 + $0x50] sm:$0xff]
      %v519 = vld [vmem:[%s466 + $0x58] sm:$0xff]
      %v520 = vld [vmem:[%s466 + $0x60] sm:$0xff]
      %v521 = vld [vmem:[%s466 + $0x68] sm:$0xff]
      %v522 = vld [vmem:[%s466 + $0x70] sm:$0xff]
      %v523 = vld [vmem:[%s466 + $0x78] sm:$0xff]
      %vm524 = vcmask 130048
      %v526 = vsel %vm524, %v486, 0
      %v529 = vsel %vm524, %v487, 0
      %v532 = vsel %vm524, %v492, 0
      %v535 = vsel %vm524, %v493, 0
      %v538 = vsel %vm524, %v494, 0
      %v541 = vsel %vm524, %v495, 0
      %v544 = vsel %vm524, %v496, 0
      %v547 = vsel %vm524, %v497, 0
      %v550 = vsel %vm524, %v498, 0
      %v553 = vsel %vm524, %v499, 0
      %v556 = vsel %vm524, %v500, 0
      %v559 = vsel %vm524, %v501, 0
      %v562 = vsel %vm524, %v502, 0
      %v565 = vsel %vm524, %v503, 0
      %v568 = vsel %vm524, %v504, 0
      %v571 = vsel %vm524, %v505, 0
      %v574 = vsel %vm524, %v506, 0
      %v577 = vsel %vm524, %v507, 0
      %579 = vmatprep.subr.mxu0 0.0
      %580 = vmatpush1.xpose.msra.mxu0 %v577
      %581 = vmatprep.subr.mxu0 0.0
      %582 = vmatpush1.xpose.msra.mxu0 %v574
      %583 = vmatprep.subr.mxu0 0.0
      %584 = vmatpush1.xpose.msra.mxu0 %v571
      %585 = vmatprep.subr.mxu0 0.0
      %586 = vmatpush1.xpose.msra.mxu0 %v568
      %587 = vmatprep.subr.mxu0 0.0
      %588 = vmatpush1.xpose.msra.mxu0 %v565
      %589 = vmatprep.subr.mxu0 0.0
      %590 = vmatpush1.xpose.msra.mxu0 %v562
      %591 = vmatprep.subr.mxu0 0.0
      %592 = vmatpush1.xpose.msra.mxu0 %v559
      %593 = vmatprep.subr.mxu0 0.0
      %594 = vmatpush1.xpose.msra.mxu0 %v556
      %595 = vmatprep.subr.mxu0 0.0
      %596 = vmatpush1.xpose.msra.mxu0 %v553
      %597 = vmatprep.subr.mxu0 0.0
      %598 = vmatpush1.xpose.msra.mxu0 %v550
      %599 = vmatprep.subr.mxu0 0.0
      %600 = vmatpush1.xpose.msra.mxu0 %v547
      %601 = vmatprep.subr.mxu0 0.0
      %602 = vmatpush1.xpose.msra.mxu0 %v544
      %603 = vmatprep.subr.mxu0 0.0
      %604 = vmatpush1.xpose.msra.mxu0 %v541
      %605 = vmatprep.subr.mxu0 0.0
      %606 = vmatpush1.xpose.msra.mxu0 %v538
      %607 = vmatprep.subr.mxu0 0.0
      %608 = vmatpush1.xpose.msra.mxu0 %v535
      %609 = vmatprep.subr.mxu0 0.0
      %610 = vmatpush1.xpose.msra.mxu0 %v532
      %611 = vmatprep.subr.mxu0 0.0
      %612 = vmatpush2.xpose.msra.mxu0 0.0
      %613 = vmatprep.subr.mxu0 0.0
      %614 = vmatpush2.xpose.msra.mxu0 0.0
      %615 = vmatprep.subr.mxu0 0.0
      %616 = vmatpush2.xpose.msra.mxu0 0.0
      %617 = vmatprep.subr.mxu0 0.0
      %618 = vmatpush2.xpose.msra.mxu0 0.0
      %619 = vmatprep.subr.mxu0 0.0
      %620 = vmatpush2.xpose.msra.mxu0 0.0
      %621 = vmatprep.subr.mxu0 0.0
      %622 = vmatpush2.xpose.msra.mxu0 0.0
      %623 = vmatprep.subr.mxu0 0.0
      %624 = vmatpush2.xpose.msra.mxu0 0.0
      %625 = vmatprep.subr.mxu0 0.0
      %626 = vmatpush2.xpose.msra.mxu0 0.0
      %627 = vmatprep.subr.mxu0 0.0
      %628 = vmatpush2.xpose.msra.mxu0 0.0
      %629 = vmatprep.subr.mxu0 0.0
      %630 = vmatpush2.xpose.msra.mxu0 0.0
      %631 = vmatprep.subr.mxu0 0.0
      %632 = vmatpush2.xpose.msra.mxu0 0.0
      %633 = vmatprep.subr.mxu0 0.0
      %634 = vmatpush2.xpose.msra.mxu0 0.0
      %635 = vmatprep.subr.mxu0 0.0
      %636 = vmatpush2.xpose.msra.mxu0 0.0
      %637 = vmatprep.subr.mxu0 0.0
      %638 = vmatpush2.xpose.msra.mxu0 0.0
      %639 = vmatprep.subr.mxu0 0.0
      %640 = vmatpush2.xpose.msra.mxu0 0.0
      %641 = vmatprep.subr.mxu0 0.0
      %642 = vmatpush2.xpose.msra.mxu0 0.0
      %643 = vmatprep.mubr.f32.mxu0 0.0
      %644 = vmatmul.mubr.f32.gmra.mxu0 %v526
      %v645 = vpop.f32.mrf.mxu0
      %v646 = vadd.f32 0.0, %v645
      %v647 = vpop.f32.mrf.mxu0
      %648 = vmatprep.mubr.f32.mxu0 0.0
      %649 = vmatmul.mubr.f32.gmra.mxu0 %v529
      %v650 = vpop.f32.mrf.mxu0
      %v651 = vadd.f32 0.0, %v650
      %v652 = vpop.f32.mrf.mxu0
      %653 = vdwg.mxu0
      %v655 = vsel %vm524, %v508, 0
      %v658 = vsel %vm524, %v509, 0
      %v661 = vsel %vm524, %v510, 0
      %v664 = vsel %vm524, %v511, 0
      %v667 = vsel %vm524, %v512, 0
      %v670 = vsel %vm524, %v513, 0
      %v673 = vsel %vm524, %v514, 0
      %v676 = vsel %vm524, %v515, 0
      %v679 = vsel %vm524, %v516, 0
      %v682 = vsel %vm524, %v517, 0
      %v685 = vsel %vm524, %v518, 0
      %v688 = vsel %vm524, %v519, 0
      %v691 = vsel %vm524, %v520, 0
      %v694 = vsel %vm524, %v521, 0
      %v697 = vsel %vm524, %v522, 0
      %v700 = vsel %vm524, %v523, 0
      %v703 = vsel %vm524, %v488, 0
      %v706 = vsel %vm524, %v489, 0
      %708 = vmatprep.subr.mxu0 0.0
      %709 = vmatpush1.xpose.msra.mxu0 0.0
      %710 = vmatprep.subr.mxu0 0.0
      %711 = vmatpush1.xpose.msra.mxu0 0.0
      %712 = vmatprep.subr.mxu0 0.0
      %713 = vmatpush1.xpose.msra.mxu0 0.0
      %714 = vmatprep.subr.mxu0 0.0
      %715 = vmatpush1.xpose.msra.mxu0 0.0
      %716 = vmatprep.subr.mxu0 0.0
      %717 = vmatpush1.xpose.msra.mxu0 0.0
      %718 = vmatprep.subr.mxu0 0.0
      %719 = vmatpush1.xpose.msra.mxu0 0.0
      %720 = vmatprep.subr.mxu0 0.0
      %721 = vmatpush1.xpose.msra.mxu0 0.0
      %722 = vmatprep.subr.mxu0 0.0
      %723 = vmatpush1.xpose.msra.mxu0 0.0
      %724 = vmatprep.subr.mxu0 0.0
      %725 = vmatpush1.xpose.msra.mxu0 0.0
      %726 = vmatprep.subr.mxu0 0.0
      %727 = vmatpush1.xpose.msra.mxu0 0.0
      %728 = vmatprep.subr.mxu0 0.0
      %729 = vmatpush1.xpose.msra.mxu0 0.0
      %730 = vmatprep.subr.mxu0 0.0
      %731 = vmatpush1.xpose.msra.mxu0 0.0
      %732 = vmatprep.subr.mxu0 0.0
      %733 = vmatpush1.xpose.msra.mxu0 0.0
      %734 = vmatprep.subr.mxu0 0.0
      %735 = vmatpush1.xpose.msra.mxu0 0.0
      %736 = vmatprep.subr.mxu0 0.0
      %737 = vmatpush1.xpose.msra.mxu0 %v706
      %738 = vmatprep.subr.mxu0 0.0
      %739 = vmatpush1.xpose.msra.mxu0 %v703
      %740 = vmatprep.subr.mxu0 0.0
      %741 = vmatpush2.xpose.msra.mxu0 0.0
      %742 = vmatprep.subr.mxu0 0.0
      %743 = vmatpush2.xpose.msra.mxu0 0.0
      %744 = vmatprep.subr.mxu0 0.0
      %745 = vmatpush2.xpose.msra.mxu0 0.0
      %746 = vmatprep.subr.mxu0 0.0
      %747 = vmatpush2.xpose.msra.mxu0 0.0
      %748 = vmatprep.subr.mxu0 0.0
      %749 = vmatpush2.xpose.msra.mxu0 0.0
      %750 = vmatprep.subr.mxu0 0.0
      %751 = vmatpush2.xpose.msra.mxu0 0.0
      %752 = vmatprep.subr.mxu0 0.0
      %753 = vmatpush2.xpose.msra.mxu0 0.0
      %754 = vmatprep.subr.mxu0 0.0
      %755 = vmatpush2.xpose.msra.mxu0 0.0
      %756 = vmatprep.subr.mxu0 0.0
      %757 = vmatpush2.xpose.msra.mxu0 0.0
      %758 = vmatprep.subr.mxu0 0.0
      %759 = vmatpush2.xpose.msra.mxu0 0.0
      %760 = vmatprep.subr.mxu0 0.0
      %761 = vmatpush2.xpose.msra.mxu0 0.0
      %762 = vmatprep.subr.mxu0 0.0
      %763 = vmatpush2.xpose.msra.mxu0 0.0
      %764 = vmatprep.subr.mxu0 0.0
      %765 = vmatpush2.xpose.msra.mxu0 0.0
      %766 = vmatprep.subr.mxu0 0.0
      %767 = vmatpush2.xpose.msra.mxu0 0.0
      %768 = vmatprep.subr.mxu0 0.0
      %769 = vmatpush2.xpose.msra.mxu0 0.0
      %770 = vmatprep.subr.mxu0 0.0
      %771 = vmatpush2.xpose.msra.mxu0 0.0
      %772 = vmatprep.mubr.f32.mxu0 0.0
      %773 = vmatmul.mubr.f32.gmra.mxu0 %v655
      %v774 = vpop.f32.mrf.mxu0
      %v775 = vadd.f32 0.0, %v774
      %v776 = vpop.f32.mrf.mxu0
      %777 = vmatprep.mubr.f32.mxu0 0.0
      %778 = vmatmul.mubr.f32.gmra.mxu0 %v658
      %v779 = vpop.f32.mrf.mxu0
      %v780 = vadd.f32 0.0, %v779
      %v781 = vpop.f32.mrf.mxu0
      %782 = vmatprep.mubr.f32.mxu0 0.0
      %783 = vmatmul.mubr.f32.gmra.mxu0 %v661
      %v784 = vpop.f32.mrf.mxu0
      %v785 = vpop.f32.mrf.mxu0
      %786 = vmatprep.mubr.f32.mxu0 0.0
      %787 = vmatmul.mubr.f32.gmra.mxu0 %v664
      %v788 = vpop.f32.mrf.mxu0
      %v789 = vpop.f32.mrf.mxu0
      %790 = vmatprep.mubr.f32.mxu0 0.0
      %791 = vmatmul.mubr.f32.gmra.mxu0 %v667
      %v792 = vpop.f32.mrf.mxu0
      %v793 = vpop.f32.mrf.mxu0
      %794 = vmatprep.mubr.f32.mxu0 0.0
      %795 = vmatmul.mubr.f32.gmra.mxu0 %v670
      %v796 = vpop.f32.mrf.mxu0
      %v797 = vpop.f32.mrf.mxu0
      %798 = vmatprep.mubr.f32.mxu0 0.0
      %799 = vmatmul.mubr.f32.gmra.mxu0 %v673
      %v800 = vpop.f32.mrf.mxu0
      %v801 = vpop.f32.mrf.mxu0
      %802 = vmatprep.mubr.f32.mxu0 0.0
      %803 = vmatmul.mubr.f32.gmra.mxu0 %v676
      %v804 = vpop.f32.mrf.mxu0
      %v805 = vpop.f32.mrf.mxu0
      %806 = vmatprep.mubr.f32.mxu0 0.0
      %807 = vmatmul.mubr.f32.gmra.mxu0 %v679
      %v808 = vpop.f32.mrf.mxu0
      %v809 = vpop.f32.mrf.mxu0
      %810 = vmatprep.mubr.f32.mxu0 0.0
      %811 = vmatmul.mubr.f32.gmra.mxu0 %v682
      %v812 = vpop.f32.mrf.mxu0
      %v813 = vpop.f32.mrf.mxu0
      %814 = vmatprep.mubr.f32.mxu0 0.0
      %815 = vmatmul.mubr.f32.gmra.mxu0 %v685
      %v816 = vpop.f32.mrf.mxu0
      %v817 = vpop.f32.mrf.mxu0
      %818 = vmatprep.mubr.f32.mxu0 0.0
      %819 = vmatmul.mubr.f32.gmra.mxu0 %v688
      %v820 = vpop.f32.mrf.mxu0
      %v821 = vpop.f32.mrf.mxu0
      %822 = vmatprep.mubr.f32.mxu0 0.0
      %823 = vmatmul.mubr.f32.gmra.mxu0 %v691
      %v824 = vpop.f32.mrf.mxu0
      %v825 = vpop.f32.mrf.mxu0
      %826 = vmatprep.mubr.f32.mxu0 0.0
      %827 = vmatmul.mubr.f32.gmra.mxu0 %v694
      %v828 = vpop.f32.mrf.mxu0
      %v829 = vpop.f32.mrf.mxu0
      %830 = vmatprep.mubr.f32.mxu0 0.0
      %831 = vmatmul.mubr.f32.gmra.mxu0 %v697
      %v832 = vpop.f32.mrf.mxu0
      %v833 = vpop.f32.mrf.mxu0
      %834 = vmatprep.mubr.f32.mxu0 0.0
      %835 = vmatmul.mubr.f32.gmra.mxu0 %v700
      %v836 = vpop.f32.mrf.mxu0
      %v837 = vpop.f32.mrf.mxu0
      %838 = vdwg.mxu0
      %vm839 = vcmp.eq.s32.totalorder %v482, 0
      %vm840 = vcmp.eq.s32.totalorder %v483, 0
      %842 = vset.pattern.permute.xlu0 0
      %843 = vperm.xlu0 %842, %v646
      %v844 = vpop.permute.xlu0 %843
      %847 = vset.pattern.permute.xlu0 0
      %848 = vperm.xlu0 %847, %v651
      %v849 = vpop.permute.xlu0 %848
      %v851 = vsel %vm839, %v844, 0.0
      %v852 = vsel %vm840, %v849, 0.0
      %v853 = vadd.f32 %v851, 0.0
      %v854 = vadd.f32 %v852, 0.0
      %vm855 = vcmp.eq.s32.totalorder %v482, 1
      %vm856 = vcmp.eq.s32.totalorder %v483, 1
      %857 = vset.pattern.permute.xlu0 1
      %858 = vperm.xlu0 %857, %v646
      %v859 = vpop.permute.xlu0 %858
      %861 = vset.pattern.permute.xlu0 1
      %862 = vperm.xlu0 %861, %v651
      %v863 = vpop.permute.xlu0 %862
      %v865 = vsel %vm855, %v859, 0.0
      %v866 = vsel %vm856, %v863, 0.0
      %v867 = vadd.f32 %v853, %v865
      %v868 = vadd.f32 %v854, %v866
      %vm869 = vcmp.eq.s32.totalorder %v482, 2
      %vm870 = vcmp.eq.s32.totalorder %v483, 2
      %871 = vset.pattern.permute.xlu0 2
      %872 = vperm.xlu0 %871, %v646
      %v873 = vpop.permute.xlu0 %872
      %875 = vset.pattern.permute.xlu0 2
      %876 = vperm.xlu0 %875, %v651
      %v877 = vpop.permute.xlu0 %876
      %v879 = vsel %vm869, %v873, 0.0
      %v880 = vsel %vm870, %v877, 0.0
      %v881 = vadd.f32 %v867, %v879
      %v882 = vadd.f32 %v868, %v880
      %vm883 = vcmp.eq.s32.totalorder %v482, 3
      %vm884 = vcmp.eq.s32.totalorder %v483, 3
      %885 = vset.pattern.permute.xlu0 3
      %886 = vperm.xlu0 %885, %v646
      %v887 = vpop.permute.xlu0 %886
      %889 = vset.pattern.permute.xlu0 3
      %890 = vperm.xlu0 %889, %v651
      %v891 = vpop.permute.xlu0 %890
      %v893 = vsel %vm883, %v887, 0.0
      %v894 = vsel %vm884, %v891, 0.0
      %v895 = vadd.f32 %v881, %v893
      %v896 = vadd.f32 %v882, %v894
      %vm897 = vcmp.eq.s32.totalorder %v482, 4
      %vm898 = vcmp.eq.s32.totalorder %v483, 4
      %899 = vset.pattern.permute.xlu0 4
      %900 = vperm.xlu0 %899, %v646
      %v901 = vpop.permute.xlu0 %900
      %903 = vset.pattern.permute.xlu0 4
      %904 = vperm.xlu0 %903, %v651
      %v905 = vpop.permute.xlu0 %904
      %v907 = vsel %vm897, %v901, 0.0
      %v908 = vsel %vm898, %v905, 0.0
      %v909 = vadd.f32 %v895, %v907
      %v910 = vadd.f32 %v896, %v908
      %vm911 = vcmp.eq.s32.totalorder %v482, 5
      %vm912 = vcmp.eq.s32.totalorder %v483, 5
      %913 = vset.pattern.permute.xlu0 5
      %914 = vperm.xlu0 %913, %v646
      %v915 = vpop.permute.xlu0 %914
      %917 = vset.pattern.permute.xlu0 5
      %918 = vperm.xlu0 %917, %v651
      %v919 = vpop.permute.xlu0 %918
      %v921 = vsel %vm911, %v915, 0.0
      %v922 = vsel %vm912, %v919, 0.0
      %v923 = vadd.f32 %v909, %v921
      %v924 = vadd.f32 %v910, %v922
      %vm925 = vcmp.eq.s32.totalorder %v482, 6
      %vm926 = vcmp.eq.s32.totalorder %v483, 6
      %927 = vset.pattern.permute.xlu0 6
      %928 = vperm.xlu0 %927, %v646
      %v929 = vpop.permute.xlu0 %928
      %931 = vset.pattern.permute.xlu0 6
      %932 = vperm.xlu0 %931, %v651
      %v933 = vpop.permute.xlu0 %932
      %v935 = vsel %vm925, %v929, 0.0
      %v936 = vsel %vm926, %v933, 0.0
      %v937 = vadd.f32 %v923, %v935
      %v938 = vadd.f32 %v924, %v936
      %vm939 = vcmp.eq.s32.totalorder %v482, 7
      %vm940 = vcmp.eq.s32.totalorder %v483, 7
      %941 = vset.pattern.permute.xlu0 7
      %942 = vperm.xlu0 %941, %v646
      %v943 = vpop.permute.xlu0 %942
      %945 = vset.pattern.permute.xlu0 7
      %946 = vperm.xlu0 %945, %v651
      %v947 = vpop.permute.xlu0 %946
      %v949 = vsel %vm939, %v943, 0.0
      %v950 = vsel %vm940, %v947, 0.0
      %v951 = vadd.f32 %v937, %v949
      %v952 = vadd.f32 %v938, %v950
      %vm953 = vcmp.eq.s32.totalorder %v482, 8
      %vm954 = vcmp.eq.s32.totalorder %v483, 8
      %955 = vset.pattern.permute.xlu0 8
      %956 = vperm.xlu0 %955, %v646
      %v957 = vpop.permute.xlu0 %956
      %959 = vset.pattern.permute.xlu0 8
      %960 = vperm.xlu0 %959, %v651
      %v961 = vpop.permute.xlu0 %960
      %v963 = vsel %vm953, %v957, 0.0
      %v964 = vsel %vm954, %v961, 0.0
      %v965 = vadd.f32 %v951, %v963
      %v966 = vadd.f32 %v952, %v964
      %vm967 = vcmp.eq.s32.totalorder %v482, 9
      %vm968 = vcmp.eq.s32.totalorder %v483, 9
      %969 = vset.pattern.permute.xlu0 9
      %970 = vperm.xlu0 %969, %v646
      %v971 = vpop.permute.xlu0 %970
      %973 = vset.pattern.permute.xlu0 9
      %974 = vperm.xlu0 %973, %v651
      %v975 = vpop.permute.xlu0 %974
      %v977 = vsel %vm967, %v971, 0.0
      %v978 = vsel %vm968, %v975, 0.0
      %v979 = vadd.f32 %v965, %v977
      %v980 = vadd.f32 %v966, %v978
      %vm981 = vcmp.eq.s32.totalorder %v482, 10
      %vm982 = vcmp.eq.s32.totalorder %v483, 10
      %983 = vset.pattern.permute.xlu0 10
      %984 = vperm.xlu0 %983, %v646
      %v985 = vpop.permute.xlu0 %984
      %987 = vset.pattern.permute.xlu0 10
      %988 = vperm.xlu0 %987, %v651
      %v989 = vpop.permute.xlu0 %988
      %v991 = vsel %vm981, %v985, 0.0
      %v992 = vsel %vm982, %v989, 0.0
      %v993 = vadd.f32 %v979, %v991
      %v994 = vadd.f32 %v980, %v992
      %vm995 = vcmp.eq.s32.totalorder %v482, 11
      %vm996 = vcmp.eq.s32.totalorder %v483, 11
      %997 = vset.pattern.permute.xlu0 11
      %998 = vperm.xlu0 %997, %v646
      %v999 = vpop.permute.xlu0 %998
      %1001 = vset.pattern.permute.xlu0 11
      %1002 = vperm.xlu0 %1001, %v651
      %v1003 = vpop.permute.xlu0 %1002
      %v1005 = vsel %vm995, %v999, 0.0
      %v1006 = vsel %vm996, %v1003, 0.0
      %v1007 = vadd.f32 %v993, %v1005
      %v1008 = vadd.f32 %v994, %v1006
      %vm1009 = vcmp.eq.s32.totalorder %v482, 12
      %vm1010 = vcmp.eq.s32.totalorder %v483, 12
      %1011 = vset.pattern.permute.xlu0 12
      %1012 = vperm.xlu0 %1011, %v646
      %v1013 = vpop.permute.xlu0 %1012
      %1015 = vset.pattern.permute.xlu0 12
      %1016 = vperm.xlu0 %1015, %v651
      %v1017 = vpop.permute.xlu0 %1016
      %v1019 = vsel %vm1009, %v1013, 0.0
      %v1020 = vsel %vm1010, %v1017, 0.0
      %v1021 = vadd.f32 %v1007, %v1019
      %v1022 = vadd.f32 %v1008, %v1020
      %vm1023 = vcmp.eq.s32.totalorder %v482, 13
      %vm1024 = vcmp.eq.s32.totalorder %v483, 13
      %1025 = vset.pattern.permute.xlu0 13
      %1026 = vperm.xlu0 %1025, %v646
      %v1027 = vpop.permute.xlu0 %1026
      %1029 = vset.pattern.permute.xlu0 13
      %1030 = vperm.xlu0 %1029, %v651
      %v1031 = vpop.permute.xlu0 %1030
      %v1033 = vsel %vm1023, %v1027, 0.0
      %v1034 = vsel %vm1024, %v1031, 0.0
      %v1035 = vadd.f32 %v1021, %v1033
      %v1036 = vadd.f32 %v1022, %v1034
      %vm1037 = vcmp.eq.s32.totalorder %v482, 14
      %vm1038 = vcmp.eq.s32.totalorder %v483, 14
      %1039 = vset.pattern.permute.xlu0 14
      %1040 = vperm.xlu0 %1039, %v646
      %v1041 = vpop.permute.xlu0 %1040
      %1043 = vset.pattern.permute.xlu0 14
      %1044 = vperm.xlu0 %1043, %v651
      %v1045 = vpop.permute.xlu0 %1044
      %v1047 = vsel %vm1037, %v1041, 0.0
      %v1048 = vsel %vm1038, %v1045, 0.0
      %v1049 = vadd.f32 %v1035, %v1047
      %v1050 = vadd.f32 %v1036, %v1048
      %1051 = vmatprep.subr.mxu0 0.0
      %1052 = vmatpush1.xpose.msra.mxu0 0.0
      %1053 = vmatprep.subr.mxu0 0.0
      %1054 = vmatpush1.xpose.msra.mxu0 0.0
      %1055 = vmatprep.subr.mxu0 0.0
      %1056 = vmatpush1.xpose.msra.mxu0 0.0
      %1057 = vmatprep.subr.mxu0 0.0
      %1058 = vmatpush1.xpose.msra.mxu0 0.0
      %1059 = vmatprep.subr.mxu0 0.0
      %1060 = vmatpush1.xpose.msra.mxu0 0.0
      %1061 = vmatprep.subr.mxu0 0.0
      %1062 = vmatpush1.xpose.msra.mxu0 0.0
      %1063 = vmatprep.subr.mxu0 0.0
      %1064 = vmatpush1.xpose.msra.mxu0 0.0
      %1065 = vmatprep.subr.mxu0 0.0
      %1066 = vmatpush1.xpose.msra.mxu0 0.0
      %1067 = vmatprep.subr.mxu0 0.0
      %1068 = vmatpush1.xpose.msra.mxu0 0.0
      %1069 = vmatprep.subr.mxu0 0.0
      %1070 = vmatpush1.xpose.msra.mxu0 0.0
      %1071 = vmatprep.subr.mxu0 0.0
      %1072 = vmatpush1.xpose.msra.mxu0 0.0
      %1073 = vmatprep.subr.mxu0 0.0
      %1074 = vmatpush1.xpose.msra.mxu0 0.0
      %1075 = vmatprep.subr.mxu0 0.0
      %1076 = vmatpush1.xpose.msra.mxu0 0.0
      %1077 = vmatprep.subr.mxu0 0.0
      %1078 = vmatpush1.xpose.msra.mxu0 0.0
      %1079 = vmatprep.subr.mxu0 0.0
      %1080 = vmatpush1.xpose.msra.mxu0 %v706
      %1081 = vmatprep.subr.mxu0 0.0
      %1082 = vmatpush1.xpose.msra.mxu0 %v703
      %1083 = vmatprep.subr.mxu0 0.0
      %1084 = vmatpush2.xpose.msra.mxu0 0.0
      %1085 = vmatprep.subr.mxu0 0.0
      %1086 = vmatpush2.xpose.msra.mxu0 0.0
      %1087 = vmatprep.subr.mxu0 0.0
      %1088 = vmatpush2.xpose.msra.mxu0 0.0
      %1089 = vmatprep.subr.mxu0 0.0
      %1090 = vmatpush2.xpose.msra.mxu0 0.0
      %1091 = vmatprep.subr.mxu0 0.0
      %1092 = vmatpush2.xpose.msra.mxu0 0.0
      %1093 = vmatprep.subr.mxu0 0.0
      %1094 = vmatpush2.xpose.msra.mxu0 0.0
      %1095 = vmatprep.subr.mxu0 0.0
      %1096 = vmatpush2.xpose.msra.mxu0 0.0
      %1097 = vmatprep.subr.mxu0 0.0
      %1098 = vmatpush2.xpose.msra.mxu0 0.0
      %1099 = vmatprep.subr.mxu0 0.0
      %1100 = vmatpush2.xpose.msra.mxu0 0.0
      %1101 = vmatprep.subr.mxu0 0.0
      %1102 = vmatpush2.xpose.msra.mxu0 0.0
      %1103 = vmatprep.subr.mxu0 0.0
      %1104 = vmatpush2.xpose.msra.mxu0 0.0
      %1105 = vmatprep.subr.mxu0 0.0
      %1106 = vmatpush2.xpose.msra.mxu0 0.0
      %1107 = vmatprep.subr.mxu0 0.0
      %1108 = vmatpush2.xpose.msra.mxu0 0.0
      %1109 = vmatprep.subr.mxu0 0.0
      %1110 = vmatpush2.xpose.msra.mxu0 0.0
      %1111 = vmatprep.subr.mxu0 0.0
      %1112 = vmatpush2.xpose.msra.mxu0 0.0
      %1113 = vmatprep.subr.mxu0 0.0
      %1114 = vmatpush2.xpose.msra.mxu0 0.0
      %1115 = vmatprep.mubr.f32.mxu0 0.0
      %1116 = vmatmul.mubr.f32.gmra.mxu0 %v526
      %v1117 = vpop.f32.mrf.mxu0
      %v1118 = vadd.f32 %v1049, %v1117
      %v1119 = vpop.f32.mrf.mxu0
      %1120 = vmatprep.mubr.f32.mxu0 0.0
      %1121 = vmatmul.mubr.f32.gmra.mxu0 %v529
      %v1122 = vpop.f32.mrf.mxu0
      %v1123 = vadd.f32 %v1050, %v1122
      %v1124 = vpop.f32.mrf.mxu0
      %1125 = vdwg.mxu0
      %v1126 = vlaneseq
      %v1127 = vshrl.u32 %v1126, 7
      %v1128 = vsub.s32 0, %v1127
      %v1129 = vrot.slane %v775, %v1128
      %v1130 = vsel %vm839, %v1129, 0.0
      %v1131 = vsel %vm840, %v1129, 0.0
      %v1132 = vadd.f32 %v1130, 0.0
      %v1133 = vadd.f32 %v1131, 0.0
      %v1134 = vlaneseq
      %v1135 = vshrl.u32 %v1134, 7
      %v1136 = vsub.s32 1, %v1135
      %v1137 = vrot.slane %v775, %v1136
      %v1138 = vsel %vm855, %v1137, 0.0
      %v1139 = vsel %vm856, %v1137, 0.0
      %v1140 = vadd.f32 %v1132, %v1138
      %v1141 = vadd.f32 %v1133, %v1139
      %v1142 = vlaneseq
      %v1143 = vshrl.u32 %v1142, 7
      %v1144 = vsub.s32 2, %v1143
      %v1145 = vrot.slane %v775, %v1144
      %v1146 = vsel %vm869, %v1145, 0.0
      %v1147 = vsel %vm870, %v1145, 0.0
      %v1148 = vadd.f32 %v1140, %v1146
      %v1149 = vadd.f32 %v1141, %v1147
      %v1150 = vlaneseq
      %v1151 = vshrl.u32 %v1150, 7
      %v1152 = vsub.s32 3, %v1151
      %v1153 = vrot.slane %v775, %v1152
      %v1154 = vsel %vm883, %v1153, 0.0
      %v1155 = vsel %vm884, %v1153, 0.0
      %v1156 = vadd.f32 %v1148, %v1154
      %v1157 = vadd.f32 %v1149, %v1155
      %v1158 = vlaneseq
      %v1159 = vshrl.u32 %v1158, 7
      %v1160 = vsub.s32 4, %v1159
      %v1161 = vrot.slane %v775, %v1160
      %v1162 = vsel %vm897, %v1161, 0.0
      %v1163 = vsel %vm898, %v1161, 0.0
      %v1164 = vadd.f32 %v1156, %v1162
      %v1165 = vadd.f32 %v1157, %v1163
      %v1166 = vlaneseq
      %v1167 = vshrl.u32 %v1166, 7
      %v1168 = vsub.s32 5, %v1167
      %v1169 = vrot.slane %v775, %v1168
      %v1170 = vsel %vm911, %v1169, 0.0
      %v1171 = vsel %vm912, %v1169, 0.0
      %v1172 = vadd.f32 %v1164, %v1170
      %v1173 = vadd.f32 %v1165, %v1171
      %v1174 = vlaneseq
      %v1175 = vshrl.u32 %v1174, 7
      %v1176 = vsub.s32 6, %v1175
      %v1177 = vrot.slane %v775, %v1176
      %v1178 = vsel %vm925, %v1177, 0.0
      %v1179 = vsel %vm926, %v1177, 0.0
      %v1180 = vadd.f32 %v1172, %v1178
      %v1181 = vadd.f32 %v1173, %v1179
      %v1182 = vlaneseq
      %v1183 = vshrl.u32 %v1182, 7
      %v1184 = vsub.s32 7, %v1183
      %v1185 = vrot.slane %v775, %v1184
      %v1186 = vsel %vm939, %v1185, 0.0
      %v1187 = vsel %vm940, %v1185, 0.0
      %v1188 = vadd.f32 %v1180, %v1186
      %v1189 = vadd.f32 %v1181, %v1187
      %v1190 = vlaneseq
      %v1191 = vshrl.u32 %v1190, 7
      %v1192 = vsub.s32 0, %v1191
      %v1193 = vrot.slane %v780, %v1192
      %v1194 = vsel %vm953, %v1193, 0.0
      %v1195 = vsel %vm954, %v1193, 0.0
      %v1196 = vadd.f32 %v1188, %v1194
      %v1197 = vadd.f32 %v1189, %v1195
      %v1198 = vlaneseq
      %v1199 = vshrl.u32 %v1198, 7
      %v1200 = vsub.s32 1, %v1199
      %v1201 = vrot.slane %v780, %v1200
      %v1202 = vsel %vm967, %v1201, 0.0
      %v1203 = vsel %vm968, %v1201, 0.0
      %v1204 = vadd.f32 %v1196, %v1202
      %v1205 = vadd.f32 %v1197, %v1203
      %v1206 = vlaneseq
      %v1207 = vshrl.u32 %v1206, 7
      %v1208 = vsub.s32 2, %v1207
      %v1209 = vrot.slane %v780, %v1208
      %v1210 = vsel %vm981, %v1209, 0.0
      %v1211 = vsel %vm982, %v1209, 0.0
      %v1212 = vadd.f32 %v1204, %v1210
      %v1213 = vadd.f32 %v1205, %v1211
      %v1214 = vlaneseq
      %v1215 = vshrl.u32 %v1214, 7
      %v1216 = vsub.s32 3, %v1215
      %v1217 = vrot.slane %v780, %v1216
      %v1218 = vsel %vm995, %v1217, 0.0
      %v1219 = vsel %vm996, %v1217, 0.0
      %v1220 = vadd.f32 %v1212, %v1218
      %v1221 = vadd.f32 %v1213, %v1219
      %v1222 = vlaneseq
      %v1223 = vshrl.u32 %v1222, 7
      %v1224 = vsub.s32 4, %v1223
      %v1225 = vrot.slane %v780, %v1224
      %v1226 = vsel %vm1009, %v1225, 0.0
      %v1227 = vsel %vm1010, %v1225, 0.0
      %v1228 = vadd.f32 %v1220, %v1226
      %v1229 = vadd.f32 %v1221, %v1227
      %v1230 = vlaneseq
      %v1231 = vshrl.u32 %v1230, 7
      %v1232 = vsub.s32 5, %v1231
      %v1233 = vrot.slane %v780, %v1232
      %v1234 = vsel %vm1023, %v1233, 0.0
      %v1235 = vsel %vm1024, %v1233, 0.0
      %v1236 = vadd.f32 %v1228, %v1234
      %v1237 = vadd.f32 %v1229, %v1235
      %v1238 = vlaneseq
      %v1239 = vshrl.u32 %v1238, 7
      %v1240 = vsub.s32 6, %v1239
      %v1241 = vrot.slane %v780, %v1240
      %v1242 = vsel %vm1037, %v1241, 0.0
      %v1243 = vsel %vm1038, %v1241, 0.0
      %v1244 = vadd.f32 %v1236, %v1242
      %v1245 = vadd.f32 %v1237, %v1243
      %v1246 = vadd.f32 %v1118, %v1244
      %v1247 = vadd.f32 %v1123, %v1245
      %v1248 = vsel %vm485, 16843009, 0
      %v1249 = vunpack.c.0.s8 %v1248
      %vm1250 = vcmp.ne.s32.totalorder %v1249, 0
      %v1251 = vsel %vm1250, 1, 0
      %v1252 = vlaneseq
      %v1253 = vshrl.u32 %v1252, 7
      %v1254 = vsub.s32 0, %v1253
      %v1255 = vrot.slane %v1251, %v1254
      %vm1256 = vcmp.eq.s32.totalorder %v1255, 1
      %v1257 = vsel %vm1256, -1e+30, %v1246
      %v1258 = vsel %vm1256, -1e+30, %v1247
      %v1259 = vsel %vm524, %v1257, -inf
      %1260 = vmax.xlane.f32.xlu0 %v1259
      %v1261 = vpop.xlane.xlu0 %1260
      %v1262 = vsel %vm524, %v1258, -inf
      %1263 = vmax.xlane.f32.xlu0 %v1262
      %v1264 = vpop.xlane.xlu0 %1263
      %v1265 = vsub.f32 %v1257, %v1261
      %v1266 = vsub.f32 %v1258, %v1264
      %v1267 = vmul.f32 %v1265, 1.442695
      %v1268 = vpow.pop %v1267
      %v1269 = vmul.f32 %v1266, 1.442695
      %v1270 = vpow.pop %v1269
      %v1271 = vsel %vm524, %v1268, 0.0
      %1272 = vadd.xlane.f32.xlu0 %v1271
      %v1273 = vpop.xlane.xlu0 %1272
      %v1274 = vsel %vm524, %v1270, 0.0
      %1275 = vadd.xlane.f32.xlu0 %v1274
      %v1276 = vpop.xlane.xlu0 %1275
      %v1277 = vrcp.pop %v1273
      %v1278 = vmul.f32 %v1268, %v1277
      %v1279 = vrcp.pop %v1276
      %v1280 = vmul.f32 %v1270, %v1279
      %v1282 = vsel %vm524, %v1278, 0
      %v1285 = vsel %vm524, %v1280, 0
      %1287 = vmatprep.subr.mxu0 0.0
      %1288 = vmatpush1.msra.mxu0 0.0
      %1289 = vmatprep.subr.mxu0 0.0
      %1290 = vmatpush1.msra.mxu0 0.0
      %1291 = vmatprep.subr.mxu0 0.0
      %1292 = vmatpush1.msra.mxu0 0.0
      %1293 = vmatprep.subr.mxu0 0.0
      %1294 = vmatpush1.msra.mxu0 0.0
      %1295 = vmatprep.subr.mxu0 0.0
      %1296 = vmatpush1.msra.mxu0 0.0
      %1297 = vmatprep.subr.mxu0 0.0
      %1298 = vmatpush1.msra.mxu0 0.0
      %1299 = vmatprep.subr.mxu0 0.0
      %1300 = vmatpush1.msra.mxu0 0.0
      %1301 = vmatprep.subr.mxu0 0.0
      %1302 = vmatpush1.msra.mxu0 0.0
      %1303 = vmatprep.subr.mxu0 0.0
      %1304 = vmatpush1.msra.mxu0 0.0
      %1305 = vmatprep.subr.mxu0 0.0
      %1306 = vmatpush1.msra.mxu0 0.0
      %1307 = vmatprep.subr.mxu0 0.0
      %1308 = vmatpush1.msra.mxu0 0.0
      %1309 = vmatprep.subr.mxu0 0.0
      %1310 = vmatpush1.msra.mxu0 0.0
      %1311 = vmatprep.subr.mxu0 0.0
      %1312 = vmatpush1.msra.mxu0 0.0
      %1313 = vmatprep.subr.mxu0 0.0
      %1314 = vmatpush1.msra.mxu0 0.0
      %1315 = vmatprep.subr.mxu0 0.0
      %1316 = vmatpush1.msra.mxu0 %v491
      %1317 = vmatprep.subr.mxu0 0.0
      %1318 = vmatpush1.msra.mxu0 %v490
      %1319 = vmatprep.subr.mxu0 0.0
      %1320 = vmatpush2.msra.mxu0 0.0
      %1321 = vmatprep.subr.mxu0 0.0
      %1322 = vmatpush2.msra.mxu0 0.0
      %1323 = vmatprep.subr.mxu0 0.0
      %1324 = vmatpush2.msra.mxu0 0.0
      %1325 = vmatprep.subr.mxu0 0.0
      %1326 = vmatpush2.msra.mxu0 0.0
      %1327 = vmatprep.subr.mxu0 0.0
      %1328 = vmatpush2.msra.mxu0 0.0
      %1329 = vmatprep.subr.mxu0 0.0
      %1330 = vmatpush2.msra.mxu0 0.0
      %1331 = vmatprep.subr.mxu0 0.0
      %1332 = vmatpush2.msra.mxu0 0.0
      %1333 = vmatprep.subr.mxu0 0.0
      %1334 = vmatpush2.msra.mxu0 0.0
      %1335 = vmatprep.subr.mxu0 0.0
      %1336 = vmatpush2.msra.mxu0 0.0
      %1337 = vmatprep.subr.mxu0 0.0
      %1338 = vmatpush2.msra.mxu0 0.0
      %1339 = vmatprep.subr.mxu0 0.0
      %1340 = vmatpush2.msra.mxu0 0.0
      %1341 = vmatprep.subr.mxu0 0.0
      %1342 = vmatpush2.msra.mxu0 0.0
      %1343 = vmatprep.subr.mxu0 0.0
      %1344 = vmatpush2.msra.mxu0 0.0
      %1345 = vmatprep.subr.mxu0 0.0
      %1346 = vmatpush2.msra.mxu0 0.0
      %1347 = vmatprep.subr.mxu0 0.0
      %1348 = vmatpush2.msra.mxu0 0.0
      %1349 = vmatprep.subr.mxu0 0.0
      %1350 = vmatpush2.msra.mxu0 0.0
      %1351 = vmatprep.mubr.f32.mxu0 0.0
      %1352 = vmatmul.mubr.f32.gmra.mxu0 %v1282
      %v1353 = vpop.f32.mrf.mxu0
      %v1354 = vadd.f32 0.0, %v1353
      %v1355 = vpop.f32.mrf.mxu0
      %1356 = vmatprep.mubr.f32.mxu0 0.0
      %1357 = vmatmul.mubr.f32.gmra.mxu0 %v1285
      %v1358 = vpop.f32.mrf.mxu0
      %v1359 = vadd.f32 0.0, %v1358
      %v1360 = vpop.f32.mrf.mxu0
      %1361 = vdwg.mxu0
      %1362 = vrot.lane.b32.xlu0 %v486, 112
      %v1363 = vpop.permute.xlu0 %1362
      %1364 = vrot.lane.b32.xlu0 %v487, 112
      %v1365 = vpop.permute.xlu0 %1364
      %1366 = vrot.lane.b32.xlu0 %v492, 112
      %v1367 = vpop.permute.xlu0 %1366
      %1368 = vrot.lane.b32.xlu0 %v493, 112
      %v1369 = vpop.permute.xlu0 %1368
      %1370 = vrot.lane.b32.xlu0 %v494, 112
      %v1371 = vpop.permute.xlu0 %1370
      %1372 = vrot.lane.b32.xlu0 %v495, 112
      %v1373 = vpop.permute.xlu0 %1372
      %1374 = vrot.lane.b32.xlu0 %v496, 112
      %v1375 = vpop.permute.xlu0 %1374
      %1376 = vrot.lane.b32.xlu0 %v497, 112
      %v1377 = vpop.permute.xlu0 %1376
      %1378 = vrot.lane.b32.xlu0 %v498, 112
      %v1379 = vpop.permute.xlu0 %1378
      %1380 = vrot.lane.b32.xlu0 %v499, 112
      %v1381 = vpop.permute.xlu0 %1380
      %1382 = vrot.lane.b32.xlu0 %v500, 112
      %v1383 = vpop.permute.xlu0 %1382
      %1384 = vrot.lane.b32.xlu0 %v501, 112
      %v1385 = vpop.permute.xlu0 %1384
      %1386 = vrot.lane.b32.xlu0 %v502, 112
      %v1387 = vpop.permute.xlu0 %1386
      %1388 = vrot.lane.b32.xlu0 %v503, 112
      %v1389 = vpop.permute.xlu0 %1388
      %1390 = vrot.lane.b32.xlu0 %v504, 112
      %v1391 = vpop.permute.xlu0 %1390
      %1392 = vrot.lane.b32.xlu0 %v505, 112
      %v1393 = vpop.permute.xlu0 %1392
      %1394 = vrot.lane.b32.xlu0 %v506, 112
      %v1395 = vpop.permute.xlu0 %1394
      %1396 = vrot.lane.b32.xlu0 %v507, 112
      %v1397 = vpop.permute.xlu0 %1396
      %v1398 = vsel %vm524, %v1363, 0
      %v1400 = vsel %vm524, %v1365, 0
      %v1402 = vsel %vm524, %v1367, 0
      %v1404 = vsel %vm524, %v1369, 0
      %v1406 = vsel %vm524, %v1371, 0
      %v1408 = vsel %vm524, %v1373, 0
      %v1410 = vsel %vm524, %v1375, 0
      %v1412 = vsel %vm524, %v1377, 0
      %v1414 = vsel %vm524, %v1379, 0
      %v1416 = vsel %vm524, %v1381, 0
      %v1418 = vsel %vm524, %v1383, 0
      %v1420 = vsel %vm524, %v1385, 0
      %v1422 = vsel %vm524, %v1387, 0
      %v1424 = vsel %vm524, %v1389, 0
      %v1426 = vsel %vm524, %v1391, 0
      %v1428 = vsel %vm524, %v1393, 0
      %v1430 = vsel %vm524, %v1395, 0
      %v1432 = vsel %vm524, %v1397, 0
      %1434 = vmatprep.subr.mxu0 0.0
      %1435 = vmatpush1.xpose.msra.mxu0 %v1432
      %1436 = vmatprep.subr.mxu0 0.0
      %1437 = vmatpush1.xpose.msra.mxu0 %v1430
      %1438 = vmatprep.subr.mxu0 0.0
      %1439 = vmatpush1.xpose.msra.mxu0 %v1428
      %1440 = vmatprep.subr.mxu0 0.0
      %1441 = vmatpush1.xpose.msra.mxu0 %v1426
      %1442 = vmatprep.subr.mxu0 0.0
      %1443 = vmatpush1.xpose.msra.mxu0 %v1424
      %1444 = vmatprep.subr.mxu0 0.0
      %1445 = vmatpush1.xpose.msra.mxu0 %v1422
      %1446 = vmatprep.subr.mxu0 0.0
      %1447 = vmatpush1.xpose.msra.mxu0 %v1420
      %1448 = vmatprep.subr.mxu0 0.0
      %1449 = vmatpush1.xpose.msra.mxu0 %v1418
      %1450 = vmatprep.subr.mxu0 0.0
      %1451 = vmatpush1.xpose.msra.mxu0 %v1416
      %1452 = vmatprep.subr.mxu0 0.0
      %1453 = vmatpush1.xpose.msra.mxu0 %v1414
      %1454 = vmatprep.subr.mxu0 0.0
      %1455 = vmatpush1.xpose.msra.mxu0 %v1412
      %1456 = vmatprep.subr.mxu0 0.0
      %1457 = vmatpush1.xpose.msra.mxu0 %v1410
      %1458 = vmatprep.subr.mxu0 0.0
      %1459 = vmatpush1.xpose.msra.mxu0 %v1408
      %1460 = vmatprep.subr.mxu0 0.0
      %1461 = vmatpush1.xpose.msra.mxu0 %v1406
      %1462 = vmatprep.subr.mxu0 0.0
      %1463 = vmatpush1.xpose.msra.mxu0 %v1404
      %1464 = vmatprep.subr.mxu0 0.0
      %1465 = vmatpush1.xpose.msra.mxu0 %v1402
      %1466 = vmatprep.subr.mxu0 0.0
      %1467 = vmatpush2.xpose.msra.mxu0 0.0
      %1468 = vmatprep.subr.mxu0 0.0
      %1469 = vmatpush2.xpose.msra.mxu0 0.0
      %1470 = vmatprep.subr.mxu0 0.0
      %1471 = vmatpush2.xpose.msra.mxu0 0.0
      %1472 = vmatprep.subr.mxu0 0.0
      %1473 = vmatpush2.xpose.msra.mxu0 0.0
      %1474 = vmatprep.subr.mxu0 0.0
      %1475 = vmatpush2.xpose.msra.mxu0 0.0
      %1476 = vmatprep.subr.mxu0 0.0
      %1477 = vmatpush2.xpose.msra.mxu0 0.0
      %1478 = vmatprep.subr.mxu0 0.0
      %1479 = vmatpush2.xpose.msra.mxu0 0.0
      %1480 = vmatprep.subr.mxu0 0.0
      %1481 = vmatpush2.xpose.msra.mxu0 0.0
      %1482 = vmatprep.subr.mxu0 0.0
      %1483 = vmatpush2.xpose.msra.mxu0 0.0
      %1484 = vmatprep.subr.mxu0 0.0
      %1485 = vmatpush2.xpose.msra.mxu0 0.0
      %1486 = vmatprep.subr.mxu0 0.0
      %1487 = vmatpush2.xpose.msra.mxu0 0.0
      %1488 = vmatprep.subr.mxu0 0.0
      %1489 = vmatpush2.xpose.msra.mxu0 0.0
      %1490 = vmatprep.subr.mxu0 0.0
      %1491 = vmatpush2.xpose.msra.mxu0 0.0
      %1492 = vmatprep.subr.mxu0 0.0
      %1493 = vmatpush2.xpose.msra.mxu0 0.0
      %1494 = vmatprep.subr.mxu0 0.0
      %1495 = vmatpush2.xpose.msra.mxu0 0.0
      %1496 = vmatprep.subr.mxu0 0.0
      %1497 = vmatpush2.xpose.msra.mxu0 0.0
      %1498 = vmatprep.mubr.f32.mxu0 0.0
      %1499 = vmatmul.mubr.f32.gmra.mxu0 %v1398
      %v1500 = vpop.f32.mrf.mxu0
      %v1501 = vadd.f32 0.0, %v1500
      %v1502 = vpop.f32.mrf.mxu0
      %1503 = vmatprep.mubr.f32.mxu0 0.0
      %1504 = vmatmul.mubr.f32.gmra.mxu0 %v1400
      %v1505 = vpop.f32.mrf.mxu0
      %v1506 = vadd.f32 0.0, %v1505
      %v1507 = vpop.f32.mrf.mxu0
      %1508 = vdwg.mxu0
      %1509 = vrot.lane.b32.xlu0 %v508, 112
      %v1510 = vpop.permute.xlu0 %1509
      %1511 = vrot.lane.b32.xlu0 %v509, 112
      %v1512 = vpop.permute.xlu0 %1511
      %1513 = vrot.lane.b32.xlu0 %v510, 112
      %v1514 = vpop.permute.xlu0 %1513
      %1515 = vrot.lane.b32.xlu0 %v511, 112
      %v1516 = vpop.permute.xlu0 %1515
      %1517 = vrot.lane.b32.xlu0 %v512, 112
      %v1518 = vpop.permute.xlu0 %1517
      %1519 = vrot.lane.b32.xlu0 %v513, 112
      %v1520 = vpop.permute.xlu0 %1519
      %1521 = vrot.lane.b32.xlu0 %v514, 112
      %v1522 = vpop.permute.xlu0 %1521
      %1523 = vrot.lane.b32.xlu0 %v515, 112
      %v1524 = vpop.permute.xlu0 %1523
      %1525 = vrot.lane.b32.xlu0 %v516, 112
      %v1526 = vpop.permute.xlu0 %1525
      %1527 = vrot.lane.b32.xlu0 %v517, 112
      %v1528 = vpop.permute.xlu0 %1527
      %1529 = vrot.lane.b32.xlu0 %v518, 112
      %v1530 = vpop.permute.xlu0 %1529
      %1531 = vrot.lane.b32.xlu0 %v519, 112
      %v1532 = vpop.permute.xlu0 %1531
      %1533 = vrot.lane.b32.xlu0 %v520, 112
      %v1534 = vpop.permute.xlu0 %1533
      %1535 = vrot.lane.b32.xlu0 %v521, 112
      %v1536 = vpop.permute.xlu0 %1535
      %1537 = vrot.lane.b32.xlu0 %v522, 112
      %v1538 = vpop.permute.xlu0 %1537
      %1539 = vrot.lane.b32.xlu0 %v523, 112
      %v1540 = vpop.permute.xlu0 %1539
      %1541 = vrot.lane.b32.xlu0 %v488, 112
      %v1542 = vpop.permute.xlu0 %1541
      %1543 = vrot.lane.b32.xlu0 %v489, 112
      %v1544 = vpop.permute.xlu0 %1543
      %v1545 = vsel %vm524, %v1510, 0
      %v1547 = vsel %vm524, %v1512, 0
      %v1549 = vsel %vm524, %v1514, 0
      %v1551 = vsel %vm524, %v1516, 0
      %v1553 = vsel %vm524, %v1518, 0
      %v1555 = vsel %vm524, %v1520, 0
      %v1557 = vsel %vm524, %v1522, 0
      %v1559 = vsel %vm524, %v1524, 0
      %v1561 = vsel %vm524, %v1526, 0
      %v1563 = vsel %vm524, %v1528, 0
      %v1565 = vsel %vm524, %v1530, 0
      %v1567 = vsel %vm524, %v1532, 0
      %v1569 = vsel %vm524, %v1534, 0
      %v1571 = vsel %vm524, %v1536, 0
      %v1573 = vsel %vm524, %v1538, 0
      %v1575 = vsel %vm524, %v1540, 0
      %v1577 = vsel %vm524, %v1542, 0
      %v1579 = vsel %vm524, %v1544, 0
      %1581 = vmatprep.subr.mxu0 0.0
      %1582 = vmatpush1.xpose.msra.mxu0 0.0
      %1583 = vmatprep.subr.mxu0 0.0
      %1584 = vmatpush1.xpose.msra.mxu0 0.0
      %1585 = vmatprep.subr.mxu0 0.0
      %1586 = vmatpush1.xpose.msra.mxu0 0.0
      %1587 = vmatprep.subr.mxu0 0.0
      %1588 = vmatpush1.xpose.msra.mxu0 0.0
      %1589 = vmatprep.subr.mxu0 0.0
      %1590 = vmatpush1.xpose.msra.mxu0 0.0
      %1591 = vmatprep.subr.mxu0 0.0
      %1592 = vmatpush1.xpose.msra.mxu0 0.0
      %1593 = vmatprep.subr.mxu0 0.0
      %1594 = vmatpush1.xpose.msra.mxu0 0.0
      %1595 = vmatprep.subr.mxu0 0.0
      %1596 = vmatpush1.xpose.msra.mxu0 0.0
      %1597 = vmatprep.subr.mxu0 0.0
      %1598 = vmatpush1.xpose.msra.mxu0 0.0
      %1599 = vmatprep.subr.mxu0 0.0
      %1600 = vmatpush1.xpose.msra.mxu0 0.0
      %1601 = vmatprep.subr.mxu0 0.0
      %1602 = vmatpush1.xpose.msra.mxu0 0.0
      %1603 = vmatprep.subr.mxu0 0.0
      %1604 = vmatpush1.xpose.msra.mxu0 0.0
      %1605 = vmatprep.subr.mxu0 0.0
      %1606 = vmatpush1.xpose.msra.mxu0 0.0
      %1607 = vmatprep.subr.mxu0 0.0
      %1608 = vmatpush1.xpose.msra.mxu0 0.0
      %1609 = vmatprep.subr.mxu0 0.0
      %1610 = vmatpush1.xpose.msra.mxu0 %v1579
      %1611 = vmatprep.subr.mxu0 0.0
      %1612 = vmatpush1.xpose.msra.mxu0 %v1577
      %1613 = vmatprep.subr.mxu0 0.0
      %1614 = vmatpush2.xpose.msra.mxu0 0.0
      %1615 = vmatprep.subr.mxu0 0.0
      %1616 = vmatpush2.xpose.msra.mxu0 0.0
      %1617 = vmatprep.subr.mxu0 0.0
      %1618 = vmatpush2.xpose.msra.mxu0 0.0
      %1619 = vmatprep.subr.mxu0 0.0
      %1620 = vmatpush2.xpose.msra.mxu0 0.0
      %1621 = vmatprep.subr.mxu0 0.0
      %1622 = vmatpush2.xpose.msra.mxu0 0.0
      %1623 = vmatprep.subr.mxu0 0.0
      %1624 = vmatpush2.xpose.msra.mxu0 0.0
      %1625 = vmatprep.subr.mxu0 0.0
      %1626 = vmatpush2.xpose.msra.mxu0 0.0
      %1627 = vmatprep.subr.mxu0 0.0
      %1628 = vmatpush2.xpose.msra.mxu0 0.0
      %1629 = vmatprep.subr.mxu0 0.0
      %1630 = vmatpush2.xpose.msra.mxu0 0.0
      %1631 = vmatprep.subr.mxu0 0.0
      %1632 = vmatpush2.xpose.msra.mxu0 0.0
      %1633 = vmatprep.subr.mxu0 0.0
      %1634 = vmatpush2.xpose.msra.mxu0 0.0
      %1635 = vmatprep.subr.mxu0 0.0
      %1636 = vmatpush2.xpose.msra.mxu0 0.0
      %1637 = vmatprep.subr.mxu0 0.0
      %1638 = vmatpush2.xpose.msra.mxu0 0.0
      %1639 = vmatprep.subr.mxu0 0.0
      %1640 = vmatpush2.xpose.msra.mxu0 0.0
      %1641 = vmatprep.subr.mxu0 0.0
      %1642 = vmatpush2.xpose.msra.mxu0 0.0
      %1643 = vmatprep.subr.mxu0 0.0
      %1644 = vmatpush2.xpose.msra.mxu0 0.0
      %1645 = vmatprep.mubr.f32.mxu0 0.0
      %1646 = vmatmul.mubr.f32.gmra.mxu0 %v1545
      %v1647 = vpop.f32.mrf.mxu0
      %v1648 = vadd.f32 0.0, %v1647
      %v1649 = vpop.f32.mrf.mxu0
      %1650 = vmatprep.mubr.f32.mxu0 0.0
      %1651 = vmatmul.mubr.f32.gmra.mxu0 %v1547
      %v1652 = vpop.f32.mrf.mxu0
      %v1653 = vadd.f32 0.0, %v1652
      %v1654 = vpop.f32.mrf.mxu0
      %1655 = vmatprep.mubr.f32.mxu0 0.0
      %1656 = vmatmul.mubr.f32.gmra.mxu0 %v1549
      %v1657 = vpop.f32.mrf.mxu0
      %v1658 = vpop.f32.mrf.mxu0
      %1659 = vmatprep.mubr.f32.mxu0 0.0
      %1660 = vmatmul.mubr.f32.gmra.mxu0 %v1551
      %v1661 = vpop.f32.mrf.mxu0
      %v1662 = vpop.f32.mrf.mxu0
      %1663 = vmatprep.mubr.f32.mxu0 0.0
      %1664 = vmatmul.mubr.f32.gmra.mxu0 %v1553
      %v1665 = vpop.f32.mrf.mxu0
      %v1666 = vpop.f32.mrf.mxu0
      %1667 = vmatprep.mubr.f32.mxu0 0.0
      %1668 = vmatmul.mubr.f32.gmra.mxu0 %v1555
      %v1669 = vpop.f32.mrf.mxu0
      %v1670 = vpop.f32.mrf.mxu0
      %1671 = vmatprep.mubr.f32.mxu0 0.0
      %1672 = vmatmul.mubr.f32.gmra.mxu0 %v1557
      %v1673 = vpop.f32.mrf.mxu0
      %v1674 = vpop.f32.mrf.mxu0
      %1675 = vmatprep.mubr.f32.mxu0 0.0
      %1676 = vmatmul.mubr.f32.gmra.mxu0 %v1559
      %v1677 = vpop.f32.mrf.mxu0
      %v1678 = vpop.f32.mrf.mxu0
      %1679 = vmatprep.mubr.f32.mxu0 0.0
      %1680 = vmatmul.mubr.f32.gmra.mxu0 %v1561
      %v1681 = vpop.f32.mrf.mxu0
      %v1682 = vpop.f32.mrf.mxu0
      %1683 = vmatprep.mubr.f32.mxu0 0.0
      %1684 = vmatmul.mubr.f32.gmra.mxu0 %v1563
      %v1685 = vpop.f32.mrf.mxu0
      %v1686 = vpop.f32.mrf.mxu0
      %1687 = vmatprep.mubr.f32.mxu0 0.0
      %1688 = vmatmul.mubr.f32.gmra.mxu0 %v1565
      %v1689 = vpop.f32.mrf.mxu0
      %v1690 = vpop.f32.mrf.mxu0
      %1691 = vmatprep.mubr.f32.mxu0 0.0
      %1692 = vmatmul.mubr.f32.gmra.mxu0 %v1567
      %v1693 = vpop.f32.mrf.mxu0
      %v1694 = vpop.f32.mrf.mxu0
      %1695 = vmatprep.mubr.f32.mxu0 0.0
      %1696 = vmatmul.mubr.f32.gmra.mxu0 %v1569
      %v1697 = vpop.f32.mrf.mxu0
      %v1698 = vpop.f32.mrf.mxu0
      %1699 = vmatprep.mubr.f32.mxu0 0.0
      %1700 = vmatmul.mubr.f32.gmra.mxu0 %v1571
      %v1701 = vpop.f32.mrf.mxu0
      %v1702 = vpop.f32.mrf.mxu0
      %1703 = vmatprep.mubr.f32.mxu0 0.0
      %1704 = vmatmul.mubr.f32.gmra.mxu0 %v1573
      %v1705 = vpop.f32.mrf.mxu0
      %v1706 = vpop.f32.mrf.mxu0
      %1707 = vmatprep.mubr.f32.mxu0 0.0
      %1708 = vmatmul.mubr.f32.gmra.mxu0 %v1575
      %v1709 = vpop.f32.mrf.mxu0
      %v1710 = vpop.f32.mrf.mxu0
      %1711 = vdwg.mxu0
      %1713 = vset.pattern.permute.xlu0 0
      %1714 = vperm.xlu0 %1713, %v1501
      %v1715 = vpop.permute.xlu0 %1714
      %1718 = vset.pattern.permute.xlu0 0
      %1719 = vperm.xlu0 %1718, %v1506
      %v1720 = vpop.permute.xlu0 %1719
      %v1722 = vsel %vm839, %v1715, 0.0
      %v1723 = vsel %vm840, %v1720, 0.0
      %v1724 = vadd.f32 %v1722, 0.0
      %v1725 = vadd.f32 %v1723, 0.0
      %1726 = vset.pattern.permute.xlu0 1
      %1727 = vperm.xlu0 %1726, %v1501
      %v1728 = vpop.permute.xlu0 %1727
      %1730 = vset.pattern.permute.xlu0 1
      %1731 = vperm.xlu0 %1730, %v1506
      %v1732 = vpop.permute.xlu0 %1731
      %v1734 = vsel %vm855, %v1728, 0.0
      %v1735 = vsel %vm856, %v1732, 0.0
      %v1736 = vadd.f32 %v1724, %v1734
      %v1737 = vadd.f32 %v1725, %v1735
      %1738 = vset.pattern.permute.xlu0 2
      %1739 = vperm.xlu0 %1738, %v1501
      %v1740 = vpop.permute.xlu0 %1739
      %1742 = vset.pattern.permute.xlu0 2
      %1743 = vperm.xlu0 %1742, %v1506
      %v1744 = vpop.permute.xlu0 %1743
      %v1746 = vsel %vm869, %v1740, 0.0
      %v1747 = vsel %vm870, %v1744, 0.0
      %v1748 = vadd.f32 %v1736, %v1746
      %v1749 = vadd.f32 %v1737, %v1747
      %1750 = vset.pattern.permute.xlu0 3
      %1751 = vperm.xlu0 %1750, %v1501
      %v1752 = vpop.permute.xlu0 %1751
      %1754 = vset.pattern.permute.xlu0 3
      %1755 = vperm.xlu0 %1754, %v1506
      %v1756 = vpop.permute.xlu0 %1755
      %v1758 = vsel %vm883, %v1752, 0.0
      %v1759 = vsel %vm884, %v1756, 0.0
      %v1760 = vadd.f32 %v1748, %v1758
      %v1761 = vadd.f32 %v1749, %v1759
      %1762 = vset.pattern.permute.xlu0 4
      %1763 = vperm.xlu0 %1762, %v1501
      %v1764 = vpop.permute.xlu0 %1763
      %1766 = vset.pattern.permute.xlu0 4
      %1767 = vperm.xlu0 %1766, %v1506
      %v1768 = vpop.permute.xlu0 %1767
      %v1770 = vsel %vm897, %v1764, 0.0
      %v1771 = vsel %vm898, %v1768, 0.0
      %v1772 = vadd.f32 %v1760, %v1770
      %v1773 = vadd.f32 %v1761, %v1771
      %1774 = vset.pattern.permute.xlu0 5
      %1775 = vperm.xlu0 %1774, %v1501
      %v1776 = vpop.permute.xlu0 %1775
      %1778 = vset.pattern.permute.xlu0 5
      %1779 = vperm.xlu0 %1778, %v1506
      %v1780 = vpop.permute.xlu0 %1779
      %v1782 = vsel %vm911, %v1776, 0.0
      %v1783 = vsel %vm912, %v1780, 0.0
      %v1784 = vadd.f32 %v1772, %v1782
      %v1785 = vadd.f32 %v1773, %v1783
      %1786 = vset.pattern.permute.xlu0 6
      %1787 = vperm.xlu0 %1786, %v1501
      %v1788 = vpop.permute.xlu0 %1787
      %1790 = vset.pattern.permute.xlu0 6
      %1791 = vperm.xlu0 %1790, %v1506
      %v1792 = vpop.permute.xlu0 %1791
      %v1794 = vsel %vm925, %v1788, 0.0
      %v1795 = vsel %vm926, %v1792, 0.0
      %v1796 = vadd.f32 %v1784, %v1794
      %v1797 = vadd.f32 %v1785, %v1795
      %1798 = vset.pattern.permute.xlu0 7
      %1799 = vperm.xlu0 %1798, %v1501
      %v1800 = vpop.permute.xlu0 %1799
      %1802 = vset.pattern.permute.xlu0 7
      %1803 = vperm.xlu0 %1802, %v1506
      %v1804 = vpop.permute.xlu0 %1803
      %v1806 = vsel %vm939, %v1800, 0.0
      %v1807 = vsel %vm940, %v1804, 0.0
      %v1808 = vadd.f32 %v1796, %v1806
      %v1809 = vadd.f32 %v1797, %v1807
      %1810 = vset.pattern.permute.xlu0 8
      %1811 = vperm.xlu0 %1810, %v1501
      %v1812 = vpop.permute.xlu0 %1811
      %1814 = vset.pattern.permute.xlu0 8
      %1815 = vperm.xlu0 %1814, %v1506
      %v1816 = vpop.permute.xlu0 %1815
      %v1818 = vsel %vm953, %v1812, 0.0
      %v1819 = vsel %vm954, %v1816, 0.0
      %v1820 = vadd.f32 %v1808, %v1818
      %v1821 = vadd.f32 %v1809, %v1819
      %1822 = vset.pattern.permute.xlu0 9
      %1823 = vperm.xlu0 %1822, %v1501
      %v1824 = vpop.permute.xlu0 %1823
      %1826 = vset.pattern.permute.xlu0 9
      %1827 = vperm.xlu0 %1826, %v1506
      %v1828 = vpop.permute.xlu0 %1827
      %v1830 = vsel %vm967, %v1824, 0.0
      %v1831 = vsel %vm968, %v1828, 0.0
      %v1832 = vadd.f32 %v1820, %v1830
      %v1833 = vadd.f32 %v1821, %v1831
      %1834 = vset.pattern.permute.xlu0 10
      %1835 = vperm.xlu0 %1834, %v1501
      %v1836 = vpop.permute.xlu0 %1835
      %1838 = vset.pattern.permute.xlu0 10
      %1839 = vperm.xlu0 %1838, %v1506
      %v1840 = vpop.permute.xlu0 %1839
      %v1842 = vsel %vm981, %v1836, 0.0
      %v1843 = vsel %vm982, %v1840, 0.0
      %v1844 = vadd.f32 %v1832, %v1842
      %v1845 = vadd.f32 %v1833, %v1843
      %1846 = vset.pattern.permute.xlu0 11
      %1847 = vperm.xlu0 %1846, %v1501
      %v1848 = vpop.permute.xlu0 %1847
      %1850 = vset.pattern.permute.xlu0 11
      %1851 = vperm.xlu0 %1850, %v1506
      %v1852 = vpop.permute.xlu0 %1851
      %v1854 = vsel %vm995, %v1848, 0.0
      %v1855 = vsel %vm996, %v1852, 0.0
      %v1856 = vadd.f32 %v1844, %v1854
      %v1857 = vadd.f32 %v1845, %v1855
      %1858 = vset.pattern.permute.xlu0 12
      %1859 = vperm.xlu0 %1858, %v1501
      %v1860 = vpop.permute.xlu0 %1859
      %1862 = vset.pattern.permute.xlu0 12
      %1863 = vperm.xlu0 %1862, %v1506
      %v1864 = vpop.permute.xlu0 %1863
      %v1866 = vsel %vm1009, %v1860, 0.0
      %v1867 = vsel %vm1010, %v1864, 0.0
      %v1868 = vadd.f32 %v1856, %v1866
      %v1869 = vadd.f32 %v1857, %v1867
      %1870 = vset.pattern.permute.xlu0 13
      %1871 = vperm.xlu0 %1870, %v1501
      %v1872 = vpop.permute.xlu0 %1871
      %1874 = vset.pattern.permute.xlu0 13
      %1875 = vperm.xlu0 %1874, %v1506
      %v1876 = vpop.permute.xlu0 %1875
      %v1878 = vsel %vm1023, %v1872, 0.0
      %v1879 = vsel %vm1024, %v1876, 0.0
      %v1880 = vadd.f32 %v1868, %v1878
      %v1881 = vadd.f32 %v1869, %v1879
      %1882 = vset.pattern.permute.xlu0 14
      %1883 = vperm.xlu0 %1882, %v1501
      %v1884 = vpop.permute.xlu0 %1883
      %1886 = vset.pattern.permute.xlu0 14
      %1887 = vperm.xlu0 %1886, %v1506
      %v1888 = vpop.permute.xlu0 %1887
      %v1890 = vsel %vm1037, %v1884, 0.0
      %v1891 = vsel %vm1038, %v1888, 0.0
      %v1892 = vadd.f32 %v1880, %v1890
      %v1893 = vadd.f32 %v1881, %v1891
      %1894 = vmatprep.subr.mxu0 0.0
      %1895 = vmatpush1.xpose.msra.mxu0 0.0
      %1896 = vmatprep.subr.mxu0 0.0
      %1897 = vmatpush1.xpose.msra.mxu0 0.0
      %1898 = vmatprep.subr.mxu0 0.0
      %1899 = vmatpush1.xpose.msra.mxu0 0.0
      %1900 = vmatprep.subr.mxu0 0.0
      %1901 = vmatpush1.xpose.msra.mxu0 0.0
      %1902 = vmatprep.subr.mxu0 0.0
      %1903 = vmatpush1.xpose.msra.mxu0 0.0
      %1904 = vmatprep.subr.mxu0 0.0
      %1905 = vmatpush1.xpose.msra.mxu0 0.0
      %1906 = vmatprep.subr.mxu0 0.0
      %1907 = vmatpush1.xpose.msra.mxu0 0.0
      %1908 = vmatprep.subr.mxu0 0.0
      %1909 = vmatpush1.xpose.msra.mxu0 0.0
      %1910 = vmatprep.subr.mxu0 0.0
      %1911 = vmatpush1.xpose.msra.mxu0 0.0
      %1912 = vmatprep.subr.mxu0 0.0
      %1913 = vmatpush1.xpose.msra.mxu0 0.0
      %1914 = vmatprep.subr.mxu0 0.0
      %1915 = vmatpush1.xpose.msra.mxu0 0.0
      %1916 = vmatprep.subr.mxu0 0.0
      %1917 = vmatpush1.xpose.msra.mxu0 0.0
      %1918 = vmatprep.subr.mxu0 0.0
      %1919 = vmatpush1.xpose.msra.mxu0 0.0
      %1920 = vmatprep.subr.mxu0 0.0
      %1921 = vmatpush1.xpose.msra.mxu0 0.0
      %1922 = vmatprep.subr.mxu0 0.0
      %1923 = vmatpush1.xpose.msra.mxu0 %v1579
      %1924 = vmatprep.subr.mxu0 0.0
      %1925 = vmatpush1.xpose.msra.mxu0 %v1577
      %1926 = vmatprep.subr.mxu0 0.0
      %1927 = vmatpush2.xpose.msra.mxu0 0.0
      %1928 = vmatprep.subr.mxu0 0.0
      %1929 = vmatpush2.xpose.msra.mxu0 0.0
      %1930 = vmatprep.subr.mxu0 0.0
      %1931 = vmatpush2.xpose.msra.mxu0 0.0
      %1932 = vmatprep.subr.mxu0 0.0
      %1933 = vmatpush2.xpose.msra.mxu0 0.0
      %1934 = vmatprep.subr.mxu0 0.0
      %1935 = vmatpush2.xpose.msra.mxu0 0.0
      %1936 = vmatprep.subr.mxu0 0.0
      %1937 = vmatpush2.xpose.msra.mxu0 0.0
      %1938 = vmatprep.subr.mxu0 0.0
      %1939 = vmatpush2.xpose.msra.mxu0 0.0
      %1940 = vmatprep.subr.mxu0 0.0
      %1941 = vmatpush2.xpose.msra.mxu0 0.0
      %1942 = vmatprep.subr.mxu0 0.0
      %1943 = vmatpush2.xpose.msra.mxu0 0.0
      %1944 = vmatprep.subr.mxu0 0.0
      %1945 = vmatpush2.xpose.msra.mxu0 0.0
      %1946 = vmatprep.subr.mxu0 0.0
      %1947 = vmatpush2.xpose.msra.mxu0 0.0
      %1948 = vmatprep.subr.mxu0 0.0
      %1949 = vmatpush2.xpose.msra.mxu0 0.0
      %1950 = vmatprep.subr.mxu0 0.0
      %1951 = vmatpush2.xpose.msra.mxu0 0.0
      %1952 = vmatprep.subr.mxu0 0.0
      %1953 = vmatpush2.xpose.msra.mxu0 0.0
      %1954 = vmatprep.subr.mxu0 0.0
      %1955 = vmatpush2.xpose.msra.mxu0 0.0
      %1956 = vmatprep.subr.mxu0 0.0
      %1957 = vmatpush2.xpose.msra.mxu0 0.0
      %1958 = vmatprep.mubr.f32.mxu0 0.0
      %1959 = vmatmul.mubr.f32.gmra.mxu0 %v1398
      %v1960 = vpop.f32.mrf.mxu0
      %v1961 = vadd.f32 %v1892, %v1960
      %v1962 = vpop.f32.mrf.mxu0
      %1963 = vmatprep.mubr.f32.mxu0 0.0
      %1964 = vmatmul.mubr.f32.gmra.mxu0 %v1400
      %v1965 = vpop.f32.mrf.mxu0
      %v1966 = vadd.f32 %v1893, %v1965
      %v1967 = vpop.f32.mrf.mxu0
      %1968 = vdwg.mxu0
      %v1969 = vlaneseq
      %v1970 = vshrl.u32 %v1969, 7
      %v1971 = vsub.s32 0, %v1970
      %v1972 = vrot.slane %v1648, %v1971
      %v1973 = vsel %vm839, %v1972, 0.0
      %v1974 = vsel %vm840, %v1972, 0.0
      %v1975 = vadd.f32 %v1973, 0.0
      %v1976 = vadd.f32 %v1974, 0.0
      %v1977 = vlaneseq
      %v1978 = vshrl.u32 %v1977, 7
      %v1979 = vsub.s32 1, %v1978
      %v1980 = vrot.slane %v1648, %v1979
      %v1981 = vsel %vm855, %v1980, 0.0
      %v1982 = vsel %vm856, %v1980, 0.0
      %v1983 = vadd.f32 %v1975, %v1981
      %v1984 = vadd.f32 %v1976, %v1982
      %v1985 = vlaneseq
      %v1986 = vshrl.u32 %v1985, 7
      %v1987 = vsub.s32 2, %v1986
      %v1988 = vrot.slane %v1648, %v1987
      %v1989 = vsel %vm869, %v1988, 0.0
      %v1990 = vsel %vm870, %v1988, 0.0
      %v1991 = vadd.f32 %v1983, %v1989
      %v1992 = vadd.f32 %v1984, %v1990
      %v1993 = vlaneseq
      %v1994 = vshrl.u32 %v1993, 7
      %v1995 = vsub.s32 3, %v1994
      %v1996 = vrot.slane %v1648, %v1995
      %v1997 = vsel %vm883, %v1996, 0.0
      %v1998 = vsel %vm884, %v1996, 0.0
      %v1999 = vadd.f32 %v1991, %v1997
      %v2000 = vadd.f32 %v1992, %v1998
      %v2001 = vlaneseq
      %v2002 = vshrl.u32 %v2001, 7
      %v2003 = vsub.s32 4, %v2002
      %v2004 = vrot.slane %v1648, %v2003
      %v2005 = vsel %vm897, %v2004, 0.0
      %v2006 = vsel %vm898, %v2004, 0.0
      %v2007 = vadd.f32 %v1999, %v2005
      %v2008 = vadd.f32 %v2000, %v2006
      %v2009 = vlaneseq
      %v2010 = vshrl.u32 %v2009, 7
      %v2011 = vsub.s32 5, %v2010
      %v2012 = vrot.slane %v1648, %v2011
      %v2013 = vsel %vm911, %v2012, 0.0
      %v2014 = vsel %vm912, %v2012, 0.0
      %v2015 = vadd.f32 %v2007, %v2013
      %v2016 = vadd.f32 %v2008, %v2014
      %v2017 = vlaneseq
      %v2018 = vshrl.u32 %v2017, 7
      %v2019 = vsub.s32 6, %v2018
      %v2020 = vrot.slane %v1648, %v2019
      %v2021 = vsel %vm925, %v2020, 0.0
      %v2022 = vsel %vm926, %v2020, 0.0
      %v2023 = vadd.f32 %v2015, %v2021
      %v2024 = vadd.f32 %v2016, %v2022
      %v2025 = vlaneseq
      %v2026 = vshrl.u32 %v2025, 7
      %v2027 = vsub.s32 7, %v2026
      %v2028 = vrot.slane %v1648, %v2027
      %v2029 = vsel %vm939, %v2028, 0.0
      %v2030 = vsel %vm940, %v2028, 0.0
      %v2031 = vadd.f32 %v2023, %v2029
      %v2032 = vadd.f32 %v2024, %v2030
      %v2033 = vlaneseq
      %v2034 = vshrl.u32 %v2033, 7
      %v2035 = vsub.s32 0, %v2034
      %v2036 = vrot.slane %v1653, %v2035
      %v2037 = vsel %vm953, %v2036, 0.0
      %v2038 = vsel %vm954, %v2036, 0.0
      %v2039 = vadd.f32 %v2031, %v2037
      %v2040 = vadd.f32 %v2032, %v2038
      %v2041 = vlaneseq
      %v2042 = vshrl.u32 %v2041, 7
      %v2043 = vsub.s32 1, %v2042
      %v2044 = vrot.slane %v1653, %v2043
      %v2045 = vsel %vm967, %v2044, 0.0
      %v2046 = vsel %vm968, %v2044, 0.0
      %v2047 = vadd.f32 %v2039, %v2045
      %v2048 = vadd.f32 %v2040, %v2046
      %v2049 = vlaneseq
      %v2050 = vshrl.u32 %v2049, 7
      %v2051 = vsub.s32 2, %v2050
      %v2052 = vrot.slane %v1653, %v2051
      %v2053 = vsel %vm981, %v2052, 0.0
      %v2054 = vsel %vm982, %v2052, 0.0
      %v2055 = vadd.f32 %v2047, %v2053
      %v2056 = vadd.f32 %v2048, %v2054
      %v2057 = vlaneseq
      %v2058 = vshrl.u32 %v2057, 7
      %v2059 = vsub.s32 3, %v2058
      %v2060 = vrot.slane %v1653, %v2059
      %v2061 = vsel %vm995, %v2060, 0.0
      %v2062 = vsel %vm996, %v2060, 0.0
      %v2063 = vadd.f32 %v2055, %v2061
      %v2064 = vadd.f32 %v2056, %v2062
      %v2065 = vlaneseq
      %v2066 = vshrl.u32 %v2065, 7
      %v2067 = vsub.s32 4, %v2066
      %v2068 = vrot.slane %v1653, %v2067
      %v2069 = vsel %vm1009, %v2068, 0.0
      %v2070 = vsel %vm1010, %v2068, 0.0
      %v2071 = vadd.f32 %v2063, %v2069
      %v2072 = vadd.f32 %v2064, %v2070
      %v2073 = vlaneseq
      %v2074 = vshrl.u32 %v2073, 7
      %v2075 = vsub.s32 5, %v2074
      %v2076 = vrot.slane %v1653, %v2075
      %v2077 = vsel %vm1023, %v2076, 0.0
      %v2078 = vsel %vm1024, %v2076, 0.0
      %v2079 = vadd.f32 %v2071, %v2077
      %v2080 = vadd.f32 %v2072, %v2078
      %v2081 = vlaneseq
      %v2082 = vshrl.u32 %v2081, 7
      %v2083 = vsub.s32 6, %v2082
      %v2084 = vrot.slane %v1653, %v2083
      %v2085 = vsel %vm1037, %v2084, 0.0
      %v2086 = vsel %vm1038, %v2084, 0.0
      %v2087 = vadd.f32 %v2079, %v2085
      %v2088 = vadd.f32 %v2080, %v2086
      %v2089 = vadd.f32 %v1961, %v2087
      %v2090 = vadd.f32 %v1966, %v2088
      %v2091 = vsel %vm1256, -1e+30, %v2089
      %v2092 = vsel %vm1256, -1e+30, %v2090
      %v2093 = vsel %vm524, %v2091, -inf
      %2094 = vmax.xlane.f32.xlu0 %v2093
      %v2095 = vpop.xlane.xlu0 %2094
      %v2096 = vsel %vm524, %v2092, -inf
      %2097 = vmax.xlane.f32.xlu0 %v2096
      %v2098 = vpop.xlane.xlu0 %2097
      %v2099 = vsub.f32 %v2091, %v2095
      %v2100 = vsub.f32 %v2092, %v2098
      %v2101 = vmul.f32 %v2099, 1.442695
      %v2102 = vpow.pop %v2101
      %v2103 = vmul.f32 %v2100, 1.442695
      %v2104 = vpow.pop %v2103
      %v2105 = vsel %vm524, %v2102, 0.0
      %2106 = vadd.xlane.f32.xlu0 %v2105
      %v2107 = vpop.xlane.xlu0 %2106
      %v2108 = vsel %vm524, %v2104, 0.0
      %2109 = vadd.xlane.f32.xlu0 %v2108
      %v2110 = vpop.xlane.xlu0 %2109
      %v2111 = vrcp.pop %v2107
      %v2112 = vmul.f32 %v2102, %v2111
      %v2113 = vrcp.pop %v2110
      %v2114 = vmul.f32 %v2104, %v2113
      %2117 = vrot.lane.b32.xlu0 %v490, 112
      %v2118 = vpop.permute.xlu0 %2117
      %2119 = vrot.lane.b32.xlu0 %v491, 112
      %v2120 = vpop.permute.xlu0 %2119
      %v2124 = vsel %vm524, %v2112, 0
      %v2127 = vsel %vm524, %v2114, 0
      %2129 = vmatprep.subr.mxu0 0.0
      %2130 = vmatpush1.msra.mxu0 0.0
      %2131 = vmatprep.subr.mxu0 0.0
      %2132 = vmatpush1.msra.mxu0 0.0
      %2133 = vmatprep.subr.mxu0 0.0
      %2134 = vmatpush1.msra.mxu0 0.0
      %2135 = vmatprep.subr.mxu0 0.0
      %2136 = vmatpush1.msra.mxu0 0.0
      %2137 = vmatprep.subr.mxu0 0.0
      %2138 = vmatpush1.msra.mxu0 0.0
      %2139 = vmatprep.subr.mxu0 0.0
      %2140 = vmatpush1.msra.mxu0 0.0
      %2141 = vmatprep.subr.mxu0 0.0
      %2142 = vmatpush1.msra.mxu0 0.0
      %2143 = vmatprep.subr.mxu0 0.0
      %2144 = vmatpush1.msra.mxu0 0.0
      %2145 = vmatprep.subr.mxu0 0.0
      %2146 = vmatpush1.msra.mxu0 0.0
      %2147 = vmatprep.subr.mxu0 0.0
      %2148 = vmatpush1.msra.mxu0 0.0
      %2149 = vmatprep.subr.mxu0 0.0
      %2150 = vmatpush1.msra.mxu0 0.0
      %2151 = vmatprep.subr.mxu0 0.0
      %2152 = vmatpush1.msra.mxu0 0.0
      %2153 = vmatprep.subr.mxu0 0.0
      %2154 = vmatpush1.msra.mxu0 0.0
      %2155 = vmatprep.subr.mxu0 0.0
      %2156 = vmatpush1.msra.mxu0 0.0
      %2157 = vmatprep.subr.mxu0 0.0
      %2158 = vmatpush1.msra.mxu0 %v2120
      %2159 = vmatprep.subr.mxu0 0.0
      %2160 = vmatpush1.msra.mxu0 %v2118
      %2161 = vmatprep.subr.mxu0 0.0
      %2162 = vmatpush2.msra.mxu0 0.0
      %2163 = vmatprep.subr.mxu0 0.0
      %2164 = vmatpush2.msra.mxu0 0.0
      %2165 = vmatprep.subr.mxu0 0.0
      %2166 = vmatpush2.msra.mxu0 0.0
      %2167 = vmatprep.subr.mxu0 0.0
      %2168 = vmatpush2.msra.mxu0 0.0
      %2169 = vmatprep.subr.mxu0 0.0
      %2170 = vmatpush2.msra.mxu0 0.0
      %2171 = vmatprep.subr.mxu0 0.0
      %2172 = vmatpush2.msra.mxu0 0.0
      %2173 = vmatprep.subr.mxu0 0.0
      %2174 = vmatpush2.msra.mxu0 0.0
      %2175 = vmatprep.subr.mxu0 0.0
      %2176 = vmatpush2.msra.mxu0 0.0
      %2177 = vmatprep.subr.mxu0 0.0
      %2178 = vmatpush2.msra.mxu0 0.0
      %2179 = vmatprep.subr.mxu0 0.0
      %2180 = vmatpush2.msra.mxu0 0.0
      %2181 = vmatprep.subr.mxu0 0.0
      %2182 = vmatpush2.msra.mxu0 0.0
      %2183 = vmatprep.subr.mxu0 0.0
      %2184 = vmatpush2.msra.mxu0 0.0
      %2185 = vmatprep.subr.mxu0 0.0
      %2186 = vmatpush2.msra.mxu0 0.0
      %2187 = vmatprep.subr.mxu0 0.0
      %2188 = vmatpush2.msra.mxu0 0.0
      %2189 = vmatprep.subr.mxu0 0.0
      %2190 = vmatpush2.msra.mxu0 0.0
      %2191 = vmatprep.subr.mxu0 0.0
      %2192 = vmatpush2.msra.mxu0 0.0
      %2193 = vmatprep.mubr.f32.mxu0 0.0
      %2194 = vmatmul.mubr.f32.gmra.mxu0 %v2124
      %v2195 = vpop.f32.mrf.mxu0
      %v2196 = vadd.f32 0.0, %v2195
      %v2197 = vpop.f32.mrf.mxu0
      %2198 = vmatprep.mubr.f32.mxu0 0.0
      %2199 = vmatmul.mubr.f32.gmra.mxu0 %v2127
      %v2200 = vpop.f32.mrf.mxu0
      %v2201 = vadd.f32 0.0, %v2200
      %v2202 = vpop.f32.mrf.mxu0
      %2203 = vdwg.mxu0
      %2204 = vrot.lane.b32.xlu0 %v486, 96
      %v2205 = vpop.permute.xlu0 %2204
      %2206 = vrot.lane.b32.xlu0 %v487, 96
      %v2207 = vpop.permute.xlu0 %2206
      %2208 = vrot.lane.b32.xlu0 %v492, 96
      %v2209 = vpop.permute.xlu0 %2208
      %2210 = vrot.lane.b32.xlu0 %v493, 96
      %v2211 = vpop.permute.xlu0 %2210
      %2212 = vrot.lane.b32.xlu0 %v494, 96
      %v2213 = vpop.permute.xlu0 %2212
      %2214 = vrot.lane.b32.xlu0 %v495, 96
      %v2215 = vpop.permute.xlu0 %2214
      %2216 = vrot.lane.b32.xlu0 %v496, 96
      %v2217 = vpop.permute.xlu0 %2216
      %2218 = vrot.lane.b32.xlu0 %v497, 96
      %v2219 = vpop.permute.xlu0 %2218
      %2220 = vrot.lane.b32.xlu0 %v498, 96
      %v2221 = vpop.permute.xlu0 %2220
      %2222 = vrot.lane.b32.xlu0 %v499, 96
      %v2223 = vpop.permute.xlu0 %2222
      %2224 = vrot.lane.b32.xlu0 %v500, 96
      %v2225 = vpop.permute.xlu0 %2224
      %2226 = vrot.lane.b32.xlu0 %v501, 96
      %v2227 = vpop.permute.xlu0 %2226
      %2228 = vrot.lane.b32.xlu0 %v502, 96
      %v2229 = vpop.permute.xlu0 %2228
      %2230 = vrot.lane.b32.xlu0 %v503, 96
      %v2231 = vpop.permute.xlu0 %2230
      %2232 = vrot.lane.b32.xlu0 %v504, 96
      %v2233 = vpop.permute.xlu0 %2232
      %2234 = vrot.lane.b32.xlu0 %v505, 96
      %v2235 = vpop.permute.xlu0 %2234
      %2236 = vrot.lane.b32.xlu0 %v506, 96
      %v2237 = vpop.permute.xlu0 %2236
      %2238 = vrot.lane.b32.xlu0 %v507, 96
      %v2239 = vpop.permute.xlu0 %2238
      %v2240 = vsel %vm524, %v2205, 0
      %v2242 = vsel %vm524, %v2207, 0
      %v2244 = vsel %vm524, %v2209, 0
      %v2246 = vsel %vm524, %v2211, 0
      %v2248 = vsel %vm524, %v2213, 0
      %v2250 = vsel %vm524, %v2215, 0
      %v2252 = vsel %vm524, %v2217, 0
      %v2254 = vsel %vm524, %v2219, 0
      %v2256 = vsel %vm524, %v2221, 0
      %v2258 = vsel %vm524, %v2223, 0
      %v2260 = vsel %vm524, %v2225, 0
      %v2262 = vsel %vm524, %v2227, 0
      %v2264 = vsel %vm524, %v2229, 0
      %v2266 = vsel %vm524, %v2231, 0
      %v2268 = vsel %vm524, %v2233, 0
      %v2270 = vsel %vm524, %v2235, 0
      %v2272 = vsel %vm524, %v2237, 0
      %v2274 = vsel %vm524, %v2239, 0
      %2276 = vmatprep.subr.mxu0 0.0
      %2277 = vmatpush1.xpose.msra.mxu0 %v2274
      %2278 = vmatprep.subr.mxu0 0.0
      %2279 = vmatpush1.xpose.msra.mxu0 %v2272
      %2280 = vmatprep.subr.mxu0 0.0
      %2281 = vmatpush1.xpose.msra.mxu0 %v2270
      %2282 = vmatprep.subr.mxu0 0.0
      %2283 = vmatpush1.xpose.msra.mxu0 %v2268
      %2284 = vmatprep.subr.mxu0 0.0
      %2285 = vmatpush1.xpose.msra.mxu0 %v2266
      %2286 = vmatprep.subr.mxu0 0.0
      %2287 = vmatpush1.xpose.msra.mxu0 %v2264
      %2288 = vmatprep.subr.mxu0 0.0
      %2289 = vmatpush1.xpose.msra.mxu0 %v2262
      %2290 = vmatprep.subr.mxu0 0.0
      %2291 = vmatpush1.xpose.msra.mxu0 %v2260
      %2292 = vmatprep.subr.mxu0 0.0
      %2293 = vmatpush1.xpose.msra.mxu0 %v2258
      %2294 = vmatprep.subr.mxu0 0.0
      %2295 = vmatpush1.xpose.msra.mxu0 %v2256
      %2296 = vmatprep.subr.mxu0 0.0
      %2297 = vmatpush1.xpose.msra.mxu0 %v2254
      %2298 = vmatprep.subr.mxu0 0.0
      %2299 = vmatpush1.xpose.msra.mxu0 %v2252
      %2300 = vmatprep.subr.mxu0 0.0
      %2301 = vmatpush1.xpose.msra.mxu0 %v2250
      %2302 = vmatprep.subr.mxu0 0.0
      %2303 = vmatpush1.xpose.msra.mxu0 %v2248
      %2304 = vmatprep.subr.mxu0 0.0
      %2305 = vmatpush1.xpose.msra.mxu0 %v2246
      %2306 = vmatprep.subr.mxu0 0.0
      %2307 = vmatpush1.xpose.msra.mxu0 %v2244
      %2308 = vmatprep.subr.mxu0 0.0
      %2309 = vmatpush2.xpose.msra.mxu0 0.0
      %2310 = vmatprep.subr.mxu0 0.0
      %2311 = vmatpush2.xpose.msra.mxu0 0.0
      %2312 = vmatprep.subr.mxu0 0.0
      %2313 = vmatpush2.xpose.msra.mxu0 0.0
      %2314 = vmatprep.subr.mxu0 0.0
      %2315 = vmatpush2.xpose.msra.mxu0 0.0
      %2316 = vmatprep.subr.mxu0 0.0
      %2317 = vmatpush2.xpose.msra.mxu0 0.0
      %2318 = vmatprep.subr.mxu0 0.0
      %2319 = vmatpush2.xpose.msra.mxu0 0.0
      %2320 = vmatprep.subr.mxu0 0.0
      %2321 = vmatpush2.xpose.msra.mxu0 0.0
      %2322 = vmatprep.subr.mxu0 0.0
      %2323 = vmatpush2.xpose.msra.mxu0 0.0
      %2324 = vmatprep.subr.mxu0 0.0
      %2325 = vmatpush2.xpose.msra.mxu0 0.0
      %2326 = vmatprep.subr.mxu0 0.0
      %2327 = vmatpush2.xpose.msra.mxu0 0.0
      %2328 = vmatprep.subr.mxu0 0.0
      %2329 = vmatpush2.xpose.msra.mxu0 0.0
      %2330 = vmatprep.subr.mxu0 0.0
      %2331 = vmatpush2.xpose.msra.mxu0 0.0
      %2332 = vmatprep.subr.mxu0 0.0
      %2333 = vmatpush2.xpose.msra.mxu0 0.0
      %2334 = vmatprep.subr.mxu0 0.0
      %2335 = vmatpush2.xpose.msra.mxu0 0.0
      %2336 = vmatprep.subr.mxu0 0.0
      %2337 = vmatpush2.xpose.msra.mxu0 0.0
      %2338 = vmatprep.subr.mxu0 0.0
      %2339 = vmatpush2.xpose.msra.mxu0 0.0
      %2340 = vmatprep.mubr.f32.mxu0 0.0
      %2341 = vmatmul.mubr.f32.gmra.mxu0 %v2240
      %v2342 = vpop.f32.mrf.mxu0
      %v2343 = vadd.f32 0.0, %v2342
      %v2344 = vpop.f32.mrf.mxu0
      %2345 = vmatprep.mubr.f32.mxu0 0.0
      %2346 = vmatmul.mubr.f32.gmra.mxu0 %v2242
      %v2347 = vpop.f32.mrf.mxu0
      %v2348 = vadd.f32 0.0, %v2347
      %v2349 = vpop.f32.mrf.mxu0
      %2350 = vdwg.mxu0
      %2351 = vrot.lane.b32.xlu0 %v508, 96
      %v2352 = vpop.permute.xlu0 %2351
      %2353 = vrot.lane.b32.xlu0 %v509, 96
      %v2354 = vpop.permute.xlu0 %2353
      %2355 = vrot.lane.b32.xlu0 %v510, 96
      %v2356 = vpop.permute.xlu0 %2355
      %2357 = vrot.lane.b32.xlu0 %v511, 96
      %v2358 = vpop.permute.xlu0 %2357
      %2359 = vrot.lane.b32.xlu0 %v512, 96
      %v2360 = vpop.permute.xlu0 %2359
      %2361 = vrot.lane.b32.xlu0 %v513, 96
      %v2362 = vpop.permute.xlu0 %2361
      %2363 = vrot.lane.b32.xlu0 %v514, 96
      %v2364 = vpop.permute.xlu0 %2363
      %2365 = vrot.lane.b32.xlu0 %v515, 96
      %v2366 = vpop.permute.xlu0 %2365
      %2367 = vrot.lane.b32.xlu0 %v516, 96
      %v2368 = vpop.permute.xlu0 %2367
      %2369 = vrot.lane.b32.xlu0 %v517, 96
      %v2370 = vpop.permute.xlu0 %2369
      %2371 = vrot.lane.b32.xlu0 %v518, 96
      %v2372 = vpop.permute.xlu0 %2371
      %2373 = vrot.lane.b32.xlu0 %v519, 96
      %v2374 = vpop.permute.xlu0 %2373
      %2375 = vrot.lane.b32.xlu0 %v520, 96
      %v2376 = vpop.permute.xlu0 %2375
      %2377 = vrot.lane.b32.xlu0 %v521, 96
      %v2378 = vpop.permute.xlu0 %2377
      %2379 = vrot.lane.b32.xlu0 %v522, 96
      %v2380 = vpop.permute.xlu0 %2379
      %2381 = vrot.lane.b32.xlu0 %v523, 96
      %v2382 = vpop.permute.xlu0 %2381
      %2383 = vrot.lane.b32.xlu0 %v488, 96
      %v2384 = vpop.permute.xlu0 %2383
      %2385 = vrot.lane.b32.xlu0 %v489, 96
      %v2386 = vpop.permute.xlu0 %2385
      %v2387 = vsel %vm524, %v2352, 0
      %v2389 = vsel %vm524, %v2354, 0
      %v2391 = vsel %vm524, %v2356, 0
      %v2393 = vsel %vm524, %v2358, 0
      %v2395 = vsel %vm524, %v2360, 0
      %v2397 = vsel %vm524, %v2362, 0
      %v2399 = vsel %vm524, %v2364, 0
      %v2401 = vsel %vm524, %v2366, 0
      %v2403 = vsel %vm524, %v2368, 0
      %v2405 = vsel %vm524, %v2370, 0
      %v2407 = vsel %vm524, %v2372, 0
      %v2409 = vsel %vm524, %v2374, 0
      %v2411 = vsel %vm524, %v2376, 0
      %v2413 = vsel %vm524, %v2378, 0
      %v2415 = vsel %vm524, %v2380, 0
      %v2417 = vsel %vm524, %v2382, 0
      %v2419 = vsel %vm524, %v2384, 0
      %v2421 = vsel %vm524, %v2386, 0
      %2423 = vmatprep.subr.mxu0 0.0
      %2424 = vmatpush1.xpose.msra.mxu0 0.0
      %2425 = vmatprep.subr.mxu0 0.0
      %2426 = vmatpush1.xpose.msra.mxu0 0.0
      %2427 = vmatprep.subr.mxu0 0.0
      %2428 = vmatpush1.xpose.msra.mxu0 0.0
      %2429 = vmatprep.subr.mxu0 0.0
      %2430 = vmatpush1.xpose.msra.mxu0 0.0
      %2431 = vmatprep.subr.mxu0 0.0
      %2432 = vmatpush1.xpose.msra.mxu0 0.0
      %2433 = vmatprep.subr.mxu0 0.0
      %2434 = vmatpush1.xpose.msra.mxu0 0.0
      %2435 = vmatprep.subr.mxu0 0.0
      %2436 = vmatpush1.xpose.msra.mxu0 0.0
      %2437 = vmatprep.subr.mxu0 0.0
      %2438 = vmatpush1.xpose.msra.mxu0 0.0
      %2439 = vmatprep.subr.mxu0 0.0
      %2440 = vmatpush1.xpose.msra.mxu0 0.0
      %2441 = vmatprep.subr.mxu0 0.0
      %2442 = vmatpush1.xpose.msra.mxu0 0.0
      %2443 = vmatprep.subr.mxu0 0.0
      %2444 = vmatpush1.xpose.msra.mxu0 0.0
      %2445 = vmatprep.subr.mxu0 0.0
      %2446 = vmatpush1.xpose.msra.mxu0 0.0
      %2447 = vmatprep.subr.mxu0 0.0
      %2448 = vmatpush1.xpose.msra.mxu0 0.0
      %2449 = vmatprep.subr.mxu0 0.0
      %2450 = vmatpush1.xpose.msra.mxu0 0.0
      %2451 = vmatprep.subr.mxu0 0.0
      %2452 = vmatpush1.xpose.msra.mxu0 %v2421
      %2453 = vmatprep.subr.mxu0 0.0
      %2454 = vmatpush1.xpose.msra.mxu0 %v2419
      %2455 = vmatprep.subr.mxu0 0.0
      %2456 = vmatpush2.xpose.msra.mxu0 0.0
      %2457 = vmatprep.subr.mxu0 0.0
      %2458 = vmatpush2.xpose.msra.mxu0 0.0
      %2459 = vmatprep.subr.mxu0 0.0
      %2460 = vmatpush2.xpose.msra.mxu0 0.0
      %2461 = vmatprep.subr.mxu0 0.0
      %2462 = vmatpush2.xpose.msra.mxu0 0.0
      %2463 = vmatprep.subr.mxu0 0.0
      %2464 = vmatpush2.xpose.msra.mxu0 0.0
      %2465 = vmatprep.subr.mxu0 0.0
      %2466 = vmatpush2.xpose.msra.mxu0 0.0
      %2467 = vmatprep.subr.mxu0 0.0
      %2468 = vmatpush2.xpose.msra.mxu0 0.0
      %2469 = vmatprep.subr.mxu0 0.0
      %2470 = vmatpush2.xpose.msra.mxu0 0.0
      %2471 = vmatprep.subr.mxu0 0.0
      %2472 = vmatpush2.xpose.msra.mxu0 0.0
      %2473 = vmatprep.subr.mxu0 0.0
      %2474 = vmatpush2.xpose.msra.mxu0 0.0
      %2475 = vmatprep.subr.mxu0 0.0
      %2476 = vmatpush2.xpose.msra.mxu0 0.0
      %2477 = vmatprep.subr.mxu0 0.0
      %2478 = vmatpush2.xpose.msra.mxu0 0.0
      %2479 = vmatprep.subr.mxu0 0.0
      %2480 = vmatpush2.xpose.msra.mxu0 0.0
      %2481 = vmatprep.subr.mxu0 0.0
      %2482 = vmatpush2.xpose.msra.mxu0 0.0
      %2483 = vmatprep.subr.mxu0 0.0
      %2484 = vmatpush2.xpose.msra.mxu0 0.0
      %2485 = vmatprep.subr.mxu0 0.0
      %2486 = vmatpush2.xpose.msra.mxu0 0.0
      %2487 = vmatprep.mubr.f32.mxu0 0.0
      %2488 = vmatmul.mubr.f32.gmra.mxu0 %v2387
      %v2489 = vpop.f32.mrf.mxu0
      %v2490 = vadd.f32 0.0, %v2489
      %v2491 = vpop.f32.mrf.mxu0
      %2492 = vmatprep.mubr.f32.mxu0 0.0
      %2493 = vmatmul.mubr.f32.gmra.mxu0 %v2389
      %v2494 = vpop.f32.mrf.mxu0
      %v2495 = vadd.f32 0.0, %v2494
      %v2496 = vpop.f32.mrf.mxu0
      %2497 = vmatprep.mubr.f32.mxu0 0.0
      %2498 = vmatmul.mubr.f32.gmra.mxu0 %v2391
      %v2499 = vpop.f32.mrf.mxu0
      %v2500 = vpop.f32.mrf.mxu0
      %2501 = vmatprep.mubr.f32.mxu0 0.0
      %2502 = vmatmul.mubr.f32.gmra.mxu0 %v2393
      %v2503 = vpop.f32.mrf.mxu0
      %v2504 = vpop.f32.mrf.mxu0
      %2505 = vmatprep.mubr.f32.mxu0 0.0
      %2506 = vmatmul.mubr.f32.gmra.mxu0 %v2395
      %v2507 = vpop.f32.mrf.mxu0
      %v2508 = vpop.f32.mrf.mxu0
      %2509 = vmatprep.mubr.f32.mxu0 0.0
      %2510 = vmatmul.mubr.f32.gmra.mxu0 %v2397
      %v2511 = vpop.f32.mrf.mxu0
      %v2512 = vpop.f32.mrf.mxu0
      %2513 = vmatprep.mubr.f32.mxu0 0.0
      %2514 = vmatmul.mubr.f32.gmra.mxu0 %v2399
      %v2515 = vpop.f32.mrf.mxu0
      %v2516 = vpop.f32.mrf.mxu0
      %2517 = vmatprep.mubr.f32.mxu0 0.0
      %2518 = vmatmul.mubr.f32.gmra.mxu0 %v2401
      %v2519 = vpop.f32.mrf.mxu0
      %v2520 = vpop.f32.mrf.mxu0
      %2521 = vmatprep.mubr.f32.mxu0 0.0
      %2522 = vmatmul.mubr.f32.gmra.mxu0 %v2403
      %v2523 = vpop.f32.mrf.mxu0
      %v2524 = vpop.f32.mrf.mxu0
      %2525 = vmatprep.mubr.f32.mxu0 0.0
      %2526 = vmatmul.mubr.f32.gmra.mxu0 %v2405
      %v2527 = vpop.f32.mrf.mxu0
      %v2528 = vpop.f32.mrf.mxu0
      %2529 = vmatprep.mubr.f32.mxu0 0.0
      %2530 = vmatmul.mubr.f32.gmra.mxu0 %v2407
      %v2531 = vpop.f32.mrf.mxu0
      %v2532 = vpop.f32.mrf.mxu0
      %2533 = vmatprep.mubr.f32.mxu0 0.0
      %2534 = vmatmul.mubr.f32.gmra.mxu0 %v2409
      %v2535 = vpop.f32.mrf.mxu0
      %v2536 = vpop.f32.mrf.mxu0
      %2537 = vmatprep.mubr.f32.mxu0 0.0
      %2538 = vmatmul.mubr.f32.gmra.mxu0 %v2411
      %v2539 = vpop.f32.mrf.mxu0
      %v2540 = vpop.f32.mrf.mxu0
      %2541 = vmatprep.mubr.f32.mxu0 0.0
      %2542 = vmatmul.mubr.f32.gmra.mxu0 %v2413
      %v2543 = vpop.f32.mrf.mxu0
      %v2544 = vpop.f32.mrf.mxu0
      %2545 = vmatprep.mubr.f32.mxu0 0.0
      %2546 = vmatmul.mubr.f32.gmra.mxu0 %v2415
      %v2547 = vpop.f32.mrf.mxu0
      %v2548 = vpop.f32.mrf.mxu0
      %2549 = vmatprep.mubr.f32.mxu0 0.0
      %2550 = vmatmul.mubr.f32.gmra.mxu0 %v2417
      %v2551 = vpop.f32.mrf.mxu0
      %v2552 = vpop.f32.mrf.mxu0
      %2553 = vdwg.mxu0
      %2555 = vset.pattern.permute.xlu0 0
      %2556 = vperm.xlu0 %2555, %v2343
      %v2557 = vpop.permute.xlu0 %2556
      %2560 = vset.pattern.permute.xlu0 0
      %2561 = vperm.xlu0 %2560, %v2348
      %v2562 = vpop.permute.xlu0 %2561
      %v2564 = vsel %vm839, %v2557, 0.0
      %v2565 = vsel %vm840, %v2562, 0.0
      %v2566 = vadd.f32 %v2564, 0.0
      %v2567 = vadd.f32 %v2565, 0.0
      %2568 = vset.pattern.permute.xlu0 1
      %2569 = vperm.xlu0 %2568, %v2343
      %v2570 = vpop.permute.xlu0 %2569
      %2572 = vset.pattern.permute.xlu0 1
      %2573 = vperm.xlu0 %2572, %v2348
      %v2574 = vpop.permute.xlu0 %2573
      %v2576 = vsel %vm855, %v2570, 0.0
      %v2577 = vsel %vm856, %v2574, 0.0
      %v2578 = vadd.f32 %v2566, %v2576
      %v2579 = vadd.f32 %v2567, %v2577
      %2580 = vset.pattern.permute.xlu0 2
      %2581 = vperm.xlu0 %2580, %v2343
      %v2582 = vpop.permute.xlu0 %2581
      %2584 = vset.pattern.permute.xlu0 2
      %2585 = vperm.xlu0 %2584, %v2348
      %v2586 = vpop.permute.xlu0 %2585
      %v2588 = vsel %vm869, %v2582, 0.0
      %v2589 = vsel %vm870, %v2586, 0.0
      %v2590 = vadd.f32 %v2578, %v2588
      %v2591 = vadd.f32 %v2579, %v2589
      %2592 = vset.pattern.permute.xlu0 3
      %2593 = vperm.xlu0 %2592, %v2343
      %v2594 = vpop.permute.xlu0 %2593
      %2596 = vset.pattern.permute.xlu0 3
      %2597 = vperm.xlu0 %2596, %v2348
      %v2598 = vpop.permute.xlu0 %2597
      %v2600 = vsel %vm883, %v2594, 0.0
      %v2601 = vsel %vm884, %v2598, 0.0
      %v2602 = vadd.f32 %v2590, %v2600
      %v2603 = vadd.f32 %v2591, %v2601
      %2604 = vset.pattern.permute.xlu0 4
      %2605 = vperm.xlu0 %2604, %v2343
      %v2606 = vpop.permute.xlu0 %2605
      %2608 = vset.pattern.permute.xlu0 4
      %2609 = vperm.xlu0 %2608, %v2348
      %v2610 = vpop.permute.xlu0 %2609
      %v2612 = vsel %vm897, %v2606, 0.0
      %v2613 = vsel %vm898, %v2610, 0.0
      %v2614 = vadd.f32 %v2602, %v2612
      %v2615 = vadd.f32 %v2603, %v2613
      %2616 = vset.pattern.permute.xlu0 5
      %2617 = vperm.xlu0 %2616, %v2343
      %v2618 = vpop.permute.xlu0 %2617
      %2620 = vset.pattern.permute.xlu0 5
      %2621 = vperm.xlu0 %2620, %v2348
      %v2622 = vpop.permute.xlu0 %2621
      %v2624 = vsel %vm911, %v2618, 0.0
      %v2625 = vsel %vm912, %v2622, 0.0
      %v2626 = vadd.f32 %v2614, %v2624
      %v2627 = vadd.f32 %v2615, %v2625
      %2628 = vset.pattern.permute.xlu0 6
      %2629 = vperm.xlu0 %2628, %v2343
      %v2630 = vpop.permute.xlu0 %2629
      %2632 = vset.pattern.permute.xlu0 6
      %2633 = vperm.xlu0 %2632, %v2348
      %v2634 = vpop.permute.xlu0 %2633
      %v2636 = vsel %vm925, %v2630, 0.0
      %v2637 = vsel %vm926, %v2634, 0.0
      %v2638 = vadd.f32 %v2626, %v2636
      %v2639 = vadd.f32 %v2627, %v2637
      %2640 = vset.pattern.permute.xlu0 7
      %2641 = vperm.xlu0 %2640, %v2343
      %v2642 = vpop.permute.xlu0 %2641
      %2644 = vset.pattern.permute.xlu0 7
      %2645 = vperm.xlu0 %2644, %v2348
      %v2646 = vpop.permute.xlu0 %2645
      %v2648 = vsel %vm939, %v2642, 0.0
      %v2649 = vsel %vm940, %v2646, 0.0
      %v2650 = vadd.f32 %v2638, %v2648
      %v2651 = vadd.f32 %v2639, %v2649
      %2652 = vset.pattern.permute.xlu0 8
      %2653 = vperm.xlu0 %2652, %v2343
      %v2654 = vpop.permute.xlu0 %2653
      %2656 = vset.pattern.permute.xlu0 8
      %2657 = vperm.xlu0 %2656, %v2348
      %v2658 = vpop.permute.xlu0 %2657
      %v2660 = vsel %vm953, %v2654, 0.0
      %v2661 = vsel %vm954, %v2658, 0.0
      %v2662 = vadd.f32 %v2650, %v2660
      %v2663 = vadd.f32 %v2651, %v2661
      %2664 = vset.pattern.permute.xlu0 9
      %2665 = vperm.xlu0 %2664, %v2343
      %v2666 = vpop.permute.xlu0 %2665
      %2668 = vset.pattern.permute.xlu0 9
      %2669 = vperm.xlu0 %2668, %v2348
      %v2670 = vpop.permute.xlu0 %2669
      %v2672 = vsel %vm967, %v2666, 0.0
      %v2673 = vsel %vm968, %v2670, 0.0
      %v2674 = vadd.f32 %v2662, %v2672
      %v2675 = vadd.f32 %v2663, %v2673
      %2676 = vset.pattern.permute.xlu0 10
      %2677 = vperm.xlu0 %2676, %v2343
      %v2678 = vpop.permute.xlu0 %2677
      %2680 = vset.pattern.permute.xlu0 10
      %2681 = vperm.xlu0 %2680, %v2348
      %v2682 = vpop.permute.xlu0 %2681
      %v2684 = vsel %vm981, %v2678, 0.0
      %v2685 = vsel %vm982, %v2682, 0.0
      %v2686 = vadd.f32 %v2674, %v2684
      %v2687 = vadd.f32 %v2675, %v2685
      %2688 = vset.pattern.permute.xlu0 11
      %2689 = vperm.xlu0 %2688, %v2343
      %v2690 = vpop.permute.xlu0 %2689
      %2692 = vset.pattern.permute.xlu0 11
      %2693 = vperm.xlu0 %2692, %v2348
      %v2694 = vpop.permute.xlu0 %2693
      %v2696 = vsel %vm995, %v2690, 0.0
      %v2697 = vsel %vm996, %v2694, 0.0
      %v2698 = vadd.f32 %v2686, %v2696
      %v2699 = vadd.f32 %v2687, %v2697
      %2700 = vset.pattern.permute.xlu0 12
      %2701 = vperm.xlu0 %2700, %v2343
      %v2702 = vpop.permute.xlu0 %2701
      %2704 = vset.pattern.permute.xlu0 12
      %2705 = vperm.xlu0 %2704, %v2348
      %v2706 = vpop.permute.xlu0 %2705
      %v2708 = vsel %vm1009, %v2702, 0.0
      %v2709 = vsel %vm1010, %v2706, 0.0
      %v2710 = vadd.f32 %v2698, %v2708
      %v2711 = vadd.f32 %v2699, %v2709
      %2712 = vset.pattern.permute.xlu0 13
      %2713 = vperm.xlu0 %2712, %v2343
      %v2714 = vpop.permute.xlu0 %2713
      %2716 = vset.pattern.permute.xlu0 13
      %2717 = vperm.xlu0 %2716, %v2348
      %v2718 = vpop.permute.xlu0 %2717
      %v2720 = vsel %vm1023, %v2714, 0.0
      %v2721 = vsel %vm1024, %v2718, 0.0
      %v2722 = vadd.f32 %v2710, %v2720
      %v2723 = vadd.f32 %v2711, %v2721
      %2724 = vset.pattern.permute.xlu0 14
      %2725 = vperm.xlu0 %2724, %v2343
      %v2726 = vpop.permute.xlu0 %2725
      %2728 = vset.pattern.permute.xlu0 14
      %2729 = vperm.xlu0 %2728, %v2348
      %v2730 = vpop.permute.xlu0 %2729
      %v2732 = vsel %vm1037, %v2726, 0.0
      %v2733 = vsel %vm1038, %v2730, 0.0
      %v2734 = vadd.f32 %v2722, %v2732
      %v2735 = vadd.f32 %v2723, %v2733
      %2736 = vmatprep.subr.mxu0 0.0
      %2737 = vmatpush1.xpose.msra.mxu0 0.0
      %2738 = vmatprep.subr.mxu0 0.0
      %2739 = vmatpush1.xpose.msra.mxu0 0.0
      %2740 = vmatprep.subr.mxu0 0.0
      %2741 = vmatpush1.xpose.msra.mxu0 0.0
      %2742 = vmatprep.subr.mxu0 0.0
      %2743 = vmatpush1.xpose.msra.mxu0 0.0
      %2744 = vmatprep.subr.mxu0 0.0
      %2745 = vmatpush1.xpose.msra.mxu0 0.0
      %2746 = vmatprep.subr.mxu0 0.0
      %2747 = vmatpush1.xpose.msra.mxu0 0.0
      %2748 = vmatprep.subr.mxu0 0.0
      %2749 = vmatpush1.xpose.msra.mxu0 0.0
      %2750 = vmatprep.subr.mxu0 0.0
      %2751 = vmatpush1.xpose.msra.mxu0 0.0
      %2752 = vmatprep.subr.mxu0 0.0
      %2753 = vmatpush1.xpose.msra.mxu0 0.0
      %2754 = vmatprep.subr.mxu0 0.0
      %2755 = vmatpush1.xpose.msra.mxu0 0.0
      %2756 = vmatprep.subr.mxu0 0.0
      %2757 = vmatpush1.xpose.msra.mxu0 0.0
      %2758 = vmatprep.subr.mxu0 0.0
      %2759 = vmatpush1.xpose.msra.mxu0 0.0
      %2760 = vmatprep.subr.mxu0 0.0
      %2761 = vmatpush1.xpose.msra.mxu0 0.0
      %2762 = vmatprep.subr.mxu0 0.0
      %2763 = vmatpush1.xpose.msra.mxu0 0.0
      %2764 = vmatprep.subr.mxu0 0.0
      %2765 = vmatpush1.xpose.msra.mxu0 %v2421
      %2766 = vmatprep.subr.mxu0 0.0
      %2767 = vmatpush1.xpose.msra.mxu0 %v2419
      %2768 = vmatprep.subr.mxu0 0.0
      %2769 = vmatpush2.xpose.msra.mxu0 0.0
      %2770 = vmatprep.subr.mxu0 0.0
      %2771 = vmatpush2.xpose.msra.mxu0 0.0
      %2772 = vmatprep.subr.mxu0 0.0
      %2773 = vmatpush2.xpose.msra.mxu0 0.0
      %2774 = vmatprep.subr.mxu0 0.0
      %2775 = vmatpush2.xpose.msra.mxu0 0.0
      %2776 = vmatprep.subr.mxu0 0.0
      %2777 = vmatpush2.xpose.msra.mxu0 0.0
      %2778 = vmatprep.subr.mxu0 0.0
      %2779 = vmatpush2.xpose.msra.mxu0 0.0
      %2780 = vmatprep.subr.mxu0 0.0
      %2781 = vmatpush2.xpose.msra.mxu0 0.0
      %2782 = vmatprep.subr.mxu0 0.0
      %2783 = vmatpush2.xpose.msra.mxu0 0.0
      %2784 = vmatprep.subr.mxu0 0.0
      %2785 = vmatpush2.xpose.msra.mxu0 0.0
      %2786 = vmatprep.subr.mxu0 0.0
      %2787 = vmatpush2.xpose.msra.mxu0 0.0
      %2788 = vmatprep.subr.mxu0 0.0
      %2789 = vmatpush2.xpose.msra.mxu0 0.0
      %2790 = vmatprep.subr.mxu0 0.0
      %2791 = vmatpush2.xpose.msra.mxu0 0.0
      %2792 = vmatprep.subr.mxu0 0.0
      %2793 = vmatpush2.xpose.msra.mxu0 0.0
      %2794 = vmatprep.subr.mxu0 0.0
      %2795 = vmatpush2.xpose.msra.mxu0 0.0
      %2796 = vmatprep.subr.mxu0 0.0
      %2797 = vmatpush2.xpose.msra.mxu0 0.0
      %2798 = vmatprep.subr.mxu0 0.0
      %2799 = vmatpush2.xpose.msra.mxu0 0.0
      %2800 = vmatprep.mubr.f32.mxu0 0.0
      %2801 = vmatmul.mubr.f32.gmra.mxu0 %v2240
      %v2802 = vpop.f32.mrf.mxu0
      %v2803 = vadd.f32 %v2734, %v2802
      %v2804 = vpop.f32.mrf.mxu0
      %2805 = vmatprep.mubr.f32.mxu0 0.0
      %2806 = vmatmul.mubr.f32.gmra.mxu0 %v2242
      %v2807 = vpop.f32.mrf.mxu0
      %v2808 = vadd.f32 %v2735, %v2807
      %v2809 = vpop.f32.mrf.mxu0
      %2810 = vdwg.mxu0
      %v2811 = vlaneseq
      %v2812 = vshrl.u32 %v2811, 7
      %v2813 = vsub.s32 0, %v2812
      %v2814 = vrot.slane %v2490, %v2813
      %v2815 = vsel %vm839, %v2814, 0.0
      %v2816 = vsel %vm840, %v2814, 0.0
      %v2817 = vadd.f32 %v2815, 0.0
      %v2818 = vadd.f32 %v2816, 0.0
      %v2819 = vlaneseq
      %v2820 = vshrl.u32 %v2819, 7
      %v2821 = vsub.s32 1, %v2820
      %v2822 = vrot.slane %v2490, %v2821
      %v2823 = vsel %vm855, %v2822, 0.0
      %v2824 = vsel %vm856, %v2822, 0.0
      %v2825 = vadd.f32 %v2817, %v2823
      %v2826 = vadd.f32 %v2818, %v2824
      %v2827 = vlaneseq
      %v2828 = vshrl.u32 %v2827, 7
      %v2829 = vsub.s32 2, %v2828
      %v2830 = vrot.slane %v2490, %v2829
      %v2831 = vsel %vm869, %v2830, 0.0
      %v2832 = vsel %vm870, %v2830, 0.0
      %v2833 = vadd.f32 %v2825, %v2831
      %v2834 = vadd.f32 %v2826, %v2832
      %v2835 = vlaneseq
      %v2836 = vshrl.u32 %v2835, 7
      %v2837 = vsub.s32 3, %v2836
      %v2838 = vrot.slane %v2490, %v2837
      %v2839 = vsel %vm883, %v2838, 0.0
      %v2840 = vsel %vm884, %v2838, 0.0
      %v2841 = vadd.f32 %v2833, %v2839
      %v2842 = vadd.f32 %v2834, %v2840
      %v2843 = vlaneseq
      %v2844 = vshrl.u32 %v2843, 7
      %v2845 = vsub.s32 4, %v2844
      %v2846 = vrot.slane %v2490, %v2845
      %v2847 = vsel %vm897, %v2846, 0.0
      %v2848 = vsel %vm898, %v2846, 0.0
      %v2849 = vadd.f32 %v2841, %v2847
      %v2850 = vadd.f32 %v2842, %v2848
      %v2851 = vlaneseq
      %v2852 = vshrl.u32 %v2851, 7
      %v2853 = vsub.s32 5, %v2852
      %v2854 = vrot.slane %v2490, %v2853
      %v2855 = vsel %vm911, %v2854, 0.0
      %v2856 = vsel %vm912, %v2854, 0.0
      %v2857 = vadd.f32 %v2849, %v2855
      %v2858 = vadd.f32 %v2850, %v2856
      %v2859 = vlaneseq
      %v2860 = vshrl.u32 %v2859, 7
      %v2861 = vsub.s32 6, %v2860
      %v2862 = vrot.slane %v2490, %v2861
      %v2863 = vsel %vm925, %v2862, 0.0
      %v2864 = vsel %vm926, %v2862, 0.0
      %v2865 = vadd.f32 %v2857, %v2863
      %v2866 = vadd.f32 %v2858, %v2864
      %v2867 = vlaneseq
      %v2868 = vshrl.u32 %v2867, 7
      %v2869 = vsub.s32 7, %v2868
      %v2870 = vrot.slane %v2490, %v2869
      %v2871 = vsel %vm939, %v2870, 0.0
      %v2872 = vsel %vm940, %v2870, 0.0
      %v2873 = vadd.f32 %v2865, %v2871
      %v2874 = vadd.f32 %v2866, %v2872
      %v2875 = vlaneseq
      %v2876 = vshrl.u32 %v2875, 7
      %v2877 = vsub.s32 0, %v2876
      %v2878 = vrot.slane %v2495, %v2877
      %v2879 = vsel %vm953, %v2878, 0.0
      %v2880 = vsel %vm954, %v2878, 0.0
      %v2881 = vadd.f32 %v2873, %v2879
      %v2882 = vadd.f32 %v2874, %v2880
      %v2883 = vlaneseq
      %v2884 = vshrl.u32 %v2883, 7
      %v2885 = vsub.s32 1, %v2884
      %v2886 = vrot.slane %v2495, %v2885
      %v2887 = vsel %vm967, %v2886, 0.0
      %v2888 = vsel %vm968, %v2886, 0.0
      %v2889 = vadd.f32 %v2881, %v2887
      %v2890 = vadd.f32 %v2882, %v2888
      %v2891 = vlaneseq
      %v2892 = vshrl.u32 %v2891, 7
      %v2893 = vsub.s32 2, %v2892
      %v2894 = vrot.slane %v2495, %v2893
      %v2895 = vsel %vm981, %v2894, 0.0
      %v2896 = vsel %vm982, %v2894, 0.0
      %v2897 = vadd.f32 %v2889, %v2895
      %v2898 = vadd.f32 %v2890, %v2896
      %v2899 = vlaneseq
      %v2900 = vshrl.u32 %v2899, 7
      %v2901 = vsub.s32 3, %v2900
      %v2902 = vrot.slane %v2495, %v2901
      %v2903 = vsel %vm995, %v2902, 0.0
      %v2904 = vsel %vm996, %v2902, 0.0
      %v2905 = vadd.f32 %v2897, %v2903
      %v2906 = vadd.f32 %v2898, %v2904
      %v2907 = vlaneseq
      %v2908 = vshrl.u32 %v2907, 7
      %v2909 = vsub.s32 4, %v2908
      %v2910 = vrot.slane %v2495, %v2909
      %v2911 = vsel %vm1009, %v2910, 0.0
      %v2912 = vsel %vm1010, %v2910, 0.0
      %v2913 = vadd.f32 %v2905, %v2911
      %v2914 = vadd.f32 %v2906, %v2912
      %v2915 = vlaneseq
      %v2916 = vshrl.u32 %v2915, 7
      %v2917 = vsub.s32 5, %v2916
      %v2918 = vrot.slane %v2495, %v2917
      %v2919 = vsel %vm1023, %v2918, 0.0
      %v2920 = vsel %vm1024, %v2918, 0.0
      %v2921 = vadd.f32 %v2913, %v2919
      %v2922 = vadd.f32 %v2914, %v2920
      %v2923 = vlaneseq
      %v2924 = vshrl.u32 %v2923, 7
      %v2925 = vsub.s32 6, %v2924
      %v2926 = vrot.slane %v2495, %v2925
      %v2927 = vsel %vm1037, %v2926, 0.0
      %v2928 = vsel %vm1038, %v2926, 0.0
      %v2929 = vadd.f32 %v2921, %v2927
      %v2930 = vadd.f32 %v2922, %v2928
      %v2931 = vadd.f32 %v2803, %v2929
      %v2932 = vadd.f32 %v2808, %v2930
      %v2933 = vsel %vm1256, -1e+30, %v2931
      %v2934 = vsel %vm1256, -1e+30, %v2932
      %v2935 = vsel %vm524, %v2933, -inf
      %2936 = vmax.xlane.f32.xlu0 %v2935
      %v2937 = vpop.xlane.xlu0 %2936
      %v2938 = vsel %vm524, %v2934, -inf
      %2939 = vmax.xlane.f32.xlu0 %v2938
      %v2940 = vpop.xlane.xlu0 %2939
      %v2941 = vsub.f32 %v2933, %v2937
      %v2942 = vsub.f32 %v2934, %v2940
      %v2943 = vmul.f32 %v2941, 1.442695
      %v2944 = vpow.pop %v2943
      %v2945 = vmul.f32 %v2942, 1.442695
      %v2946 = vpow.pop %v2945
      %v2947 = vsel %vm524, %v2944, 0.0
      %2948 = vadd.xlane.f32.xlu0 %v2947
      %v2949 = vpop.xlane.xlu0 %2948
      %v2950 = vsel %vm524, %v2946, 0.0
      %2951 = vadd.xlane.f32.xlu0 %v2950
      %v2952 = vpop.xlane.xlu0 %2951
      %v2953 = vrcp.pop %v2949
      %v2954 = vmul.f32 %v2944, %v2953
      %v2955 = vrcp.pop %v2952
      %v2956 = vmul.f32 %v2946, %v2955
      %2957 = vrot.lane.b32.xlu0 %v490, 96
      %v2958 = vpop.permute.xlu0 %2957
      %2959 = vrot.lane.b32.xlu0 %v491, 96
      %v2960 = vpop.permute.xlu0 %2959
      %v2964 = vsel %vm524, %v2954, 0
      %v2967 = vsel %vm524, %v2956, 0
      %2969 = vmatprep.subr.mxu0 0.0
      %2970 = vmatpush1.msra.mxu0 0.0
      %2971 = vmatprep.subr.mxu0 0.0
      %2972 = vmatpush1.msra.mxu0 0.0
      %2973 = vmatprep.subr.mxu0 0.0
      %2974 = vmatpush1.msra.mxu0 0.0
      %2975 = vmatprep.subr.mxu0 0.0
      %2976 = vmatpush1.msra.mxu0 0.0
      %2977 = vmatprep.subr.mxu0 0.0
      %2978 = vmatpush1.msra.mxu0 0.0
      %2979 = vmatprep.subr.mxu0 0.0
      %2980 = vmatpush1.msra.mxu0 0.0
      %2981 = vmatprep.subr.mxu0 0.0
      %2982 = vmatpush1.msra.mxu0 0.0
      %2983 = vmatprep.subr.mxu0 0.0
      %2984 = vmatpush1.msra.mxu0 0.0
      %2985 = vmatprep.subr.mxu0 0.0
      %2986 = vmatpush1.msra.mxu0 0.0
      %2987 = vmatprep.subr.mxu0 0.0
      %2988 = vmatpush1.msra.mxu0 0.0
      %2989 = vmatprep.subr.mxu0 0.0
      %2990 = vmatpush1.msra.mxu0 0.0
      %2991 = vmatprep.subr.mxu0 0.0
      %2992 = vmatpush1.msra.mxu0 0.0
      %2993 = vmatprep.subr.mxu0 0.0
      %2994 = vmatpush1.msra.mxu0 0.0
      %2995 = vmatprep.subr.mxu0 0.0
      %2996 = vmatpush1.msra.mxu0 0.0
      %2997 = vmatprep.subr.mxu0 0.0
      %2998 = vmatpush1.msra.mxu0 %v2960
      %2999 = vmatprep.subr.mxu0 0.0
      %3000 = vmatpush1.msra.mxu0 %v2958
      %3001 = vmatprep.subr.mxu0 0.0
      %3002 = vmatpush2.msra.mxu0 0.0
      %3003 = vmatprep.subr.mxu0 0.0
      %3004 = vmatpush2.msra.mxu0 0.0
      %3005 = vmatprep.subr.mxu0 0.0
      %3006 = vmatpush2.msra.mxu0 0.0
      %3007 = vmatprep.subr.mxu0 0.0
      %3008 = vmatpush2.msra.mxu0 0.0
      %3009 = vmatprep.subr.mxu0 0.0
      %3010 = vmatpush2.msra.mxu0 0.0
      %3011 = vmatprep.subr.mxu0 0.0
      %3012 = vmatpush2.msra.mxu0 0.0
      %3013 = vmatprep.subr.mxu0 0.0
      %3014 = vmatpush2.msra.mxu0 0.0
      %3015 = vmatprep.subr.mxu0 0.0
      %3016 = vmatpush2.msra.mxu0 0.0
      %3017 = vmatprep.subr.mxu0 0.0
      %3018 = vmatpush2.msra.mxu0 0.0
      %3019 = vmatprep.subr.mxu0 0.0
      %3020 = vmatpush2.msra.mxu0 0.0
      %3021 = vmatprep.subr.mxu0 0.0
      %3022 = vmatpush2.msra.mxu0 0.0
      %3023 = vmatprep.subr.mxu0 0.0
      %3024 = vmatpush2.msra.mxu0 0.0
      %3025 = vmatprep.subr.mxu0 0.0
      %3026 = vmatpush2.msra.mxu0 0.0
      %3027 = vmatprep.subr.mxu0 0.0
      %3028 = vmatpush2.msra.mxu0 0.0
      %3029 = vmatprep.subr.mxu0 0.0
      %3030 = vmatpush2.msra.mxu0 0.0
      %3031 = vmatprep.subr.mxu0 0.0
      %3032 = vmatpush2.msra.mxu0 0.0
      %3033 = vmatprep.mubr.f32.mxu0 0.0
      %3034 = vmatmul.mubr.f32.gmra.mxu0 %v2964
      %v3035 = vpop.f32.mrf.mxu0
      %v3036 = vadd.f32 0.0, %v3035
      %v3037 = vpop.f32.mrf.mxu0
      %3038 = vmatprep.mubr.f32.mxu0 0.0
      %3039 = vmatmul.mubr.f32.gmra.mxu0 %v2967
      %v3040 = vpop.f32.mrf.mxu0
      %v3041 = vadd.f32 0.0, %v3040
      %v3042 = vpop.f32.mrf.mxu0
      %3043 = vdwg.mxu0
      %3044 = vrot.lane.b32.xlu0 %v486, 80
      %v3045 = vpop.permute.xlu0 %3044
      %3046 = vrot.lane.b32.xlu0 %v487, 80
      %v3047 = vpop.permute.xlu0 %3046
      %3048 = vrot.lane.b32.xlu0 %v492, 80
      %v3049 = vpop.permute.xlu0 %3048
      %3050 = vrot.lane.b32.xlu0 %v493, 80
      %v3051 = vpop.permute.xlu0 %3050
      %3052 = vrot.lane.b32.xlu0 %v494, 80
      %v3053 = vpop.permute.xlu0 %3052
      %3054 = vrot.lane.b32.xlu0 %v495, 80
      %v3055 = vpop.permute.xlu0 %3054
      %3056 = vrot.lane.b32.xlu0 %v496, 80
      %v3057 = vpop.permute.xlu0 %3056
      %3058 = vrot.lane.b32.xlu0 %v497, 80
      %v3059 = vpop.permute.xlu0 %3058
      %3060 = vrot.lane.b32.xlu0 %v498, 80
      %v3061 = vpop.permute.xlu0 %3060
      %3062 = vrot.lane.b32.xlu0 %v499, 80
      %v3063 = vpop.permute.xlu0 %3062
      %3064 = vrot.lane.b32.xlu0 %v500, 80
      %v3065 = vpop.permute.xlu0 %3064
      %3066 = vrot.lane.b32.xlu0 %v501, 80
      %v3067 = vpop.permute.xlu0 %3066
      %3068 = vrot.lane.b32.xlu0 %v502, 80
      %v3069 = vpop.permute.xlu0 %3068
      %3070 = vrot.lane.b32.xlu0 %v503, 80
      %v3071 = vpop.permute.xlu0 %3070
      %3072 = vrot.lane.b32.xlu0 %v504, 80
      %v3073 = vpop.permute.xlu0 %3072
      %3074 = vrot.lane.b32.xlu0 %v505, 80
      %v3075 = vpop.permute.xlu0 %3074
      %3076 = vrot.lane.b32.xlu0 %v506, 80
      %v3077 = vpop.permute.xlu0 %3076
      %3078 = vrot.lane.b32.xlu0 %v507, 80
      %v3079 = vpop.permute.xlu0 %3078
      %v3080 = vsel %vm524, %v3045, 0
      %v3082 = vsel %vm524, %v3047, 0
      %v3084 = vsel %vm524, %v3049, 0
      %v3086 = vsel %vm524, %v3051, 0
      %v3088 = vsel %vm524, %v3053, 0
      %v3090 = vsel %vm524, %v3055, 0
      %v3092 = vsel %vm524, %v3057, 0
      %v3094 = vsel %vm524, %v3059, 0
      %v3096 = vsel %vm524, %v3061, 0
      %v3098 = vsel %vm524, %v3063, 0
      %v3100 = vsel %vm524, %v3065, 0
      %v3102 = vsel %vm524, %v3067, 0
      %v3104 = vsel %vm524, %v3069, 0
      %v3106 = vsel %vm524, %v3071, 0
      %v3108 = vsel %vm524, %v3073, 0
      %v3110 = vsel %vm524, %v3075, 0
      %v3112 = vsel %vm524, %v3077, 0
      %v3114 = vsel %vm524, %v3079, 0
      %3116 = vmatprep.subr.mxu0 0.0
      %3117 = vmatpush1.xpose.msra.mxu0 %v3114
      %3118 = vmatprep.subr.mxu0 0.0
      %3119 = vmatpush1.xpose.msra.mxu0 %v3112
      %3120 = vmatprep.subr.mxu0 0.0
      %3121 = vmatpush1.xpose.msra.mxu0 %v3110
      %3122 = vmatprep.subr.mxu0 0.0
      %3123 = vmatpush1.xpose.msra.mxu0 %v3108
      %3124 = vmatprep.subr.mxu0 0.0
      %3125 = vmatpush1.xpose.msra.mxu0 %v3106
      %3126 = vmatprep.subr.mxu0 0.0
      %3127 = vmatpush1.xpose.msra.mxu0 %v3104
      %3128 = vmatprep.subr.mxu0 0.0
      %3129 = vmatpush1.xpose.msra.mxu0 %v3102
      %3130 = vmatprep.subr.mxu0 0.0
      %3131 = vmatpush1.xpose.msra.mxu0 %v3100
      %3132 = vmatprep.subr.mxu0 0.0
      %3133 = vmatpush1.xpose.msra.mxu0 %v3098
      %3134 = vmatprep.subr.mxu0 0.0
      %3135 = vmatpush1.xpose.msra.mxu0 %v3096
      %3136 = vmatprep.subr.mxu0 0.0
      %3137 = vmatpush1.xpose.msra.mxu0 %v3094
      %3138 = vmatprep.subr.mxu0 0.0
      %3139 = vmatpush1.xpose.msra.mxu0 %v3092
      %3140 = vmatprep.subr.mxu0 0.0
      %3141 = vmatpush1.xpose.msra.mxu0 %v3090
      %3142 = vmatprep.subr.mxu0 0.0
      %3143 = vmatpush1.xpose.msra.mxu0 %v3088
      %3144 = vmatprep.subr.mxu0 0.0
      %3145 = vmatpush1.xpose.msra.mxu0 %v3086
      %3146 = vmatprep.subr.mxu0 0.0
      %3147 = vmatpush1.xpose.msra.mxu0 %v3084
      %3148 = vmatprep.subr.mxu0 0.0
      %3149 = vmatpush2.xpose.msra.mxu0 0.0
      %3150 = vmatprep.subr.mxu0 0.0
      %3151 = vmatpush2.xpose.msra.mxu0 0.0
      %3152 = vmatprep.subr.mxu0 0.0
      %3153 = vmatpush2.xpose.msra.mxu0 0.0
      %3154 = vmatprep.subr.mxu0 0.0
      %3155 = vmatpush2.xpose.msra.mxu0 0.0
      %3156 = vmatprep.subr.mxu0 0.0
      %3157 = vmatpush2.xpose.msra.mxu0 0.0
      %3158 = vmatprep.subr.mxu0 0.0
      %3159 = vmatpush2.xpose.msra.mxu0 0.0
      %3160 = vmatprep.subr.mxu0 0.0
      %3161 = vmatpush2.xpose.msra.mxu0 0.0
      %3162 = vmatprep.subr.mxu0 0.0
      %3163 = vmatpush2.xpose.msra.mxu0 0.0
      %3164 = vmatprep.subr.mxu0 0.0
      %3165 = vmatpush2.xpose.msra.mxu0 0.0
      %3166 = vmatprep.subr.mxu0 0.0
      %3167 = vmatpush2.xpose.msra.mxu0 0.0
      %3168 = vmatprep.subr.mxu0 0.0
      %3169 = vmatpush2.xpose.msra.mxu0 0.0
      %3170 = vmatprep.subr.mxu0 0.0
      %3171 = vmatpush2.xpose.msra.mxu0 0.0
      %3172 = vmatprep.subr.mxu0 0.0
      %3173 = vmatpush2.xpose.msra.mxu0 0.0
      %3174 = vmatprep.subr.mxu0 0.0
      %3175 = vmatpush2.xpose.msra.mxu0 0.0
      %3176 = vmatprep.subr.mxu0 0.0
      %3177 = vmatpush2.xpose.msra.mxu0 0.0
      %3178 = vmatprep.subr.mxu0 0.0
      %3179 = vmatpush2.xpose.msra.mxu0 0.0
      %3180 = vmatprep.mubr.f32.mxu0 0.0
      %3181 = vmatmul.mubr.f32.gmra.mxu0 %v3080
      %v3182 = vpop.f32.mrf.mxu0
      %v3183 = vadd.f32 0.0, %v3182
      %v3184 = vpop.f32.mrf.mxu0
      %3185 = vmatprep.mubr.f32.mxu0 0.0
      %3186 = vmatmul.mubr.f32.gmra.mxu0 %v3082
      %v3187 = vpop.f32.mrf.mxu0
      %v3188 = vadd.f32 0.0, %v3187
      %v3189 = vpop.f32.mrf.mxu0
      %3190 = vdwg.mxu0
      %3191 = vrot.lane.b32.xlu0 %v508, 80
      %v3192 = vpop.permute.xlu0 %3191
      %3193 = vrot.lane.b32.xlu0 %v509, 80
      %v3194 = vpop.permute.xlu0 %3193
      %3195 = vrot.lane.b32.xlu0 %v510, 80
      %v3196 = vpop.permute.xlu0 %3195
      %3197 = vrot.lane.b32.xlu0 %v511, 80
      %v3198 = vpop.permute.xlu0 %3197
      %3199 = vrot.lane.b32.xlu0 %v512, 80
      %v3200 = vpop.permute.xlu0 %3199
      %3201 = vrot.lane.b32.xlu0 %v513, 80
      %v3202 = vpop.permute.xlu0 %3201
      %3203 = vrot.lane.b32.xlu0 %v514, 80
      %v3204 = vpop.permute.xlu0 %3203
      %3205 = vrot.lane.b32.xlu0 %v515, 80
      %v3206 = vpop.permute.xlu0 %3205
      %3207 = vrot.lane.b32.xlu0 %v516, 80
      %v3208 = vpop.permute.xlu0 %3207
      %3209 = vrot.lane.b32.xlu0 %v517, 80
      %v3210 = vpop.permute.xlu0 %3209
      %3211 = vrot.lane.b32.xlu0 %v518, 80
      %v3212 = vpop.permute.xlu0 %3211
      %3213 = vrot.lane.b32.xlu0 %v519, 80
      %v3214 = vpop.permute.xlu0 %3213
      %3215 = vrot.lane.b32.xlu0 %v520, 80
      %v3216 = vpop.permute.xlu0 %3215
      %3217 = vrot.lane.b32.xlu0 %v521, 80
      %v3218 = vpop.permute.xlu0 %3217
      %3219 = vrot.lane.b32.xlu0 %v522, 80
      %v3220 = vpop.permute.xlu0 %3219
      %3221 = vrot.lane.b32.xlu0 %v523, 80
      %v3222 = vpop.permute.xlu0 %3221
      %3223 = vrot.lane.b32.xlu0 %v488, 80
      %v3224 = vpop.permute.xlu0 %3223
      %3225 = vrot.lane.b32.xlu0 %v489, 80
      %v3226 = vpop.permute.xlu0 %3225
      %v3227 = vsel %vm524, %v3192, 0
      %v3229 = vsel %vm524, %v3194, 0
      %v3231 = vsel %vm524, %v3196, 0
      %v3233 = vsel %vm524, %v3198, 0
      %v3235 = vsel %vm524, %v3200, 0
      %v3237 = vsel %vm524, %v3202, 0
      %v3239 = vsel %vm524, %v3204, 0
      %v3241 = vsel %vm524, %v3206, 0
      %v3243 = vsel %vm524, %v3208, 0
      %v3245 = vsel %vm524, %v3210, 0
      %v3247 = vsel %vm524, %v3212, 0
      %v3249 = vsel %vm524, %v3214, 0
      %v3251 = vsel %vm524, %v3216, 0
      %v3253 = vsel %vm524, %v3218, 0
      %v3255 = vsel %vm524, %v3220, 0
      %v3257 = vsel %vm524, %v3222, 0
      %v3259 = vsel %vm524, %v3224, 0
      %v3261 = vsel %vm524, %v3226, 0
      %3263 = vmatprep.subr.mxu0 0.0
      %3264 = vmatpush1.xpose.msra.mxu0 0.0
      %3265 = vmatprep.subr.mxu0 0.0
      %3266 = vmatpush1.xpose.msra.mxu0 0.0
      %3267 = vmatprep.subr.mxu0 0.0
      %3268 = vmatpush1.xpose.msra.mxu0 0.0
      %3269 = vmatprep.subr.mxu0 0.0
      %3270 = vmatpush1.xpose.msra.mxu0 0.0
      %3271 = vmatprep.subr.mxu0 0.0
      %3272 = vmatpush1.xpose.msra.mxu0 0.0
      %3273 = vmatprep.subr.mxu0 0.0
      %3274 = vmatpush1.xpose.msra.mxu0 0.0
      %3275 = vmatprep.subr.mxu0 0.0
      %3276 = vmatpush1.xpose.msra.mxu0 0.0
      %3277 = vmatprep.subr.mxu0 0.0
      %3278 = vmatpush1.xpose.msra.mxu0 0.0
      %3279 = vmatprep.subr.mxu0 0.0
      %3280 = vmatpush1.xpose.msra.mxu0 0.0
      %3281 = vmatprep.subr.mxu0 0.0
      %3282 = vmatpush1.xpose.msra.mxu0 0.0
      %3283 = vmatprep.subr.mxu0 0.0
      %3284 = vmatpush1.xpose.msra.mxu0 0.0
      %3285 = vmatprep.subr.mxu0 0.0
      %3286 = vmatpush1.xpose.msra.mxu0 0.0
      %3287 = vmatprep.subr.mxu0 0.0
      %3288 = vmatpush1.xpose.msra.mxu0 0.0
      %3289 = vmatprep.subr.mxu0 0.0
      %3290 = vmatpush1.xpose.msra.mxu0 0.0
      %3291 = vmatprep.subr.mxu0 0.0
      %3292 = vmatpush1.xpose.msra.mxu0 %v3261
      %3293 = vmatprep.subr.mxu0 0.0
      %3294 = vmatpush1.xpose.msra.mxu0 %v3259
      %3295 = vmatprep.subr.mxu0 0.0
      %3296 = vmatpush2.xpose.msra.mxu0 0.0
      %3297 = vmatprep.subr.mxu0 0.0
      %3298 = vmatpush2.xpose.msra.mxu0 0.0
      %3299 = vmatprep.subr.mxu0 0.0
      %3300 = vmatpush2.xpose.msra.mxu0 0.0
      %3301 = vmatprep.subr.mxu0 0.0
      %3302 = vmatpush2.xpose.msra.mxu0 0.0
      %3303 = vmatprep.subr.mxu0 0.0
      %3304 = vmatpush2.xpose.msra.mxu0 0.0
      %3305 = vmatprep.subr.mxu0 0.0
      %3306 = vmatpush2.xpose.msra.mxu0 0.0
      %3307 = vmatprep.subr.mxu0 0.0
      %3308 = vmatpush2.xpose.msra.mxu0 0.0
      %3309 = vmatprep.subr.mxu0 0.0
      %3310 = vmatpush2.xpose.msra.mxu0 0.0
      %3311 = vmatprep.subr.mxu0 0.0
      %3312 = vmatpush2.xpose.msra.mxu0 0.0
      %3313 = vmatprep.subr.mxu0 0.0
      %3314 = vmatpush2.xpose.msra.mxu0 0.0
      %3315 = vmatprep.subr.mxu0 0.0
      %3316 = vmatpush2.xpose.msra.mxu0 0.0
      %3317 = vmatprep.subr.mxu0 0.0
      %3318 = vmatpush2.xpose.msra.mxu0 0.0
      %3319 = vmatprep.subr.mxu0 0.0
      %3320 = vmatpush2.xpose.msra.mxu0 0.0
      %3321 = vmatprep.subr.mxu0 0.0
      %3322 = vmatpush2.xpose.msra.mxu0 0.0
      %3323 = vmatprep.subr.mxu0 0.0
      %3324 = vmatpush2.xpose.msra.mxu0 0.0
      %3325 = vmatprep.subr.mxu0 0.0
      %3326 = vmatpush2.xpose.msra.mxu0 0.0
      %3327 = vmatprep.mubr.f32.mxu0 0.0
      %3328 = vmatmul.mubr.f32.gmra.mxu0 %v3227
      %v3329 = vpop.f32.mrf.mxu0
      %v3330 = vadd.f32 0.0, %v3329
      %v3331 = vpop.f32.mrf.mxu0
      %3332 = vmatprep.mubr.f32.mxu0 0.0
      %3333 = vmatmul.mubr.f32.gmra.mxu0 %v3229
      %v3334 = vpop.f32.mrf.mxu0
      %v3335 = vadd.f32 0.0, %v3334
      %v3336 = vpop.f32.mrf.mxu0
      %3337 = vmatprep.mubr.f32.mxu0 0.0
      %3338 = vmatmul.mubr.f32.gmra.mxu0 %v3231
      %v3339 = vpop.f32.mrf.mxu0
      %v3340 = vpop.f32.mrf.mxu0
      %3341 = vmatprep.mubr.f32.mxu0 0.0
      %3342 = vmatmul.mubr.f32.gmra.mxu0 %v3233
      %v3343 = vpop.f32.mrf.mxu0
      %v3344 = vpop.f32.mrf.mxu0
      %3345 = vmatprep.mubr.f32.mxu0 0.0
      %3346 = vmatmul.mubr.f32.gmra.mxu0 %v3235
      %v3347 = vpop.f32.mrf.mxu0
      %v3348 = vpop.f32.mrf.mxu0
      %3349 = vmatprep.mubr.f32.mxu0 0.0
      %3350 = vmatmul.mubr.f32.gmra.mxu0 %v3237
      %v3351 = vpop.f32.mrf.mxu0
      %v3352 = vpop.f32.mrf.mxu0
      %3353 = vmatprep.mubr.f32.mxu0 0.0
      %3354 = vmatmul.mubr.f32.gmra.mxu0 %v3239
      %v3355 = vpop.f32.mrf.mxu0
      %v3356 = vpop.f32.mrf.mxu0
      %3357 = vmatprep.mubr.f32.mxu0 0.0
      %3358 = vmatmul.mubr.f32.gmra.mxu0 %v3241
      %v3359 = vpop.f32.mrf.mxu0
      %v3360 = vpop.f32.mrf.mxu0
      %3361 = vmatprep.mubr.f32.mxu0 0.0
      %3362 = vmatmul.mubr.f32.gmra.mxu0 %v3243
      %v3363 = vpop.f32.mrf.mxu0
      %v3364 = vpop.f32.mrf.mxu0
      %3365 = vmatprep.mubr.f32.mxu0 0.0
      %3366 = vmatmul.mubr.f32.gmra.mxu0 %v3245
      %v3367 = vpop.f32.mrf.mxu0
      %v3368 = vpop.f32.mrf.mxu0
      %3369 = vmatprep.mubr.f32.mxu0 0.0
      %3370 = vmatmul.mubr.f32.gmra.mxu0 %v3247
      %v3371 = vpop.f32.mrf.mxu0
      %v3372 = vpop.f32.mrf.mxu0
      %3373 = vmatprep.mubr.f32.mxu0 0.0
      %3374 = vmatmul.mubr.f32.gmra.mxu0 %v3249
      %v3375 = vpop.f32.mrf.mxu0
      %v3376 = vpop.f32.mrf.mxu0
      %3377 = vmatprep.mubr.f32.mxu0 0.0
      %3378 = vmatmul.mubr.f32.gmra.mxu0 %v3251
      %v3379 = vpop.f32.mrf.mxu0
      %v3380 = vpop.f32.mrf.mxu0
      %3381 = vmatprep.mubr.f32.mxu0 0.0
      %3382 = vmatmul.mubr.f32.gmra.mxu0 %v3253
      %v3383 = vpop.f32.mrf.mxu0
      %v3384 = vpop.f32.mrf.mxu0
      %3385 = vmatprep.mubr.f32.mxu0 0.0
      %3386 = vmatmul.mubr.f32.gmra.mxu0 %v3255
      %v3387 = vpop.f32.mrf.mxu0
      %v3388 = vpop.f32.mrf.mxu0
      %3389 = vmatprep.mubr.f32.mxu0 0.0
      %3390 = vmatmul.mubr.f32.gmra.mxu0 %v3257
      %v3391 = vpop.f32.mrf.mxu0
      %v3392 = vpop.f32.mrf.mxu0
      %3393 = vdwg.mxu0
      %3395 = vset.pattern.permute.xlu0 0
      %3396 = vperm.xlu0 %3395, %v3183
      %v3397 = vpop.permute.xlu0 %3396
      %3400 = vset.pattern.permute.xlu0 0
      %3401 = vperm.xlu0 %3400, %v3188
      %v3402 = vpop.permute.xlu0 %3401
      %v3404 = vsel %vm839, %v3397, 0.0
      %v3405 = vsel %vm840, %v3402, 0.0
      %v3406 = vadd.f32 %v3404, 0.0
      %v3407 = vadd.f32 %v3405, 0.0
      %3408 = vset.pattern.permute.xlu0 1
      %3409 = vperm.xlu0 %3408, %v3183
      %v3410 = vpop.permute.xlu0 %3409
      %3412 = vset.pattern.permute.xlu0 1
      %3413 = vperm.xlu0 %3412, %v3188
      %v3414 = vpop.permute.xlu0 %3413
      %v3416 = vsel %vm855, %v3410, 0.0
      %v3417 = vsel %vm856, %v3414, 0.0
      %v3418 = vadd.f32 %v3406, %v3416
      %v3419 = vadd.f32 %v3407, %v3417
      %3420 = vset.pattern.permute.xlu0 2
      %3421 = vperm.xlu0 %3420, %v3183
      %v3422 = vpop.permute.xlu0 %3421
      %3424 = vset.pattern.permute.xlu0 2
      %3425 = vperm.xlu0 %3424, %v3188
      %v3426 = vpop.permute.xlu0 %3425
      %v3428 = vsel %vm869, %v3422, 0.0
      %v3429 = vsel %vm870, %v3426, 0.0
      %v3430 = vadd.f32 %v3418, %v3428
      %v3431 = vadd.f32 %v3419, %v3429
      %3432 = vset.pattern.permute.xlu0 3
      %3433 = vperm.xlu0 %3432, %v3183
      %v3434 = vpop.permute.xlu0 %3433
      %3436 = vset.pattern.permute.xlu0 3
      %3437 = vperm.xlu0 %3436, %v3188
      %v3438 = vpop.permute.xlu0 %3437
      %v3440 = vsel %vm883, %v3434, 0.0
      %v3441 = vsel %vm884, %v3438, 0.0
      %v3442 = vadd.f32 %v3430, %v3440
      %v3443 = vadd.f32 %v3431, %v3441
      %3444 = vset.pattern.permute.xlu0 4
      %3445 = vperm.xlu0 %3444, %v3183
      %v3446 = vpop.permute.xlu0 %3445
      %3448 = vset.pattern.permute.xlu0 4
      %3449 = vperm.xlu0 %3448, %v3188
      %v3450 = vpop.permute.xlu0 %3449
      %v3452 = vsel %vm897, %v3446, 0.0
      %v3453 = vsel %vm898, %v3450, 0.0
      %v3454 = vadd.f32 %v3442, %v3452
      %v3455 = vadd.f32 %v3443, %v3453
      %3456 = vset.pattern.permute.xlu0 5
      %3457 = vperm.xlu0 %3456, %v3183
      %v3458 = vpop.permute.xlu0 %3457
      %3460 = vset.pattern.permute.xlu0 5
      %3461 = vperm.xlu0 %3460, %v3188
      %v3462 = vpop.permute.xlu0 %3461
      %v3464 = vsel %vm911, %v3458, 0.0
      %v3465 = vsel %vm912, %v3462, 0.0
      %v3466 = vadd.f32 %v3454, %v3464
      %v3467 = vadd.f32 %v3455, %v3465
      %3468 = vset.pattern.permute.xlu0 6
      %3469 = vperm.xlu0 %3468, %v3183
      %v3470 = vpop.permute.xlu0 %3469
      %3472 = vset.pattern.permute.xlu0 6
      %3473 = vperm.xlu0 %3472, %v3188
      %v3474 = vpop.permute.xlu0 %3473
      %v3476 = vsel %vm925, %v3470, 0.0
      %v3477 = vsel %vm926, %v3474, 0.0
      %v3478 = vadd.f32 %v3466, %v3476
      %v3479 = vadd.f32 %v3467, %v3477
      %3480 = vset.pattern.permute.xlu0 7
      %3481 = vperm.xlu0 %3480, %v3183
      %v3482 = vpop.permute.xlu0 %3481
      %3484 = vset.pattern.permute.xlu0 7
      %3485 = vperm.xlu0 %3484, %v3188
      %v3486 = vpop.permute.xlu0 %3485
      %v3488 = vsel %vm939, %v3482, 0.0
      %v3489 = vsel %vm940, %v3486, 0.0
      %v3490 = vadd.f32 %v3478, %v3488
      %v3491 = vadd.f32 %v3479, %v3489
      %3492 = vset.pattern.permute.xlu0 8
      %3493 = vperm.xlu0 %3492, %v3183
      %v3494 = vpop.permute.xlu0 %3493
      %3496 = vset.pattern.permute.xlu0 8
      %3497 = vperm.xlu0 %3496, %v3188
      %v3498 = vpop.permute.xlu0 %3497
      %v3500 = vsel %vm953, %v3494, 0.0
      %v3501 = vsel %vm954, %v3498, 0.0
      %v3502 = vadd.f32 %v3490, %v3500
      %v3503 = vadd.f32 %v3491, %v3501
      %3504 = vset.pattern.permute.xlu0 9
      %3505 = vperm.xlu0 %3504, %v3183
      %v3506 = vpop.permute.xlu0 %3505
      %3508 = vset.pattern.permute.xlu0 9
      %3509 = vperm.xlu0 %3508, %v3188
      %v3510 = vpop.permute.xlu0 %3509
      %v3512 = vsel %vm967, %v3506, 0.0
      %v3513 = vsel %vm968, %v3510, 0.0
      %v3514 = vadd.f32 %v3502, %v3512
      %v3515 = vadd.f32 %v3503, %v3513
      %3516 = vset.pattern.permute.xlu0 10
      %3517 = vperm.xlu0 %3516, %v3183
      %v3518 = vpop.permute.xlu0 %3517
      %3520 = vset.pattern.permute.xlu0 10
      %3521 = vperm.xlu0 %3520, %v3188
      %v3522 = vpop.permute.xlu0 %3521
      %v3524 = vsel %vm981, %v3518, 0.0
      %v3525 = vsel %vm982, %v3522, 0.0
      %v3526 = vadd.f32 %v3514, %v3524
      %v3527 = vadd.f32 %v3515, %v3525
      %3528 = vset.pattern.permute.xlu0 11
      %3529 = vperm.xlu0 %3528, %v3183
      %v3530 = vpop.permute.xlu0 %3529
      %3532 = vset.pattern.permute.xlu0 11
      %3533 = vperm.xlu0 %3532, %v3188
      %v3534 = vpop.permute.xlu0 %3533
      %v3536 = vsel %vm995, %v3530, 0.0
      %v3537 = vsel %vm996, %v3534, 0.0
      %v3538 = vadd.f32 %v3526, %v3536
      %v3539 = vadd.f32 %v3527, %v3537
      %3540 = vset.pattern.permute.xlu0 12
      %3541 = vperm.xlu0 %3540, %v3183
      %v3542 = vpop.permute.xlu0 %3541
      %3544 = vset.pattern.permute.xlu0 12
      %3545 = vperm.xlu0 %3544, %v3188
      %v3546 = vpop.permute.xlu0 %3545
      %v3548 = vsel %vm1009, %v3542, 0.0
      %v3549 = vsel %vm1010, %v3546, 0.0
      %v3550 = vadd.f32 %v3538, %v3548
      %v3551 = vadd.f32 %v3539, %v3549
      %3552 = vset.pattern.permute.xlu0 13
      %3553 = vperm.xlu0 %3552, %v3183
      %v3554 = vpop.permute.xlu0 %3553
      %3556 = vset.pattern.permute.xlu0 13
      %3557 = vperm.xlu0 %3556, %v3188
      %v3558 = vpop.permute.xlu0 %3557
      %v3560 = vsel %vm1023, %v3554, 0.0
      %v3561 = vsel %vm1024, %v3558, 0.0
      %v3562 = vadd.f32 %v3550, %v3560
      %v3563 = vadd.f32 %v3551, %v3561
      %3564 = vset.pattern.permute.xlu0 14
      %3565 = vperm.xlu0 %3564, %v3183
      %v3566 = vpop.permute.xlu0 %3565
      %3568 = vset.pattern.permute.xlu0 14
      %3569 = vperm.xlu0 %3568, %v3188
      %v3570 = vpop.permute.xlu0 %3569
      %v3572 = vsel %vm1037, %v3566, 0.0
      %v3573 = vsel %vm1038, %v3570, 0.0
      %v3574 = vadd.f32 %v3562, %v3572
      %v3575 = vadd.f32 %v3563, %v3573
      %3576 = vmatprep.subr.mxu0 0.0
      %3577 = vmatpush1.xpose.msra.mxu0 0.0
      %3578 = vmatprep.subr.mxu0 0.0
      %3579 = vmatpush1.xpose.msra.mxu0 0.0
      %3580 = vmatprep.subr.mxu0 0.0
      %3581 = vmatpush1.xpose.msra.mxu0 0.0
      %3582 = vmatprep.subr.mxu0 0.0
      %3583 = vmatpush1.xpose.msra.mxu0 0.0
      %3584 = vmatprep.subr.mxu0 0.0
      %3585 = vmatpush1.xpose.msra.mxu0 0.0
      %3586 = vmatprep.subr.mxu0 0.0
      %3587 = vmatpush1.xpose.msra.mxu0 0.0
      %3588 = vmatprep.subr.mxu0 0.0
      %3589 = vmatpush1.xpose.msra.mxu0 0.0
      %3590 = vmatprep.subr.mxu0 0.0
      %3591 = vmatpush1.xpose.msra.mxu0 0.0
      %3592 = vmatprep.subr.mxu0 0.0
      %3593 = vmatpush1.xpose.msra.mxu0 0.0
      %3594 = vmatprep.subr.mxu0 0.0
      %3595 = vmatpush1.xpose.msra.mxu0 0.0
      %3596 = vmatprep.subr.mxu0 0.0
      %3597 = vmatpush1.xpose.msra.mxu0 0.0
      %3598 = vmatprep.subr.mxu0 0.0
      %3599 = vmatpush1.xpose.msra.mxu0 0.0
      %3600 = vmatprep.subr.mxu0 0.0
      %3601 = vmatpush1.xpose.msra.mxu0 0.0
      %3602 = vmatprep.subr.mxu0 0.0
      %3603 = vmatpush1.xpose.msra.mxu0 0.0
      %3604 = vmatprep.subr.mxu0 0.0
      %3605 = vmatpush1.xpose.msra.mxu0 %v3261
      %3606 = vmatprep.subr.mxu0 0.0
      %3607 = vmatpush1.xpose.msra.mxu0 %v3259
      %3608 = vmatprep.subr.mxu0 0.0
      %3609 = vmatpush2.xpose.msra.mxu0 0.0
      %3610 = vmatprep.subr.mxu0 0.0
      %3611 = vmatpush2.xpose.msra.mxu0 0.0
      %3612 = vmatprep.subr.mxu0 0.0
      %3613 = vmatpush2.xpose.msra.mxu0 0.0
      %3614 = vmatprep.subr.mxu0 0.0
      %3615 = vmatpush2.xpose.msra.mxu0 0.0
      %3616 = vmatprep.subr.mxu0 0.0
      %3617 = vmatpush2.xpose.msra.mxu0 0.0
      %3618 = vmatprep.subr.mxu0 0.0
      %3619 = vmatpush2.xpose.msra.mxu0 0.0
      %3620 = vmatprep.subr.mxu0 0.0
      %3621 = vmatpush2.xpose.msra.mxu0 0.0
      %3622 = vmatprep.subr.mxu0 0.0
      %3623 = vmatpush2.xpose.msra.mxu0 0.0
      %3624 = vmatprep.subr.mxu0 0.0
      %3625 = vmatpush2.xpose.msra.mxu0 0.0
      %3626 = vmatprep.subr.mxu0 0.0
      %3627 = vmatpush2.xpose.msra.mxu0 0.0
      %3628 = vmatprep.subr.mxu0 0.0
      %3629 = vmatpush2.xpose.msra.mxu0 0.0
      %3630 = vmatprep.subr.mxu0 0.0
      %3631 = vmatpush2.xpose.msra.mxu0 0.0
      %3632 = vmatprep.subr.mxu0 0.0
      %3633 = vmatpush2.xpose.msra.mxu0 0.0
      %3634 = vmatprep.subr.mxu0 0.0
      %3635 = vmatpush2.xpose.msra.mxu0 0.0
      %3636 = vmatprep.subr.mxu0 0.0
      %3637 = vmatpush2.xpose.msra.mxu0 0.0
      %3638 = vmatprep.subr.mxu0 0.0
      %3639 = vmatpush2.xpose.msra.mxu0 0.0
      %3640 = vmatprep.mubr.f32.mxu0 0.0
      %3641 = vmatmul.mubr.f32.gmra.mxu0 %v3080
      %v3642 = vpop.f32.mrf.mxu0
      %v3643 = vadd.f32 %v3574, %v3642
      %v3644 = vpop.f32.mrf.mxu0
      %3645 = vmatprep.mubr.f32.mxu0 0.0
      %3646 = vmatmul.mubr.f32.gmra.mxu0 %v3082
      %v3647 = vpop.f32.mrf.mxu0
      %v3648 = vadd.f32 %v3575, %v3647
      %v3649 = vpop.f32.mrf.mxu0
      %3650 = vdwg.mxu0
      %v3651 = vlaneseq
      %v3652 = vshrl.u32 %v3651, 7
      %v3653 = vsub.s32 0, %v3652
      %v3654 = vrot.slane %v3330, %v3653
      %v3655 = vsel %vm839, %v3654, 0.0
      %v3656 = vsel %vm840, %v3654, 0.0
      %v3657 = vadd.f32 %v3655, 0.0
      %v3658 = vadd.f32 %v3656, 0.0
      %v3659 = vlaneseq
      %v3660 = vshrl.u32 %v3659, 7
      %v3661 = vsub.s32 1, %v3660
      %v3662 = vrot.slane %v3330, %v3661
      %v3663 = vsel %vm855, %v3662, 0.0
      %v3664 = vsel %vm856, %v3662, 0.0
      %v3665 = vadd.f32 %v3657, %v3663
      %v3666 = vadd.f32 %v3658, %v3664
      %v3667 = vlaneseq
      %v3668 = vshrl.u32 %v3667, 7
      %v3669 = vsub.s32 2, %v3668
      %v3670 = vrot.slane %v3330, %v3669
      %v3671 = vsel %vm869, %v3670, 0.0
      %v3672 = vsel %vm870, %v3670, 0.0
      %v3673 = vadd.f32 %v3665, %v3671
      %v3674 = vadd.f32 %v3666, %v3672
      %v3675 = vlaneseq
      %v3676 = vshrl.u32 %v3675, 7
      %v3677 = vsub.s32 3, %v3676
      %v3678 = vrot.slane %v3330, %v3677
      %v3679 = vsel %vm883, %v3678, 0.0
      %v3680 = vsel %vm884, %v3678, 0.0
      %v3681 = vadd.f32 %v3673, %v3679
      %v3682 = vadd.f32 %v3674, %v3680
      %v3683 = vlaneseq
      %v3684 = vshrl.u32 %v3683, 7
      %v3685 = vsub.s32 4, %v3684
      %v3686 = vrot.slane %v3330, %v3685
      %v3687 = vsel %vm897, %v3686, 0.0
      %v3688 = vsel %vm898, %v3686, 0.0
      %v3689 = vadd.f32 %v3681, %v3687
      %v3690 = vadd.f32 %v3682, %v3688
      %v3691 = vlaneseq
      %v3692 = vshrl.u32 %v3691, 7
      %v3693 = vsub.s32 5, %v3692
      %v3694 = vrot.slane %v3330, %v3693
      %v3695 = vsel %vm911, %v3694, 0.0
      %v3696 = vsel %vm912, %v3694, 0.0
      %v3697 = vadd.f32 %v3689, %v3695
      %v3698 = vadd.f32 %v3690, %v3696
      %v3699 = vlaneseq
      %v3700 = vshrl.u32 %v3699, 7
      %v3701 = vsub.s32 6, %v3700
      %v3702 = vrot.slane %v3330, %v3701
      %v3703 = vsel %vm925, %v3702, 0.0
      %v3704 = vsel %vm926, %v3702, 0.0
      %v3705 = vadd.f32 %v3697, %v3703
      %v3706 = vadd.f32 %v3698, %v3704
      %v3707 = vlaneseq
      %v3708 = vshrl.u32 %v3707, 7
      %v3709 = vsub.s32 7, %v3708
      %v3710 = vrot.slane %v3330, %v3709
      %v3711 = vsel %vm939, %v3710, 0.0
      %v3712 = vsel %vm940, %v3710, 0.0
      %v3713 = vadd.f32 %v3705, %v3711
      %v3714 = vadd.f32 %v3706, %v3712
      %v3715 = vlaneseq
      %v3716 = vshrl.u32 %v3715, 7
      %v3717 = vsub.s32 0, %v3716
      %v3718 = vrot.slane %v3335, %v3717
      %v3719 = vsel %vm953, %v3718, 0.0
      %v3720 = vsel %vm954, %v3718, 0.0
      %v3721 = vadd.f32 %v3713, %v3719
      %v3722 = vadd.f32 %v3714, %v3720
      %v3723 = vlaneseq
      %v3724 = vshrl.u32 %v3723, 7
      %v3725 = vsub.s32 1, %v3724
      %v3726 = vrot.slane %v3335, %v3725
      %v3727 = vsel %vm967, %v3726, 0.0
      %v3728 = vsel %vm968, %v3726, 0.0
      %v3729 = vadd.f32 %v3721, %v3727
      %v3730 = vadd.f32 %v3722, %v3728
      %v3731 = vlaneseq
      %v3732 = vshrl.u32 %v3731, 7
      %v3733 = vsub.s32 2, %v3732
      %v3734 = vrot.slane %v3335, %v3733
      %v3735 = vsel %vm981, %v3734, 0.0
      %v3736 = vsel %vm982, %v3734, 0.0
      %v3737 = vadd.f32 %v3729, %v3735
      %v3738 = vadd.f32 %v3730, %v3736
      %v3739 = vlaneseq
      %v3740 = vshrl.u32 %v3739, 7
      %v3741 = vsub.s32 3, %v3740
      %v3742 = vrot.slane %v3335, %v3741
      %v3743 = vsel %vm995, %v3742, 0.0
      %v3744 = vsel %vm996, %v3742, 0.0
      %v3745 = vadd.f32 %v3737, %v3743
      %v3746 = vadd.f32 %v3738, %v3744
      %v3747 = vlaneseq
      %v3748 = vshrl.u32 %v3747, 7
      %v3749 = vsub.s32 4, %v3748
      %v3750 = vrot.slane %v3335, %v3749
      %v3751 = vsel %vm1009, %v3750, 0.0
      %v3752 = vsel %vm1010, %v3750, 0.0
      %v3753 = vadd.f32 %v3745, %v3751
      %v3754 = vadd.f32 %v3746, %v3752
      %v3755 = vlaneseq
      %v3756 = vshrl.u32 %v3755, 7
      %v3757 = vsub.s32 5, %v3756
      %v3758 = vrot.slane %v3335, %v3757
      %v3759 = vsel %vm1023, %v3758, 0.0
      %v3760 = vsel %vm1024, %v3758, 0.0
      %v3761 = vadd.f32 %v3753, %v3759
      %v3762 = vadd.f32 %v3754, %v3760
      %v3763 = vlaneseq
      %v3764 = vshrl.u32 %v3763, 7
      %v3765 = vsub.s32 6, %v3764
      %v3766 = vrot.slane %v3335, %v3765
      %v3767 = vsel %vm1037, %v3766, 0.0
      %v3768 = vsel %vm1038, %v3766, 0.0
      %v3769 = vadd.f32 %v3761, %v3767
      %v3770 = vadd.f32 %v3762, %v3768
      %v3771 = vadd.f32 %v3643, %v3769
      %v3772 = vadd.f32 %v3648, %v3770
      %v3773 = vsel %vm1256, -1e+30, %v3771
      %v3774 = vsel %vm1256, -1e+30, %v3772
      %v3775 = vsel %vm524, %v3773, -inf
      %3776 = vmax.xlane.f32.xlu0 %v3775
      %v3777 = vpop.xlane.xlu0 %3776
      %v3778 = vsel %vm524, %v3774, -inf
      %3779 = vmax.xlane.f32.xlu0 %v3778
      %v3780 = vpop.xlane.xlu0 %3779
      %v3781 = vsub.f32 %v3773, %v3777
      %v3782 = vsub.f32 %v3774, %v3780
      %v3783 = vmul.f32 %v3781, 1.442695
      %v3784 = vpow.pop %v3783
      %v3785 = vmul.f32 %v3782, 1.442695
      %v3786 = vpow.pop %v3785
      %v3787 = vsel %vm524, %v3784, 0.0
      %3788 = vadd.xlane.f32.xlu0 %v3787
      %v3789 = vpop.xlane.xlu0 %3788
      %v3790 = vsel %vm524, %v3786, 0.0
      %3791 = vadd.xlane.f32.xlu0 %v3790
      %v3792 = vpop.xlane.xlu0 %3791
      %v3793 = vrcp.pop %v3789
      %v3794 = vmul.f32 %v3784, %v3793
      %v3795 = vrcp.pop %v3792
      %v3796 = vmul.f32 %v3786, %v3795
      %3797 = vrot.lane.b32.xlu0 %v490, 80
      %v3798 = vpop.permute.xlu0 %3797
      %3799 = vrot.lane.b32.xlu0 %v491, 80
      %v3800 = vpop.permute.xlu0 %3799
      %v3804 = vsel %vm524, %v3794, 0
      %v3807 = vsel %vm524, %v3796, 0
      %3809 = vmatprep.subr.mxu0 0.0
      %3810 = vmatpush1.msra.mxu0 0.0
      %3811 = vmatprep.subr.mxu0 0.0
      %3812 = vmatpush1.msra.mxu0 0.0
      %3813 = vmatprep.subr.mxu0 0.0
      %3814 = vmatpush1.msra.mxu0 0.0
      %3815 = vmatprep.subr.mxu0 0.0
      %3816 = vmatpush1.msra.mxu0 0.0
      %3817 = vmatprep.subr.mxu0 0.0
      %3818 = vmatpush1.msra.mxu0 0.0
      %3819 = vmatprep.subr.mxu0 0.0
      %3820 = vmatpush1.msra.mxu0 0.0
      %3821 = vmatprep.subr.mxu0 0.0
      %3822 = vmatpush1.msra.mxu0 0.0
      %3823 = vmatprep.subr.mxu0 0.0
      %3824 = vmatpush1.msra.mxu0 0.0
      %3825 = vmatprep.subr.mxu0 0.0
      %3826 = vmatpush1.msra.mxu0 0.0
      %3827 = vmatprep.subr.mxu0 0.0
      %3828 = vmatpush1.msra.mxu0 0.0
      %3829 = vmatprep.subr.mxu0 0.0
      %3830 = vmatpush1.msra.mxu0 0.0
      %3831 = vmatprep.subr.mxu0 0.0
      %3832 = vmatpush1.msra.mxu0 0.0
      %3833 = vmatprep.subr.mxu0 0.0
      %3834 = vmatpush1.msra.mxu0 0.0
      %3835 = vmatprep.subr.mxu0 0.0
      %3836 = vmatpush1.msra.mxu0 0.0
      %3837 = vmatprep.subr.mxu0 0.0
      %3838 = vmatpush1.msra.mxu0 %v3800
      %3839 = vmatprep.subr.mxu0 0.0
      %3840 = vmatpush1.msra.mxu0 %v3798
      %3841 = vmatprep.subr.mxu0 0.0
      %3842 = vmatpush2.msra.mxu0 0.0
      %3843 = vmatprep.subr.mxu0 0.0
      %3844 = vmatpush2.msra.mxu0 0.0
      %3845 = vmatprep.subr.mxu0 0.0
      %3846 = vmatpush2.msra.mxu0 0.0
      %3847 = vmatprep.subr.mxu0 0.0
      %3848 = vmatpush2.msra.mxu0 0.0
      %3849 = vmatprep.subr.mxu0 0.0
      %3850 = vmatpush2.msra.mxu0 0.0
      %3851 = vmatprep.subr.mxu0 0.0
      %3852 = vmatpush2.msra.mxu0 0.0
      %3853 = vmatprep.subr.mxu0 0.0
      %3854 = vmatpush2.msra.mxu0 0.0
      %3855 = vmatprep.subr.mxu0 0.0
      %3856 = vmatpush2.msra.mxu0 0.0
      %3857 = vmatprep.subr.mxu0 0.0
      %3858 = vmatpush2.msra.mxu0 0.0
      %3859 = vmatprep.subr.mxu0 0.0
      %3860 = vmatpush2.msra.mxu0 0.0
      %3861 = vmatprep.subr.mxu0 0.0
      %3862 = vmatpush2.msra.mxu0 0.0
      %3863 = vmatprep.subr.mxu0 0.0
      %3864 = vmatpush2.msra.mxu0 0.0
      %3865 = vmatprep.subr.mxu0 0.0
      %3866 = vmatpush2.msra.mxu0 0.0
      %3867 = vmatprep.subr.mxu0 0.0
      %3868 = vmatpush2.msra.mxu0 0.0
      %3869 = vmatprep.subr.mxu0 0.0
      %3870 = vmatpush2.msra.mxu0 0.0
      %3871 = vmatprep.subr.mxu0 0.0
      %3872 = vmatpush2.msra.mxu0 0.0
      %3873 = vmatprep.mubr.f32.mxu0 0.0
      %3874 = vmatmul.mubr.f32.gmra.mxu0 %v3804
      %v3875 = vpop.f32.mrf.mxu0
      %v3876 = vadd.f32 0.0, %v3875
      %v3877 = vpop.f32.mrf.mxu0
      %3878 = vmatprep.mubr.f32.mxu0 0.0
      %3879 = vmatmul.mubr.f32.gmra.mxu0 %v3807
      %v3880 = vpop.f32.mrf.mxu0
      %v3881 = vadd.f32 0.0, %v3880
      %v3882 = vpop.f32.mrf.mxu0
      %3883 = vdwg.mxu0
      %3886 = vrot.lane.b32.xlu0 %v2196, 16
      %v3887 = vpop.permute.xlu0 %3886
      %3888 = vrot.lane.b32.xlu0 %v2201, 16
      %v3889 = vpop.permute.xlu0 %3888
      %3894 = vrot.lane.b32.xlu0 %v3036, 32
      %v3895 = vpop.permute.xlu0 %3894
      %3896 = vrot.lane.b32.xlu0 %v3041, 32
      %v3897 = vpop.permute.xlu0 %3896
      %3902 = vrot.lane.b32.xlu0 %v3876, 48
      %v3903 = vpop.permute.xlu0 %3902
      %3904 = vrot.lane.b32.xlu0 %v3881, 48
      %v3905 = vpop.permute.xlu0 %3904
      %v3908 = vsel %vm524, %v1354, %v3887
      %v3909 = vsel %vm524, %v1359, %v3889
      %vm3910 = vcmask 261120
      %v3911 = vsel %vm3910, %v3908, %v3895
      %v3912 = vsel %vm3910, %v3909, %v3897
      %vm3913 = vcmask 392192
      %v3914 = vsel %vm3913, %v3911, %v3903
      %v3915 = vsel %vm3913, %v3912, %v3905
      %v3916 = vld [vmem:[%s458] sm:$0xff]
      %v3917 = vld [vmem:[%s458 + $0x8] sm:$0xff]
      %v3918 = vmul.f32 %v3914, %v3916
      %v3919 = vmul.f32 %v3915, %v3917
      %vm3920 = vcmask 523264
      %3921 = vst.msk [vmem:[%s477] sm:$0xff] %vm3920, %v3918
      %3922 = vst.msk [vmem:[%s477 + $0x8] sm:$0xff] %vm3920, %v3919
      %p3923 = scmp.lt.s32.totalorder %s23, 1
      %s3924 = scalar_select %p3923, %s23, 1
      %p3925 = scmp.lt.s32.totalorder %s24, 0
      %s3926 = scalar_select %p3925, %s24, 0
      %s3927 = smul.addr %s3924, 2
      %s3928 = sadd.s32 %s3926, %s3927
      %s3929 = smul.addr %s3928, 8
      %s3930 = scalar_lea.vmem %s8, %s3929
      // Predicated region
      $region53: #{attention_forward.4} parent=51 // pred_check
        %p3931 = pneg %p262
      $region54: #{attention_forward.4} parent=51 // pred_check_branch
        %3933 = sbr.rel (%p3931) target = $region56
      $region55: #{attention_forward.4} parent=51 // pred_region
        _
      $region56: #{attention_forward.4} parent=51 // pred_fallthru
        _
    $region52: #{attention_forward.4} parent=5 // pred_fallthru
      _
    %p3934 = scmp.le.s32.totalorder 2, %s14
    // Predicated region
    $region57: #{attention_forward.4} parent=5 // pred_check
      %p3935 = pneg %p3934
    $region58: #{attention_forward.4} parent=5 // pred_check_branch
      %3937 = sbr.rel (%p3935) target = $region60
    $region59: #{attention_forward.4} parent=5 // pred_region
      %s3938 = ssub.s32 %s14, 2
      // Predicated region
      $region61: #{attention_forward.4} parent=59 // pred_check
        %p3939 = pneg %p268
      $region62: #{attention_forward.4} parent=59 // pred_check_branch
        %3941 = sbr.rel (%p3939) target = $region64
      $region63: #{attention_forward.4} parent=59 // pred_region
        %p3942 = scmp.lt.s32.totalorder %s25, 1
        %s3943 = scalar_select %p3942, %s25, 1
        %p3944 = scmp.lt.s32.totalorder %s26, 0
        %s3945 = scalar_select %p3944, %s26, 0
        %s3946 = smul.addr %s3943, 2
        %s3947 = sadd.s32 %s3945, %s3946
        %s3948 = smul.addr %s3947, 8
        %s3949 = scalar_lea.vmem %s8, %s3948
      $region64: #{attention_forward.4} parent=59 // pred_fallthru
        _
    $region60: #{attention_forward.4} parent=5 // pred_fallthru
      _
  $region6: #{attention_forward.4} parent=0 // loop_footer
    %s18 = sadd.s32 1, %s14
  $region7: #{attention_forward.4} parent=0 // loop_footer_branch
    %13 = sbr.rel target = $region3
  $region8: #{attention_forward.4} parent=0 // loop_exit
    _

</llo_original>
